<compile_context>
chip_gen: v7x
topology: tpu7x:2x2x1
jax: 0.10.0
libtpu: 0.0.40
codegen_flags: <defaults>
</compile_context>

<pallas_src>
import jax
import jax.numpy as jnp
from jax.experimental import pallas as pl
from jax.experimental.pallas import tpu as pltpu


def pathgcn_kernel(h_ref, x_ref,
                   w1_ref,        # [Wl*Wl, C]  tiled horizontal depthwise weights / Wl
                   w2_ref,        # [Wl*Wl, C]  repeated vertical depthwise weights / Wl
                   wcat_ref,      # [2C, 2C]    block-diag(w_lin, w_linv)
                   bcat_ref,      # [1, 2C]     concat(b_conv@w_lin + b_lin, b_vert@w_linv + b_linv)
                   out_ref):
    h = h_ref[...].astype(jnp.float32)                    # [TN, Wl*Wl, C]  (bf16 -> f32)

    # Depthwise conv + mean, both paths: one mul + one sublane-axis reduction each.
    s1 = jnp.sum(h * w1_ref[...][None], axis=1)           # [TN, C]
    s2 = jnp.sum(h * w2_ref[...][None], axis=1)           # [TN, C]

    # Fused per-path Linear + ReLU on the MXU (block-diagonal weight).
    pre = jnp.concatenate([s1, s2], axis=-1)               # [TN, 2C]
    y = jnp.dot(pre, wcat_ref[...],
                preferred_element_type=jnp.float32) + bcat_ref[...]
    y = jnp.maximum(y, 0.0)                                 # [TN, 2C]

    C = out_ref.shape[-1]
    # h3 (bigram) branch of the torch forward never reaches the output -> skipped.
    # dropout(p=0.5) is identity in eval mode.
    out_ref[...] = y[:, :C] + y[:, C:] + x_ref[...]


def _choose_block_n(n):
    """Largest block in [128, 1024] that keeps >=2 grid steps when N allows (v7x megacore)."""
    bn = 1024
    while bn > 128 and n < 2 * bn:
        bn //= 2
    return bn


def pathgcn_forward(x, node_image, params, *, block_n=None):
    """x: [N, C] node features, node_image: [N, Wl, Wl] int32 walk indices."""
    N, C = x.shape
    Wl = node_image.shape[1]
    Wl2 = Wl * Wl

    if block_n is None:
        block_n = _choose_block_n(N)
    n_pad = ((N + block_n - 1) // block_n) * block_n

    # Glue: gather walk features (pure indexing), flatten walk dims, cast the
    # dominant HBM stream to bf16.  Accumulation stays f32 inside the kernel.
    h = x[node_image.reshape(N, Wl2)].astype(jnp.bfloat16)          # [N, Wl2, C]
    x32 = x.astype(jnp.float32)
    if n_pad != N:                                                   # ragged-tail padding
        h = jnp.pad(h, ((0, n_pad - N), (0, 0), (0, 0)))
        x32 = jnp.pad(x32, ((0, n_pad - N), (0, 0)))

    # Weight preprocessing (tiny, done once in the wrapper):
    #   flatten (i,j) -> k = i*Wl + j; fold the 1/Wl mean into the conv weights.
    w1 = jnp.tile(params["w_conv"] / Wl, (Wl, 1))                    # w_conv[j,c]  -> [Wl2, C]
    w2 = jnp.repeat(params["w_vert"] / Wl, Wl, axis=0)               # w_vert[i,c]  -> [Wl2, C]
    # Fused Linear: block-diagonal weight, conv biases folded into the matmul bias.
    wlin, wlinv = params["w_lin"], params["w_linv"]
    wcat = jnp.zeros((2 * C, 2 * C), jnp.float32)
    wcat = wcat.at[:C, :C].set(wlin).at[C:, C:].set(wlinv)
    b1 = params["b_conv"] @ wlin + params["b_lin"]                   # [1, C]
    b2 = params["b_vert"] @ wlinv + params["b_linv"]                 # [1, C]
    bcat = jnp.concatenate([b1, b2], axis=-1)                        # [1, 2C]

    const = lambda shape: pl.BlockSpec(shape, lambda i: (0,) * len(shape))

    out = pl.pallas_call(
        pathgcn_kernel,
        out_shape=jax.ShapeDtypeStruct((n_pad, C), jnp.float32),
        grid=(n_pad // block_n,),
        in_specs=[
            pl.BlockSpec((block_n, Wl2, C), lambda i: (i, 0, 0)),    # gathered walks (bf16)
            pl.BlockSpec((block_n, C), lambda i: (i, 0)),            # residual x (f32)
            const((Wl2, C)), const((Wl2, C)),                        # pre-tiled conv weights
            const((2 * C, 2 * C)), const((1, 2 * C)),                # fused linear w / b
        ],
        out_specs=pl.BlockSpec((block_n, C), lambda i: (i, 0)),
        compiler_params=pltpu.CompilerParams(dimension_semantics=("parallel",)),
    )(h, x32, w1, w2, wcat, bcat)
    return out[:N]


def pathgcn_reference(x, node_image, params):
    """Pure-JAX f32 reference mirroring the torch forward (first_layer=0, eval mode)."""
    h = x[node_image].astype(jnp.float32)                            # [N, Wl, Wl, C]
    Wl = h.shape[1]
    h1_pre = jnp.sum(h * params["w_conv"][None, None], axis=(1, 2)) / Wl + params["b_conv"][0]
    h2_pre = jnp.sum(h * params["w_vert"][None, :, None, :], axis=(1, 2)) / Wl + params["b_vert"][0]
    h1 = jax.nn.relu(h1_pre @ params["w_lin"] + params["b_lin"][0])
    h2 = jax.nn.relu(h2_pre @ params["w_linv"] + params["b_linv"][0])
    return h1 + h2 + x


def init_params(key, in_dim, walk_len):
    ks = jax.random.split(key, 8)
    scale = 0.1
    return {
        # depthwise conv weights, torch shapes [C,1,1,Wl] / [C,1,Wl,1] stored as [Wl, C]
        "w_conv": scale * jax.random.normal(ks[0], (walk_len, in_dim), jnp.float32),
        "b_conv": scale * jax.random.normal(ks[1], (1, in_dim), jnp.float32),
        "w_vert": scale * jax.random.normal(ks[2], (walk_len, in_dim), jnp.float32),
        "b_vert": scale * jax.random.normal(ks[3], (1, in_dim), jnp.float32),
        # nn.Linear weights stored pre-transposed as [in, out] (torch is [out, in], y = x W^T + b)
        "w_lin": scale * jax.random.normal(ks[4], (in_dim, in_dim), jnp.float32),
        "b_lin": scale * jax.random.normal(ks[5], (1, in_dim), jnp.float32),
        "w_linv": scale * jax.random.normal(ks[6], (in_dim, in_dim), jnp.float32),
        "b_linv": scale * jax.random.normal(ks[7], (1, in_dim), jnp.float32),
        # TODO(synk): first_layer=1 branch (strcut_conv 1x1 + position_embedding) not exercised
        # since the module default is first_layer=0 (node_struct contributes 0.0).
    }


if __name__ == "__main__":
    num_nodes = 600     # N (non-multiple of block to exercise ragged-tail padding)
    in_dim = 32         # C
    walk_len = 4        # Wl (node_image is [N, walk_len, walk_len])

    key = jax.random.PRNGKey(0)
    kx, ki, kp = jax.random.split(key, 3)

    x = jax.random.normal(kx, (num_nodes, in_dim), jnp.float32)
    node_image = jax.random.randint(ki, (num_nodes, walk_len, walk_len), 0, num_nodes,
                                    dtype=jnp.int32)
    params = init_params(kp, in_dim, walk_len)

    out = pathgcn_forward(x, node_image, params)
    out = jax.block_until_ready(out)

    ref = pathgcn_reference(x, node_image, params)
    assert out.shape == (num_nodes, in_dim)
    # Tolerance accounts for the bf16 cast of the gathered stream (accumulation is f32).
    assert jnp.allclose(out, ref, atol=2e-2, rtol=2e-2), "Pallas kernel mismatch vs reference"

    print("KERNEL_OK")
</pallas_src>

<mosaic_0001>
module attributes {stable_mosaic.version = 11 : i64} {
  func.func @pathgcn_kernel(%arg0: i32, %arg1: memref<256x16x32xbf16, #tpu.memory_space<vmem>>, %arg2: memref<256x32xf32, #tpu.memory_space<vmem>>, %arg3: memref<16x32xf32, #tpu.memory_space<vmem>>, %arg4: memref<16x32xf32, #tpu.memory_space<vmem>>, %arg5: memref<64x64xf32, #tpu.memory_space<vmem>>, %arg6: memref<1x64xf32, #tpu.memory_space<vmem>>, %arg7: memref<256x32xf32, #tpu.memory_space<vmem>>) attributes {dimension_semantics = [#tpu.dimension_semantics<parallel>], iteration_bounds = array<i64: 3>, scalar_prefetch = 0 : i64, scratch_operands = 0 : i64, tpu.core_type = #tpu.core_type<tc>, window_params = [{transform_indices = @transform_0, window_bounds = array<i64: 256, 16, 32>}, {transform_indices = @transform_1, window_bounds = array<i64: 256, 32>}, {pipeline_mode = #tpu.pipeline_mode<synchronous>, transform_indices = @transform_2, window_bounds = array<i64: 16, 32>}, {pipeline_mode = #tpu.pipeline_mode<synchronous>, transform_indices = @transform_3, window_bounds = array<i64: 16, 32>}, {pipeline_mode = #tpu.pipeline_mode<synchronous>, transform_indices = @transform_4, window_bounds = array<i64: 64, 64>}, {pipeline_mode = #tpu.pipeline_mode<synchronous>, transform_indices = @transform_5, window_bounds = array<i64: 1, 64>}, {transform_indices = @transform_6, window_bounds = array<i64: 256, 32>}]} {
    %c0 = arith.constant 0 : index
    %c0_0 = arith.constant 0 : index
    %c0_1 = arith.constant 0 : index
    %0 = vector.load %arg1[%c0, %c0_0, %c0_1] : memref<256x16x32xbf16, #tpu.memory_space<vmem>>, vector<256x16x32xbf16>
    %1 = arith.extf %0 : vector<256x16x32xbf16> to vector<256x16x32xf32>
    %c0_2 = arith.constant 0 : index
    %c0_3 = arith.constant 0 : index
    %2 = vector.load %arg3[%c0_2, %c0_3] : memref<16x32xf32, #tpu.memory_space<vmem>>, vector<16x32xf32>
    %3 = vector.shape_cast %2 : vector<16x32xf32> to vector<1x16x32xf32>
    %4 = vector.broadcast %3 : vector<1x16x32xf32> to vector<256x16x32xf32>
    %5 = arith.mulf %1, %4 : vector<256x16x32xf32>
    %cst = arith.constant dense<0.000000e+00> : vector<256x32xf32>
    %6 = vector.multi_reduction <add>, %5, %cst [1] : vector<256x16x32xf32> to vector<256x32xf32>
    %c0_4 = arith.constant 0 : index
    %c0_5 = arith.constant 0 : index
    %7 = vector.load %arg4[%c0_4, %c0_5] : memref<16x32xf32, #tpu.memory_space<vmem>>, vector<16x32xf32>
    %8 = vector.shape_cast %7 : vector<16x32xf32> to vector<1x16x32xf32>
    %9 = vector.broadcast %8 : vector<1x16x32xf32> to vector<256x16x32xf32>
    %10 = arith.mulf %1, %9 : vector<256x16x32xf32>
    %cst_6 = arith.constant dense<0.000000e+00> : vector<256x32xf32>
    %11 = vector.multi_reduction <add>, %10, %cst_6 [1] : vector<256x16x32xf32> to vector<256x32xf32>
    %12 = tpu.concatenate %6, %11 in 1 : vector<256x32xf32>, vector<256x32xf32> -> vector<256x64xf32>
    %c0_7 = arith.constant 0 : index
    %c0_8 = arith.constant 0 : index
    %13 = vector.load %arg5[%c0_7, %c0_8] : memref<64x64xf32, #tpu.memory_space<vmem>>, vector<64x64xf32>
    %cst_9 = arith.constant dense<0.000000e+00> : vector<256x64xf32>
    %14 = tpu.matmul %12, %13, %cst_9 {dimension_numbers = #tpu.dot_dimension_numbers<[1], [0], [0], [1], [0, 0, 1, 1], [], []>} : vector<256x64xf32>, vector<64x64xf32>, vector<256x64xf32> -> vector<256x64xf32>
    %c0_10 = arith.constant 0 : index
    %c0_11 = arith.constant 0 : index
    %15 = vector.load %arg6[%c0_10, %c0_11] : memref<1x64xf32, #tpu.memory_space<vmem>>, vector<1x64xf32>
    %16 = vector.broadcast %15 : vector<1x64xf32> to vector<256x64xf32>
    %17 = arith.addf %14, %16 : vector<256x64xf32>
    %cst_12 = arith.constant 0.000000e+00 : f32
    %18 = vector.broadcast %cst_12 : f32 to vector<256x64xf32>
    %19 = arith.maximumf %17, %18 : vector<256x64xf32>
    %20 = vector.extract_strided_slice %19 {offsets = [0, 0], sizes = [256, 32], strides = [1, 1]} : vector<256x64xf32> to vector<256x32xf32>
    %21 = vector.extract_strided_slice %19 {offsets = [0, 32], sizes = [256, 32], strides = [1, 1]} : vector<256x64xf32> to vector<256x32xf32>
    %22 = arith.addf %20, %21 : vector<256x32xf32>
    %c0_13 = arith.constant 0 : index
    %c0_14 = arith.constant 0 : index
    %23 = vector.load %arg2[%c0_13, %c0_14] : memref<256x32xf32, #tpu.memory_space<vmem>>, vector<256x32xf32>
    %24 = arith.addf %22, %23 : vector<256x32xf32>
    %c0_15 = arith.constant 0 : index
    %c0_16 = arith.constant 0 : index
    %25 = vector.load %arg7[%c0_15, %c0_16] : memref<256x32xf32, #tpu.memory_space<vmem>>, vector<256x32xf32>
    tpu.vector_store %arg7[%c0_15, %c0_16], %24 {strides = array<i32>} : memref<256x32xf32, #tpu.memory_space<vmem>>, vector<256x32xf32>,
    return
  }
  func.func @transform_0(%arg0: i32) -> (i32, i32, i32) {
    %c0_i32 = arith.constant 0 : i32
    %c0_i32_0 = arith.constant 0 : i32
    %c0_i32_1 = arith.constant 0 : i32
    return %arg0, %c0_i32, %c0_i32_0 : i32, i32, i32
  }
  func.func @transform_1(%arg0: i32) -> (i32, i32) {
    %c0_i32 = arith.constant 0 : i32
    %c0_i32_0 = arith.constant 0 : i32
    return %arg0, %c0_i32 : i32, i32
  }
  func.func @transform_2(%arg0: i32) -> (i32, i32) {
    %c0_i32 = arith.constant 0 : i32
    %c0_i32_0 = arith.constant 0 : i32
    %c0_i32_1 = arith.constant 0 : i32
    return %c0_i32, %c0_i32_0 : i32, i32
  }
  func.func @transform_3(%arg0: i32) -> (i32, i32) {
    %c0_i32 = arith.constant 0 : i32
    %c0_i32_0 = arith.constant 0 : i32
    %c0_i32_1 = arith.constant 0 : i32
    return %c0_i32, %c0_i32_0 : i32, i32
  }
  func.func @transform_4(%arg0: i32) -> (i32, i32) {
    %c0_i32 = arith.constant 0 : i32
    %c0_i32_0 = arith.constant 0 : i32
    %c0_i32_1 = arith.constant 0 : i32
    return %c0_i32, %c0_i32_0 : i32, i32
  }
  func.func @transform_5(%arg0: i32) -> (i32, i32) {
    %c0_i32 = arith.constant 0 : i32
    %c0_i32_0 = arith.constant 0 : i32
    %c0_i32_1 = arith.constant 0 : i32
    return %c0_i32, %c0_i32_0 : i32, i32
  }
  func.func @transform_6(%arg0: i32) -> (i32, i32) {
    %c0_i32 = arith.constant 0 : i32
    %c0_i32_0 = arith.constant 0 : i32
    return %arg0, %c0_i32 : i32, i32
  }
}

</mosaic_0001>

<llo_original>
// kernel: tpu_custom_call.1
$region0: #{tpu_custom_call.1}
  #allocation0 [shape = 'u32[]', space=smem, size = 0x4, offset = 0x4, fixed_abs, tag = 'smem constant byte address 0x4 - core index']
  #allocation1 [shape = 'u32[144,128]{1,0:T(1,128)}', space=vmem, size = 0x12000, scoped, tag = 'internal scratch']
  %s0 = inlined_call_operand.vmem [shape: bf16[768,16,32], index: 0, kind: input, shape index: {}]
  %s1 = inlined_call_operand.vmem [shape: f32[768,32], index: 1, kind: input, shape index: {}]
  %s2 = inlined_call_operand.vmem [shape: f32[16,32], index: 2, kind: input, shape index: {}]
  %s3 = inlined_call_operand.vmem [shape: f32[16,32], index: 3, kind: input, shape index: {}]
  %s4 = inlined_call_operand.vmem [shape: f32[64,64], index: 4, kind: input, shape index: {}]
  %s5 = inlined_call_operand.vmem [shape: f32[1,64], index: 5, kind: input, shape index: {}]
  %s6 = inlined_call_operand.vmem [shape: f32[768,32], index: 6, kind: output, shape index: {}]
  %s7 = sld [smem:[#allocation0]]
  $region57: #{tpu_custom_call.1} parent=0
    _
  %s9 = ssub.s32 1, %s7
  %s10 = scalar_select 0, %s9, %s7
  loop: start=0, step=1, limit=5
  $region2: #{tpu_custom_call.1} parent=0 // loop_pre_header
    _
  $region3: #{tpu_custom_call.1} parent=0 // loop_header
    %s12 = sphi 0, %s16
    %p13 = scmp.ge.s32.totalorder %s12, 5
    %s22 = sphi 0, %s24
    %s25 = sphi 0, %s22
    %s26 = sphi 0, %s25
    %s42 = sphi 0, %s26
    %s48 = sphi 0, %s50
    %s51 = sphi 0, %s48
    %s52 = sphi 0, %s51
    %s68 = sphi 0, %s52
    %s72 = sphi 0, %s72
    %s74 = sphi 0, %s72
    %s75 = sphi 0, %s74
    %s89 = sphi 0, %s75
    %s93 = sphi 0, %s93
    %s95 = sphi 0, %s93
    %s96 = sphi 0, %s95
    %s110 = sphi 0, %s96
    %s114 = sphi 0, %s114
    %s116 = sphi 0, %s114
    %s117 = sphi 0, %s116
    %s131 = sphi 0, %s117
    %s135 = sphi 0, %s135
    %s137 = sphi 0, %s135
    %s138 = sphi 0, %s137
    %s152 = sphi 0, %s138
    %s158 = sphi 0, %s160
    %s161 = sphi 0, %s158
    %s162 = sphi 0, %s161
    %s178 = sphi 0, %s162
  $region4: #{tpu_custom_call.1} parent=0 // loop_header_branch
    %15 = sbr.rel (%p13) target = $region8
  $region5: #{tpu_custom_call.1} parent=0 // loop_body
    %s17 = ssub.s32 %s12, 1
    %s18 = ssub.s32 %s12, 2
    %s19 = sadd.s32 %s12, 1
    %s20 = ssub.s32 %s12, %s19
    %p21 = scmp.eq.s32.totalorder %s20, 0
    %s23 = sadd.s32 %s22, 1
    %s24 = scalar_select %p21, %s22, %s23
    %p27 = pneg %p21
    %p28 = scmp.eq.s32.totalorder %s12, 2
    %p29 = por %p27, %p28
    %p30 = scmp.ne.s32.totalorder %s22, %s25
    %p31 = scmp.eq.s32.totalorder %s12, 0
    %p32 = por %p30, %p31
    %p33 = scmp.ne.s32.totalorder %s22, %s25
    %p34 = scmp.eq.s32.totalorder %s17, 2
    %p35 = por %p33, %p34
    %p36 = scmp.ne.s32.totalorder %s25, %s26
    %p37 = scmp.eq.s32.totalorder %s17, 0
    %p38 = por %p36, %p37
    %p39 = scmp.ne.s32.totalorder %s25, %s26
    %p40 = scmp.eq.s32.totalorder %s18, 2
    %p41 = por %p39, %p40
    %p43 = scmp.ne.s32.totalorder %s26, %s42
    %p44 = scmp.eq.s32.totalorder %s18, 0
    %p45 = por %p43, %p44
    %s46 = ssub.s32 %s12, %s19
    %p47 = scmp.eq.s32.totalorder %s46, 0
    %s49 = sadd.s32 %s48, 1
    %s50 = scalar_select %p47, %s48, %s49
    %p53 = pneg %p47
    %p54 = scmp.eq.s32.totalorder %s12, 2
    %p55 = por %p53, %p54
    %p56 = scmp.ne.s32.totalorder %s48, %s51
    %p57 = scmp.eq.s32.totalorder %s12, 0
    %p58 = por %p56, %p57
    %p59 = scmp.ne.s32.totalorder %s48, %s51
    %p60 = scmp.eq.s32.totalorder %s17, 2
    %p61 = por %p59, %p60
    %p62 = scmp.ne.s32.totalorder %s51, %s52
    %p63 = scmp.eq.s32.totalorder %s17, 0
    %p64 = por %p62, %p63
    %p65 = scmp.ne.s32.totalorder %s51, %s52
    %p66 = scmp.eq.s32.totalorder %s18, 2
    %p67 = por %p65, %p66
    %p69 = scmp.ne.s32.totalorder %s52, %s68
    %p70 = scmp.eq.s32.totalorder %s18, 0
    %p71 = por %p69, %p70
    %s73 = sadd.s32 %s72, 1
    %p76 = scmp.eq.s32.totalorder %s12, 2
    %p77 = scmp.ne.s32.totalorder %s72, %s74
    %p78 = scmp.eq.s32.totalorder %s12, 0
    %p79 = por %p77, %p78
    %p80 = scmp.ne.s32.totalorder %s72, %s74
    %p81 = scmp.eq.s32.totalorder %s17, 2
    %p82 = por %p80, %p81
    %p83 = scmp.ne.s32.totalorder %s74, %s75
    %p84 = scmp.eq.s32.totalorder %s17, 0
    %p85 = por %p83, %p84
    %p86 = scmp.ne.s32.totalorder %s74, %s75
    %p87 = scmp.eq.s32.totalorder %s18, 2
    %p88 = por %p86, %p87
    %p90 = scmp.ne.s32.totalorder %s75, %s89
    %p91 = scmp.eq.s32.totalorder %s18, 0
    %p92 = por %p90, %p91
    %s94 = sadd.s32 %s93, 1
    %p97 = scmp.eq.s32.totalorder %s12, 2
    %p98 = scmp.ne.s32.totalorder %s93, %s95
    %p99 = scmp.eq.s32.totalorder %s12, 0
    %p100 = por %p98, %p99
    %p101 = scmp.ne.s32.totalorder %s93, %s95
    %p102 = scmp.eq.s32.totalorder %s17, 2
    %p103 = por %p101, %p102
    %p104 = scmp.ne.s32.totalorder %s95, %s96
    %p105 = scmp.eq.s32.totalorder %s17, 0
    %p106 = por %p104, %p105
    %p107 = scmp.ne.s32.totalorder %s95, %s96
    %p108 = scmp.eq.s32.totalorder %s18, 2
    %p109 = por %p107, %p108
    %p111 = scmp.ne.s32.totalorder %s96, %s110
    %p112 = scmp.eq.s32.totalorder %s18, 0
    %p113 = por %p111, %p112
    %s115 = sadd.s32 %s114, 1
    %p118 = scmp.eq.s32.totalorder %s12, 2
    %p119 = scmp.ne.s32.totalorder %s114, %s116
    %p120 = scmp.eq.s32.totalorder %s12, 0
    %p121 = por %p119, %p120
    %p122 = scmp.ne.s32.totalorder %s114, %s116
    %p123 = scmp.eq.s32.totalorder %s17, 2
    %p124 = por %p122, %p123
    %p125 = scmp.ne.s32.totalorder %s116, %s117
    %p126 = scmp.eq.s32.totalorder %s17, 0
    %p127 = por %p125, %p126
    %p128 = scmp.ne.s32.totalorder %s116, %s117
    %p129 = scmp.eq.s32.totalorder %s18, 2
    %p130 = por %p128, %p129
    %p132 = scmp.ne.s32.totalorder %s117, %s131
    %p133 = scmp.eq.s32.totalorder %s18, 0
    %p134 = por %p132, %p133
    %s136 = sadd.s32 %s135, 1
    %p139 = scmp.eq.s32.totalorder %s12, 2
    %p140 = scmp.ne.s32.totalorder %s135, %s137
    %p141 = scmp.eq.s32.totalorder %s12, 0
    %p142 = por %p140, %p141
    %p143 = scmp.ne.s32.totalorder %s135, %s137
    %p144 = scmp.eq.s32.totalorder %s17, 2
    %p145 = por %p143, %p144
    %p146 = scmp.ne.s32.totalorder %s137, %s138
    %p147 = scmp.eq.s32.totalorder %s17, 0
    %p148 = por %p146, %p147
    %p149 = scmp.ne.s32.totalorder %s137, %s138
    %p150 = scmp.eq.s32.totalorder %s18, 2
    %p151 = por %p149, %p150
    %p153 = scmp.ne.s32.totalorder %s138, %s152
    %p154 = scmp.eq.s32.totalorder %s18, 0
    %p155 = por %p153, %p154
    %s156 = ssub.s32 %s12, %s19
    %p157 = scmp.eq.s32.totalorder %s156, 0
    %s159 = sadd.s32 %s158, 1
    %s160 = scalar_select %p157, %s158, %s159
    %p163 = pneg %p157
    %p164 = scmp.eq.s32.totalorder %s12, 2
    %p165 = por %p163, %p164
    %p166 = scmp.ne.s32.totalorder %s158, %s161
    %p167 = scmp.eq.s32.totalorder %s12, 0
    %p168 = por %p166, %p167
    %p169 = scmp.ne.s32.totalorder %s158, %s161
    %p170 = scmp.eq.s32.totalorder %s17, 2
    %p171 = por %p169, %p170
    %p172 = scmp.ne.s32.totalorder %s161, %s162
    %p173 = scmp.eq.s32.totalorder %s17, 0
    %p174 = por %p172, %p173
    %p175 = scmp.ne.s32.totalorder %s161, %s162
    %p176 = scmp.eq.s32.totalorder %s18, 2
    %p177 = por %p175, %p176
    %p179 = scmp.ne.s32.totalorder %s162, %s178
    %p180 = scmp.eq.s32.totalorder %s18, 0
    %p181 = por %p179, %p180
    %p182 = scmp.le.s32.totalorder 1, %s12
    %p183 = scmp.lt.s32.totalorder %s12, 4
    %p184 = pnand %p182, %p183
    %p185 = pneg %p184
    // Predicated region
    $region9: #{tpu_custom_call.1} parent=5 // pred_check
      _
    $region10: #{tpu_custom_call.1} parent=5 // pred_check_branch
      %187 = sbr.rel (%p184) target = $region12
    $region11: #{tpu_custom_call.1} parent=5 // pred_region
      %s188 = ssub.s32 %s12, 1
      // Predicated region
      $region13: #{tpu_custom_call.1} parent=11 // pred_check
        %p189 = pneg %p85
      $region14: #{tpu_custom_call.1} parent=11 // pred_check_branch
        %191 = sbr.rel (%p189) target = $region16
      $region15: #{tpu_custom_call.1} parent=11 // pred_region
        _
      $region16: #{tpu_custom_call.1} parent=11 // pred_fallthru
        _
      // Predicated region
      $region17: #{tpu_custom_call.1} parent=11 // pred_check
        %p192 = pneg %p106
      $region18: #{tpu_custom_call.1} parent=11 // pred_check_branch
        %194 = sbr.rel (%p192) target = $region20
      $region19: #{tpu_custom_call.1} parent=11 // pred_region
        _
      $region20: #{tpu_custom_call.1} parent=11 // pred_fallthru
        _
      // Predicated region
      $region21: #{tpu_custom_call.1} parent=11 // pred_check
        %p195 = pneg %p127
      $region22: #{tpu_custom_call.1} parent=11 // pred_check_branch
        %197 = sbr.rel (%p195) target = $region24
      $region23: #{tpu_custom_call.1} parent=11 // pred_region
        _
      $region24: #{tpu_custom_call.1} parent=11 // pred_fallthru
        _
      // Predicated region
      $region25: #{tpu_custom_call.1} parent=11 // pred_check
        %p198 = pneg %p148
      $region26: #{tpu_custom_call.1} parent=11 // pred_check_branch
        %200 = sbr.rel (%p198) target = $region28
      $region27: #{tpu_custom_call.1} parent=11 // pred_region
        _
      $region28: #{tpu_custom_call.1} parent=11 // pred_fallthru
        _
    $region12: #{tpu_custom_call.1} parent=5 // pred_fallthru
      _
    %p201 = scmp.lt.s32.totalorder %s12, 3
    // Predicated region
    $region29: #{tpu_custom_call.1} parent=5 // pred_check
      %p202 = pneg %p201
    $region30: #{tpu_custom_call.1} parent=5 // pred_check_branch
      %204 = sbr.rel (%p202) target = $region32
    $region31: #{tpu_custom_call.1} parent=5 // pred_region
      // Predicated region
      $region33: #{tpu_custom_call.1} parent=31 // pred_check
        %p205 = pneg %p32
      $region34: #{tpu_custom_call.1} parent=31 // pred_check_branch
        %207 = sbr.rel (%p205) target = $region36
      $region35: #{tpu_custom_call.1} parent=31 // pred_region
        %s208 = smul.u32 256, %s12
        %p209 = scmp.lt.s32.totalorder %s208, 767
        %s210 = scalar_select %p209, %s208, 767
        %s211 = smul.addr %s210, 2
        %s212 = smul.addr %s211, 4
        %s213 = scalar_lea.vmem %s0, %s212
        %s214 = smul.u32 256, %s12
      $region36: #{tpu_custom_call.1} parent=31 // pred_fallthru
        _
      // Predicated region
      $region37: #{tpu_custom_call.1} parent=31 // pred_check
        %p215 = pneg %p58
      $region38: #{tpu_custom_call.1} parent=31 // pred_check_branch
        %217 = sbr.rel (%p215) target = $region40
      $region39: #{tpu_custom_call.1} parent=31 // pred_region
        %s218 = smul.u32 32, %s12
        %p219 = scmp.lt.s32.totalorder %s218, 95
        %s220 = scalar_select %p219, %s218, 95
        %s221 = smul.addr %s220, 8
        %s222 = scalar_lea.vmem %s1, %s221
        %s223 = smul.u32 32, %s12
      $region40: #{tpu_custom_call.1} parent=31 // pred_fallthru
        _
    $region32: #{tpu_custom_call.1} parent=5 // pred_fallthru
      _
    %p224 = scmp.le.s32.totalorder 1, %s12
    %p225 = scmp.lt.s32.totalorder %s12, 4
    %p226 = pnand %p224, %p225
    %p227 = pneg %p226
    // Predicated region
    $region41: #{tpu_custom_call.1} parent=5 // pred_check
      _
    $region42: #{tpu_custom_call.1} parent=5 // pred_check_branch
      %229 = sbr.rel (%p226) target = $region44
    $region43: #{tpu_custom_call.1} parent=5 // pred_region
      %s230 = ssub.s32 %s12, 1
      %s231 = smul.u32 256, %s17
      %p232 = scmp.lt.s32.totalorder %s231, 767
      %s233 = scalar_select %p232, %s231, 767
      %s234 = smul.addr %s233, 2
      %s235 = smul.addr %s234, 4
      %s236 = scalar_lea.vmem %s0, %s235
      %p237 = pneg %p38
      %p238 = pneg %p35
      %s239 = smul.u32 32, %s17
      %p240 = scmp.lt.s32.totalorder %s239, 95
      %s241 = scalar_select %p240, %s239, 95
      %s242 = smul.addr %s241, 8
      %s243 = scalar_lea.vmem %s1, %s242
      %p244 = pneg %p64
      %p245 = pneg %p61
      %p246 = pneg %p85
      %p247 = pneg %p82
      %p248 = pneg %p106
      %p249 = pneg %p103
      %p250 = pneg %p127
      %p251 = pneg %p124
      %p252 = pneg %p148
      %p253 = pneg %p145
      %p254 = pneg %p174
      %p255 = pneg %p171
      %s256 = smul.u32 32, %s17
      %p257 = scmp.lt.s32.totalorder %s256, 95
      %s258 = scalar_select %p257, %s256, 95
      %s259 = smul.addr %s258, 8
      %s260 = scalar_lea.vmem %s6, %s259
      %s261 = smul.u32 256, %s17
      %p262 = scmp.lt.s32.totalorder %s261, 767
      %s263 = scalar_select %p262, %s261, 767
      %s264 = smul.addr %s263, 2
      %s265 = smul.addr %s264, 4
      %s266 = scalar_lea.vmem %s0, %s265
      %s267 = smul.u32 256, %s17
      %s268 = smul.u32 32, %s17
      %p269 = scmp.lt.s32.totalorder %s268, 95
      %s270 = scalar_select %p269, %s268, 95
      %s271 = smul.addr %s270, 8
      %s272 = scalar_lea.vmem %s1, %s271
      %s273 = smul.u32 32, %s17
      %s274 = smul.u32 32, %s17
      %p275 = scmp.lt.s32.totalorder %s274, 95
      %s276 = scalar_select %p275, %s274, 95
      %s277 = smul.addr %s276, 8
      %s278 = scalar_lea.vmem %s6, %s277
      %s279 = smul.u32 32, %s17
      %v280 = vld [vmem:[%s266] sm:$0xf]
      %v281 = vld [vmem:[%s266 + $0x4] sm:$0xf]
      %v282 = vld [vmem:[%s266 + $0x8] sm:$0xf]
      %v283 = vld [vmem:[%s266 + $0xc] sm:$0xf]
      %v284 = vld [vmem:[%s266 + $0x10] sm:$0xf]
      %v285 = vld [vmem:[%s266 + $0x14] sm:$0xf]
      %v286 = vld [vmem:[%s266 + $0x18] sm:$0xf]
      %v287 = vld [vmem:[%s266 + $0x1c] sm:$0xf]
      %v288 = vld [vmem:[%s266 + $0x20] sm:$0xf]
      %v289 = vld [vmem:[%s266 + $0x24] sm:$0xf]
      %v290 = vld [vmem:[%s266 + $0x28] sm:$0xf]
      %v291 = vld [vmem:[%s266 + $0x2c] sm:$0xf]
      %v292 = vld [vmem:[%s266 + $0x30] sm:$0xf]
      %v293 = vld [vmem:[%s266 + $0x34] sm:$0xf]
      %v294 = vld [vmem:[%s266 + $0x38] sm:$0xf]
      %v295 = vld [vmem:[%s266 + $0x3c] sm:$0xf]
      %v296 = vld [vmem:[%s266 + $0x40] sm:$0xf]
      %v297 = vld [vmem:[%s266 + $0x44] sm:$0xf]
      %v298 = vld [vmem:[%s266 + $0x48] sm:$0xf]
      %v299 = vld [vmem:[%s266 + $0x4c] sm:$0xf]
      %v300 = vld [vmem:[%s266 + $0x50] sm:$0xf]
      %v301 = vld [vmem:[%s266 + $0x54] sm:$0xf]
      %v302 = vld [vmem:[%s266 + $0x58] sm:$0xf]
      %v303 = vld [vmem:[%s266 + $0x5c] sm:$0xf]
      %v304 = vld [vmem:[%s266 + $0x60] sm:$0xf]
      %v305 = vld [vmem:[%s266 + $0x64] sm:$0xf]
      %v306 = vld [vmem:[%s266 + $0x68] sm:$0xf]
      %v307 = vld [vmem:[%s266 + $0x6c] sm:$0xf]
      %v308 = vld [vmem:[%s266 + $0x70] sm:$0xf]
      %v309 = vld [vmem:[%s266 + $0x74] sm:$0xf]
      %v310 = vld [vmem:[%s266 + $0x78] sm:$0xf]
      %v311 = vld [vmem:[%s266 + $0x7c] sm:$0xf]
      %v312 = vld [vmem:[%s266 + $0x80] sm:$0xf]
      %v313 = vld [vmem:[%s266 + $0x84] sm:$0xf]
      %v314 = vld [vmem:[%s266 + $0x88] sm:$0xf]
      %v315 = vld [vmem:[%s266 + $0x8c] sm:$0xf]
      %v316 = vld [vmem:[%s266 + $0x90] sm:$0xf]
      %v317 = vld [vmem:[%s266 + $0x94] sm:$0xf]
      %v318 = vld [vmem:[%s266 + $0x98] sm:$0xf]
      %v319 = vld [vmem:[%s266 + $0x9c] sm:$0xf]
      %v320 = vld [vmem:[%s266 + $0xa0] sm:$0xf]
      %v321 = vld [vmem:[%s266 + $0xa4] sm:$0xf]
      %v322 = vld [vmem:[%s266 + $0xa8] sm:$0xf]
      %v323 = vld [vmem:[%s266 + $0xac] sm:$0xf]
      %v324 = vld [vmem:[%s266 + $0xb0] sm:$0xf]
      %v325 = vld [vmem:[%s266 + $0xb4] sm:$0xf]
      %v326 = vld [vmem:[%s266 + $0xb8] sm:$0xf]
      %v327 = vld [vmem:[%s266 + $0xbc] sm:$0xf]
      %v328 = vld [vmem:[%s266 + $0xc0] sm:$0xf]
      %v329 = vld [vmem:[%s266 + $0xc4] sm:$0xf]
      %v330 = vld [vmem:[%s266 + $0xc8] sm:$0xf]
      %v331 = vld [vmem:[%s266 + $0xcc] sm:$0xf]
      %v332 = vld [vmem:[%s266 + $0xd0] sm:$0xf]
      %v333 = vld [vmem:[%s266 + $0xd4] sm:$0xf]
      %v334 = vld [vmem:[%s266 + $0xd8] sm:$0xf]
      %v335 = vld [vmem:[%s266 + $0xdc] sm:$0xf]
      %v336 = vld [vmem:[%s266 + $0xe0] sm:$0xf]
      %v337 = vld [vmem:[%s266 + $0xe4] sm:$0xf]
      %v338 = vld [vmem:[%s266 + $0xe8] sm:$0xf]
      %v339 = vld [vmem:[%s266 + $0xec] sm:$0xf]
      %v340 = vld [vmem:[%s266 + $0xf0] sm:$0xf]
      %v341 = vld [vmem:[%s266 + $0xf4] sm:$0xf]
      %v342 = vld [vmem:[%s266 + $0xf8] sm:$0xf]
      %v343 = vld [vmem:[%s266 + $0xfc] sm:$0xf]
      %v344 = vld [vmem:[%s266 + $0x100] sm:$0xf]
      %v345 = vld [vmem:[%s266 + $0x104] sm:$0xf]
      %v346 = vld [vmem:[%s266 + $0x108] sm:$0xf]
      %v347 = vld [vmem:[%s266 + $0x10c] sm:$0xf]
      %v348 = vld [vmem:[%s266 + $0x110] sm:$0xf]
      %v349 = vld [vmem:[%s266 + $0x114] sm:$0xf]
      %v350 = vld [vmem:[%s266 + $0x118] sm:$0xf]
      %v351 = vld [vmem:[%s266 + $0x11c] sm:$0xf]
      %v352 = vld [vmem:[%s266 + $0x120] sm:$0xf]
      %v353 = vld [vmem:[%s266 + $0x124] sm:$0xf]
      %v354 = vld [vmem:[%s266 + $0x128] sm:$0xf]
      %v355 = vld [vmem:[%s266 + $0x12c] sm:$0xf]
      %v356 = vld [vmem:[%s266 + $0x130] sm:$0xf]
      %v357 = vld [vmem:[%s266 + $0x134] sm:$0xf]
      %v358 = vld [vmem:[%s266 + $0x138] sm:$0xf]
      %v359 = vld [vmem:[%s266 + $0x13c] sm:$0xf]
      %v360 = vld [vmem:[%s266 + $0x140] sm:$0xf]
      %v361 = vld [vmem:[%s266 + $0x144] sm:$0xf]
      %v362 = vld [vmem:[%s266 + $0x148] sm:$0xf]
      %v363 = vld [vmem:[%s266 + $0x14c] sm:$0xf]
      %v364 = vld [vmem:[%s266 + $0x150] sm:$0xf]
      %v365 = vld [vmem:[%s266 + $0x154] sm:$0xf]
      %v366 = vld [vmem:[%s266 + $0x158] sm:$0xf]
      %v367 = vld [vmem:[%s266 + $0x15c] sm:$0xf]
      %v368 = vld [vmem:[%s266 + $0x160] sm:$0xf]
      %v369 = vld [vmem:[%s266 + $0x164] sm:$0xf]
      %v370 = vld [vmem:[%s266 + $0x168] sm:$0xf]
      %v371 = vld [vmem:[%s266 + $0x16c] sm:$0xf]
      %v372 = vld [vmem:[%s266 + $0x170] sm:$0xf]
      %v373 = vld [vmem:[%s266 + $0x174] sm:$0xf]
      %v374 = vld [vmem:[%s266 + $0x178] sm:$0xf]
      %v375 = vld [vmem:[%s266 + $0x17c] sm:$0xf]
      %v376 = vld [vmem:[%s266 + $0x180] sm:$0xf]
      %v377 = vld [vmem:[%s266 + $0x184] sm:$0xf]
      %v378 = vld [vmem:[%s266 + $0x188] sm:$0xf]
      %v379 = vld [vmem:[%s266 + $0x18c] sm:$0xf]
      %v380 = vld [vmem:[%s266 + $0x190] sm:$0xf]
      %v381 = vld [vmem:[%s266 + $0x194] sm:$0xf]
      %v382 = vld [vmem:[%s266 + $0x198] sm:$0xf]
      %v383 = vld [vmem:[%s266 + $0x19c] sm:$0xf]
      %v384 = vld [vmem:[%s266 + $0x1a0] sm:$0xf]
      %v385 = vld [vmem:[%s266 + $0x1a4] sm:$0xf]
      %v386 = vld [vmem:[%s266 + $0x1a8] sm:$0xf]
      %v387 = vld [vmem:[%s266 + $0x1ac] sm:$0xf]
      %v388 = vld [vmem:[%s266 + $0x1b0] sm:$0xf]
      %v389 = vld [vmem:[%s266 + $0x1b4] sm:$0xf]
      %v390 = vld [vmem:[%s266 + $0x1b8] sm:$0xf]
      %v391 = vld [vmem:[%s266 + $0x1bc] sm:$0xf]
      %v392 = vld [vmem:[%s266 + $0x1c0] sm:$0xf]
      %v393 = vld [vmem:[%s266 + $0x1c4] sm:$0xf]
      %v394 = vld [vmem:[%s266 + $0x1c8] sm:$0xf]
      %v395 = vld [vmem:[%s266 + $0x1cc] sm:$0xf]
      %v396 = vld [vmem:[%s266 + $0x1d0] sm:$0xf]
      %v397 = vld [vmem:[%s266 + $0x1d4] sm:$0xf]
      %v398 = vld [vmem:[%s266 + $0x1d8] sm:$0xf]
      %v399 = vld [vmem:[%s266 + $0x1dc] sm:$0xf]
      %v400 = vld [vmem:[%s266 + $0x1e0] sm:$0xf]
      %v401 = vld [vmem:[%s266 + $0x1e4] sm:$0xf]
      %v402 = vld [vmem:[%s266 + $0x1e8] sm:$0xf]
      %v403 = vld [vmem:[%s266 + $0x1ec] sm:$0xf]
      %v404 = vld [vmem:[%s266 + $0x1f0] sm:$0xf]
      %v405 = vld [vmem:[%s266 + $0x1f4] sm:$0xf]
      %v406 = vld [vmem:[%s266 + $0x1f8] sm:$0xf]
      %v407 = vld [vmem:[%s266 + $0x1fc] sm:$0xf]
      %v408 = vld [vmem:[%s266 + $0x200] sm:$0xf]
      %v409 = vld [vmem:[%s266 + $0x204] sm:$0xf]
      %v410 = vld [vmem:[%s266 + $0x208] sm:$0xf]
      %v411 = vld [vmem:[%s266 + $0x20c] sm:$0xf]
      %v412 = vld [vmem:[%s266 + $0x210] sm:$0xf]
      %v413 = vld [vmem:[%s266 + $0x214] sm:$0xf]
      %v414 = vld [vmem:[%s266 + $0x218] sm:$0xf]
      %v415 = vld [vmem:[%s266 + $0x21c] sm:$0xf]
      %v416 = vld [vmem:[%s266 + $0x220] sm:$0xf]
      %v417 = vld [vmem:[%s266 + $0x224] sm:$0xf]
      %v418 = vld [vmem:[%s266 + $0x228] sm:$0xf]
      %v419 = vld [vmem:[%s266 + $0x22c] sm:$0xf]
      %v420 = vld [vmem:[%s266 + $0x230] sm:$0xf]
      %v421 = vld [vmem:[%s266 + $0x234] sm:$0xf]
      %v422 = vld [vmem:[%s266 + $0x238] sm:$0xf]
      %v423 = vld [vmem:[%s266 + $0x23c] sm:$0xf]
      %v424 = vld [vmem:[%s266 + $0x240] sm:$0xf]
      %v425 = vld [vmem:[%s266 + $0x244] sm:$0xf]
      %v426 = vld [vmem:[%s266 + $0x248] sm:$0xf]
      %v427 = vld [vmem:[%s266 + $0x24c] sm:$0xf]
      %v428 = vld [vmem:[%s266 + $0x250] sm:$0xf]
      %v429 = vld [vmem:[%s266 + $0x254] sm:$0xf]
      %v430 = vld [vmem:[%s266 + $0x258] sm:$0xf]
      %v431 = vld [vmem:[%s266 + $0x25c] sm:$0xf]
      %v432 = vld [vmem:[%s266 + $0x260] sm:$0xf]
      %v433 = vld [vmem:[%s266 + $0x264] sm:$0xf]
      %v434 = vld [vmem:[%s266 + $0x268] sm:$0xf]
      %v435 = vld [vmem:[%s266 + $0x26c] sm:$0xf]
      %v436 = vld [vmem:[%s266 + $0x270] sm:$0xf]
      %v437 = vld [vmem:[%s266 + $0x274] sm:$0xf]
      %v438 = vld [vmem:[%s266 + $0x278] sm:$0xf]
      %v439 = vld [vmem:[%s266 + $0x27c] sm:$0xf]
      %v440 = vld [vmem:[%s266 + $0x280] sm:$0xf]
      %v441 = vld [vmem:[%s266 + $0x284] sm:$0xf]
      %v442 = vld [vmem:[%s266 + $0x288] sm:$0xf]
      %v443 = vld [vmem:[%s266 + $0x28c] sm:$0xf]
      %v444 = vld [vmem:[%s266 + $0x290] sm:$0xf]
      %v445 = vld [vmem:[%s266 + $0x294] sm:$0xf]
      %v446 = vld [vmem:[%s266 + $0x298] sm:$0xf]
      %v447 = vld [vmem:[%s266 + $0x29c] sm:$0xf]
      %v448 = vld [vmem:[%s266 + $0x2a0] sm:$0xf]
      %v449 = vld [vmem:[%s266 + $0x2a4] sm:$0xf]
      %v450 = vld [vmem:[%s266 + $0x2a8] sm:$0xf]
      %v451 = vld [vmem:[%s266 + $0x2ac] sm:$0xf]
      %v452 = vld [vmem:[%s266 + $0x2b0] sm:$0xf]
      %v453 = vld [vmem:[%s266 + $0x2b4] sm:$0xf]
      %v454 = vld [vmem:[%s266 + $0x2b8] sm:$0xf]
      %v455 = vld [vmem:[%s266 + $0x2bc] sm:$0xf]
      %v456 = vld [vmem:[%s266 + $0x2c0] sm:$0xf]
      %v457 = vld [vmem:[%s266 + $0x2c4] sm:$0xf]
      %v458 = vld [vmem:[%s266 + $0x2c8] sm:$0xf]
      %v459 = vld [vmem:[%s266 + $0x2cc] sm:$0xf]
      %v460 = vld [vmem:[%s266 + $0x2d0] sm:$0xf]
      %v461 = vld [vmem:[%s266 + $0x2d4] sm:$0xf]
      %v462 = vld [vmem:[%s266 + $0x2d8] sm:$0xf]
      %v463 = vld [vmem:[%s266 + $0x2dc] sm:$0xf]
      %v464 = vld [vmem:[%s266 + $0x2e0] sm:$0xf]
      %v465 = vld [vmem:[%s266 + $0x2e4] sm:$0xf]
      %v466 = vld [vmem:[%s266 + $0x2e8] sm:$0xf]
      %v467 = vld [vmem:[%s266 + $0x2ec] sm:$0xf]
      %v468 = vld [vmem:[%s266 + $0x2f0] sm:$0xf]
      %v469 = vld [vmem:[%s266 + $0x2f4] sm:$0xf]
      %v470 = vld [vmem:[%s266 + $0x2f8] sm:$0xf]
      %v471 = vld [vmem:[%s266 + $0x2fc] sm:$0xf]
      %v472 = vld [vmem:[%s266 + $0x300] sm:$0xf]
      %v473 = vld [vmem:[%s266 + $0x304] sm:$0xf]
      %v474 = vld [vmem:[%s266 + $0x308] sm:$0xf]
      %v475 = vld [vmem:[%s266 + $0x30c] sm:$0xf]
      %v476 = vld [vmem:[%s266 + $0x310] sm:$0xf]
      %v477 = vld [vmem:[%s266 + $0x314] sm:$0xf]
      %v478 = vld [vmem:[%s266 + $0x318] sm:$0xf]
      %v479 = vld [vmem:[%s266 + $0x31c] sm:$0xf]
      %v480 = vld [vmem:[%s266 + $0x320] sm:$0xf]
      %v481 = vld [vmem:[%s266 + $0x324] sm:$0xf]
      %v482 = vld [vmem:[%s266 + $0x328] sm:$0xf]
      %v483 = vld [vmem:[%s266 + $0x32c] sm:$0xf]
      %v484 = vld [vmem:[%s266 + $0x330] sm:$0xf]
      %v485 = vld [vmem:[%s266 + $0x334] sm:$0xf]
      %v486 = vld [vmem:[%s266 + $0x338] sm:$0xf]
      %v487 = vld [vmem:[%s266 + $0x33c] sm:$0xf]
      %v488 = vld [vmem:[%s266 + $0x340] sm:$0xf]
      %v489 = vld [vmem:[%s266 + $0x344] sm:$0xf]
      %v490 = vld [vmem:[%s266 + $0x348] sm:$0xf]
      %v491 = vld [vmem:[%s266 + $0x34c] sm:$0xf]
      %v492 = vld [vmem:[%s266 + $0x350] sm:$0xf]
      %v493 = vld [vmem:[%s266 + $0x354] sm:$0xf]
      %v494 = vld [vmem:[%s266 + $0x358] sm:$0xf]
      %v495 = vld [vmem:[%s266 + $0x35c] sm:$0xf]
      %v496 = vld [vmem:[%s266 + $0x360] sm:$0xf]
      %v497 = vld [vmem:[%s266 + $0x364] sm:$0xf]
      %v498 = vld [vmem:[%s266 + $0x368] sm:$0xf]
      %v499 = vld [vmem:[%s266 + $0x36c] sm:$0xf]
      %v500 = vld [vmem:[%s266 + $0x370] sm:$0xf]
      %v501 = vld [vmem:[%s266 + $0x374] sm:$0xf]
      %v502 = vld [vmem:[%s266 + $0x378] sm:$0xf]
      %v503 = vld [vmem:[%s266 + $0x37c] sm:$0xf]
      %v504 = vld [vmem:[%s266 + $0x380] sm:$0xf]
      %v505 = vld [vmem:[%s266 + $0x384] sm:$0xf]
      %v506 = vld [vmem:[%s266 + $0x388] sm:$0xf]
      %v507 = vld [vmem:[%s266 + $0x38c] sm:$0xf]
      %v508 = vld [vmem:[%s266 + $0x390] sm:$0xf]
      %v509 = vld [vmem:[%s266 + $0x394] sm:$0xf]
      %v510 = vld [vmem:[%s266 + $0x398] sm:$0xf]
      %v511 = vld [vmem:[%s266 + $0x39c] sm:$0xf]
      %v512 = vld [vmem:[%s266 + $0x3a0] sm:$0xf]
      %v513 = vld [vmem:[%s266 + $0x3a4] sm:$0xf]
      %v514 = vld [vmem:[%s266 + $0x3a8] sm:$0xf]
      %v515 = vld [vmem:[%s266 + $0x3ac] sm:$0xf]
      %v516 = vld [vmem:[%s266 + $0x3b0] sm:$0xf]
      %v517 = vld [vmem:[%s266 + $0x3b4] sm:$0xf]
      %v518 = vld [vmem:[%s266 + $0x3b8] sm:$0xf]
      %v519 = vld [vmem:[%s266 + $0x3bc] sm:$0xf]
      %v520 = vld [vmem:[%s266 + $0x3c0] sm:$0xf]
      %v521 = vld [vmem:[%s266 + $0x3c4] sm:$0xf]
      %v522 = vld [vmem:[%s266 + $0x3c8] sm:$0xf]
      %v523 = vld [vmem:[%s266 + $0x3cc] sm:$0xf]
      %v524 = vld [vmem:[%s266 + $0x3d0] sm:$0xf]
      %v525 = vld [vmem:[%s266 + $0x3d4] sm:$0xf]
      %v526 = vld [vmem:[%s266 + $0x3d8] sm:$0xf]
      %v527 = vld [vmem:[%s266 + $0x3dc] sm:$0xf]
      %v528 = vld [vmem:[%s266 + $0x3e0] sm:$0xf]
      %v529 = vld [vmem:[%s266 + $0x3e4] sm:$0xf]
      %v530 = vld [vmem:[%s266 + $0x3e8] sm:$0xf]
      %v531 = vld [vmem:[%s266 + $0x3ec] sm:$0xf]
      %v532 = vld [vmem:[%s266 + $0x3f0] sm:$0xf]
      %v533 = vld [vmem:[%s266 + $0x3f4] sm:$0xf]
      %v534 = vld [vmem:[%s266 + $0x3f8] sm:$0xf]
      %v535 = vld [vmem:[%s266 + $0x3fc] sm:$0xf]
      %v536 = vld [vmem:[%s266 + $0x400] sm:$0xf]
      %v537 = vld [vmem:[%s266 + $0x404] sm:$0xf]
      %v538 = vld [vmem:[%s266 + $0x408] sm:$0xf]
      %v539 = vld [vmem:[%s266 + $0x40c] sm:$0xf]
      %v540 = vld [vmem:[%s266 + $0x410] sm:$0xf]
      %v541 = vld [vmem:[%s266 + $0x414] sm:$0xf]
      %v542 = vld [vmem:[%s266 + $0x418] sm:$0xf]
      %v543 = vld [vmem:[%s266 + $0x41c] sm:$0xf]
      %v544 = vld [vmem:[%s266 + $0x420] sm:$0xf]
      %v545 = vld [vmem:[%s266 + $0x424] sm:$0xf]
      %v546 = vld [vmem:[%s266 + $0x428] sm:$0xf]
      %v547 = vld [vmem:[%s266 + $0x42c] sm:$0xf]
      %v548 = vld [vmem:[%s266 + $0x430] sm:$0xf]
      %v549 = vld [vmem:[%s266 + $0x434] sm:$0xf]
      %v550 = vld [vmem:[%s266 + $0x438] sm:$0xf]
      %v551 = vld [vmem:[%s266 + $0x43c] sm:$0xf]
      %v552 = vld [vmem:[%s266 + $0x440] sm:$0xf]
      %v553 = vld [vmem:[%s266 + $0x444] sm:$0xf]
      %v554 = vld [vmem:[%s266 + $0x448] sm:$0xf]
      %v555 = vld [vmem:[%s266 + $0x44c] sm:$0xf]
      %v556 = vld [vmem:[%s266 + $0x450] sm:$0xf]
      %v557 = vld [vmem:[%s266 + $0x454] sm:$0xf]
      %v558 = vld [vmem:[%s266 + $0x458] sm:$0xf]
      %v559 = vld [vmem:[%s266 + $0x45c] sm:$0xf]
      %v560 = vld [vmem:[%s266 + $0x460] sm:$0xf]
      %v561 = vld [vmem:[%s266 + $0x464] sm:$0xf]
      %v562 = vld [vmem:[%s266 + $0x468] sm:$0xf]
      %v563 = vld [vmem:[%s266 + $0x46c] sm:$0xf]
      %v564 = vld [vmem:[%s266 + $0x470] sm:$0xf]
      %v565 = vld [vmem:[%s266 + $0x474] sm:$0xf]
      %v566 = vld [vmem:[%s266 + $0x478] sm:$0xf]
      %v567 = vld [vmem:[%s266 + $0x47c] sm:$0xf]
      %v568 = vld [vmem:[%s266 + $0x480] sm:$0xf]
      %v569 = vld [vmem:[%s266 + $0x484] sm:$0xf]
      %v570 = vld [vmem:[%s266 + $0x488] sm:$0xf]
      %v571 = vld [vmem:[%s266 + $0x48c] sm:$0xf]
      %v572 = vld [vmem:[%s266 + $0x490] sm:$0xf]
      %v573 = vld [vmem:[%s266 + $0x494] sm:$0xf]
      %v574 = vld [vmem:[%s266 + $0x498] sm:$0xf]
      %v575 = vld [vmem:[%s266 + $0x49c] sm:$0xf]
      %v576 = vld [vmem:[%s266 + $0x4a0] sm:$0xf]
      %v577 = vld [vmem:[%s266 + $0x4a4] sm:$0xf]
      %v578 = vld [vmem:[%s266 + $0x4a8] sm:$0xf]
      %v579 = vld [vmem:[%s266 + $0x4ac] sm:$0xf]
      %v580 = vld [vmem:[%s266 + $0x4b0] sm:$0xf]
      %v581 = vld [vmem:[%s266 + $0x4b4] sm:$0xf]
      %v582 = vld [vmem:[%s266 + $0x4b8] sm:$0xf]
      %v583 = vld [vmem:[%s266 + $0x4bc] sm:$0xf]
      %v584 = vld [vmem:[%s266 + $0x4c0] sm:$0xf]
      %v585 = vld [vmem:[%s266 + $0x4c4] sm:$0xf]
      %v586 = vld [vmem:[%s266 + $0x4c8] sm:$0xf]
      %v587 = vld [vmem:[%s266 + $0x4cc] sm:$0xf]
      %v588 = vld [vmem:[%s266 + $0x4d0] sm:$0xf]
      %v589 = vld [vmem:[%s266 + $0x4d4] sm:$0xf]
      %v590 = vld [vmem:[%s266 + $0x4d8] sm:$0xf]
      %v591 = vld [vmem:[%s266 + $0x4dc] sm:$0xf]
      %v592 = vld [vmem:[%s266 + $0x4e0] sm:$0xf]
      %v593 = vld [vmem:[%s266 + $0x4e4] sm:$0xf]
      %v594 = vld [vmem:[%s266 + $0x4e8] sm:$0xf]
      %v595 = vld [vmem:[%s266 + $0x4ec] sm:$0xf]
      %v596 = vld [vmem:[%s266 + $0x4f0] sm:$0xf]
      %v597 = vld [vmem:[%s266 + $0x4f4] sm:$0xf]
      %v598 = vld [vmem:[%s266 + $0x4f8] sm:$0xf]
      %v599 = vld [vmem:[%s266 + $0x4fc] sm:$0xf]
      %v600 = vld [vmem:[%s266 + $0x500] sm:$0xf]
      %v601 = vld [vmem:[%s266 + $0x504] sm:$0xf]
      %v602 = vld [vmem:[%s266 + $0x508] sm:$0xf]
      %v603 = vld [vmem:[%s266 + $0x50c] sm:$0xf]
      %v604 = vld [vmem:[%s266 + $0x510] sm:$0xf]
      %v605 = vld [vmem:[%s266 + $0x514] sm:$0xf]
      %v606 = vld [vmem:[%s266 + $0x518] sm:$0xf]
      %v607 = vld [vmem:[%s266 + $0x51c] sm:$0xf]
      %v608 = vld [vmem:[%s266 + $0x520] sm:$0xf]
      %v609 = vld [vmem:[%s266 + $0x524] sm:$0xf]
      %v610 = vld [vmem:[%s266 + $0x528] sm:$0xf]
      %v611 = vld [vmem:[%s266 + $0x52c] sm:$0xf]
      %v612 = vld [vmem:[%s266 + $0x530] sm:$0xf]
      %v613 = vld [vmem:[%s266 + $0x534] sm:$0xf]
      %v614 = vld [vmem:[%s266 + $0x538] sm:$0xf]
      %v615 = vld [vmem:[%s266 + $0x53c] sm:$0xf]
      %v616 = vld [vmem:[%s266 + $0x540] sm:$0xf]
      %v617 = vld [vmem:[%s266 + $0x544] sm:$0xf]
      %v618 = vld [vmem:[%s266 + $0x548] sm:$0xf]
      %v619 = vld [vmem:[%s266 + $0x54c] sm:$0xf]
      %v620 = vld [vmem:[%s266 + $0x550] sm:$0xf]
      %v621 = vld [vmem:[%s266 + $0x554] sm:$0xf]
      %v622 = vld [vmem:[%s266 + $0x558] sm:$0xf]
      %v623 = vld [vmem:[%s266 + $0x55c] sm:$0xf]
      %v624 = vld [vmem:[%s266 + $0x560] sm:$0xf]
      %v625 = vld [vmem:[%s266 + $0x564] sm:$0xf]
      %v626 = vld [vmem:[%s266 + $0x568] sm:$0xf]
      %v627 = vld [vmem:[%s266 + $0x56c] sm:$0xf]
      %v628 = vld [vmem:[%s266 + $0x570] sm:$0xf]
      %v629 = vld [vmem:[%s266 + $0x574] sm:$0xf]
      %v630 = vld [vmem:[%s266 + $0x578] sm:$0xf]
      %v631 = vld [vmem:[%s266 + $0x57c] sm:$0xf]
      %v632 = vld [vmem:[%s266 + $0x580] sm:$0xf]
      %v633 = vld [vmem:[%s266 + $0x584] sm:$0xf]
      %v634 = vld [vmem:[%s266 + $0x588] sm:$0xf]
      %v635 = vld [vmem:[%s266 + $0x58c] sm:$0xf]
      %v636 = vld [vmem:[%s266 + $0x590] sm:$0xf]
      %v637 = vld [vmem:[%s266 + $0x594] sm:$0xf]
      %v638 = vld [vmem:[%s266 + $0x598] sm:$0xf]
      %v639 = vld [vmem:[%s266 + $0x59c] sm:$0xf]
      %v640 = vld [vmem:[%s266 + $0x5a0] sm:$0xf]
      %v641 = vld [vmem:[%s266 + $0x5a4] sm:$0xf]
      %v642 = vld [vmem:[%s266 + $0x5a8] sm:$0xf]
      %v643 = vld [vmem:[%s266 + $0x5ac] sm:$0xf]
      %v644 = vld [vmem:[%s266 + $0x5b0] sm:$0xf]
      %v645 = vld [vmem:[%s266 + $0x5b4] sm:$0xf]
      %v646 = vld [vmem:[%s266 + $0x5b8] sm:$0xf]
      %v647 = vld [vmem:[%s266 + $0x5bc] sm:$0xf]
      %v648 = vld [vmem:[%s266 + $0x5c0] sm:$0xf]
      %v649 = vld [vmem:[%s266 + $0x5c4] sm:$0xf]
      %v650 = vld [vmem:[%s266 + $0x5c8] sm:$0xf]
      %v651 = vld [vmem:[%s266 + $0x5cc] sm:$0xf]
      %v652 = vld [vmem:[%s266 + $0x5d0] sm:$0xf]
      %v653 = vld [vmem:[%s266 + $0x5d4] sm:$0xf]
      %v654 = vld [vmem:[%s266 + $0x5d8] sm:$0xf]
      %v655 = vld [vmem:[%s266 + $0x5dc] sm:$0xf]
      %v656 = vld [vmem:[%s266 + $0x5e0] sm:$0xf]
      %v657 = vld [vmem:[%s266 + $0x5e4] sm:$0xf]
      %v658 = vld [vmem:[%s266 + $0x5e8] sm:$0xf]
      %v659 = vld [vmem:[%s266 + $0x5ec] sm:$0xf]
      %v660 = vld [vmem:[%s266 + $0x5f0] sm:$0xf]
      %v661 = vld [vmem:[%s266 + $0x5f4] sm:$0xf]
      %v662 = vld [vmem:[%s266 + $0x5f8] sm:$0xf]
      %v663 = vld [vmem:[%s266 + $0x5fc] sm:$0xf]
      %v664 = vld [vmem:[%s266 + $0x600] sm:$0xf]
      %v665 = vld [vmem:[%s266 + $0x604] sm:$0xf]
      %v666 = vld [vmem:[%s266 + $0x608] sm:$0xf]
      %v667 = vld [vmem:[%s266 + $0x60c] sm:$0xf]
      %v668 = vld [vmem:[%s266 + $0x610] sm:$0xf]
      %v669 = vld [vmem:[%s266 + $0x614] sm:$0xf]
      %v670 = vld [vmem:[%s266 + $0x618] sm:$0xf]
      %v671 = vld [vmem:[%s266 + $0x61c] sm:$0xf]
      %v672 = vld [vmem:[%s266 + $0x620] sm:$0xf]
      %v673 = vld [vmem:[%s266 + $0x624] sm:$0xf]
      %v674 = vld [vmem:[%s266 + $0x628] sm:$0xf]
      %v675 = vld [vmem:[%s266 + $0x62c] sm:$0xf]
      %v676 = vld [vmem:[%s266 + $0x630] sm:$0xf]
      %v677 = vld [vmem:[%s266 + $0x634] sm:$0xf]
      %v678 = vld [vmem:[%s266 + $0x638] sm:$0xf]
      %v679 = vld [vmem:[%s266 + $0x63c] sm:$0xf]
      %v680 = vld [vmem:[%s266 + $0x640] sm:$0xf]
      %v681 = vld [vmem:[%s266 + $0x644] sm:$0xf]
      %v682 = vld [vmem:[%s266 + $0x648] sm:$0xf]
      %v683 = vld [vmem:[%s266 + $0x64c] sm:$0xf]
      %v684 = vld [vmem:[%s266 + $0x650] sm:$0xf]
      %v685 = vld [vmem:[%s266 + $0x654] sm:$0xf]
      %v686 = vld [vmem:[%s266 + $0x658] sm:$0xf]
      %v687 = vld [vmem:[%s266 + $0x65c] sm:$0xf]
      %v688 = vld [vmem:[%s266 + $0x660] sm:$0xf]
      %v689 = vld [vmem:[%s266 + $0x664] sm:$0xf]
      %v690 = vld [vmem:[%s266 + $0x668] sm:$0xf]
      %v691 = vld [vmem:[%s266 + $0x66c] sm:$0xf]
      %v692 = vld [vmem:[%s266 + $0x670] sm:$0xf]
      %v693 = vld [vmem:[%s266 + $0x674] sm:$0xf]
      %v694 = vld [vmem:[%s266 + $0x678] sm:$0xf]
      %v695 = vld [vmem:[%s266 + $0x67c] sm:$0xf]
      %v696 = vld [vmem:[%s266 + $0x680] sm:$0xf]
      %v697 = vld [vmem:[%s266 + $0x684] sm:$0xf]
      %v698 = vld [vmem:[%s266 + $0x688] sm:$0xf]
      %v699 = vld [vmem:[%s266 + $0x68c] sm:$0xf]
      %v700 = vld [vmem:[%s266 + $0x690] sm:$0xf]
      %v701 = vld [vmem:[%s266 + $0x694] sm:$0xf]
      %v702 = vld [vmem:[%s266 + $0x698] sm:$0xf]
      %v703 = vld [vmem:[%s266 + $0x69c] sm:$0xf]
      %v704 = vld [vmem:[%s266 + $0x6a0] sm:$0xf]
      %v705 = vld [vmem:[%s266 + $0x6a4] sm:$0xf]
      %v706 = vld [vmem:[%s266 + $0x6a8] sm:$0xf]
      %v707 = vld [vmem:[%s266 + $0x6ac] sm:$0xf]
      %v708 = vld [vmem:[%s266 + $0x6b0] sm:$0xf]
      %v709 = vld [vmem:[%s266 + $0x6b4] sm:$0xf]
      %v710 = vld [vmem:[%s266 + $0x6b8] sm:$0xf]
      %v711 = vld [vmem:[%s266 + $0x6bc] sm:$0xf]
      %v712 = vld [vmem:[%s266 + $0x6c0] sm:$0xf]
      %v713 = vld [vmem:[%s266 + $0x6c4] sm:$0xf]
      %v714 = vld [vmem:[%s266 + $0x6c8] sm:$0xf]
      %v715 = vld [vmem:[%s266 + $0x6cc] sm:$0xf]
      %v716 = vld [vmem:[%s266 + $0x6d0] sm:$0xf]
      %v717 = vld [vmem:[%s266 + $0x6d4] sm:$0xf]
      %v718 = vld [vmem:[%s266 + $0x6d8] sm:$0xf]
      %v719 = vld [vmem:[%s266 + $0x6dc] sm:$0xf]
      %v720 = vld [vmem:[%s266 + $0x6e0] sm:$0xf]
      %v721 = vld [vmem:[%s266 + $0x6e4] sm:$0xf]
      %v722 = vld [vmem:[%s266 + $0x6e8] sm:$0xf]
      %v723 = vld [vmem:[%s266 + $0x6ec] sm:$0xf]
      %v724 = vld [vmem:[%s266 + $0x6f0] sm:$0xf]
      %v725 = vld [vmem:[%s266 + $0x6f4] sm:$0xf]
      %v726 = vld [vmem:[%s266 + $0x6f8] sm:$0xf]
      %v727 = vld [vmem:[%s266 + $0x6fc] sm:$0xf]
      %v728 = vld [vmem:[%s266 + $0x700] sm:$0xf]
      %v729 = vld [vmem:[%s266 + $0x704] sm:$0xf]
      %v730 = vld [vmem:[%s266 + $0x708] sm:$0xf]
      %v731 = vld [vmem:[%s266 + $0x70c] sm:$0xf]
      %v732 = vld [vmem:[%s266 + $0x710] sm:$0xf]
      %v733 = vld [vmem:[%s266 + $0x714] sm:$0xf]
      %v734 = vld [vmem:[%s266 + $0x718] sm:$0xf]
      %v735 = vld [vmem:[%s266 + $0x71c] sm:$0xf]
      %v736 = vld [vmem:[%s266 + $0x720] sm:$0xf]
      %v737 = vld [vmem:[%s266 + $0x724] sm:$0xf]
      %v738 = vld [vmem:[%s266 + $0x728] sm:$0xf]
      %v739 = vld [vmem:[%s266 + $0x72c] sm:$0xf]
      %v740 = vld [vmem:[%s266 + $0x730] sm:$0xf]
      %v741 = vld [vmem:[%s266 + $0x734] sm:$0xf]
      %v742 = vld [vmem:[%s266 + $0x738] sm:$0xf]
      %v743 = vld [vmem:[%s266 + $0x73c] sm:$0xf]
      %v744 = vld [vmem:[%s266 + $0x740] sm:$0xf]
      %v745 = vld [vmem:[%s266 + $0x744] sm:$0xf]
      %v746 = vld [vmem:[%s266 + $0x748] sm:$0xf]
      %v747 = vld [vmem:[%s266 + $0x74c] sm:$0xf]
      %v748 = vld [vmem:[%s266 + $0x750] sm:$0xf]
      %v749 = vld [vmem:[%s266 + $0x754] sm:$0xf]
      %v750 = vld [vmem:[%s266 + $0x758] sm:$0xf]
      %v751 = vld [vmem:[%s266 + $0x75c] sm:$0xf]
      %v752 = vld [vmem:[%s266 + $0x760] sm:$0xf]
      %v753 = vld [vmem:[%s266 + $0x764] sm:$0xf]
      %v754 = vld [vmem:[%s266 + $0x768] sm:$0xf]
      %v755 = vld [vmem:[%s266 + $0x76c] sm:$0xf]
      %v756 = vld [vmem:[%s266 + $0x770] sm:$0xf]
      %v757 = vld [vmem:[%s266 + $0x774] sm:$0xf]
      %v758 = vld [vmem:[%s266 + $0x778] sm:$0xf]
      %v759 = vld [vmem:[%s266 + $0x77c] sm:$0xf]
      %v760 = vld [vmem:[%s266 + $0x780] sm:$0xf]
      %v761 = vld [vmem:[%s266 + $0x784] sm:$0xf]
      %v762 = vld [vmem:[%s266 + $0x788] sm:$0xf]
      %v763 = vld [vmem:[%s266 + $0x78c] sm:$0xf]
      %v764 = vld [vmem:[%s266 + $0x790] sm:$0xf]
      %v765 = vld [vmem:[%s266 + $0x794] sm:$0xf]
      %v766 = vld [vmem:[%s266 + $0x798] sm:$0xf]
      %v767 = vld [vmem:[%s266 + $0x79c] sm:$0xf]
      %v768 = vld [vmem:[%s266 + $0x7a0] sm:$0xf]
      %v769 = vld [vmem:[%s266 + $0x7a4] sm:$0xf]
      %v770 = vld [vmem:[%s266 + $0x7a8] sm:$0xf]
      %v771 = vld [vmem:[%s266 + $0x7ac] sm:$0xf]
      %v772 = vld [vmem:[%s266 + $0x7b0] sm:$0xf]
      %v773 = vld [vmem:[%s266 + $0x7b4] sm:$0xf]
      %v774 = vld [vmem:[%s266 + $0x7b8] sm:$0xf]
      %v775 = vld [vmem:[%s266 + $0x7bc] sm:$0xf]
      %v776 = vld [vmem:[%s266 + $0x7c0] sm:$0xf]
      %v777 = vld [vmem:[%s266 + $0x7c4] sm:$0xf]
      %v778 = vld [vmem:[%s266 + $0x7c8] sm:$0xf]
      %v779 = vld [vmem:[%s266 + $0x7cc] sm:$0xf]
      %v780 = vld [vmem:[%s266 + $0x7d0] sm:$0xf]
      %v781 = vld [vmem:[%s266 + $0x7d4] sm:$0xf]
      %v782 = vld [vmem:[%s266 + $0x7d8] sm:$0xf]
      %v783 = vld [vmem:[%s266 + $0x7dc] sm:$0xf]
      %v784 = vld [vmem:[%s266 + $0x7e0] sm:$0xf]
      %v785 = vld [vmem:[%s266 + $0x7e4] sm:$0xf]
      %v786 = vld [vmem:[%s266 + $0x7e8] sm:$0xf]
      %v787 = vld [vmem:[%s266 + $0x7ec] sm:$0xf]
      %v788 = vld [vmem:[%s266 + $0x7f0] sm:$0xf]
      %v789 = vld [vmem:[%s266 + $0x7f4] sm:$0xf]
      %v790 = vld [vmem:[%s266 + $0x7f8] sm:$0xf]
      %v791 = vld [vmem:[%s266 + $0x7fc] sm:$0xf]
      %v792 = vunpack.c.l.bf16 %v280
      %v793 = vunpack.c.l.bf16 %v281
      %v794 = vunpack.c.l.bf16 %v282
      %v795 = vunpack.c.l.bf16 %v283
      %v796 = vunpack.c.l.bf16 %v284
      %v797 = vunpack.c.l.bf16 %v285
      %v798 = vunpack.c.l.bf16 %v286
      %v799 = vunpack.c.l.bf16 %v287
      %v800 = vunpack.c.l.bf16 %v288
      %v801 = vunpack.c.l.bf16 %v289
      %v802 = vunpack.c.l.bf16 %v290
      %v803 = vunpack.c.l.bf16 %v291
      %v804 = vunpack.c.l.bf16 %v292
      %v805 = vunpack.c.l.bf16 %v293
      %v806 = vunpack.c.l.bf16 %v294
      %v807 = vunpack.c.l.bf16 %v295
      %v808 = vunpack.c.l.bf16 %v296
      %v809 = vunpack.c.l.bf16 %v297
      %v810 = vunpack.c.l.bf16 %v298
      %v811 = vunpack.c.l.bf16 %v299
      %v812 = vunpack.c.l.bf16 %v300
      %v813 = vunpack.c.l.bf16 %v301
      %v814 = vunpack.c.l.bf16 %v302
      %v815 = vunpack.c.l.bf16 %v303
      %v816 = vunpack.c.l.bf16 %v304
      %v817 = vunpack.c.l.bf16 %v305
      %v818 = vunpack.c.l.bf16 %v306
      %v819 = vunpack.c.l.bf16 %v307
      %v820 = vunpack.c.l.bf16 %v308
      %v821 = vunpack.c.l.bf16 %v309
      %v822 = vunpack.c.l.bf16 %v310
      %v823 = vunpack.c.l.bf16 %v311
      %v824 = vunpack.c.l.bf16 %v312
      %v825 = vunpack.c.l.bf16 %v313
      %v826 = vunpack.c.l.bf16 %v314
      %v827 = vunpack.c.l.bf16 %v315
      %v828 = vunpack.c.l.bf16 %v316
      %v829 = vunpack.c.l.bf16 %v317
      %v830 = vunpack.c.l.bf16 %v318
      %v831 = vunpack.c.l.bf16 %v319
      %v832 = vunpack.c.l.bf16 %v320
      %v833 = vunpack.c.l.bf16 %v321
      %v834 = vunpack.c.l.bf16 %v322
      %v835 = vunpack.c.l.bf16 %v323
      %v836 = vunpack.c.l.bf16 %v324
      %v837 = vunpack.c.l.bf16 %v325
      %v838 = vunpack.c.l.bf16 %v326
      %v839 = vunpack.c.l.bf16 %v327
      %v840 = vunpack.c.l.bf16 %v328
      %v841 = vunpack.c.l.bf16 %v329
      %v842 = vunpack.c.l.bf16 %v330
      %v843 = vunpack.c.l.bf16 %v331
      %v844 = vunpack.c.l.bf16 %v332
      %v845 = vunpack.c.l.bf16 %v333
      %v846 = vunpack.c.l.bf16 %v334
      %v847 = vunpack.c.l.bf16 %v335
      %v848 = vunpack.c.l.bf16 %v336
      %v849 = vunpack.c.l.bf16 %v337
      %v850 = vunpack.c.l.bf16 %v338
      %v851 = vunpack.c.l.bf16 %v339
      %v852 = vunpack.c.l.bf16 %v340
      %v853 = vunpack.c.l.bf16 %v341
      %v854 = vunpack.c.l.bf16 %v342
      %v855 = vunpack.c.l.bf16 %v343
      %v856 = vunpack.c.l.bf16 %v344
      %v857 = vunpack.c.l.bf16 %v345
      %v858 = vunpack.c.l.bf16 %v346
      %v859 = vunpack.c.l.bf16 %v347
      %v860 = vunpack.c.l.bf16 %v348
      %v861 = vunpack.c.l.bf16 %v349
      %v862 = vunpack.c.l.bf16 %v350
      %v863 = vunpack.c.l.bf16 %v351
      %v864 = vunpack.c.l.bf16 %v352
      %v865 = vunpack.c.l.bf16 %v353
      %v866 = vunpack.c.l.bf16 %v354
      %v867 = vunpack.c.l.bf16 %v355
      %v868 = vunpack.c.l.bf16 %v356
      %v869 = vunpack.c.l.bf16 %v357
      %v870 = vunpack.c.l.bf16 %v358
      %v871 = vunpack.c.l.bf16 %v359
      %v872 = vunpack.c.l.bf16 %v360
      %v873 = vunpack.c.l.bf16 %v361
      %v874 = vunpack.c.l.bf16 %v362
      %v875 = vunpack.c.l.bf16 %v363
      %v876 = vunpack.c.l.bf16 %v364
      %v877 = vunpack.c.l.bf16 %v365
      %v878 = vunpack.c.l.bf16 %v366
      %v879 = vunpack.c.l.bf16 %v367
      %v880 = vunpack.c.l.bf16 %v368
      %v881 = vunpack.c.l.bf16 %v369
      %v882 = vunpack.c.l.bf16 %v370
      %v883 = vunpack.c.l.bf16 %v371
      %v884 = vunpack.c.l.bf16 %v372
      %v885 = vunpack.c.l.bf16 %v373
      %v886 = vunpack.c.l.bf16 %v374
      %v887 = vunpack.c.l.bf16 %v375
      %v888 = vunpack.c.l.bf16 %v376
      %v889 = vunpack.c.l.bf16 %v377
      %v890 = vunpack.c.l.bf16 %v378
      %v891 = vunpack.c.l.bf16 %v379
      %v892 = vunpack.c.l.bf16 %v380
      %v893 = vunpack.c.l.bf16 %v381
      %v894 = vunpack.c.l.bf16 %v382
      %v895 = vunpack.c.l.bf16 %v383
      %v896 = vunpack.c.l.bf16 %v384
      %v897 = vunpack.c.l.bf16 %v385
      %v898 = vunpack.c.l.bf16 %v386
      %v899 = vunpack.c.l.bf16 %v387
      %v900 = vunpack.c.l.bf16 %v388
      %v901 = vunpack.c.l.bf16 %v389
      %v902 = vunpack.c.l.bf16 %v390
      %v903 = vunpack.c.l.bf16 %v391
      %v904 = vunpack.c.l.bf16 %v392
      %v905 = vunpack.c.l.bf16 %v393
      %v906 = vunpack.c.l.bf16 %v394
      %v907 = vunpack.c.l.bf16 %v395
      %v908 = vunpack.c.l.bf16 %v396
      %v909 = vunpack.c.l.bf16 %v397
      %v910 = vunpack.c.l.bf16 %v398
      %v911 = vunpack.c.l.bf16 %v399
      %v912 = vunpack.c.l.bf16 %v400
      %v913 = vunpack.c.l.bf16 %v401
      %v914 = vunpack.c.l.bf16 %v402
      %v915 = vunpack.c.l.bf16 %v403
      %v916 = vunpack.c.l.bf16 %v404
      %v917 = vunpack.c.l.bf16 %v405
      %v918 = vunpack.c.l.bf16 %v406
      %v919 = vunpack.c.l.bf16 %v407
      %v920 = vunpack.c.l.bf16 %v408
      %v921 = vunpack.c.l.bf16 %v409
      %v922 = vunpack.c.l.bf16 %v410
      %v923 = vunpack.c.l.bf16 %v411
      %v924 = vunpack.c.l.bf16 %v412
      %v925 = vunpack.c.l.bf16 %v413
      %v926 = vunpack.c.l.bf16 %v414
      %v927 = vunpack.c.l.bf16 %v415
      %v928 = vunpack.c.l.bf16 %v416
      %v929 = vunpack.c.l.bf16 %v417
      %v930 = vunpack.c.l.bf16 %v418
      %v931 = vunpack.c.l.bf16 %v419
      %v932 = vunpack.c.l.bf16 %v420
      %v933 = vunpack.c.l.bf16 %v421
      %v934 = vunpack.c.l.bf16 %v422
      %v935 = vunpack.c.l.bf16 %v423
      %v936 = vunpack.c.l.bf16 %v424
      %v937 = vunpack.c.l.bf16 %v425
      %v938 = vunpack.c.l.bf16 %v426
      %v939 = vunpack.c.l.bf16 %v427
      %v940 = vunpack.c.l.bf16 %v428
      %v941 = vunpack.c.l.bf16 %v429
      %v942 = vunpack.c.l.bf16 %v430
      %v943 = vunpack.c.l.bf16 %v431
      %v944 = vunpack.c.l.bf16 %v432
      %v945 = vunpack.c.l.bf16 %v433
      %v946 = vunpack.c.l.bf16 %v434
      %v947 = vunpack.c.l.bf16 %v435
      %v948 = vunpack.c.l.bf16 %v436
      %v949 = vunpack.c.l.bf16 %v437
      %v950 = vunpack.c.l.bf16 %v438
      %v951 = vunpack.c.l.bf16 %v439
      %v952 = vunpack.c.l.bf16 %v440
      %v953 = vunpack.c.l.bf16 %v441
      %v954 = vunpack.c.l.bf16 %v442
      %v955 = vunpack.c.l.bf16 %v443
      %v956 = vunpack.c.l.bf16 %v444
      %v957 = vunpack.c.l.bf16 %v445
      %v958 = vunpack.c.l.bf16 %v446
      %v959 = vunpack.c.l.bf16 %v447
      %v960 = vunpack.c.l.bf16 %v448
      %v961 = vunpack.c.l.bf16 %v449
      %v962 = vunpack.c.l.bf16 %v450
      %v963 = vunpack.c.l.bf16 %v451
      %v964 = vunpack.c.l.bf16 %v452
      %v965 = vunpack.c.l.bf16 %v453
      %v966 = vunpack.c.l.bf16 %v454
      %v967 = vunpack.c.l.bf16 %v455
      %v968 = vunpack.c.l.bf16 %v456
      %v969 = vunpack.c.l.bf16 %v457
      %v970 = vunpack.c.l.bf16 %v458
      %v971 = vunpack.c.l.bf16 %v459
      %v972 = vunpack.c.l.bf16 %v460
      %v973 = vunpack.c.l.bf16 %v461
      %v974 = vunpack.c.l.bf16 %v462
      %v975 = vunpack.c.l.bf16 %v463
      %v976 = vunpack.c.l.bf16 %v464
      %v977 = vunpack.c.l.bf16 %v465
      %v978 = vunpack.c.l.bf16 %v466
      %v979 = vunpack.c.l.bf16 %v467
      %v980 = vunpack.c.l.bf16 %v468
      %v981 = vunpack.c.l.bf16 %v469
      %v982 = vunpack.c.l.bf16 %v470
      %v983 = vunpack.c.l.bf16 %v471
      %v984 = vunpack.c.l.bf16 %v472
      %v985 = vunpack.c.l.bf16 %v473
      %v986 = vunpack.c.l.bf16 %v474
      %v987 = vunpack.c.l.bf16 %v475
      %v988 = vunpack.c.l.bf16 %v476
      %v989 = vunpack.c.l.bf16 %v477
      %v990 = vunpack.c.l.bf16 %v478
      %v991 = vunpack.c.l.bf16 %v479
      %v992 = vunpack.c.l.bf16 %v480
      %v993 = vunpack.c.l.bf16 %v481
      %v994 = vunpack.c.l.bf16 %v482
      %v995 = vunpack.c.l.bf16 %v483
      %v996 = vunpack.c.l.bf16 %v484
      %v997 = vunpack.c.l.bf16 %v485
      %v998 = vunpack.c.l.bf16 %v486
      %v999 = vunpack.c.l.bf16 %v487
      %v1000 = vunpack.c.l.bf16 %v488
      %v1001 = vunpack.c.l.bf16 %v489
      %v1002 = vunpack.c.l.bf16 %v490
      %v1003 = vunpack.c.l.bf16 %v491
      %v1004 = vunpack.c.l.bf16 %v492
      %v1005 = vunpack.c.l.bf16 %v493
      %v1006 = vunpack.c.l.bf16 %v494
      %v1007 = vunpack.c.l.bf16 %v495
      %v1008 = vunpack.c.l.bf16 %v496
      %v1009 = vunpack.c.l.bf16 %v497
      %v1010 = vunpack.c.l.bf16 %v498
      %v1011 = vunpack.c.l.bf16 %v499
      %v1012 = vunpack.c.l.bf16 %v500
      %v1013 = vunpack.c.l.bf16 %v501
      %v1014 = vunpack.c.l.bf16 %v502
      %v1015 = vunpack.c.l.bf16 %v503
      %v1016 = vunpack.c.l.bf16 %v504
      %v1017 = vunpack.c.l.bf16 %v505
      %v1018 = vunpack.c.l.bf16 %v506
      %v1019 = vunpack.c.l.bf16 %v507
      %v1020 = vunpack.c.l.bf16 %v508
      %v1021 = vunpack.c.l.bf16 %v509
      %v1022 = vunpack.c.l.bf16 %v510
      %v1023 = vunpack.c.l.bf16 %v511
      %v1024 = vunpack.c.l.bf16 %v512
      %v1025 = vunpack.c.l.bf16 %v513
      %v1026 = vunpack.c.l.bf16 %v514
      %v1027 = vunpack.c.l.bf16 %v515
      %v1028 = vunpack.c.l.bf16 %v516
      %v1029 = vunpack.c.l.bf16 %v517
      %v1030 = vunpack.c.l.bf16 %v518
      %v1031 = vunpack.c.l.bf16 %v519
      %v1032 = vunpack.c.l.bf16 %v520
      %v1033 = vunpack.c.l.bf16 %v521
      %v1034 = vunpack.c.l.bf16 %v522
      %v1035 = vunpack.c.l.bf16 %v523
      %v1036 = vunpack.c.l.bf16 %v524
      %v1037 = vunpack.c.l.bf16 %v525
      %v1038 = vunpack.c.l.bf16 %v526
      %v1039 = vunpack.c.l.bf16 %v527
      %v1040 = vunpack.c.l.bf16 %v528
      %v1041 = vunpack.c.l.bf16 %v529
      %v1042 = vunpack.c.l.bf16 %v530
      %v1043 = vunpack.c.l.bf16 %v531
      %v1044 = vunpack.c.l.bf16 %v532
      %v1045 = vunpack.c.l.bf16 %v533
      %v1046 = vunpack.c.l.bf16 %v534
      %v1047 = vunpack.c.l.bf16 %v535
      %v1048 = vunpack.c.l.bf16 %v536
      %v1049 = vunpack.c.l.bf16 %v537
      %v1050 = vunpack.c.l.bf16 %v538
      %v1051 = vunpack.c.l.bf16 %v539
      %v1052 = vunpack.c.l.bf16 %v540
      %v1053 = vunpack.c.l.bf16 %v541
      %v1054 = vunpack.c.l.bf16 %v542
      %v1055 = vunpack.c.l.bf16 %v543
      %v1056 = vunpack.c.l.bf16 %v544
      %v1057 = vunpack.c.l.bf16 %v545
      %v1058 = vunpack.c.l.bf16 %v546
      %v1059 = vunpack.c.l.bf16 %v547
      %v1060 = vunpack.c.l.bf16 %v548
      %v1061 = vunpack.c.l.bf16 %v549
      %v1062 = vunpack.c.l.bf16 %v550
      %v1063 = vunpack.c.l.bf16 %v551
      %v1064 = vunpack.c.l.bf16 %v552
      %v1065 = vunpack.c.l.bf16 %v553
      %v1066 = vunpack.c.l.bf16 %v554
      %v1067 = vunpack.c.l.bf16 %v555
      %v1068 = vunpack.c.l.bf16 %v556
      %v1069 = vunpack.c.l.bf16 %v557
      %v1070 = vunpack.c.l.bf16 %v558
      %v1071 = vunpack.c.l.bf16 %v559
      %v1072 = vunpack.c.l.bf16 %v560
      %v1073 = vunpack.c.l.bf16 %v561
      %v1074 = vunpack.c.l.bf16 %v562
      %v1075 = vunpack.c.l.bf16 %v563
      %v1076 = vunpack.c.l.bf16 %v564
      %v1077 = vunpack.c.l.bf16 %v565
      %v1078 = vunpack.c.l.bf16 %v566
      %v1079 = vunpack.c.l.bf16 %v567
      %v1080 = vunpack.c.l.bf16 %v568
      %v1081 = vunpack.c.l.bf16 %v569
      %v1082 = vunpack.c.l.bf16 %v570
      %v1083 = vunpack.c.l.bf16 %v571
      %v1084 = vunpack.c.l.bf16 %v572
      %v1085 = vunpack.c.l.bf16 %v573
      %v1086 = vunpack.c.l.bf16 %v574
      %v1087 = vunpack.c.l.bf16 %v575
      %v1088 = vunpack.c.l.bf16 %v576
      %v1089 = vunpack.c.l.bf16 %v577
      %v1090 = vunpack.c.l.bf16 %v578
      %v1091 = vunpack.c.l.bf16 %v579
      %v1092 = vunpack.c.l.bf16 %v580
      %v1093 = vunpack.c.l.bf16 %v581
      %v1094 = vunpack.c.l.bf16 %v582
      %v1095 = vunpack.c.l.bf16 %v583
      %v1096 = vunpack.c.l.bf16 %v584
      %v1097 = vunpack.c.l.bf16 %v585
      %v1098 = vunpack.c.l.bf16 %v586
      %v1099 = vunpack.c.l.bf16 %v587
      %v1100 = vunpack.c.l.bf16 %v588
      %v1101 = vunpack.c.l.bf16 %v589
      %v1102 = vunpack.c.l.bf16 %v590
      %v1103 = vunpack.c.l.bf16 %v591
      %v1104 = vunpack.c.l.bf16 %v592
      %v1105 = vunpack.c.l.bf16 %v593
      %v1106 = vunpack.c.l.bf16 %v594
      %v1107 = vunpack.c.l.bf16 %v595
      %v1108 = vunpack.c.l.bf16 %v596
      %v1109 = vunpack.c.l.bf16 %v597
      %v1110 = vunpack.c.l.bf16 %v598
      %v1111 = vunpack.c.l.bf16 %v599
      %v1112 = vunpack.c.l.bf16 %v600
      %v1113 = vunpack.c.l.bf16 %v601
      %v1114 = vunpack.c.l.bf16 %v602
      %v1115 = vunpack.c.l.bf16 %v603
      %v1116 = vunpack.c.l.bf16 %v604
      %v1117 = vunpack.c.l.bf16 %v605
      %v1118 = vunpack.c.l.bf16 %v606
      %v1119 = vunpack.c.l.bf16 %v607
      %v1120 = vunpack.c.l.bf16 %v608
      %v1121 = vunpack.c.l.bf16 %v609
      %v1122 = vunpack.c.l.bf16 %v610
      %v1123 = vunpack.c.l.bf16 %v611
      %v1124 = vunpack.c.l.bf16 %v612
      %v1125 = vunpack.c.l.bf16 %v613
      %v1126 = vunpack.c.l.bf16 %v614
      %v1127 = vunpack.c.l.bf16 %v615
      %v1128 = vunpack.c.l.bf16 %v616
      %v1129 = vunpack.c.l.bf16 %v617
      %v1130 = vunpack.c.l.bf16 %v618
      %v1131 = vunpack.c.l.bf16 %v619
      %v1132 = vunpack.c.l.bf16 %v620
      %v1133 = vunpack.c.l.bf16 %v621
      %v1134 = vunpack.c.l.bf16 %v622
      %v1135 = vunpack.c.l.bf16 %v623
      %v1136 = vunpack.c.l.bf16 %v624
      %v1137 = vunpack.c.l.bf16 %v625
      %v1138 = vunpack.c.l.bf16 %v626
      %v1139 = vunpack.c.l.bf16 %v627
      %v1140 = vunpack.c.l.bf16 %v628
      %v1141 = vunpack.c.l.bf16 %v629
      %v1142 = vunpack.c.l.bf16 %v630
      %v1143 = vunpack.c.l.bf16 %v631
      %v1144 = vunpack.c.l.bf16 %v632
      %v1145 = vunpack.c.l.bf16 %v633
      %v1146 = vunpack.c.l.bf16 %v634
      %v1147 = vunpack.c.l.bf16 %v635
      %v1148 = vunpack.c.l.bf16 %v636
      %v1149 = vunpack.c.l.bf16 %v637
      %v1150 = vunpack.c.l.bf16 %v638
      %v1151 = vunpack.c.l.bf16 %v639
      %v1152 = vunpack.c.l.bf16 %v640
      %v1153 = vunpack.c.l.bf16 %v641
      %v1154 = vunpack.c.l.bf16 %v642
      %v1155 = vunpack.c.l.bf16 %v643
      %v1156 = vunpack.c.l.bf16 %v644
      %v1157 = vunpack.c.l.bf16 %v645
      %v1158 = vunpack.c.l.bf16 %v646
      %v1159 = vunpack.c.l.bf16 %v647
      %v1160 = vunpack.c.l.bf16 %v648
      %v1161 = vunpack.c.l.bf16 %v649
      %v1162 = vunpack.c.l.bf16 %v650
      %v1163 = vunpack.c.l.bf16 %v651
      %v1164 = vunpack.c.l.bf16 %v652
      %v1165 = vunpack.c.l.bf16 %v653
      %v1166 = vunpack.c.l.bf16 %v654
      %v1167 = vunpack.c.l.bf16 %v655
      %v1168 = vunpack.c.l.bf16 %v656
      %v1169 = vunpack.c.l.bf16 %v657
      %v1170 = vunpack.c.l.bf16 %v658
      %v1171 = vunpack.c.l.bf16 %v659
      %v1172 = vunpack.c.l.bf16 %v660
      %v1173 = vunpack.c.l.bf16 %v661
      %v1174 = vunpack.c.l.bf16 %v662
      %v1175 = vunpack.c.l.bf16 %v663
      %v1176 = vunpack.c.l.bf16 %v664
      %v1177 = vunpack.c.l.bf16 %v665
      %v1178 = vunpack.c.l.bf16 %v666
      %v1179 = vunpack.c.l.bf16 %v667
      %v1180 = vunpack.c.l.bf16 %v668
      %v1181 = vunpack.c.l.bf16 %v669
      %v1182 = vunpack.c.l.bf16 %v670
      %v1183 = vunpack.c.l.bf16 %v671
      %v1184 = vunpack.c.l.bf16 %v672
      %v1185 = vunpack.c.l.bf16 %v673
      %v1186 = vunpack.c.l.bf16 %v674
      %v1187 = vunpack.c.l.bf16 %v675
      %v1188 = vunpack.c.l.bf16 %v676
      %v1189 = vunpack.c.l.bf16 %v677
      %v1190 = vunpack.c.l.bf16 %v678
      %v1191 = vunpack.c.l.bf16 %v679
      %v1192 = vunpack.c.l.bf16 %v680
      %v1193 = vunpack.c.l.bf16 %v681
      %v1194 = vunpack.c.l.bf16 %v682
      %v1195 = vunpack.c.l.bf16 %v683
      %v1196 = vunpack.c.l.bf16 %v684
      %v1197 = vunpack.c.l.bf16 %v685
      %v1198 = vunpack.c.l.bf16 %v686
      %v1199 = vunpack.c.l.bf16 %v687
      %v1200 = vunpack.c.l.bf16 %v688
      %v1201 = vunpack.c.l.bf16 %v689
      %v1202 = vunpack.c.l.bf16 %v690
      %v1203 = vunpack.c.l.bf16 %v691
      %v1204 = vunpack.c.l.bf16 %v692
      %v1205 = vunpack.c.l.bf16 %v693
      %v1206 = vunpack.c.l.bf16 %v694
      %v1207 = vunpack.c.l.bf16 %v695
      %v1208 = vunpack.c.l.bf16 %v696
      %v1209 = vunpack.c.l.bf16 %v697
      %v1210 = vunpack.c.l.bf16 %v698
      %v1211 = vunpack.c.l.bf16 %v699
      %v1212 = vunpack.c.l.bf16 %v700
      %v1213 = vunpack.c.l.bf16 %v701
      %v1214 = vunpack.c.l.bf16 %v702
      %v1215 = vunpack.c.l.bf16 %v703
      %v1216 = vunpack.c.l.bf16 %v704
      %v1217 = vunpack.c.l.bf16 %v705
      %v1218 = vunpack.c.l.bf16 %v706
      %v1219 = vunpack.c.l.bf16 %v707
      %v1220 = vunpack.c.l.bf16 %v708
      %v1221 = vunpack.c.l.bf16 %v709
      %v1222 = vunpack.c.l.bf16 %v710
      %v1223 = vunpack.c.l.bf16 %v711
      %v1224 = vunpack.c.l.bf16 %v712
      %v1225 = vunpack.c.l.bf16 %v713
      %v1226 = vunpack.c.l.bf16 %v714
      %v1227 = vunpack.c.l.bf16 %v715
      %v1228 = vunpack.c.l.bf16 %v716
      %v1229 = vunpack.c.l.bf16 %v717
      %v1230 = vunpack.c.l.bf16 %v718
      %v1231 = vunpack.c.l.bf16 %v719
      %v1232 = vunpack.c.l.bf16 %v720
      %v1233 = vunpack.c.l.bf16 %v721
      %v1234 = vunpack.c.l.bf16 %v722
      %v1235 = vunpack.c.l.bf16 %v723
      %v1236 = vunpack.c.l.bf16 %v724
      %v1237 = vunpack.c.l.bf16 %v725
      %v1238 = vunpack.c.l.bf16 %v726
      %v1239 = vunpack.c.l.bf16 %v727
      %v1240 = vunpack.c.l.bf16 %v728
      %v1241 = vunpack.c.l.bf16 %v729
      %v1242 = vunpack.c.l.bf16 %v730
      %v1243 = vunpack.c.l.bf16 %v731
      %v1244 = vunpack.c.l.bf16 %v732
      %v1245 = vunpack.c.l.bf16 %v733
      %v1246 = vunpack.c.l.bf16 %v734
      %v1247 = vunpack.c.l.bf16 %v735
      %v1248 = vunpack.c.l.bf16 %v736
      %v1249 = vunpack.c.l.bf16 %v737
      %v1250 = vunpack.c.l.bf16 %v738
      %v1251 = vunpack.c.l.bf16 %v739
      %v1252 = vunpack.c.l.bf16 %v740
      %v1253 = vunpack.c.l.bf16 %v741
      %v1254 = vunpack.c.l.bf16 %v742
      %v1255 = vunpack.c.l.bf16 %v743
      %v1256 = vunpack.c.l.bf16 %v744
      %v1257 = vunpack.c.l.bf16 %v745
      %v1258 = vunpack.c.l.bf16 %v746
      %v1259 = vunpack.c.l.bf16 %v747
      %v1260 = vunpack.c.l.bf16 %v748
      %v1261 = vunpack.c.l.bf16 %v749
      %v1262 = vunpack.c.l.bf16 %v750
      %v1263 = vunpack.c.l.bf16 %v751
      %v1264 = vunpack.c.l.bf16 %v752
      %v1265 = vunpack.c.l.bf16 %v753
      %v1266 = vunpack.c.l.bf16 %v754
      %v1267 = vunpack.c.l.bf16 %v755
      %v1268 = vunpack.c.l.bf16 %v756
      %v1269 = vunpack.c.l.bf16 %v757
      %v1270 = vunpack.c.l.bf16 %v758
      %v1271 = vunpack.c.l.bf16 %v759
      %v1272 = vunpack.c.l.bf16 %v760
      %v1273 = vunpack.c.l.bf16 %v761
      %v1274 = vunpack.c.l.bf16 %v762
      %v1275 = vunpack.c.l.bf16 %v763
      %v1276 = vunpack.c.l.bf16 %v764
      %v1277 = vunpack.c.l.bf16 %v765
      %v1278 = vunpack.c.l.bf16 %v766
      %v1279 = vunpack.c.l.bf16 %v767
      %v1280 = vunpack.c.l.bf16 %v768
      %v1281 = vunpack.c.l.bf16 %v769
      %v1282 = vunpack.c.l.bf16 %v770
      %v1283 = vunpack.c.l.bf16 %v771
      %v1284 = vunpack.c.l.bf16 %v772
      %v1285 = vunpack.c.l.bf16 %v773
      %v1286 = vunpack.c.l.bf16 %v774
      %v1287 = vunpack.c.l.bf16 %v775
      %v1288 = vunpack.c.l.bf16 %v776
      %v1289 = vunpack.c.l.bf16 %v777
      %v1290 = vunpack.c.l.bf16 %v778
      %v1291 = vunpack.c.l.bf16 %v779
      %v1292 = vunpack.c.l.bf16 %v780
      %v1293 = vunpack.c.l.bf16 %v781
      %v1294 = vunpack.c.l.bf16 %v782
      %v1295 = vunpack.c.l.bf16 %v783
      %v1296 = vunpack.c.l.bf16 %v784
      %v1297 = vunpack.c.l.bf16 %v785
      %v1298 = vunpack.c.l.bf16 %v786
      %v1299 = vunpack.c.l.bf16 %v787
      %v1300 = vunpack.c.l.bf16 %v788
      %v1301 = vunpack.c.l.bf16 %v789
      %v1302 = vunpack.c.l.bf16 %v790
      %v1303 = vunpack.c.l.bf16 %v791
      %v1304 = vld [vmem:[%s2] sm:$0xff]
      %v1305 = vld [vmem:[%s2 + $0x8] sm:$0xff]
      %v1306 = vmul.f32 %v792, %v1304
      %v1307 = vmul.f32 %v793, %v1305
      %v1308 = vmul.f32 %v794, %v1304
      %v1309 = vmul.f32 %v795, %v1305
      %v1310 = vmul.f32 %v796, %v1304
      %v1311 = vmul.f32 %v797, %v1305
      %v1312 = vmul.f32 %v798, %v1304
      %v1313 = vmul.f32 %v799, %v1305
      %v1314 = vmul.f32 %v800, %v1304
      %v1315 = vmul.f32 %v801, %v1305
      %v1316 = vmul.f32 %v802, %v1304
      %v1317 = vmul.f32 %v803, %v1305
      %v1318 = vmul.f32 %v804, %v1304
      %v1319 = vmul.f32 %v805, %v1305
      %v1320 = vmul.f32 %v806, %v1304
      %v1321 = vmul.f32 %v807, %v1305
      %v1322 = vmul.f32 %v808, %v1304
      %v1323 = vmul.f32 %v809, %v1305
      %v1324 = vmul.f32 %v810, %v1304
      %v1325 = vmul.f32 %v811, %v1305
      %v1326 = vmul.f32 %v812, %v1304
      %v1327 = vmul.f32 %v813, %v1305
      %v1328 = vmul.f32 %v814, %v1304
      %v1329 = vmul.f32 %v815, %v1305
      %v1330 = vmul.f32 %v816, %v1304
      %v1331 = vmul.f32 %v817, %v1305
      %v1332 = vmul.f32 %v818, %v1304
      %v1333 = vmul.f32 %v819, %v1305
      %v1334 = vmul.f32 %v820, %v1304
      %v1335 = vmul.f32 %v821, %v1305
      %v1336 = vmul.f32 %v822, %v1304
      %v1337 = vmul.f32 %v823, %v1305
      %v1338 = vmul.f32 %v824, %v1304
      %v1339 = vmul.f32 %v825, %v1305
      %v1340 = vmul.f32 %v826, %v1304
      %v1341 = vmul.f32 %v827, %v1305
      %v1342 = vmul.f32 %v828, %v1304
      %v1343 = vmul.f32 %v829, %v1305
      %v1344 = vmul.f32 %v830, %v1304
      %v1345 = vmul.f32 %v831, %v1305
      %v1346 = vmul.f32 %v832, %v1304
      %v1347 = vmul.f32 %v833, %v1305
      %v1348 = vmul.f32 %v834, %v1304
      %v1349 = vmul.f32 %v835, %v1305
      %v1350 = vmul.f32 %v836, %v1304
      %v1351 = vmul.f32 %v837, %v1305
      %v1352 = vmul.f32 %v838, %v1304
      %v1353 = vmul.f32 %v839, %v1305
      %v1354 = vmul.f32 %v840, %v1304
      %v1355 = vmul.f32 %v841, %v1305
      %v1356 = vmul.f32 %v842, %v1304
      %v1357 = vmul.f32 %v843, %v1305
      %v1358 = vmul.f32 %v844, %v1304
      %v1359 = vmul.f32 %v845, %v1305
      %v1360 = vmul.f32 %v846, %v1304
      %v1361 = vmul.f32 %v847, %v1305
      %v1362 = vmul.f32 %v848, %v1304
      %v1363 = vmul.f32 %v849, %v1305
      %v1364 = vmul.f32 %v850, %v1304
      %v1365 = vmul.f32 %v851, %v1305
      %v1366 = vmul.f32 %v852, %v1304
      %v1367 = vmul.f32 %v853, %v1305
      %v1368 = vmul.f32 %v854, %v1304
      %v1369 = vmul.f32 %v855, %v1305
      %v1370 = vmul.f32 %v856, %v1304
      %v1371 = vmul.f32 %v857, %v1305
      %v1372 = vmul.f32 %v858, %v1304
      %v1373 = vmul.f32 %v859, %v1305
      %v1374 = vmul.f32 %v860, %v1304
      %v1375 = vmul.f32 %v861, %v1305
      %v1376 = vmul.f32 %v862, %v1304
      %v1377 = vmul.f32 %v863, %v1305
      %v1378 = vmul.f32 %v864, %v1304
      %v1379 = vmul.f32 %v865, %v1305
      %v1380 = vmul.f32 %v866, %v1304
      %v1381 = vmul.f32 %v867, %v1305
      %v1382 = vmul.f32 %v868, %v1304
      %v1383 = vmul.f32 %v869, %v1305
      %v1384 = vmul.f32 %v870, %v1304
      %v1385 = vmul.f32 %v871, %v1305
      %v1386 = vmul.f32 %v872, %v1304
      %v1387 = vmul.f32 %v873, %v1305
      %v1388 = vmul.f32 %v874, %v1304
      %v1389 = vmul.f32 %v875, %v1305
      %v1390 = vmul.f32 %v876, %v1304
      %v1391 = vmul.f32 %v877, %v1305
      %v1392 = vmul.f32 %v878, %v1304
      %v1393 = vmul.f32 %v879, %v1305
      %v1394 = vmul.f32 %v880, %v1304
      %v1395 = vmul.f32 %v881, %v1305
      %v1396 = vmul.f32 %v882, %v1304
      %v1397 = vmul.f32 %v883, %v1305
      %v1398 = vmul.f32 %v884, %v1304
      %v1399 = vmul.f32 %v885, %v1305
      %v1400 = vmul.f32 %v886, %v1304
      %v1401 = vmul.f32 %v887, %v1305
      %v1402 = vmul.f32 %v888, %v1304
      %v1403 = vmul.f32 %v889, %v1305
      %v1404 = vmul.f32 %v890, %v1304
      %v1405 = vmul.f32 %v891, %v1305
      %v1406 = vmul.f32 %v892, %v1304
      %v1407 = vmul.f32 %v893, %v1305
      %v1408 = vmul.f32 %v894, %v1304
      %v1409 = vmul.f32 %v895, %v1305
      %v1410 = vmul.f32 %v896, %v1304
      %v1411 = vmul.f32 %v897, %v1305
      %v1412 = vmul.f32 %v898, %v1304
      %v1413 = vmul.f32 %v899, %v1305
      %v1414 = vmul.f32 %v900, %v1304
      %v1415 = vmul.f32 %v901, %v1305
      %v1416 = vmul.f32 %v902, %v1304
      %v1417 = vmul.f32 %v903, %v1305
      %v1418 = vmul.f32 %v904, %v1304
      %v1419 = vmul.f32 %v905, %v1305
      %v1420 = vmul.f32 %v906, %v1304
      %v1421 = vmul.f32 %v907, %v1305
      %v1422 = vmul.f32 %v908, %v1304
      %v1423 = vmul.f32 %v909, %v1305
      %v1424 = vmul.f32 %v910, %v1304
      %v1425 = vmul.f32 %v911, %v1305
      %v1426 = vmul.f32 %v912, %v1304
      %v1427 = vmul.f32 %v913, %v1305
      %v1428 = vmul.f32 %v914, %v1304
      %v1429 = vmul.f32 %v915, %v1305
      %v1430 = vmul.f32 %v916, %v1304
      %v1431 = vmul.f32 %v917, %v1305
      %v1432 = vmul.f32 %v918, %v1304
      %v1433 = vmul.f32 %v919, %v1305
      %v1434 = vmul.f32 %v920, %v1304
      %v1435 = vmul.f32 %v921, %v1305
      %v1436 = vmul.f32 %v922, %v1304
      %v1437 = vmul.f32 %v923, %v1305
      %v1438 = vmul.f32 %v924, %v1304
      %v1439 = vmul.f32 %v925, %v1305
      %v1440 = vmul.f32 %v926, %v1304
      %v1441 = vmul.f32 %v927, %v1305
      %v1442 = vmul.f32 %v928, %v1304
      %v1443 = vmul.f32 %v929, %v1305
      %v1444 = vmul.f32 %v930, %v1304
      %v1445 = vmul.f32 %v931, %v1305
      %v1446 = vmul.f32 %v932, %v1304
      %v1447 = vmul.f32 %v933, %v1305
      %v1448 = vmul.f32 %v934, %v1304
      %v1449 = vmul.f32 %v935, %v1305
      %v1450 = vmul.f32 %v936, %v1304
      %v1451 = vmul.f32 %v937, %v1305
      %v1452 = vmul.f32 %v938, %v1304
      %v1453 = vmul.f32 %v939, %v1305
      %v1454 = vmul.f32 %v940, %v1304
      %v1455 = vmul.f32 %v941, %v1305
      %v1456 = vmul.f32 %v942, %v1304
      %v1457 = vmul.f32 %v943, %v1305
      %v1458 = vmul.f32 %v944, %v1304
      %v1459 = vmul.f32 %v945, %v1305
      %v1460 = vmul.f32 %v946, %v1304
      %v1461 = vmul.f32 %v947, %v1305
      %v1462 = vmul.f32 %v948, %v1304
      %v1463 = vmul.f32 %v949, %v1305
      %v1464 = vmul.f32 %v950, %v1304
      %v1465 = vmul.f32 %v951, %v1305
      %v1466 = vmul.f32 %v952, %v1304
      %v1467 = vmul.f32 %v953, %v1305
      %v1468 = vmul.f32 %v954, %v1304
      %v1469 = vmul.f32 %v955, %v1305
      %v1470 = vmul.f32 %v956, %v1304
      %v1471 = vmul.f32 %v957, %v1305
      %v1472 = vmul.f32 %v958, %v1304
      %v1473 = vmul.f32 %v959, %v1305
      %v1474 = vmul.f32 %v960, %v1304
      %v1475 = vmul.f32 %v961, %v1305
      %v1476 = vmul.f32 %v962, %v1304
      %v1477 = vmul.f32 %v963, %v1305
      %v1478 = vmul.f32 %v964, %v1304
      %v1479 = vmul.f32 %v965, %v1305
      %v1480 = vmul.f32 %v966, %v1304
      %v1481 = vmul.f32 %v967, %v1305
      %v1482 = vmul.f32 %v968, %v1304
      %v1483 = vmul.f32 %v969, %v1305
      %v1484 = vmul.f32 %v970, %v1304
      %v1485 = vmul.f32 %v971, %v1305
      %v1486 = vmul.f32 %v972, %v1304
      %v1487 = vmul.f32 %v973, %v1305
      %v1488 = vmul.f32 %v974, %v1304
      %v1489 = vmul.f32 %v975, %v1305
      %v1490 = vmul.f32 %v976, %v1304
      %v1491 = vmul.f32 %v977, %v1305
      %v1492 = vmul.f32 %v978, %v1304
      %v1493 = vmul.f32 %v979, %v1305
      %v1494 = vmul.f32 %v980, %v1304
      %v1495 = vmul.f32 %v981, %v1305
      %v1496 = vmul.f32 %v982, %v1304
      %v1497 = vmul.f32 %v983, %v1305
      %v1498 = vmul.f32 %v984, %v1304
      %v1499 = vmul.f32 %v985, %v1305
      %v1500 = vmul.f32 %v986, %v1304
      %v1501 = vmul.f32 %v987, %v1305
      %v1502 = vmul.f32 %v988, %v1304
      %v1503 = vmul.f32 %v989, %v1305
      %v1504 = vmul.f32 %v990, %v1304
      %v1505 = vmul.f32 %v991, %v1305
      %v1506 = vmul.f32 %v992, %v1304
      %v1507 = vmul.f32 %v993, %v1305
      %v1508 = vmul.f32 %v994, %v1304
      %v1509 = vmul.f32 %v995, %v1305
      %v1510 = vmul.f32 %v996, %v1304
      %v1511 = vmul.f32 %v997, %v1305
      %v1512 = vmul.f32 %v998, %v1304
      %v1513 = vmul.f32 %v999, %v1305
      %v1514 = vmul.f32 %v1000, %v1304
      %v1515 = vmul.f32 %v1001, %v1305
      %v1516 = vmul.f32 %v1002, %v1304
      %v1517 = vmul.f32 %v1003, %v1305
      %v1518 = vmul.f32 %v1004, %v1304
      %v1519 = vmul.f32 %v1005, %v1305
      %v1520 = vmul.f32 %v1006, %v1304
      %v1521 = vmul.f32 %v1007, %v1305
      %v1522 = vmul.f32 %v1008, %v1304
      %v1523 = vmul.f32 %v1009, %v1305
      %v1524 = vmul.f32 %v1010, %v1304
      %v1525 = vmul.f32 %v1011, %v1305
      %v1526 = vmul.f32 %v1012, %v1304
      %v1527 = vmul.f32 %v1013, %v1305
      %v1528 = vmul.f32 %v1014, %v1304
      %v1529 = vmul.f32 %v1015, %v1305
      %v1530 = vmul.f32 %v1016, %v1304
      %v1531 = vmul.f32 %v1017, %v1305
      %v1532 = vmul.f32 %v1018, %v1304
      %v1533 = vmul.f32 %v1019, %v1305
      %v1534 = vmul.f32 %v1020, %v1304
      %v1535 = vmul.f32 %v1021, %v1305
      %v1536 = vmul.f32 %v1022, %v1304
      %v1537 = vmul.f32 %v1023, %v1305
      %v1538 = vmul.f32 %v1024, %v1304
      %v1539 = vmul.f32 %v1025, %v1305
      %v1540 = vmul.f32 %v1026, %v1304
      %v1541 = vmul.f32 %v1027, %v1305
      %v1542 = vmul.f32 %v1028, %v1304
      %v1543 = vmul.f32 %v1029, %v1305
      %v1544 = vmul.f32 %v1030, %v1304
      %v1545 = vmul.f32 %v1031, %v1305
      %v1546 = vmul.f32 %v1032, %v1304
      %v1547 = vmul.f32 %v1033, %v1305
      %v1548 = vmul.f32 %v1034, %v1304
      %v1549 = vmul.f32 %v1035, %v1305
      %v1550 = vmul.f32 %v1036, %v1304
      %v1551 = vmul.f32 %v1037, %v1305
      %v1552 = vmul.f32 %v1038, %v1304
      %v1553 = vmul.f32 %v1039, %v1305
      %v1554 = vmul.f32 %v1040, %v1304
      %v1555 = vmul.f32 %v1041, %v1305
      %v1556 = vmul.f32 %v1042, %v1304
      %v1557 = vmul.f32 %v1043, %v1305
      %v1558 = vmul.f32 %v1044, %v1304
      %v1559 = vmul.f32 %v1045, %v1305
      %v1560 = vmul.f32 %v1046, %v1304
      %v1561 = vmul.f32 %v1047, %v1305
      %v1562 = vmul.f32 %v1048, %v1304
      %v1563 = vmul.f32 %v1049, %v1305
      %v1564 = vmul.f32 %v1050, %v1304
      %v1565 = vmul.f32 %v1051, %v1305
      %v1566 = vmul.f32 %v1052, %v1304
      %v1567 = vmul.f32 %v1053, %v1305
      %v1568 = vmul.f32 %v1054, %v1304
      %v1569 = vmul.f32 %v1055, %v1305
      %v1570 = vmul.f32 %v1056, %v1304
      %v1571 = vmul.f32 %v1057, %v1305
      %v1572 = vmul.f32 %v1058, %v1304
      %v1573 = vmul.f32 %v1059, %v1305
      %v1574 = vmul.f32 %v1060, %v1304
      %v1575 = vmul.f32 %v1061, %v1305
      %v1576 = vmul.f32 %v1062, %v1304
      %v1577 = vmul.f32 %v1063, %v1305
      %v1578 = vmul.f32 %v1064, %v1304
      %v1579 = vmul.f32 %v1065, %v1305
      %v1580 = vmul.f32 %v1066, %v1304
      %v1581 = vmul.f32 %v1067, %v1305
      %v1582 = vmul.f32 %v1068, %v1304
      %v1583 = vmul.f32 %v1069, %v1305
      %v1584 = vmul.f32 %v1070, %v1304
      %v1585 = vmul.f32 %v1071, %v1305
      %v1586 = vmul.f32 %v1072, %v1304
      %v1587 = vmul.f32 %v1073, %v1305
      %v1588 = vmul.f32 %v1074, %v1304
      %v1589 = vmul.f32 %v1075, %v1305
      %v1590 = vmul.f32 %v1076, %v1304
      %v1591 = vmul.f32 %v1077, %v1305
      %v1592 = vmul.f32 %v1078, %v1304
      %v1593 = vmul.f32 %v1079, %v1305
      %v1594 = vmul.f32 %v1080, %v1304
      %v1595 = vmul.f32 %v1081, %v1305
      %v1596 = vmul.f32 %v1082, %v1304
      %v1597 = vmul.f32 %v1083, %v1305
      %v1598 = vmul.f32 %v1084, %v1304
      %v1599 = vmul.f32 %v1085, %v1305
      %v1600 = vmul.f32 %v1086, %v1304
      %v1601 = vmul.f32 %v1087, %v1305
      %v1602 = vmul.f32 %v1088, %v1304
      %v1603 = vmul.f32 %v1089, %v1305
      %v1604 = vmul.f32 %v1090, %v1304
      %v1605 = vmul.f32 %v1091, %v1305
      %v1606 = vmul.f32 %v1092, %v1304
      %v1607 = vmul.f32 %v1093, %v1305
      %v1608 = vmul.f32 %v1094, %v1304
      %v1609 = vmul.f32 %v1095, %v1305
      %v1610 = vmul.f32 %v1096, %v1304
      %v1611 = vmul.f32 %v1097, %v1305
      %v1612 = vmul.f32 %v1098, %v1304
      %v1613 = vmul.f32 %v1099, %v1305
      %v1614 = vmul.f32 %v1100, %v1304
      %v1615 = vmul.f32 %v1101, %v1305
      %v1616 = vmul.f32 %v1102, %v1304
      %v1617 = vmul.f32 %v1103, %v1305
      %v1618 = vmul.f32 %v1104, %v1304
      %v1619 = vmul.f32 %v1105, %v1305
      %v1620 = vmul.f32 %v1106, %v1304
      %v1621 = vmul.f32 %v1107, %v1305
      %v1622 = vmul.f32 %v1108, %v1304
      %v1623 = vmul.f32 %v1109, %v1305
      %v1624 = vmul.f32 %v1110, %v1304
      %v1625 = vmul.f32 %v1111, %v1305
      %v1626 = vmul.f32 %v1112, %v1304
      %v1627 = vmul.f32 %v1113, %v1305
      %v1628 = vmul.f32 %v1114, %v1304
      %v1629 = vmul.f32 %v1115, %v1305
      %v1630 = vmul.f32 %v1116, %v1304
      %v1631 = vmul.f32 %v1117, %v1305
      %v1632 = vmul.f32 %v1118, %v1304
      %v1633 = vmul.f32 %v1119, %v1305
      %v1634 = vmul.f32 %v1120, %v1304
      %v1635 = vmul.f32 %v1121, %v1305
      %v1636 = vmul.f32 %v1122, %v1304
      %v1637 = vmul.f32 %v1123, %v1305
      %v1638 = vmul.f32 %v1124, %v1304
      %v1639 = vmul.f32 %v1125, %v1305
      %v1640 = vmul.f32 %v1126, %v1304
      %v1641 = vmul.f32 %v1127, %v1305
      %v1642 = vmul.f32 %v1128, %v1304
      %v1643 = vmul.f32 %v1129, %v1305
      %v1644 = vmul.f32 %v1130, %v1304
      %v1645 = vmul.f32 %v1131, %v1305
      %v1646 = vmul.f32 %v1132, %v1304
      %v1647 = vmul.f32 %v1133, %v1305
      %v1648 = vmul.f32 %v1134, %v1304
      %v1649 = vmul.f32 %v1135, %v1305
      %v1650 = vmul.f32 %v1136, %v1304
      %v1651 = vmul.f32 %v1137, %v1305
      %v1652 = vmul.f32 %v1138, %v1304
      %v1653 = vmul.f32 %v1139, %v1305
      %v1654 = vmul.f32 %v1140, %v1304
      %v1655 = vmul.f32 %v1141, %v1305
      %v1656 = vmul.f32 %v1142, %v1304
      %v1657 = vmul.f32 %v1143, %v1305
      %v1658 = vmul.f32 %v1144, %v1304
      %v1659 = vmul.f32 %v1145, %v1305
      %v1660 = vmul.f32 %v1146, %v1304
      %v1661 = vmul.f32 %v1147, %v1305
      %v1662 = vmul.f32 %v1148, %v1304
      %v1663 = vmul.f32 %v1149, %v1305
      %v1664 = vmul.f32 %v1150, %v1304
      %v1665 = vmul.f32 %v1151, %v1305
      %v1666 = vmul.f32 %v1152, %v1304
      %v1667 = vmul.f32 %v1153, %v1305
      %v1668 = vmul.f32 %v1154, %v1304
      %v1669 = vmul.f32 %v1155, %v1305
      %v1670 = vmul.f32 %v1156, %v1304
      %v1671 = vmul.f32 %v1157, %v1305
      %v1672 = vmul.f32 %v1158, %v1304
      %v1673 = vmul.f32 %v1159, %v1305
      %v1674 = vmul.f32 %v1160, %v1304
      %v1675 = vmul.f32 %v1161, %v1305
      %v1676 = vmul.f32 %v1162, %v1304
      %v1677 = vmul.f32 %v1163, %v1305
      %v1678 = vmul.f32 %v1164, %v1304
      %v1679 = vmul.f32 %v1165, %v1305
      %v1680 = vmul.f32 %v1166, %v1304
      %v1681 = vmul.f32 %v1167, %v1305
      %v1682 = vmul.f32 %v1168, %v1304
      %v1683 = vmul.f32 %v1169, %v1305
      %v1684 = vmul.f32 %v1170, %v1304
      %v1685 = vmul.f32 %v1171, %v1305
      %v1686 = vmul.f32 %v1172, %v1304
      %v1687 = vmul.f32 %v1173, %v1305
      %v1688 = vmul.f32 %v1174, %v1304
      %v1689 = vmul.f32 %v1175, %v1305
      %v1690 = vmul.f32 %v1176, %v1304
      %v1691 = vmul.f32 %v1177, %v1305
      %v1692 = vmul.f32 %v1178, %v1304
      %v1693 = vmul.f32 %v1179, %v1305
      %v1694 = vmul.f32 %v1180, %v1304
      %v1695 = vmul.f32 %v1181, %v1305
      %v1696 = vmul.f32 %v1182, %v1304
      %v1697 = vmul.f32 %v1183, %v1305
      %v1698 = vmul.f32 %v1184, %v1304
      %v1699 = vmul.f32 %v1185, %v1305
      %v1700 = vmul.f32 %v1186, %v1304
      %v1701 = vmul.f32 %v1187, %v1305
      %v1702 = vmul.f32 %v1188, %v1304
      %v1703 = vmul.f32 %v1189, %v1305
      %v1704 = vmul.f32 %v1190, %v1304
      %v1705 = vmul.f32 %v1191, %v1305
      %v1706 = vmul.f32 %v1192, %v1304
      %v1707 = vmul.f32 %v1193, %v1305
      %v1708 = vmul.f32 %v1194, %v1304
      %v1709 = vmul.f32 %v1195, %v1305
      %v1710 = vmul.f32 %v1196, %v1304
      %v1711 = vmul.f32 %v1197, %v1305
      %v1712 = vmul.f32 %v1198, %v1304
      %v1713 = vmul.f32 %v1199, %v1305
      %v1714 = vmul.f32 %v1200, %v1304
      %v1715 = vmul.f32 %v1201, %v1305
      %v1716 = vmul.f32 %v1202, %v1304
      %v1717 = vmul.f32 %v1203, %v1305
      %v1718 = vmul.f32 %v1204, %v1304
      %v1719 = vmul.f32 %v1205, %v1305
      %v1720 = vmul.f32 %v1206, %v1304
      %v1721 = vmul.f32 %v1207, %v1305
      %v1722 = vmul.f32 %v1208, %v1304
      %v1723 = vmul.f32 %v1209, %v1305
      %v1724 = vmul.f32 %v1210, %v1304
      %v1725 = vmul.f32 %v1211, %v1305
      %v1726 = vmul.f32 %v1212, %v1304
      %v1727 = vmul.f32 %v1213, %v1305
      %v1728 = vmul.f32 %v1214, %v1304
      %v1729 = vmul.f32 %v1215, %v1305
      %v1730 = vmul.f32 %v1216, %v1304
      %v1731 = vmul.f32 %v1217, %v1305
      %v1732 = vmul.f32 %v1218, %v1304
      %v1733 = vmul.f32 %v1219, %v1305
      %v1734 = vmul.f32 %v1220, %v1304
      %v1735 = vmul.f32 %v1221, %v1305
      %v1736 = vmul.f32 %v1222, %v1304
      %v1737 = vmul.f32 %v1223, %v1305
      %v1738 = vmul.f32 %v1224, %v1304
      %v1739 = vmul.f32 %v1225, %v1305
      %v1740 = vmul.f32 %v1226, %v1304
      %v1741 = vmul.f32 %v1227, %v1305
      %v1742 = vmul.f32 %v1228, %v1304
      %v1743 = vmul.f32 %v1229, %v1305
      %v1744 = vmul.f32 %v1230, %v1304
      %v1745 = vmul.f32 %v1231, %v1305
      %v1746 = vmul.f32 %v1232, %v1304
      %v1747 = vmul.f32 %v1233, %v1305
      %v1748 = vmul.f32 %v1234, %v1304
      %v1749 = vmul.f32 %v1235, %v1305
      %v1750 = vmul.f32 %v1236, %v1304
      %v1751 = vmul.f32 %v1237, %v1305
      %v1752 = vmul.f32 %v1238, %v1304
      %v1753 = vmul.f32 %v1239, %v1305
      %v1754 = vmul.f32 %v1240, %v1304
      %v1755 = vmul.f32 %v1241, %v1305
      %v1756 = vmul.f32 %v1242, %v1304
      %v1757 = vmul.f32 %v1243, %v1305
      %v1758 = vmul.f32 %v1244, %v1304
      %v1759 = vmul.f32 %v1245, %v1305
      %v1760 = vmul.f32 %v1246, %v1304
      %v1761 = vmul.f32 %v1247, %v1305
      %v1762 = vmul.f32 %v1248, %v1304
      %v1763 = vmul.f32 %v1249, %v1305
      %v1764 = vmul.f32 %v1250, %v1304
      %v1765 = vmul.f32 %v1251, %v1305
      %v1766 = vmul.f32 %v1252, %v1304
      %v1767 = vmul.f32 %v1253, %v1305
      %v1768 = vmul.f32 %v1254, %v1304
      %v1769 = vmul.f32 %v1255, %v1305
      %v1770 = vmul.f32 %v1256, %v1304
      %v1771 = vmul.f32 %v1257, %v1305
      %v1772 = vmul.f32 %v1258, %v1304
      %v1773 = vmul.f32 %v1259, %v1305
      %v1774 = vmul.f32 %v1260, %v1304
      %v1775 = vmul.f32 %v1261, %v1305
      %v1776 = vmul.f32 %v1262, %v1304
      %v1777 = vmul.f32 %v1263, %v1305
      %v1778 = vmul.f32 %v1264, %v1304
      %v1779 = vmul.f32 %v1265, %v1305
      %v1780 = vmul.f32 %v1266, %v1304
      %v1781 = vmul.f32 %v1267, %v1305
      %v1782 = vmul.f32 %v1268, %v1304
      %v1783 = vmul.f32 %v1269, %v1305
      %v1784 = vmul.f32 %v1270, %v1304
      %v1785 = vmul.f32 %v1271, %v1305
      %v1786 = vmul.f32 %v1272, %v1304
      %v1787 = vmul.f32 %v1273, %v1305
      %v1788 = vmul.f32 %v1274, %v1304
      %v1789 = vmul.f32 %v1275, %v1305
      %v1790 = vmul.f32 %v1276, %v1304
      %v1791 = vmul.f32 %v1277, %v1305
      %v1792 = vmul.f32 %v1278, %v1304
      %v1793 = vmul.f32 %v1279, %v1305
      %v1794 = vmul.f32 %v1280, %v1304
      %v1795 = vmul.f32 %v1281, %v1305
      %v1796 = vmul.f32 %v1282, %v1304
      %v1797 = vmul.f32 %v1283, %v1305
      %v1798 = vmul.f32 %v1284, %v1304
      %v1799 = vmul.f32 %v1285, %v1305
      %v1800 = vmul.f32 %v1286, %v1304
      %v1801 = vmul.f32 %v1287, %v1305
      %v1802 = vmul.f32 %v1288, %v1304
      %v1803 = vmul.f32 %v1289, %v1305
      %v1804 = vmul.f32 %v1290, %v1304
      %v1805 = vmul.f32 %v1291, %v1305
      %v1806 = vmul.f32 %v1292, %v1304
      %v1807 = vmul.f32 %v1293, %v1305
      %v1808 = vmul.f32 %v1294, %v1304
      %v1809 = vmul.f32 %v1295, %v1305
      %v1810 = vmul.f32 %v1296, %v1304
      %v1811 = vmul.f32 %v1297, %v1305
      %v1812 = vmul.f32 %v1298, %v1304
      %v1813 = vmul.f32 %v1299, %v1305
      %v1814 = vmul.f32 %v1300, %v1304
      %v1815 = vmul.f32 %v1301, %v1305
      %v1816 = vmul.f32 %v1302, %v1304
      %v1817 = vmul.f32 %v1303, %v1305
      %vm1818 = vcmask 261120
      %v1819 = vsel %vm1818, %v1306, 0.0
      %v1820 = vsel %vm1818, %v1307, 0.0
      %v1821 = vadd.f32 %v1819, %v1820
      %v1822 = vrot.slane %v1821, 4
      %v1823 = vadd.f32 %v1821, %v1822
      %v1824 = vrot.slane %v1823, 2
      %v1825 = vadd.f32 %v1823, %v1824
      %v1826 = vrot.slane %v1825, 1
      %v1827 = vadd.f32 %v1825, %v1826
      %v1828 = vsel %vm1818, %v1308, 0.0
      %v1829 = vsel %vm1818, %v1309, 0.0
      %v1830 = vadd.f32 %v1828, %v1829
      %v1831 = vrot.slane %v1830, 4
      %v1832 = vadd.f32 %v1830, %v1831
      %v1833 = vrot.slane %v1832, 2
      %v1834 = vadd.f32 %v1832, %v1833
      %v1835 = vrot.slane %v1834, 1
      %v1836 = vadd.f32 %v1834, %v1835
      %v1837 = vsel %vm1818, %v1310, 0.0
      %v1838 = vsel %vm1818, %v1311, 0.0
      %v1839 = vadd.f32 %v1837, %v1838
      %v1840 = vrot.slane %v1839, 4
      %v1841 = vadd.f32 %v1839, %v1840
      %v1842 = vrot.slane %v1841, 2
      %v1843 = vadd.f32 %v1841, %v1842
      %v1844 = vrot.slane %v1843, 1
      %v1845 = vadd.f32 %v1843, %v1844
      %v1846 = vsel %vm1818, %v1312, 0.0
      %v1847 = vsel %vm1818, %v1313, 0.0
      %v1848 = vadd.f32 %v1846, %v1847
      %v1849 = vrot.slane %v1848, 4
      %v1850 = vadd.f32 %v1848, %v1849
      %v1851 = vrot.slane %v1850, 2
      %v1852 = vadd.f32 %v1850, %v1851
      %v1853 = vrot.slane %v1852, 1
      %v1854 = vadd.f32 %v1852, %v1853
      %v1855 = vsel %vm1818, %v1314, 0.0
      %v1856 = vsel %vm1818, %v1315, 0.0
      %v1857 = vadd.f32 %v1855, %v1856
      %v1858 = vrot.slane %v1857, 4
      %v1859 = vadd.f32 %v1857, %v1858
      %v1860 = vrot.slane %v1859, 2
      %v1861 = vadd.f32 %v1859, %v1860
      %v1862 = vrot.slane %v1861, 1
      %v1863 = vadd.f32 %v1861, %v1862
      %v1864 = vsel %vm1818, %v1316, 0.0
      %v1865 = vsel %vm1818, %v1317, 0.0
      %v1866 = vadd.f32 %v1864, %v1865
      %v1867 = vrot.slane %v1866, 4
      %v1868 = vadd.f32 %v1866, %v1867
      %v1869 = vrot.slane %v1868, 2
      %v1870 = vadd.f32 %v1868, %v1869
      %v1871 = vrot.slane %v1870, 1
      %v1872 = vadd.f32 %v1870, %v1871
      %v1873 = vsel %vm1818, %v1318, 0.0
      %v1874 = vsel %vm1818, %v1319, 0.0
      %v1875 = vadd.f32 %v1873, %v1874
      %v1876 = vrot.slane %v1875, 4
      %v1877 = vadd.f32 %v1875, %v1876
      %v1878 = vrot.slane %v1877, 2
      %v1879 = vadd.f32 %v1877, %v1878
      %v1880 = vrot.slane %v1879, 1
      %v1881 = vadd.f32 %v1879, %v1880
      %v1882 = vsel %vm1818, %v1320, 0.0
      %v1883 = vsel %vm1818, %v1321, 0.0
      %v1884 = vadd.f32 %v1882, %v1883
      %v1885 = vrot.slane %v1884, 4
      %v1886 = vadd.f32 %v1884, %v1885
      %v1887 = vrot.slane %v1886, 2
      %v1888 = vadd.f32 %v1886, %v1887
      %v1889 = vrot.slane %v1888, 1
      %v1890 = vadd.f32 %v1888, %v1889
      %v1891 = vsel %vm1818, %v1322, 0.0
      %v1892 = vsel %vm1818, %v1323, 0.0
      %v1893 = vadd.f32 %v1891, %v1892
      %v1894 = vrot.slane %v1893, 4
      %v1895 = vadd.f32 %v1893, %v1894
      %v1896 = vrot.slane %v1895, 2
      %v1897 = vadd.f32 %v1895, %v1896
      %v1898 = vrot.slane %v1897, 1
      %v1899 = vadd.f32 %v1897, %v1898
      %v1900 = vsel %vm1818, %v1324, 0.0
      %v1901 = vsel %vm1818, %v1325, 0.0
      %v1902 = vadd.f32 %v1900, %v1901
      %v1903 = vrot.slane %v1902, 4
      %v1904 = vadd.f32 %v1902, %v1903
      %v1905 = vrot.slane %v1904, 2
      %v1906 = vadd.f32 %v1904, %v1905
      %v1907 = vrot.slane %v1906, 1
      %v1908 = vadd.f32 %v1906, %v1907
      %v1909 = vsel %vm1818, %v1326, 0.0
      %v1910 = vsel %vm1818, %v1327, 0.0
      %v1911 = vadd.f32 %v1909, %v1910
      %v1912 = vrot.slane %v1911, 4
      %v1913 = vadd.f32 %v1911, %v1912
      %v1914 = vrot.slane %v1913, 2
      %v1915 = vadd.f32 %v1913, %v1914
      %v1916 = vrot.slane %v1915, 1
      %v1917 = vadd.f32 %v1915, %v1916
      %v1918 = vsel %vm1818, %v1328, 0.0
      %v1919 = vsel %vm1818, %v1329, 0.0
      %v1920 = vadd.f32 %v1918, %v1919
      %v1921 = vrot.slane %v1920, 4
      %v1922 = vadd.f32 %v1920, %v1921
      %v1923 = vrot.slane %v1922, 2
      %v1924 = vadd.f32 %v1922, %v1923
      %v1925 = vrot.slane %v1924, 1
      %v1926 = vadd.f32 %v1924, %v1925
      %v1927 = vsel %vm1818, %v1330, 0.0
      %v1928 = vsel %vm1818, %v1331, 0.0
      %v1929 = vadd.f32 %v1927, %v1928
      %v1930 = vrot.slane %v1929, 4
      %v1931 = vadd.f32 %v1929, %v1930
      %v1932 = vrot.slane %v1931, 2
      %v1933 = vadd.f32 %v1931, %v1932
      %v1934 = vrot.slane %v1933, 1
      %v1935 = vadd.f32 %v1933, %v1934
      %v1936 = vsel %vm1818, %v1332, 0.0
      %v1937 = vsel %vm1818, %v1333, 0.0
      %v1938 = vadd.f32 %v1936, %v1937
      %v1939 = vrot.slane %v1938, 4
      %v1940 = vadd.f32 %v1938, %v1939
      %v1941 = vrot.slane %v1940, 2
      %v1942 = vadd.f32 %v1940, %v1941
      %v1943 = vrot.slane %v1942, 1
      %v1944 = vadd.f32 %v1942, %v1943
      %v1945 = vsel %vm1818, %v1334, 0.0
      %v1946 = vsel %vm1818, %v1335, 0.0
      %v1947 = vadd.f32 %v1945, %v1946
      %v1948 = vrot.slane %v1947, 4
      %v1949 = vadd.f32 %v1947, %v1948
      %v1950 = vrot.slane %v1949, 2
      %v1951 = vadd.f32 %v1949, %v1950
      %v1952 = vrot.slane %v1951, 1
      %v1953 = vadd.f32 %v1951, %v1952
      %v1954 = vsel %vm1818, %v1336, 0.0
      %v1955 = vsel %vm1818, %v1337, 0.0
      %v1956 = vadd.f32 %v1954, %v1955
      %v1957 = vrot.slane %v1956, 4
      %v1958 = vadd.f32 %v1956, %v1957
      %v1959 = vrot.slane %v1958, 2
      %v1960 = vadd.f32 %v1958, %v1959
      %v1961 = vrot.slane %v1960, 1
      %v1962 = vadd.f32 %v1960, %v1961
      %v1963 = vsel %vm1818, %v1338, 0.0
      %v1964 = vsel %vm1818, %v1339, 0.0
      %v1965 = vadd.f32 %v1963, %v1964
      %v1966 = vrot.slane %v1965, 4
      %v1967 = vadd.f32 %v1965, %v1966
      %v1968 = vrot.slane %v1967, 2
      %v1969 = vadd.f32 %v1967, %v1968
      %v1970 = vrot.slane %v1969, 1
      %v1971 = vadd.f32 %v1969, %v1970
      %v1972 = vsel %vm1818, %v1340, 0.0
      %v1973 = vsel %vm1818, %v1341, 0.0
      %v1974 = vadd.f32 %v1972, %v1973
      %v1975 = vrot.slane %v1974, 4
      %v1976 = vadd.f32 %v1974, %v1975
      %v1977 = vrot.slane %v1976, 2
      %v1978 = vadd.f32 %v1976, %v1977
      %v1979 = vrot.slane %v1978, 1
      %v1980 = vadd.f32 %v1978, %v1979
      %v1981 = vsel %vm1818, %v1342, 0.0
      %v1982 = vsel %vm1818, %v1343, 0.0
      %v1983 = vadd.f32 %v1981, %v1982
      %v1984 = vrot.slane %v1983, 4
      %v1985 = vadd.f32 %v1983, %v1984
      %v1986 = vrot.slane %v1985, 2
      %v1987 = vadd.f32 %v1985, %v1986
      %v1988 = vrot.slane %v1987, 1
      %v1989 = vadd.f32 %v1987, %v1988
      %v1990 = vsel %vm1818, %v1344, 0.0
      %v1991 = vsel %vm1818, %v1345, 0.0
      %v1992 = vadd.f32 %v1990, %v1991
      %v1993 = vrot.slane %v1992, 4
      %v1994 = vadd.f32 %v1992, %v1993
      %v1995 = vrot.slane %v1994, 2
      %v1996 = vadd.f32 %v1994, %v1995
      %v1997 = vrot.slane %v1996, 1
      %v1998 = vadd.f32 %v1996, %v1997
      %v1999 = vsel %vm1818, %v1346, 0.0
      %v2000 = vsel %vm1818, %v1347, 0.0
      %v2001 = vadd.f32 %v1999, %v2000
      %v2002 = vrot.slane %v2001, 4
      %v2003 = vadd.f32 %v2001, %v2002
      %v2004 = vrot.slane %v2003, 2
      %v2005 = vadd.f32 %v2003, %v2004
      %v2006 = vrot.slane %v2005, 1
      %v2007 = vadd.f32 %v2005, %v2006
      %v2008 = vsel %vm1818, %v1348, 0.0
      %v2009 = vsel %vm1818, %v1349, 0.0
      %v2010 = vadd.f32 %v2008, %v2009
      %v2011 = vrot.slane %v2010, 4
      %v2012 = vadd.f32 %v2010, %v2011
      %v2013 = vrot.slane %v2012, 2
      %v2014 = vadd.f32 %v2012, %v2013
      %v2015 = vrot.slane %v2014, 1
      %v2016 = vadd.f32 %v2014, %v2015
      %v2017 = vsel %vm1818, %v1350, 0.0
      %v2018 = vsel %vm1818, %v1351, 0.0
      %v2019 = vadd.f32 %v2017, %v2018
      %v2020 = vrot.slane %v2019, 4
      %v2021 = vadd.f32 %v2019, %v2020
      %v2022 = vrot.slane %v2021, 2
      %v2023 = vadd.f32 %v2021, %v2022
      %v2024 = vrot.slane %v2023, 1
      %v2025 = vadd.f32 %v2023, %v2024
      %v2026 = vsel %vm1818, %v1352, 0.0
      %v2027 = vsel %vm1818, %v1353, 0.0
      %v2028 = vadd.f32 %v2026, %v2027
      %v2029 = vrot.slane %v2028, 4
      %v2030 = vadd.f32 %v2028, %v2029
      %v2031 = vrot.slane %v2030, 2
      %v2032 = vadd.f32 %v2030, %v2031
      %v2033 = vrot.slane %v2032, 1
      %v2034 = vadd.f32 %v2032, %v2033
      %v2035 = vsel %vm1818, %v1354, 0.0
      %v2036 = vsel %vm1818, %v1355, 0.0
      %v2037 = vadd.f32 %v2035, %v2036
      %v2038 = vrot.slane %v2037, 4
      %v2039 = vadd.f32 %v2037, %v2038
      %v2040 = vrot.slane %v2039, 2
      %v2041 = vadd.f32 %v2039, %v2040
      %v2042 = vrot.slane %v2041, 1
      %v2043 = vadd.f32 %v2041, %v2042
      %v2044 = vsel %vm1818, %v1356, 0.0
      %v2045 = vsel %vm1818, %v1357, 0.0
      %v2046 = vadd.f32 %v2044, %v2045
      %v2047 = vrot.slane %v2046, 4
      %v2048 = vadd.f32 %v2046, %v2047
      %v2049 = vrot.slane %v2048, 2
      %v2050 = vadd.f32 %v2048, %v2049
      %v2051 = vrot.slane %v2050, 1
      %v2052 = vadd.f32 %v2050, %v2051
      %v2053 = vsel %vm1818, %v1358, 0.0
      %v2054 = vsel %vm1818, %v1359, 0.0
      %v2055 = vadd.f32 %v2053, %v2054
      %v2056 = vrot.slane %v2055, 4
      %v2057 = vadd.f32 %v2055, %v2056
      %v2058 = vrot.slane %v2057, 2
      %v2059 = vadd.f32 %v2057, %v2058
      %v2060 = vrot.slane %v2059, 1
      %v2061 = vadd.f32 %v2059, %v2060
      %v2062 = vsel %vm1818, %v1360, 0.0
      %v2063 = vsel %vm1818, %v1361, 0.0
      %v2064 = vadd.f32 %v2062, %v2063
      %v2065 = vrot.slane %v2064, 4
      %v2066 = vadd.f32 %v2064, %v2065
      %v2067 = vrot.slane %v2066, 2
      %v2068 = vadd.f32 %v2066, %v2067
      %v2069 = vrot.slane %v2068, 1
      %v2070 = vadd.f32 %v2068, %v2069
      %v2071 = vsel %vm1818, %v1362, 0.0
      %v2072 = vsel %vm1818, %v1363, 0.0
      %v2073 = vadd.f32 %v2071, %v2072
      %v2074 = vrot.slane %v2073, 4
      %v2075 = vadd.f32 %v2073, %v2074
      %v2076 = vrot.slane %v2075, 2
      %v2077 = vadd.f32 %v2075, %v2076
      %v2078 = vrot.slane %v2077, 1
      %v2079 = vadd.f32 %v2077, %v2078
      %v2080 = vsel %vm1818, %v1364, 0.0
      %v2081 = vsel %vm1818, %v1365, 0.0
      %v2082 = vadd.f32 %v2080, %v2081
      %v2083 = vrot.slane %v2082, 4
      %v2084 = vadd.f32 %v2082, %v2083
      %v2085 = vrot.slane %v2084, 2
      %v2086 = vadd.f32 %v2084, %v2085
      %v2087 = vrot.slane %v2086, 1
      %v2088 = vadd.f32 %v2086, %v2087
      %v2089 = vsel %vm1818, %v1366, 0.0
      %v2090 = vsel %vm1818, %v1367, 0.0
      %v2091 = vadd.f32 %v2089, %v2090
      %v2092 = vrot.slane %v2091, 4
      %v2093 = vadd.f32 %v2091, %v2092
      %v2094 = vrot.slane %v2093, 2
      %v2095 = vadd.f32 %v2093, %v2094
      %v2096 = vrot.slane %v2095, 1
      %v2097 = vadd.f32 %v2095, %v2096
      %v2098 = vsel %vm1818, %v1368, 0.0
      %v2099 = vsel %vm1818, %v1369, 0.0
      %v2100 = vadd.f32 %v2098, %v2099
      %v2101 = vrot.slane %v2100, 4
      %v2102 = vadd.f32 %v2100, %v2101
      %v2103 = vrot.slane %v2102, 2
      %v2104 = vadd.f32 %v2102, %v2103
      %v2105 = vrot.slane %v2104, 1
      %v2106 = vadd.f32 %v2104, %v2105
      %v2107 = vsel %vm1818, %v1370, 0.0
      %v2108 = vsel %vm1818, %v1371, 0.0
      %v2109 = vadd.f32 %v2107, %v2108
      %v2110 = vrot.slane %v2109, 4
      %v2111 = vadd.f32 %v2109, %v2110
      %v2112 = vrot.slane %v2111, 2
      %v2113 = vadd.f32 %v2111, %v2112
      %v2114 = vrot.slane %v2113, 1
      %v2115 = vadd.f32 %v2113, %v2114
      %v2116 = vsel %vm1818, %v1372, 0.0
      %v2117 = vsel %vm1818, %v1373, 0.0
      %v2118 = vadd.f32 %v2116, %v2117
      %v2119 = vrot.slane %v2118, 4
      %v2120 = vadd.f32 %v2118, %v2119
      %v2121 = vrot.slane %v2120, 2
      %v2122 = vadd.f32 %v2120, %v2121
      %v2123 = vrot.slane %v2122, 1
      %v2124 = vadd.f32 %v2122, %v2123
      %v2125 = vsel %vm1818, %v1374, 0.0
      %v2126 = vsel %vm1818, %v1375, 0.0
      %v2127 = vadd.f32 %v2125, %v2126
      %v2128 = vrot.slane %v2127, 4
      %v2129 = vadd.f32 %v2127, %v2128
      %v2130 = vrot.slane %v2129, 2
      %v2131 = vadd.f32 %v2129, %v2130
      %v2132 = vrot.slane %v2131, 1
      %v2133 = vadd.f32 %v2131, %v2132
      %v2134 = vsel %vm1818, %v1376, 0.0
      %v2135 = vsel %vm1818, %v1377, 0.0
      %v2136 = vadd.f32 %v2134, %v2135
      %v2137 = vrot.slane %v2136, 4
      %v2138 = vadd.f32 %v2136, %v2137
      %v2139 = vrot.slane %v2138, 2
      %v2140 = vadd.f32 %v2138, %v2139
      %v2141 = vrot.slane %v2140, 1
      %v2142 = vadd.f32 %v2140, %v2141
      %v2143 = vsel %vm1818, %v1378, 0.0
      %v2144 = vsel %vm1818, %v1379, 0.0
      %v2145 = vadd.f32 %v2143, %v2144
      %v2146 = vrot.slane %v2145, 4
      %v2147 = vadd.f32 %v2145, %v2146
      %v2148 = vrot.slane %v2147, 2
      %v2149 = vadd.f32 %v2147, %v2148
      %v2150 = vrot.slane %v2149, 1
      %v2151 = vadd.f32 %v2149, %v2150
      %v2152 = vsel %vm1818, %v1380, 0.0
      %v2153 = vsel %vm1818, %v1381, 0.0
      %v2154 = vadd.f32 %v2152, %v2153
      %v2155 = vrot.slane %v2154, 4
      %v2156 = vadd.f32 %v2154, %v2155
      %v2157 = vrot.slane %v2156, 2
      %v2158 = vadd.f32 %v2156, %v2157
      %v2159 = vrot.slane %v2158, 1
      %v2160 = vadd.f32 %v2158, %v2159
      %v2161 = vsel %vm1818, %v1382, 0.0
      %v2162 = vsel %vm1818, %v1383, 0.0
      %v2163 = vadd.f32 %v2161, %v2162
      %v2164 = vrot.slane %v2163, 4
      %v2165 = vadd.f32 %v2163, %v2164
      %v2166 = vrot.slane %v2165, 2
      %v2167 = vadd.f32 %v2165, %v2166
      %v2168 = vrot.slane %v2167, 1
      %v2169 = vadd.f32 %v2167, %v2168
      %v2170 = vsel %vm1818, %v1384, 0.0
      %v2171 = vsel %vm1818, %v1385, 0.0
      %v2172 = vadd.f32 %v2170, %v2171
      %v2173 = vrot.slane %v2172, 4
      %v2174 = vadd.f32 %v2172, %v2173
      %v2175 = vrot.slane %v2174, 2
      %v2176 = vadd.f32 %v2174, %v2175
      %v2177 = vrot.slane %v2176, 1
      %v2178 = vadd.f32 %v2176, %v2177
      %v2179 = vsel %vm1818, %v1386, 0.0
      %v2180 = vsel %vm1818, %v1387, 0.0
      %v2181 = vadd.f32 %v2179, %v2180
      %v2182 = vrot.slane %v2181, 4
      %v2183 = vadd.f32 %v2181, %v2182
      %v2184 = vrot.slane %v2183, 2
      %v2185 = vadd.f32 %v2183, %v2184
      %v2186 = vrot.slane %v2185, 1
      %v2187 = vadd.f32 %v2185, %v2186
      %v2188 = vsel %vm1818, %v1388, 0.0
      %v2189 = vsel %vm1818, %v1389, 0.0
      %v2190 = vadd.f32 %v2188, %v2189
      %v2191 = vrot.slane %v2190, 4
      %v2192 = vadd.f32 %v2190, %v2191
      %v2193 = vrot.slane %v2192, 2
      %v2194 = vadd.f32 %v2192, %v2193
      %v2195 = vrot.slane %v2194, 1
      %v2196 = vadd.f32 %v2194, %v2195
      %v2197 = vsel %vm1818, %v1390, 0.0
      %v2198 = vsel %vm1818, %v1391, 0.0
      %v2199 = vadd.f32 %v2197, %v2198
      %v2200 = vrot.slane %v2199, 4
      %v2201 = vadd.f32 %v2199, %v2200
      %v2202 = vrot.slane %v2201, 2
      %v2203 = vadd.f32 %v2201, %v2202
      %v2204 = vrot.slane %v2203, 1
      %v2205 = vadd.f32 %v2203, %v2204
      %v2206 = vsel %vm1818, %v1392, 0.0
      %v2207 = vsel %vm1818, %v1393, 0.0
      %v2208 = vadd.f32 %v2206, %v2207
      %v2209 = vrot.slane %v2208, 4
      %v2210 = vadd.f32 %v2208, %v2209
      %v2211 = vrot.slane %v2210, 2
      %v2212 = vadd.f32 %v2210, %v2211
      %v2213 = vrot.slane %v2212, 1
      %v2214 = vadd.f32 %v2212, %v2213
      %v2215 = vsel %vm1818, %v1394, 0.0
      %v2216 = vsel %vm1818, %v1395, 0.0
      %v2217 = vadd.f32 %v2215, %v2216
      %v2218 = vrot.slane %v2217, 4
      %v2219 = vadd.f32 %v2217, %v2218
      %v2220 = vrot.slane %v2219, 2
      %v2221 = vadd.f32 %v2219, %v2220
      %v2222 = vrot.slane %v2221, 1
      %v2223 = vadd.f32 %v2221, %v2222
      %v2224 = vsel %vm1818, %v1396, 0.0
      %v2225 = vsel %vm1818, %v1397, 0.0
      %v2226 = vadd.f32 %v2224, %v2225
      %v2227 = vrot.slane %v2226, 4
      %v2228 = vadd.f32 %v2226, %v2227
      %v2229 = vrot.slane %v2228, 2
      %v2230 = vadd.f32 %v2228, %v2229
      %v2231 = vrot.slane %v2230, 1
      %v2232 = vadd.f32 %v2230, %v2231
      %v2233 = vsel %vm1818, %v1398, 0.0
      %v2234 = vsel %vm1818, %v1399, 0.0
      %v2235 = vadd.f32 %v2233, %v2234
      %v2236 = vrot.slane %v2235, 4
      %v2237 = vadd.f32 %v2235, %v2236
      %v2238 = vrot.slane %v2237, 2
      %v2239 = vadd.f32 %v2237, %v2238
      %v2240 = vrot.slane %v2239, 1
      %v2241 = vadd.f32 %v2239, %v2240
      %v2242 = vsel %vm1818, %v1400, 0.0
      %v2243 = vsel %vm1818, %v1401, 0.0
      %v2244 = vadd.f32 %v2242, %v2243
      %v2245 = vrot.slane %v2244, 4
      %v2246 = vadd.f32 %v2244, %v2245
      %v2247 = vrot.slane %v2246, 2
      %v2248 = vadd.f32 %v2246, %v2247
      %v2249 = vrot.slane %v2248, 1
      %v2250 = vadd.f32 %v2248, %v2249
      %v2251 = vsel %vm1818, %v1402, 0.0
      %v2252 = vsel %vm1818, %v1403, 0.0
      %v2253 = vadd.f32 %v2251, %v2252
      %v2254 = vrot.slane %v2253, 4
      %v2255 = vadd.f32 %v2253, %v2254
      %v2256 = vrot.slane %v2255, 2
      %v2257 = vadd.f32 %v2255, %v2256
      %v2258 = vrot.slane %v2257, 1
      %v2259 = vadd.f32 %v2257, %v2258
      %v2260 = vsel %vm1818, %v1404, 0.0
      %v2261 = vsel %vm1818, %v1405, 0.0
      %v2262 = vadd.f32 %v2260, %v2261
      %v2263 = vrot.slane %v2262, 4
      %v2264 = vadd.f32 %v2262, %v2263
      %v2265 = vrot.slane %v2264, 2
      %v2266 = vadd.f32 %v2264, %v2265
      %v2267 = vrot.slane %v2266, 1
      %v2268 = vadd.f32 %v2266, %v2267
      %v2269 = vsel %vm1818, %v1406, 0.0
      %v2270 = vsel %vm1818, %v1407, 0.0
      %v2271 = vadd.f32 %v2269, %v2270
      %v2272 = vrot.slane %v2271, 4
      %v2273 = vadd.f32 %v2271, %v2272
      %v2274 = vrot.slane %v2273, 2
      %v2275 = vadd.f32 %v2273, %v2274
      %v2276 = vrot.slane %v2275, 1
      %v2277 = vadd.f32 %v2275, %v2276
      %v2278 = vsel %vm1818, %v1408, 0.0
      %v2279 = vsel %vm1818, %v1409, 0.0
      %v2280 = vadd.f32 %v2278, %v2279
      %v2281 = vrot.slane %v2280, 4
      %v2282 = vadd.f32 %v2280, %v2281
      %v2283 = vrot.slane %v2282, 2
      %v2284 = vadd.f32 %v2282, %v2283
      %v2285 = vrot.slane %v2284, 1
      %v2286 = vadd.f32 %v2284, %v2285
      %v2287 = vsel %vm1818, %v1410, 0.0
      %v2288 = vsel %vm1818, %v1411, 0.0
      %v2289 = vadd.f32 %v2287, %v2288
      %v2290 = vrot.slane %v2289, 4
      %v2291 = vadd.f32 %v2289, %v2290
      %v2292 = vrot.slane %v2291, 2
      %v2293 = vadd.f32 %v2291, %v2292
      %v2294 = vrot.slane %v2293, 1
      %v2295 = vadd.f32 %v2293, %v2294
      %v2296 = vsel %vm1818, %v1412, 0.0
      %v2297 = vsel %vm1818, %v1413, 0.0
      %v2298 = vadd.f32 %v2296, %v2297
      %v2299 = vrot.slane %v2298, 4
      %v2300 = vadd.f32 %v2298, %v2299
      %v2301 = vrot.slane %v2300, 2
      %v2302 = vadd.f32 %v2300, %v2301
      %v2303 = vrot.slane %v2302, 1
      %v2304 = vadd.f32 %v2302, %v2303
      %v2305 = vsel %vm1818, %v1414, 0.0
      %v2306 = vsel %vm1818, %v1415, 0.0
      %v2307 = vadd.f32 %v2305, %v2306
      %v2308 = vrot.slane %v2307, 4
      %v2309 = vadd.f32 %v2307, %v2308
      %v2310 = vrot.slane %v2309, 2
      %v2311 = vadd.f32 %v2309, %v2310
      %v2312 = vrot.slane %v2311, 1
      %v2313 = vadd.f32 %v2311, %v2312
      %v2314 = vsel %vm1818, %v1416, 0.0
      %v2315 = vsel %vm1818, %v1417, 0.0
      %v2316 = vadd.f32 %v2314, %v2315
      %v2317 = vrot.slane %v2316, 4
      %v2318 = vadd.f32 %v2316, %v2317
      %v2319 = vrot.slane %v2318, 2
      %v2320 = vadd.f32 %v2318, %v2319
      %v2321 = vrot.slane %v2320, 1
      %v2322 = vadd.f32 %v2320, %v2321
      %v2323 = vsel %vm1818, %v1418, 0.0
      %v2324 = vsel %vm1818, %v1419, 0.0
      %v2325 = vadd.f32 %v2323, %v2324
      %v2326 = vrot.slane %v2325, 4
      %v2327 = vadd.f32 %v2325, %v2326
      %v2328 = vrot.slane %v2327, 2
      %v2329 = vadd.f32 %v2327, %v2328
      %v2330 = vrot.slane %v2329, 1
      %v2331 = vadd.f32 %v2329, %v2330
      %v2332 = vsel %vm1818, %v1420, 0.0
      %v2333 = vsel %vm1818, %v1421, 0.0
      %v2334 = vadd.f32 %v2332, %v2333
      %v2335 = vrot.slane %v2334, 4
      %v2336 = vadd.f32 %v2334, %v2335
      %v2337 = vrot.slane %v2336, 2
      %v2338 = vadd.f32 %v2336, %v2337
      %v2339 = vrot.slane %v2338, 1
      %v2340 = vadd.f32 %v2338, %v2339
      %v2341 = vsel %vm1818, %v1422, 0.0
      %v2342 = vsel %vm1818, %v1423, 0.0
      %v2343 = vadd.f32 %v2341, %v2342
      %v2344 = vrot.slane %v2343, 4
      %v2345 = vadd.f32 %v2343, %v2344
      %v2346 = vrot.slane %v2345, 2
      %v2347 = vadd.f32 %v2345, %v2346
      %v2348 = vrot.slane %v2347, 1
      %v2349 = vadd.f32 %v2347, %v2348
      %v2350 = vsel %vm1818, %v1424, 0.0
      %v2351 = vsel %vm1818, %v1425, 0.0
      %v2352 = vadd.f32 %v2350, %v2351
      %v2353 = vrot.slane %v2352, 4
      %v2354 = vadd.f32 %v2352, %v2353
      %v2355 = vrot.slane %v2354, 2
      %v2356 = vadd.f32 %v2354, %v2355
      %v2357 = vrot.slane %v2356, 1
      %v2358 = vadd.f32 %v2356, %v2357
      %v2359 = vsel %vm1818, %v1426, 0.0
      %v2360 = vsel %vm1818, %v1427, 0.0
      %v2361 = vadd.f32 %v2359, %v2360
      %v2362 = vrot.slane %v2361, 4
      %v2363 = vadd.f32 %v2361, %v2362
      %v2364 = vrot.slane %v2363, 2
      %v2365 = vadd.f32 %v2363, %v2364
      %v2366 = vrot.slane %v2365, 1
      %v2367 = vadd.f32 %v2365, %v2366
      %v2368 = vsel %vm1818, %v1428, 0.0
      %v2369 = vsel %vm1818, %v1429, 0.0
      %v2370 = vadd.f32 %v2368, %v2369
      %v2371 = vrot.slane %v2370, 4
      %v2372 = vadd.f32 %v2370, %v2371
      %v2373 = vrot.slane %v2372, 2
      %v2374 = vadd.f32 %v2372, %v2373
      %v2375 = vrot.slane %v2374, 1
      %v2376 = vadd.f32 %v2374, %v2375
      %v2377 = vsel %vm1818, %v1430, 0.0
      %v2378 = vsel %vm1818, %v1431, 0.0
      %v2379 = vadd.f32 %v2377, %v2378
      %v2380 = vrot.slane %v2379, 4
      %v2381 = vadd.f32 %v2379, %v2380
      %v2382 = vrot.slane %v2381, 2
      %v2383 = vadd.f32 %v2381, %v2382
      %v2384 = vrot.slane %v2383, 1
      %v2385 = vadd.f32 %v2383, %v2384
      %v2386 = vsel %vm1818, %v1432, 0.0
      %v2387 = vsel %vm1818, %v1433, 0.0
      %v2388 = vadd.f32 %v2386, %v2387
      %v2389 = vrot.slane %v2388, 4
      %v2390 = vadd.f32 %v2388, %v2389
      %v2391 = vrot.slane %v2390, 2
      %v2392 = vadd.f32 %v2390, %v2391
      %v2393 = vrot.slane %v2392, 1
      %v2394 = vadd.f32 %v2392, %v2393
      %v2395 = vsel %vm1818, %v1434, 0.0
      %v2396 = vsel %vm1818, %v1435, 0.0
      %v2397 = vadd.f32 %v2395, %v2396
      %v2398 = vrot.slane %v2397, 4
      %v2399 = vadd.f32 %v2397, %v2398
      %v2400 = vrot.slane %v2399, 2
      %v2401 = vadd.f32 %v2399, %v2400
      %v2402 = vrot.slane %v2401, 1
      %v2403 = vadd.f32 %v2401, %v2402
      %v2404 = vsel %vm1818, %v1436, 0.0
      %v2405 = vsel %vm1818, %v1437, 0.0
      %v2406 = vadd.f32 %v2404, %v2405
      %v2407 = vrot.slane %v2406, 4
      %v2408 = vadd.f32 %v2406, %v2407
      %v2409 = vrot.slane %v2408, 2
      %v2410 = vadd.f32 %v2408, %v2409
      %v2411 = vrot.slane %v2410, 1
      %v2412 = vadd.f32 %v2410, %v2411
      %v2413 = vsel %vm1818, %v1438, 0.0
      %v2414 = vsel %vm1818, %v1439, 0.0
      %v2415 = vadd.f32 %v2413, %v2414
      %v2416 = vrot.slane %v2415, 4
      %v2417 = vadd.f32 %v2415, %v2416
      %v2418 = vrot.slane %v2417, 2
      %v2419 = vadd.f32 %v2417, %v2418
      %v2420 = vrot.slane %v2419, 1
      %v2421 = vadd.f32 %v2419, %v2420
      %v2422 = vsel %vm1818, %v1440, 0.0
      %v2423 = vsel %vm1818, %v1441, 0.0
      %v2424 = vadd.f32 %v2422, %v2423
      %v2425 = vrot.slane %v2424, 4
      %v2426 = vadd.f32 %v2424, %v2425
      %v2427 = vrot.slane %v2426, 2
      %v2428 = vadd.f32 %v2426, %v2427
      %v2429 = vrot.slane %v2428, 1
      %v2430 = vadd.f32 %v2428, %v2429
      %v2431 = vsel %vm1818, %v1442, 0.0
      %v2432 = vsel %vm1818, %v1443, 0.0
      %v2433 = vadd.f32 %v2431, %v2432
      %v2434 = vrot.slane %v2433, 4
      %v2435 = vadd.f32 %v2433, %v2434
      %v2436 = vrot.slane %v2435, 2
      %v2437 = vadd.f32 %v2435, %v2436
      %v2438 = vrot.slane %v2437, 1
      %v2439 = vadd.f32 %v2437, %v2438
      %v2440 = vsel %vm1818, %v1444, 0.0
      %v2441 = vsel %vm1818, %v1445, 0.0
      %v2442 = vadd.f32 %v2440, %v2441
      %v2443 = vrot.slane %v2442, 4
      %v2444 = vadd.f32 %v2442, %v2443
      %v2445 = vrot.slane %v2444, 2
      %v2446 = vadd.f32 %v2444, %v2445
      %v2447 = vrot.slane %v2446, 1
      %v2448 = vadd.f32 %v2446, %v2447
      %v2449 = vsel %vm1818, %v1446, 0.0
      %v2450 = vsel %vm1818, %v1447, 0.0
      %v2451 = vadd.f32 %v2449, %v2450
      %v2452 = vrot.slane %v2451, 4
      %v2453 = vadd.f32 %v2451, %v2452
      %v2454 = vrot.slane %v2453, 2
      %v2455 = vadd.f32 %v2453, %v2454
      %v2456 = vrot.slane %v2455, 1
      %v2457 = vadd.f32 %v2455, %v2456
      %v2458 = vsel %vm1818, %v1448, 0.0
      %v2459 = vsel %vm1818, %v1449, 0.0
      %v2460 = vadd.f32 %v2458, %v2459
      %v2461 = vrot.slane %v2460, 4
      %v2462 = vadd.f32 %v2460, %v2461
      %v2463 = vrot.slane %v2462, 2
      %v2464 = vadd.f32 %v2462, %v2463
      %v2465 = vrot.slane %v2464, 1
      %v2466 = vadd.f32 %v2464, %v2465
      %v2467 = vsel %vm1818, %v1450, 0.0
      %v2468 = vsel %vm1818, %v1451, 0.0
      %v2469 = vadd.f32 %v2467, %v2468
      %v2470 = vrot.slane %v2469, 4
      %v2471 = vadd.f32 %v2469, %v2470
      %v2472 = vrot.slane %v2471, 2
      %v2473 = vadd.f32 %v2471, %v2472
      %v2474 = vrot.slane %v2473, 1
      %v2475 = vadd.f32 %v2473, %v2474
      %v2476 = vsel %vm1818, %v1452, 0.0
      %v2477 = vsel %vm1818, %v1453, 0.0
      %v2478 = vadd.f32 %v2476, %v2477
      %v2479 = vrot.slane %v2478, 4
      %v2480 = vadd.f32 %v2478, %v2479
      %v2481 = vrot.slane %v2480, 2
      %v2482 = vadd.f32 %v2480, %v2481
      %v2483 = vrot.slane %v2482, 1
      %v2484 = vadd.f32 %v2482, %v2483
      %v2485 = vsel %vm1818, %v1454, 0.0
      %v2486 = vsel %vm1818, %v1455, 0.0
      %v2487 = vadd.f32 %v2485, %v2486
      %v2488 = vrot.slane %v2487, 4
      %v2489 = vadd.f32 %v2487, %v2488
      %v2490 = vrot.slane %v2489, 2
      %v2491 = vadd.f32 %v2489, %v2490
      %v2492 = vrot.slane %v2491, 1
      %v2493 = vadd.f32 %v2491, %v2492
      %v2494 = vsel %vm1818, %v1456, 0.0
      %v2495 = vsel %vm1818, %v1457, 0.0
      %v2496 = vadd.f32 %v2494, %v2495
      %v2497 = vrot.slane %v2496, 4
      %v2498 = vadd.f32 %v2496, %v2497
      %v2499 = vrot.slane %v2498, 2
      %v2500 = vadd.f32 %v2498, %v2499
      %v2501 = vrot.slane %v2500, 1
      %v2502 = vadd.f32 %v2500, %v2501
      %v2503 = vsel %vm1818, %v1458, 0.0
      %v2504 = vsel %vm1818, %v1459, 0.0
      %v2505 = vadd.f32 %v2503, %v2504
      %v2506 = vrot.slane %v2505, 4
      %v2507 = vadd.f32 %v2505, %v2506
      %v2508 = vrot.slane %v2507, 2
      %v2509 = vadd.f32 %v2507, %v2508
      %v2510 = vrot.slane %v2509, 1
      %v2511 = vadd.f32 %v2509, %v2510
      %v2512 = vsel %vm1818, %v1460, 0.0
      %v2513 = vsel %vm1818, %v1461, 0.0
      %v2514 = vadd.f32 %v2512, %v2513
      %v2515 = vrot.slane %v2514, 4
      %v2516 = vadd.f32 %v2514, %v2515
      %v2517 = vrot.slane %v2516, 2
      %v2518 = vadd.f32 %v2516, %v2517
      %v2519 = vrot.slane %v2518, 1
      %v2520 = vadd.f32 %v2518, %v2519
      %v2521 = vsel %vm1818, %v1462, 0.0
      %v2522 = vsel %vm1818, %v1463, 0.0
      %v2523 = vadd.f32 %v2521, %v2522
      %v2524 = vrot.slane %v2523, 4
      %v2525 = vadd.f32 %v2523, %v2524
      %v2526 = vrot.slane %v2525, 2
      %v2527 = vadd.f32 %v2525, %v2526
      %v2528 = vrot.slane %v2527, 1
      %v2529 = vadd.f32 %v2527, %v2528
      %v2530 = vsel %vm1818, %v1464, 0.0
      %v2531 = vsel %vm1818, %v1465, 0.0
      %v2532 = vadd.f32 %v2530, %v2531
      %v2533 = vrot.slane %v2532, 4
      %v2534 = vadd.f32 %v2532, %v2533
      %v2535 = vrot.slane %v2534, 2
      %v2536 = vadd.f32 %v2534, %v2535
      %v2537 = vrot.slane %v2536, 1
      %v2538 = vadd.f32 %v2536, %v2537
      %v2539 = vsel %vm1818, %v1466, 0.0
      %v2540 = vsel %vm1818, %v1467, 0.0
      %v2541 = vadd.f32 %v2539, %v2540
      %v2542 = vrot.slane %v2541, 4
      %v2543 = vadd.f32 %v2541, %v2542
      %v2544 = vrot.slane %v2543, 2
      %v2545 = vadd.f32 %v2543, %v2544
      %v2546 = vrot.slane %v2545, 1
      %v2547 = vadd.f32 %v2545, %v2546
      %v2548 = vsel %vm1818, %v1468, 0.0
      %v2549 = vsel %vm1818, %v1469, 0.0
      %v2550 = vadd.f32 %v2548, %v2549
      %v2551 = vrot.slane %v2550, 4
      %v2552 = vadd.f32 %v2550, %v2551
      %v2553 = vrot.slane %v2552, 2
      %v2554 = vadd.f32 %v2552, %v2553
      %v2555 = vrot.slane %v2554, 1
      %v2556 = vadd.f32 %v2554, %v2555
      %v2557 = vsel %vm1818, %v1470, 0.0
      %v2558 = vsel %vm1818, %v1471, 0.0
      %v2559 = vadd.f32 %v2557, %v2558
      %v2560 = vrot.slane %v2559, 4
      %v2561 = vadd.f32 %v2559, %v2560
      %v2562 = vrot.slane %v2561, 2
      %v2563 = vadd.f32 %v2561, %v2562
      %v2564 = vrot.slane %v2563, 1
      %v2565 = vadd.f32 %v2563, %v2564
      %v2566 = vsel %vm1818, %v1472, 0.0
      %v2567 = vsel %vm1818, %v1473, 0.0
      %v2568 = vadd.f32 %v2566, %v2567
      %v2569 = vrot.slane %v2568, 4
      %v2570 = vadd.f32 %v2568, %v2569
      %v2571 = vrot.slane %v2570, 2
      %v2572 = vadd.f32 %v2570, %v2571
      %v2573 = vrot.slane %v2572, 1
      %v2574 = vadd.f32 %v2572, %v2573
      %v2575 = vsel %vm1818, %v1474, 0.0
      %v2576 = vsel %vm1818, %v1475, 0.0
      %v2577 = vadd.f32 %v2575, %v2576
      %v2578 = vrot.slane %v2577, 4
      %v2579 = vadd.f32 %v2577, %v2578
      %v2580 = vrot.slane %v2579, 2
      %v2581 = vadd.f32 %v2579, %v2580
      %v2582 = vrot.slane %v2581, 1
      %v2583 = vadd.f32 %v2581, %v2582
      %v2584 = vsel %vm1818, %v1476, 0.0
      %v2585 = vsel %vm1818, %v1477, 0.0
      %v2586 = vadd.f32 %v2584, %v2585
      %v2587 = vrot.slane %v2586, 4
      %v2588 = vadd.f32 %v2586, %v2587
      %v2589 = vrot.slane %v2588, 2
      %v2590 = vadd.f32 %v2588, %v2589
      %v2591 = vrot.slane %v2590, 1
      %v2592 = vadd.f32 %v2590, %v2591
      %v2593 = vsel %vm1818, %v1478, 0.0
      %v2594 = vsel %vm1818, %v1479, 0.0
      %v2595 = vadd.f32 %v2593, %v2594
      %v2596 = vrot.slane %v2595, 4
      %v2597 = vadd.f32 %v2595, %v2596
      %v2598 = vrot.slane %v2597, 2
      %v2599 = vadd.f32 %v2597, %v2598
      %v2600 = vrot.slane %v2599, 1
      %v2601 = vadd.f32 %v2599, %v2600
      %v2602 = vsel %vm1818, %v1480, 0.0
      %v2603 = vsel %vm1818, %v1481, 0.0
      %v2604 = vadd.f32 %v2602, %v2603
      %v2605 = vrot.slane %v2604, 4
      %v2606 = vadd.f32 %v2604, %v2605
      %v2607 = vrot.slane %v2606, 2
      %v2608 = vadd.f32 %v2606, %v2607
      %v2609 = vrot.slane %v2608, 1
      %v2610 = vadd.f32 %v2608, %v2609
      %v2611 = vsel %vm1818, %v1482, 0.0
      %v2612 = vsel %vm1818, %v1483, 0.0
      %v2613 = vadd.f32 %v2611, %v2612
      %v2614 = vrot.slane %v2613, 4
      %v2615 = vadd.f32 %v2613, %v2614
      %v2616 = vrot.slane %v2615, 2
      %v2617 = vadd.f32 %v2615, %v2616
      %v2618 = vrot.slane %v2617, 1
      %v2619 = vadd.f32 %v2617, %v2618
      %v2620 = vsel %vm1818, %v1484, 0.0
      %v2621 = vsel %vm1818, %v1485, 0.0
      %v2622 = vadd.f32 %v2620, %v2621
      %v2623 = vrot.slane %v2622, 4
      %v2624 = vadd.f32 %v2622, %v2623
      %v2625 = vrot.slane %v2624, 2
      %v2626 = vadd.f32 %v2624, %v2625
      %v2627 = vrot.slane %v2626, 1
      %v2628 = vadd.f32 %v2626, %v2627
      %v2629 = vsel %vm1818, %v1486, 0.0
      %v2630 = vsel %vm1818, %v1487, 0.0
      %v2631 = vadd.f32 %v2629, %v2630
      %v2632 = vrot.slane %v2631, 4
      %v2633 = vadd.f32 %v2631, %v2632
      %v2634 = vrot.slane %v2633, 2
      %v2635 = vadd.f32 %v2633, %v2634
      %v2636 = vrot.slane %v2635, 1
      %v2637 = vadd.f32 %v2635, %v2636
      %v2638 = vsel %vm1818, %v1488, 0.0
      %v2639 = vsel %vm1818, %v1489, 0.0
      %v2640 = vadd.f32 %v2638, %v2639
      %v2641 = vrot.slane %v2640, 4
      %v2642 = vadd.f32 %v2640, %v2641
      %v2643 = vrot.slane %v2642, 2
      %v2644 = vadd.f32 %v2642, %v2643
      %v2645 = vrot.slane %v2644, 1
      %v2646 = vadd.f32 %v2644, %v2645
      %v2647 = vsel %vm1818, %v1490, 0.0
      %v2648 = vsel %vm1818, %v1491, 0.0
      %v2649 = vadd.f32 %v2647, %v2648
      %v2650 = vrot.slane %v2649, 4
      %v2651 = vadd.f32 %v2649, %v2650
      %v2652 = vrot.slane %v2651, 2
      %v2653 = vadd.f32 %v2651, %v2652
      %v2654 = vrot.slane %v2653, 1
      %v2655 = vadd.f32 %v2653, %v2654
      %v2656 = vsel %vm1818, %v1492, 0.0
      %v2657 = vsel %vm1818, %v1493, 0.0
      %v2658 = vadd.f32 %v2656, %v2657
      %v2659 = vrot.slane %v2658, 4
      %v2660 = vadd.f32 %v2658, %v2659
      %v2661 = vrot.slane %v2660, 2
      %v2662 = vadd.f32 %v2660, %v2661
      %v2663 = vrot.slane %v2662, 1
      %v2664 = vadd.f32 %v2662, %v2663
      %v2665 = vsel %vm1818, %v1494, 0.0
      %v2666 = vsel %vm1818, %v1495, 0.0
      %v2667 = vadd.f32 %v2665, %v2666
      %v2668 = vrot.slane %v2667, 4
      %v2669 = vadd.f32 %v2667, %v2668
      %v2670 = vrot.slane %v2669, 2
      %v2671 = vadd.f32 %v2669, %v2670
      %v2672 = vrot.slane %v2671, 1
      %v2673 = vadd.f32 %v2671, %v2672
      %v2674 = vsel %vm1818, %v1496, 0.0
      %v2675 = vsel %vm1818, %v1497, 0.0
      %v2676 = vadd.f32 %v2674, %v2675
      %v2677 = vrot.slane %v2676, 4
      %v2678 = vadd.f32 %v2676, %v2677
      %v2679 = vrot.slane %v2678, 2
      %v2680 = vadd.f32 %v2678, %v2679
      %v2681 = vrot.slane %v2680, 1
      %v2682 = vadd.f32 %v2680, %v2681
      %v2683 = vsel %vm1818, %v1498, 0.0
      %v2684 = vsel %vm1818, %v1499, 0.0
      %v2685 = vadd.f32 %v2683, %v2684
      %v2686 = vrot.slane %v2685, 4
      %v2687 = vadd.f32 %v2685, %v2686
      %v2688 = vrot.slane %v2687, 2
      %v2689 = vadd.f32 %v2687, %v2688
      %v2690 = vrot.slane %v2689, 1
      %v2691 = vadd.f32 %v2689, %v2690
      %v2692 = vsel %vm1818, %v1500, 0.0
      %v2693 = vsel %vm1818, %v1501, 0.0
      %v2694 = vadd.f32 %v2692, %v2693
      %v2695 = vrot.slane %v2694, 4
      %v2696 = vadd.f32 %v2694, %v2695
      %v2697 = vrot.slane %v2696, 2
      %v2698 = vadd.f32 %v2696, %v2697
      %v2699 = vrot.slane %v2698, 1
      %v2700 = vadd.f32 %v2698, %v2699
      %v2701 = vsel %vm1818, %v1502, 0.0
      %v2702 = vsel %vm1818, %v1503, 0.0
      %v2703 = vadd.f32 %v2701, %v2702
      %v2704 = vrot.slane %v2703, 4
      %v2705 = vadd.f32 %v2703, %v2704
      %v2706 = vrot.slane %v2705, 2
      %v2707 = vadd.f32 %v2705, %v2706
      %v2708 = vrot.slane %v2707, 1
      %v2709 = vadd.f32 %v2707, %v2708
      %v2710 = vsel %vm1818, %v1504, 0.0
      %v2711 = vsel %vm1818, %v1505, 0.0
      %v2712 = vadd.f32 %v2710, %v2711
      %v2713 = vrot.slane %v2712, 4
      %v2714 = vadd.f32 %v2712, %v2713
      %v2715 = vrot.slane %v2714, 2
      %v2716 = vadd.f32 %v2714, %v2715
      %v2717 = vrot.slane %v2716, 1
      %v2718 = vadd.f32 %v2716, %v2717
      %v2719 = vsel %vm1818, %v1506, 0.0
      %v2720 = vsel %vm1818, %v1507, 0.0
      %v2721 = vadd.f32 %v2719, %v2720
      %v2722 = vrot.slane %v2721, 4
      %v2723 = vadd.f32 %v2721, %v2722
      %v2724 = vrot.slane %v2723, 2
      %v2725 = vadd.f32 %v2723, %v2724
      %v2726 = vrot.slane %v2725, 1
      %v2727 = vadd.f32 %v2725, %v2726
      %v2728 = vsel %vm1818, %v1508, 0.0
      %v2729 = vsel %vm1818, %v1509, 0.0
      %v2730 = vadd.f32 %v2728, %v2729
      %v2731 = vrot.slane %v2730, 4
      %v2732 = vadd.f32 %v2730, %v2731
      %v2733 = vrot.slane %v2732, 2
      %v2734 = vadd.f32 %v2732, %v2733
      %v2735 = vrot.slane %v2734, 1
      %v2736 = vadd.f32 %v2734, %v2735
      %v2737 = vsel %vm1818, %v1510, 0.0
      %v2738 = vsel %vm1818, %v1511, 0.0
      %v2739 = vadd.f32 %v2737, %v2738
      %v2740 = vrot.slane %v2739, 4
      %v2741 = vadd.f32 %v2739, %v2740
      %v2742 = vrot.slane %v2741, 2
      %v2743 = vadd.f32 %v2741, %v2742
      %v2744 = vrot.slane %v2743, 1
      %v2745 = vadd.f32 %v2743, %v2744
      %v2746 = vsel %vm1818, %v1512, 0.0
      %v2747 = vsel %vm1818, %v1513, 0.0
      %v2748 = vadd.f32 %v2746, %v2747
      %v2749 = vrot.slane %v2748, 4
      %v2750 = vadd.f32 %v2748, %v2749
      %v2751 = vrot.slane %v2750, 2
      %v2752 = vadd.f32 %v2750, %v2751
      %v2753 = vrot.slane %v2752, 1
      %v2754 = vadd.f32 %v2752, %v2753
      %v2755 = vsel %vm1818, %v1514, 0.0
      %v2756 = vsel %vm1818, %v1515, 0.0
      %v2757 = vadd.f32 %v2755, %v2756
      %v2758 = vrot.slane %v2757, 4
      %v2759 = vadd.f32 %v2757, %v2758
      %v2760 = vrot.slane %v2759, 2
      %v2761 = vadd.f32 %v2759, %v2760
      %v2762 = vrot.slane %v2761, 1
      %v2763 = vadd.f32 %v2761, %v2762
      %v2764 = vsel %vm1818, %v1516, 0.0
      %v2765 = vsel %vm1818, %v1517, 0.0
      %v2766 = vadd.f32 %v2764, %v2765
      %v2767 = vrot.slane %v2766, 4
      %v2768 = vadd.f32 %v2766, %v2767
      %v2769 = vrot.slane %v2768, 2
      %v2770 = vadd.f32 %v2768, %v2769
      %v2771 = vrot.slane %v2770, 1
      %v2772 = vadd.f32 %v2770, %v2771
      %v2773 = vsel %vm1818, %v1518, 0.0
      %v2774 = vsel %vm1818, %v1519, 0.0
      %v2775 = vadd.f32 %v2773, %v2774
      %v2776 = vrot.slane %v2775, 4
      %v2777 = vadd.f32 %v2775, %v2776
      %v2778 = vrot.slane %v2777, 2
      %v2779 = vadd.f32 %v2777, %v2778
      %v2780 = vrot.slane %v2779, 1
      %v2781 = vadd.f32 %v2779, %v2780
      %v2782 = vsel %vm1818, %v1520, 0.0
      %v2783 = vsel %vm1818, %v1521, 0.0
      %v2784 = vadd.f32 %v2782, %v2783
      %v2785 = vrot.slane %v2784, 4
      %v2786 = vadd.f32 %v2784, %v2785
      %v2787 = vrot.slane %v2786, 2
      %v2788 = vadd.f32 %v2786, %v2787
      %v2789 = vrot.slane %v2788, 1
      %v2790 = vadd.f32 %v2788, %v2789
      %v2791 = vsel %vm1818, %v1522, 0.0
      %v2792 = vsel %vm1818, %v1523, 0.0
      %v2793 = vadd.f32 %v2791, %v2792
      %v2794 = vrot.slane %v2793, 4
      %v2795 = vadd.f32 %v2793, %v2794
      %v2796 = vrot.slane %v2795, 2
      %v2797 = vadd.f32 %v2795, %v2796
      %v2798 = vrot.slane %v2797, 1
      %v2799 = vadd.f32 %v2797, %v2798
      %v2800 = vsel %vm1818, %v1524, 0.0
      %v2801 = vsel %vm1818, %v1525, 0.0
      %v2802 = vadd.f32 %v2800, %v2801
      %v2803 = vrot.slane %v2802, 4
      %v2804 = vadd.f32 %v2802, %v2803
      %v2805 = vrot.slane %v2804, 2
      %v2806 = vadd.f32 %v2804, %v2805
      %v2807 = vrot.slane %v2806, 1
      %v2808 = vadd.f32 %v2806, %v2807
      %v2809 = vsel %vm1818, %v1526, 0.0
      %v2810 = vsel %vm1818, %v1527, 0.0
      %v2811 = vadd.f32 %v2809, %v2810
      %v2812 = vrot.slane %v2811, 4
      %v2813 = vadd.f32 %v2811, %v2812
      %v2814 = vrot.slane %v2813, 2
      %v2815 = vadd.f32 %v2813, %v2814
      %v2816 = vrot.slane %v2815, 1
      %v2817 = vadd.f32 %v2815, %v2816
      %v2818 = vsel %vm1818, %v1528, 0.0
      %v2819 = vsel %vm1818, %v1529, 0.0
      %v2820 = vadd.f32 %v2818, %v2819
      %v2821 = vrot.slane %v2820, 4
      %v2822 = vadd.f32 %v2820, %v2821
      %v2823 = vrot.slane %v2822, 2
      %v2824 = vadd.f32 %v2822, %v2823
      %v2825 = vrot.slane %v2824, 1
      %v2826 = vadd.f32 %v2824, %v2825
      %v2827 = vsel %vm1818, %v1530, 0.0
      %v2828 = vsel %vm1818, %v1531, 0.0
      %v2829 = vadd.f32 %v2827, %v2828
      %v2830 = vrot.slane %v2829, 4
      %v2831 = vadd.f32 %v2829, %v2830
      %v2832 = vrot.slane %v2831, 2
      %v2833 = vadd.f32 %v2831, %v2832
      %v2834 = vrot.slane %v2833, 1
      %v2835 = vadd.f32 %v2833, %v2834
      %v2836 = vsel %vm1818, %v1532, 0.0
      %v2837 = vsel %vm1818, %v1533, 0.0
      %v2838 = vadd.f32 %v2836, %v2837
      %v2839 = vrot.slane %v2838, 4
      %v2840 = vadd.f32 %v2838, %v2839
      %v2841 = vrot.slane %v2840, 2
      %v2842 = vadd.f32 %v2840, %v2841
      %v2843 = vrot.slane %v2842, 1
      %v2844 = vadd.f32 %v2842, %v2843
      %v2845 = vsel %vm1818, %v1534, 0.0
      %v2846 = vsel %vm1818, %v1535, 0.0
      %v2847 = vadd.f32 %v2845, %v2846
      %v2848 = vrot.slane %v2847, 4
      %v2849 = vadd.f32 %v2847, %v2848
      %v2850 = vrot.slane %v2849, 2
      %v2851 = vadd.f32 %v2849, %v2850
      %v2852 = vrot.slane %v2851, 1
      %v2853 = vadd.f32 %v2851, %v2852
      %v2854 = vsel %vm1818, %v1536, 0.0
      %v2855 = vsel %vm1818, %v1537, 0.0
      %v2856 = vadd.f32 %v2854, %v2855
      %v2857 = vrot.slane %v2856, 4
      %v2858 = vadd.f32 %v2856, %v2857
      %v2859 = vrot.slane %v2858, 2
      %v2860 = vadd.f32 %v2858, %v2859
      %v2861 = vrot.slane %v2860, 1
      %v2862 = vadd.f32 %v2860, %v2861
      %v2863 = vsel %vm1818, %v1538, 0.0
      %v2864 = vsel %vm1818, %v1539, 0.0
      %v2865 = vadd.f32 %v2863, %v2864
      %v2866 = vrot.slane %v2865, 4
      %v2867 = vadd.f32 %v2865, %v2866
      %v2868 = vrot.slane %v2867, 2
      %v2869 = vadd.f32 %v2867, %v2868
      %v2870 = vrot.slane %v2869, 1
      %v2871 = vadd.f32 %v2869, %v2870
      %v2872 = vsel %vm1818, %v1540, 0.0
      %v2873 = vsel %vm1818, %v1541, 0.0
      %v2874 = vadd.f32 %v2872, %v2873
      %v2875 = vrot.slane %v2874, 4
      %v2876 = vadd.f32 %v2874, %v2875
      %v2877 = vrot.slane %v2876, 2
      %v2878 = vadd.f32 %v2876, %v2877
      %v2879 = vrot.slane %v2878, 1
      %v2880 = vadd.f32 %v2878, %v2879
      %v2881 = vsel %vm1818, %v1542, 0.0
      %v2882 = vsel %vm1818, %v1543, 0.0
      %v2883 = vadd.f32 %v2881, %v2882
      %v2884 = vrot.slane %v2883, 4
      %v2885 = vadd.f32 %v2883, %v2884
      %v2886 = vrot.slane %v2885, 2
      %v2887 = vadd.f32 %v2885, %v2886
      %v2888 = vrot.slane %v2887, 1
      %v2889 = vadd.f32 %v2887, %v2888
      %v2890 = vsel %vm1818, %v1544, 0.0
      %v2891 = vsel %vm1818, %v1545, 0.0
      %v2892 = vadd.f32 %v2890, %v2891
      %v2893 = vrot.slane %v2892, 4
      %v2894 = vadd.f32 %v2892, %v2893
      %v2895 = vrot.slane %v2894, 2
      %v2896 = vadd.f32 %v2894, %v2895
      %v2897 = vrot.slane %v2896, 1
      %v2898 = vadd.f32 %v2896, %v2897
      %v2899 = vsel %vm1818, %v1546, 0.0
      %v2900 = vsel %vm1818, %v1547, 0.0
      %v2901 = vadd.f32 %v2899, %v2900
      %v2902 = vrot.slane %v2901, 4
      %v2903 = vadd.f32 %v2901, %v2902
      %v2904 = vrot.slane %v2903, 2
      %v2905 = vadd.f32 %v2903, %v2904
      %v2906 = vrot.slane %v2905, 1
      %v2907 = vadd.f32 %v2905, %v2906
      %v2908 = vsel %vm1818, %v1548, 0.0
      %v2909 = vsel %vm1818, %v1549, 0.0
      %v2910 = vadd.f32 %v2908, %v2909
      %v2911 = vrot.slane %v2910, 4
      %v2912 = vadd.f32 %v2910, %v2911
      %v2913 = vrot.slane %v2912, 2
      %v2914 = vadd.f32 %v2912, %v2913
      %v2915 = vrot.slane %v2914, 1
      %v2916 = vadd.f32 %v2914, %v2915
      %v2917 = vsel %vm1818, %v1550, 0.0
      %v2918 = vsel %vm1818, %v1551, 0.0
      %v2919 = vadd.f32 %v2917, %v2918
      %v2920 = vrot.slane %v2919, 4
      %v2921 = vadd.f32 %v2919, %v2920
      %v2922 = vrot.slane %v2921, 2
      %v2923 = vadd.f32 %v2921, %v2922
      %v2924 = vrot.slane %v2923, 1
      %v2925 = vadd.f32 %v2923, %v2924
      %v2926 = vsel %vm1818, %v1552, 0.0
      %v2927 = vsel %vm1818, %v1553, 0.0
      %v2928 = vadd.f32 %v2926, %v2927
      %v2929 = vrot.slane %v2928, 4
      %v2930 = vadd.f32 %v2928, %v2929
      %v2931 = vrot.slane %v2930, 2
      %v2932 = vadd.f32 %v2930, %v2931
      %v2933 = vrot.slane %v2932, 1
      %v2934 = vadd.f32 %v2932, %v2933
      %v2935 = vsel %vm1818, %v1554, 0.0
      %v2936 = vsel %vm1818, %v1555, 0.0
      %v2937 = vadd.f32 %v2935, %v2936
      %v2938 = vrot.slane %v2937, 4
      %v2939 = vadd.f32 %v2937, %v2938
      %v2940 = vrot.slane %v2939, 2
      %v2941 = vadd.f32 %v2939, %v2940
      %v2942 = vrot.slane %v2941, 1
      %v2943 = vadd.f32 %v2941, %v2942
      %v2944 = vsel %vm1818, %v1556, 0.0
      %v2945 = vsel %vm1818, %v1557, 0.0
      %v2946 = vadd.f32 %v2944, %v2945
      %v2947 = vrot.slane %v2946, 4
      %v2948 = vadd.f32 %v2946, %v2947
      %v2949 = vrot.slane %v2948, 2
      %v2950 = vadd.f32 %v2948, %v2949
      %v2951 = vrot.slane %v2950, 1
      %v2952 = vadd.f32 %v2950, %v2951
      %v2953 = vsel %vm1818, %v1558, 0.0
      %v2954 = vsel %vm1818, %v1559, 0.0
      %v2955 = vadd.f32 %v2953, %v2954
      %v2956 = vrot.slane %v2955, 4
      %v2957 = vadd.f32 %v2955, %v2956
      %v2958 = vrot.slane %v2957, 2
      %v2959 = vadd.f32 %v2957, %v2958
      %v2960 = vrot.slane %v2959, 1
      %v2961 = vadd.f32 %v2959, %v2960
      %v2962 = vsel %vm1818, %v1560, 0.0
      %v2963 = vsel %vm1818, %v1561, 0.0
      %v2964 = vadd.f32 %v2962, %v2963
      %v2965 = vrot.slane %v2964, 4
      %v2966 = vadd.f32 %v2964, %v2965
      %v2967 = vrot.slane %v2966, 2
      %v2968 = vadd.f32 %v2966, %v2967
      %v2969 = vrot.slane %v2968, 1
      %v2970 = vadd.f32 %v2968, %v2969
      %v2971 = vsel %vm1818, %v1562, 0.0
      %v2972 = vsel %vm1818, %v1563, 0.0
      %v2973 = vadd.f32 %v2971, %v2972
      %v2974 = vrot.slane %v2973, 4
      %v2975 = vadd.f32 %v2973, %v2974
      %v2976 = vrot.slane %v2975, 2
      %v2977 = vadd.f32 %v2975, %v2976
      %v2978 = vrot.slane %v2977, 1
      %v2979 = vadd.f32 %v2977, %v2978
      %v2980 = vsel %vm1818, %v1564, 0.0
      %v2981 = vsel %vm1818, %v1565, 0.0
      %v2982 = vadd.f32 %v2980, %v2981
      %v2983 = vrot.slane %v2982, 4
      %v2984 = vadd.f32 %v2982, %v2983
      %v2985 = vrot.slane %v2984, 2
      %v2986 = vadd.f32 %v2984, %v2985
      %v2987 = vrot.slane %v2986, 1
      %v2988 = vadd.f32 %v2986, %v2987
      %v2989 = vsel %vm1818, %v1566, 0.0
      %v2990 = vsel %vm1818, %v1567, 0.0
      %v2991 = vadd.f32 %v2989, %v2990
      %v2992 = vrot.slane %v2991, 4
      %v2993 = vadd.f32 %v2991, %v2992
      %v2994 = vrot.slane %v2993, 2
      %v2995 = vadd.f32 %v2993, %v2994
      %v2996 = vrot.slane %v2995, 1
      %v2997 = vadd.f32 %v2995, %v2996
      %v2998 = vsel %vm1818, %v1568, 0.0
      %v2999 = vsel %vm1818, %v1569, 0.0
      %v3000 = vadd.f32 %v2998, %v2999
      %v3001 = vrot.slane %v3000, 4
      %v3002 = vadd.f32 %v3000, %v3001
      %v3003 = vrot.slane %v3002, 2
      %v3004 = vadd.f32 %v3002, %v3003
      %v3005 = vrot.slane %v3004, 1
      %v3006 = vadd.f32 %v3004, %v3005
      %v3007 = vsel %vm1818, %v1570, 0.0
      %v3008 = vsel %vm1818, %v1571, 0.0
      %v3009 = vadd.f32 %v3007, %v3008
      %v3010 = vrot.slane %v3009, 4
      %v3011 = vadd.f32 %v3009, %v3010
      %v3012 = vrot.slane %v3011, 2
      %v3013 = vadd.f32 %v3011, %v3012
      %v3014 = vrot.slane %v3013, 1
      %v3015 = vadd.f32 %v3013, %v3014
      %v3016 = vsel %vm1818, %v1572, 0.0
      %v3017 = vsel %vm1818, %v1573, 0.0
      %v3018 = vadd.f32 %v3016, %v3017
      %v3019 = vrot.slane %v3018, 4
      %v3020 = vadd.f32 %v3018, %v3019
      %v3021 = vrot.slane %v3020, 2
      %v3022 = vadd.f32 %v3020, %v3021
      %v3023 = vrot.slane %v3022, 1
      %v3024 = vadd.f32 %v3022, %v3023
      %v3025 = vsel %vm1818, %v1574, 0.0
      %v3026 = vsel %vm1818, %v1575, 0.0
      %v3027 = vadd.f32 %v3025, %v3026
      %v3028 = vrot.slane %v3027, 4
      %v3029 = vadd.f32 %v3027, %v3028
      %v3030 = vrot.slane %v3029, 2
      %v3031 = vadd.f32 %v3029, %v3030
      %v3032 = vrot.slane %v3031, 1
      %v3033 = vadd.f32 %v3031, %v3032
      %v3034 = vsel %vm1818, %v1576, 0.0
      %v3035 = vsel %vm1818, %v1577, 0.0
      %v3036 = vadd.f32 %v3034, %v3035
      %v3037 = vrot.slane %v3036, 4
      %v3038 = vadd.f32 %v3036, %v3037
      %v3039 = vrot.slane %v3038, 2
      %v3040 = vadd.f32 %v3038, %v3039
      %v3041 = vrot.slane %v3040, 1
      %v3042 = vadd.f32 %v3040, %v3041
      %v3043 = vsel %vm1818, %v1578, 0.0
      %v3044 = vsel %vm1818, %v1579, 0.0
      %v3045 = vadd.f32 %v3043, %v3044
      %v3046 = vrot.slane %v3045, 4
      %v3047 = vadd.f32 %v3045, %v3046
      %v3048 = vrot.slane %v3047, 2
      %v3049 = vadd.f32 %v3047, %v3048
      %v3050 = vrot.slane %v3049, 1
      %v3051 = vadd.f32 %v3049, %v3050
      %v3052 = vsel %vm1818, %v1580, 0.0
      %v3053 = vsel %vm1818, %v1581, 0.0
      %v3054 = vadd.f32 %v3052, %v3053
      %v3055 = vrot.slane %v3054, 4
      %v3056 = vadd.f32 %v3054, %v3055
      %v3057 = vrot.slane %v3056, 2
      %v3058 = vadd.f32 %v3056, %v3057
      %v3059 = vrot.slane %v3058, 1
      %v3060 = vadd.f32 %v3058, %v3059
      %v3061 = vsel %vm1818, %v1582, 0.0
      %v3062 = vsel %vm1818, %v1583, 0.0
      %v3063 = vadd.f32 %v3061, %v3062
      %v3064 = vrot.slane %v3063, 4
      %v3065 = vadd.f32 %v3063, %v3064
      %v3066 = vrot.slane %v3065, 2
      %v3067 = vadd.f32 %v3065, %v3066
      %v3068 = vrot.slane %v3067, 1
      %v3069 = vadd.f32 %v3067, %v3068
      %v3070 = vsel %vm1818, %v1584, 0.0
      %v3071 = vsel %vm1818, %v1585, 0.0
      %v3072 = vadd.f32 %v3070, %v3071
      %v3073 = vrot.slane %v3072, 4
      %v3074 = vadd.f32 %v3072, %v3073
      %v3075 = vrot.slane %v3074, 2
      %v3076 = vadd.f32 %v3074, %v3075
      %v3077 = vrot.slane %v3076, 1
      %v3078 = vadd.f32 %v3076, %v3077
      %v3079 = vsel %vm1818, %v1586, 0.0
      %v3080 = vsel %vm1818, %v1587, 0.0
      %v3081 = vadd.f32 %v3079, %v3080
      %v3082 = vrot.slane %v3081, 4
      %v3083 = vadd.f32 %v3081, %v3082
      %v3084 = vrot.slane %v3083, 2
      %v3085 = vadd.f32 %v3083, %v3084
      %v3086 = vrot.slane %v3085, 1
      %v3087 = vadd.f32 %v3085, %v3086
      %v3088 = vsel %vm1818, %v1588, 0.0
      %v3089 = vsel %vm1818, %v1589, 0.0
      %v3090 = vadd.f32 %v3088, %v3089
      %v3091 = vrot.slane %v3090, 4
      %v3092 = vadd.f32 %v3090, %v3091
      %v3093 = vrot.slane %v3092, 2
      %v3094 = vadd.f32 %v3092, %v3093
      %v3095 = vrot.slane %v3094, 1
      %v3096 = vadd.f32 %v3094, %v3095
      %v3097 = vsel %vm1818, %v1590, 0.0
      %v3098 = vsel %vm1818, %v1591, 0.0
      %v3099 = vadd.f32 %v3097, %v3098
      %v3100 = vrot.slane %v3099, 4
      %v3101 = vadd.f32 %v3099, %v3100
      %v3102 = vrot.slane %v3101, 2
      %v3103 = vadd.f32 %v3101, %v3102
      %v3104 = vrot.slane %v3103, 1
      %v3105 = vadd.f32 %v3103, %v3104
      %v3106 = vsel %vm1818, %v1592, 0.0
      %v3107 = vsel %vm1818, %v1593, 0.0
      %v3108 = vadd.f32 %v3106, %v3107
      %v3109 = vrot.slane %v3108, 4
      %v3110 = vadd.f32 %v3108, %v3109
      %v3111 = vrot.slane %v3110, 2
      %v3112 = vadd.f32 %v3110, %v3111
      %v3113 = vrot.slane %v3112, 1
      %v3114 = vadd.f32 %v3112, %v3113
      %v3115 = vsel %vm1818, %v1594, 0.0
      %v3116 = vsel %vm1818, %v1595, 0.0
      %v3117 = vadd.f32 %v3115, %v3116
      %v3118 = vrot.slane %v3117, 4
      %v3119 = vadd.f32 %v3117, %v3118
      %v3120 = vrot.slane %v3119, 2
      %v3121 = vadd.f32 %v3119, %v3120
      %v3122 = vrot.slane %v3121, 1
      %v3123 = vadd.f32 %v3121, %v3122
      %v3124 = vsel %vm1818, %v1596, 0.0
      %v3125 = vsel %vm1818, %v1597, 0.0
      %v3126 = vadd.f32 %v3124, %v3125
      %v3127 = vrot.slane %v3126, 4
      %v3128 = vadd.f32 %v3126, %v3127
      %v3129 = vrot.slane %v3128, 2
      %v3130 = vadd.f32 %v3128, %v3129
      %v3131 = vrot.slane %v3130, 1
      %v3132 = vadd.f32 %v3130, %v3131
      %v3133 = vsel %vm1818, %v1598, 0.0
      %v3134 = vsel %vm1818, %v1599, 0.0
      %v3135 = vadd.f32 %v3133, %v3134
      %v3136 = vrot.slane %v3135, 4
      %v3137 = vadd.f32 %v3135, %v3136
      %v3138 = vrot.slane %v3137, 2
      %v3139 = vadd.f32 %v3137, %v3138
      %v3140 = vrot.slane %v3139, 1
      %v3141 = vadd.f32 %v3139, %v3140
      %v3142 = vsel %vm1818, %v1600, 0.0
      %v3143 = vsel %vm1818, %v1601, 0.0
      %v3144 = vadd.f32 %v3142, %v3143
      %v3145 = vrot.slane %v3144, 4
      %v3146 = vadd.f32 %v3144, %v3145
      %v3147 = vrot.slane %v3146, 2
      %v3148 = vadd.f32 %v3146, %v3147
      %v3149 = vrot.slane %v3148, 1
      %v3150 = vadd.f32 %v3148, %v3149
      %v3151 = vsel %vm1818, %v1602, 0.0
      %v3152 = vsel %vm1818, %v1603, 0.0
      %v3153 = vadd.f32 %v3151, %v3152
      %v3154 = vrot.slane %v3153, 4
      %v3155 = vadd.f32 %v3153, %v3154
      %v3156 = vrot.slane %v3155, 2
      %v3157 = vadd.f32 %v3155, %v3156
      %v3158 = vrot.slane %v3157, 1
      %v3159 = vadd.f32 %v3157, %v3158
      %v3160 = vsel %vm1818, %v1604, 0.0
      %v3161 = vsel %vm1818, %v1605, 0.0
      %v3162 = vadd.f32 %v3160, %v3161
      %v3163 = vrot.slane %v3162, 4
      %v3164 = vadd.f32 %v3162, %v3163
      %v3165 = vrot.slane %v3164, 2
      %v3166 = vadd.f32 %v3164, %v3165
      %v3167 = vrot.slane %v3166, 1
      %v3168 = vadd.f32 %v3166, %v3167
      %v3169 = vsel %vm1818, %v1606, 0.0
      %v3170 = vsel %vm1818, %v1607, 0.0
      %v3171 = vadd.f32 %v3169, %v3170
      %v3172 = vrot.slane %v3171, 4
      %v3173 = vadd.f32 %v3171, %v3172
      %v3174 = vrot.slane %v3173, 2
      %v3175 = vadd.f32 %v3173, %v3174
      %v3176 = vrot.slane %v3175, 1
      %v3177 = vadd.f32 %v3175, %v3176
      %v3178 = vsel %vm1818, %v1608, 0.0
      %v3179 = vsel %vm1818, %v1609, 0.0
      %v3180 = vadd.f32 %v3178, %v3179
      %v3181 = vrot.slane %v3180, 4
      %v3182 = vadd.f32 %v3180, %v3181
      %v3183 = vrot.slane %v3182, 2
      %v3184 = vadd.f32 %v3182, %v3183
      %v3185 = vrot.slane %v3184, 1
      %v3186 = vadd.f32 %v3184, %v3185
      %v3187 = vsel %vm1818, %v1610, 0.0
      %v3188 = vsel %vm1818, %v1611, 0.0
      %v3189 = vadd.f32 %v3187, %v3188
      %v3190 = vrot.slane %v3189, 4
      %v3191 = vadd.f32 %v3189, %v3190
      %v3192 = vrot.slane %v3191, 2
      %v3193 = vadd.f32 %v3191, %v3192
      %v3194 = vrot.slane %v3193, 1
      %v3195 = vadd.f32 %v3193, %v3194
      %v3196 = vsel %vm1818, %v1612, 0.0
      %v3197 = vsel %vm1818, %v1613, 0.0
      %v3198 = vadd.f32 %v3196, %v3197
      %v3199 = vrot.slane %v3198, 4
      %v3200 = vadd.f32 %v3198, %v3199
      %v3201 = vrot.slane %v3200, 2
      %v3202 = vadd.f32 %v3200, %v3201
      %v3203 = vrot.slane %v3202, 1
      %v3204 = vadd.f32 %v3202, %v3203
      %v3205 = vsel %vm1818, %v1614, 0.0
      %v3206 = vsel %vm1818, %v1615, 0.0
      %v3207 = vadd.f32 %v3205, %v3206
      %v3208 = vrot.slane %v3207, 4
      %v3209 = vadd.f32 %v3207, %v3208
      %v3210 = vrot.slane %v3209, 2
      %v3211 = vadd.f32 %v3209, %v3210
      %v3212 = vrot.slane %v3211, 1
      %v3213 = vadd.f32 %v3211, %v3212
      %v3214 = vsel %vm1818, %v1616, 0.0
      %v3215 = vsel %vm1818, %v1617, 0.0
      %v3216 = vadd.f32 %v3214, %v3215
      %v3217 = vrot.slane %v3216, 4
      %v3218 = vadd.f32 %v3216, %v3217
      %v3219 = vrot.slane %v3218, 2
      %v3220 = vadd.f32 %v3218, %v3219
      %v3221 = vrot.slane %v3220, 1
      %v3222 = vadd.f32 %v3220, %v3221
      %v3223 = vsel %vm1818, %v1618, 0.0
      %v3224 = vsel %vm1818, %v1619, 0.0
      %v3225 = vadd.f32 %v3223, %v3224
      %v3226 = vrot.slane %v3225, 4
      %v3227 = vadd.f32 %v3225, %v3226
      %v3228 = vrot.slane %v3227, 2
      %v3229 = vadd.f32 %v3227, %v3228
      %v3230 = vrot.slane %v3229, 1
      %v3231 = vadd.f32 %v3229, %v3230
      %v3232 = vsel %vm1818, %v1620, 0.0
      %v3233 = vsel %vm1818, %v1621, 0.0
      %v3234 = vadd.f32 %v3232, %v3233
      %v3235 = vrot.slane %v3234, 4
      %v3236 = vadd.f32 %v3234, %v3235
      %v3237 = vrot.slane %v3236, 2
      %v3238 = vadd.f32 %v3236, %v3237
      %v3239 = vrot.slane %v3238, 1
      %v3240 = vadd.f32 %v3238, %v3239
      %v3241 = vsel %vm1818, %v1622, 0.0
      %v3242 = vsel %vm1818, %v1623, 0.0
      %v3243 = vadd.f32 %v3241, %v3242
      %v3244 = vrot.slane %v3243, 4
      %v3245 = vadd.f32 %v3243, %v3244
      %v3246 = vrot.slane %v3245, 2
      %v3247 = vadd.f32 %v3245, %v3246
      %v3248 = vrot.slane %v3247, 1
      %v3249 = vadd.f32 %v3247, %v3248
      %v3250 = vsel %vm1818, %v1624, 0.0
      %v3251 = vsel %vm1818, %v1625, 0.0
      %v3252 = vadd.f32 %v3250, %v3251
      %v3253 = vrot.slane %v3252, 4
      %v3254 = vadd.f32 %v3252, %v3253
      %v3255 = vrot.slane %v3254, 2
      %v3256 = vadd.f32 %v3254, %v3255
      %v3257 = vrot.slane %v3256, 1
      %v3258 = vadd.f32 %v3256, %v3257
      %v3259 = vsel %vm1818, %v1626, 0.0
      %v3260 = vsel %vm1818, %v1627, 0.0
      %v3261 = vadd.f32 %v3259, %v3260
      %v3262 = vrot.slane %v3261, 4
      %v3263 = vadd.f32 %v3261, %v3262
      %v3264 = vrot.slane %v3263, 2
      %v3265 = vadd.f32 %v3263, %v3264
      %v3266 = vrot.slane %v3265, 1
      %v3267 = vadd.f32 %v3265, %v3266
      %v3268 = vsel %vm1818, %v1628, 0.0
      %v3269 = vsel %vm1818, %v1629, 0.0
      %v3270 = vadd.f32 %v3268, %v3269
      %v3271 = vrot.slane %v3270, 4
      %v3272 = vadd.f32 %v3270, %v3271
      %v3273 = vrot.slane %v3272, 2
      %v3274 = vadd.f32 %v3272, %v3273
      %v3275 = vrot.slane %v3274, 1
      %v3276 = vadd.f32 %v3274, %v3275
      %v3277 = vsel %vm1818, %v1630, 0.0
      %v3278 = vsel %vm1818, %v1631, 0.0
      %v3279 = vadd.f32 %v3277, %v3278
      %v3280 = vrot.slane %v3279, 4
      %v3281 = vadd.f32 %v3279, %v3280
      %v3282 = vrot.slane %v3281, 2
      %v3283 = vadd.f32 %v3281, %v3282
      %v3284 = vrot.slane %v3283, 1
      %v3285 = vadd.f32 %v3283, %v3284
      %v3286 = vsel %vm1818, %v1632, 0.0
      %v3287 = vsel %vm1818, %v1633, 0.0
      %v3288 = vadd.f32 %v3286, %v3287
      %v3289 = vrot.slane %v3288, 4
      %v3290 = vadd.f32 %v3288, %v3289
      %v3291 = vrot.slane %v3290, 2
      %v3292 = vadd.f32 %v3290, %v3291
      %v3293 = vrot.slane %v3292, 1
      %v3294 = vadd.f32 %v3292, %v3293
      %v3295 = vsel %vm1818, %v1634, 0.0
      %v3296 = vsel %vm1818, %v1635, 0.0
      %v3297 = vadd.f32 %v3295, %v3296
      %v3298 = vrot.slane %v3297, 4
      %v3299 = vadd.f32 %v3297, %v3298
      %v3300 = vrot.slane %v3299, 2
      %v3301 = vadd.f32 %v3299, %v3300
      %v3302 = vrot.slane %v3301, 1
      %v3303 = vadd.f32 %v3301, %v3302
      %v3304 = vsel %vm1818, %v1636, 0.0
      %v3305 = vsel %vm1818, %v1637, 0.0
      %v3306 = vadd.f32 %v3304, %v3305
      %v3307 = vrot.slane %v3306, 4
      %v3308 = vadd.f32 %v3306, %v3307
      %v3309 = vrot.slane %v3308, 2
      %v3310 = vadd.f32 %v3308, %v3309
      %v3311 = vrot.slane %v3310, 1
      %v3312 = vadd.f32 %v3310, %v3311
      %v3313 = vsel %vm1818, %v1638, 0.0
      %v3314 = vsel %vm1818, %v1639, 0.0
      %v3315 = vadd.f32 %v3313, %v3314
      %v3316 = vrot.slane %v3315, 4
      %v3317 = vadd.f32 %v3315, %v3316
      %v3318 = vrot.slane %v3317, 2
      %v3319 = vadd.f32 %v3317, %v3318
      %v3320 = vrot.slane %v3319, 1
      %v3321 = vadd.f32 %v3319, %v3320
      %v3322 = vsel %vm1818, %v1640, 0.0
      %v3323 = vsel %vm1818, %v1641, 0.0
      %v3324 = vadd.f32 %v3322, %v3323
      %v3325 = vrot.slane %v3324, 4
      %v3326 = vadd.f32 %v3324, %v3325
      %v3327 = vrot.slane %v3326, 2
      %v3328 = vadd.f32 %v3326, %v3327
      %v3329 = vrot.slane %v3328, 1
      %v3330 = vadd.f32 %v3328, %v3329
      %v3331 = vsel %vm1818, %v1642, 0.0
      %v3332 = vsel %vm1818, %v1643, 0.0
      %v3333 = vadd.f32 %v3331, %v3332
      %v3334 = vrot.slane %v3333, 4
      %v3335 = vadd.f32 %v3333, %v3334
      %v3336 = vrot.slane %v3335, 2
      %v3337 = vadd.f32 %v3335, %v3336
      %v3338 = vrot.slane %v3337, 1
      %v3339 = vadd.f32 %v3337, %v3338
      %v3340 = vsel %vm1818, %v1644, 0.0
      %v3341 = vsel %vm1818, %v1645, 0.0
      %v3342 = vadd.f32 %v3340, %v3341
      %v3343 = vrot.slane %v3342, 4
      %v3344 = vadd.f32 %v3342, %v3343
      %v3345 = vrot.slane %v3344, 2
      %v3346 = vadd.f32 %v3344, %v3345
      %v3347 = vrot.slane %v3346, 1
      %v3348 = vadd.f32 %v3346, %v3347
      %v3349 = vsel %vm1818, %v1646, 0.0
      %v3350 = vsel %vm1818, %v1647, 0.0
      %v3351 = vadd.f32 %v3349, %v3350
      %v3352 = vrot.slane %v3351, 4
      %v3353 = vadd.f32 %v3351, %v3352
      %v3354 = vrot.slane %v3353, 2
      %v3355 = vadd.f32 %v3353, %v3354
      %v3356 = vrot.slane %v3355, 1
      %v3357 = vadd.f32 %v3355, %v3356
      %v3358 = vsel %vm1818, %v1648, 0.0
      %v3359 = vsel %vm1818, %v1649, 0.0
      %v3360 = vadd.f32 %v3358, %v3359
      %v3361 = vrot.slane %v3360, 4
      %v3362 = vadd.f32 %v3360, %v3361
      %v3363 = vrot.slane %v3362, 2
      %v3364 = vadd.f32 %v3362, %v3363
      %v3365 = vrot.slane %v3364, 1
      %v3366 = vadd.f32 %v3364, %v3365
      %v3367 = vsel %vm1818, %v1650, 0.0
      %v3368 = vsel %vm1818, %v1651, 0.0
      %v3369 = vadd.f32 %v3367, %v3368
      %v3370 = vrot.slane %v3369, 4
      %v3371 = vadd.f32 %v3369, %v3370
      %v3372 = vrot.slane %v3371, 2
      %v3373 = vadd.f32 %v3371, %v3372
      %v3374 = vrot.slane %v3373, 1
      %v3375 = vadd.f32 %v3373, %v3374
      %v3376 = vsel %vm1818, %v1652, 0.0
      %v3377 = vsel %vm1818, %v1653, 0.0
      %v3378 = vadd.f32 %v3376, %v3377
      %v3379 = vrot.slane %v3378, 4
      %v3380 = vadd.f32 %v3378, %v3379
      %v3381 = vrot.slane %v3380, 2
      %v3382 = vadd.f32 %v3380, %v3381
      %v3383 = vrot.slane %v3382, 1
      %v3384 = vadd.f32 %v3382, %v3383
      %v3385 = vsel %vm1818, %v1654, 0.0
      %v3386 = vsel %vm1818, %v1655, 0.0
      %v3387 = vadd.f32 %v3385, %v3386
      %v3388 = vrot.slane %v3387, 4
      %v3389 = vadd.f32 %v3387, %v3388
      %v3390 = vrot.slane %v3389, 2
      %v3391 = vadd.f32 %v3389, %v3390
      %v3392 = vrot.slane %v3391, 1
      %v3393 = vadd.f32 %v3391, %v3392
      %v3394 = vsel %vm1818, %v1656, 0.0
      %v3395 = vsel %vm1818, %v1657, 0.0
      %v3396 = vadd.f32 %v3394, %v3395
      %v3397 = vrot.slane %v3396, 4
      %v3398 = vadd.f32 %v3396, %v3397
      %v3399 = vrot.slane %v3398, 2
      %v3400 = vadd.f32 %v3398, %v3399
      %v3401 = vrot.slane %v3400, 1
      %v3402 = vadd.f32 %v3400, %v3401
      %v3403 = vsel %vm1818, %v1658, 0.0
      %v3404 = vsel %vm1818, %v1659, 0.0
      %v3405 = vadd.f32 %v3403, %v3404
      %v3406 = vrot.slane %v3405, 4
      %v3407 = vadd.f32 %v3405, %v3406
      %v3408 = vrot.slane %v3407, 2
      %v3409 = vadd.f32 %v3407, %v3408
      %v3410 = vrot.slane %v3409, 1
      %v3411 = vadd.f32 %v3409, %v3410
      %v3412 = vsel %vm1818, %v1660, 0.0
      %v3413 = vsel %vm1818, %v1661, 0.0
      %v3414 = vadd.f32 %v3412, %v3413
      %v3415 = vrot.slane %v3414, 4
      %v3416 = vadd.f32 %v3414, %v3415
      %v3417 = vrot.slane %v3416, 2
      %v3418 = vadd.f32 %v3416, %v3417
      %v3419 = vrot.slane %v3418, 1
      %v3420 = vadd.f32 %v3418, %v3419
      %v3421 = vsel %vm1818, %v1662, 0.0
      %v3422 = vsel %vm1818, %v1663, 0.0
      %v3423 = vadd.f32 %v3421, %v3422
      %v3424 = vrot.slane %v3423, 4
      %v3425 = vadd.f32 %v3423, %v3424
      %v3426 = vrot.slane %v3425, 2
      %v3427 = vadd.f32 %v3425, %v3426
      %v3428 = vrot.slane %v3427, 1
      %v3429 = vadd.f32 %v3427, %v3428
      %v3430 = vsel %vm1818, %v1664, 0.0
      %v3431 = vsel %vm1818, %v1665, 0.0
      %v3432 = vadd.f32 %v3430, %v3431
      %v3433 = vrot.slane %v3432, 4
      %v3434 = vadd.f32 %v3432, %v3433
      %v3435 = vrot.slane %v3434, 2
      %v3436 = vadd.f32 %v3434, %v3435
      %v3437 = vrot.slane %v3436, 1
      %v3438 = vadd.f32 %v3436, %v3437
      %v3439 = vsel %vm1818, %v1666, 0.0
      %v3440 = vsel %vm1818, %v1667, 0.0
      %v3441 = vadd.f32 %v3439, %v3440
      %v3442 = vrot.slane %v3441, 4
      %v3443 = vadd.f32 %v3441, %v3442
      %v3444 = vrot.slane %v3443, 2
      %v3445 = vadd.f32 %v3443, %v3444
      %v3446 = vrot.slane %v3445, 1
      %v3447 = vadd.f32 %v3445, %v3446
      %v3448 = vsel %vm1818, %v1668, 0.0
      %v3449 = vsel %vm1818, %v1669, 0.0
      %v3450 = vadd.f32 %v3448, %v3449
      %v3451 = vrot.slane %v3450, 4
      %v3452 = vadd.f32 %v3450, %v3451
      %v3453 = vrot.slane %v3452, 2
      %v3454 = vadd.f32 %v3452, %v3453
      %v3455 = vrot.slane %v3454, 1
      %v3456 = vadd.f32 %v3454, %v3455
      %v3457 = vsel %vm1818, %v1670, 0.0
      %v3458 = vsel %vm1818, %v1671, 0.0
      %v3459 = vadd.f32 %v3457, %v3458
      %v3460 = vrot.slane %v3459, 4
      %v3461 = vadd.f32 %v3459, %v3460
      %v3462 = vrot.slane %v3461, 2
      %v3463 = vadd.f32 %v3461, %v3462
      %v3464 = vrot.slane %v3463, 1
      %v3465 = vadd.f32 %v3463, %v3464
      %v3466 = vsel %vm1818, %v1672, 0.0
      %v3467 = vsel %vm1818, %v1673, 0.0
      %v3468 = vadd.f32 %v3466, %v3467
      %v3469 = vrot.slane %v3468, 4
      %v3470 = vadd.f32 %v3468, %v3469
      %v3471 = vrot.slane %v3470, 2
      %v3472 = vadd.f32 %v3470, %v3471
      %v3473 = vrot.slane %v3472, 1
      %v3474 = vadd.f32 %v3472, %v3473
      %v3475 = vsel %vm1818, %v1674, 0.0
      %v3476 = vsel %vm1818, %v1675, 0.0
      %v3477 = vadd.f32 %v3475, %v3476
      %v3478 = vrot.slane %v3477, 4
      %v3479 = vadd.f32 %v3477, %v3478
      %v3480 = vrot.slane %v3479, 2
      %v3481 = vadd.f32 %v3479, %v3480
      %v3482 = vrot.slane %v3481, 1
      %v3483 = vadd.f32 %v3481, %v3482
      %v3484 = vsel %vm1818, %v1676, 0.0
      %v3485 = vsel %vm1818, %v1677, 0.0
      %v3486 = vadd.f32 %v3484, %v3485
      %v3487 = vrot.slane %v3486, 4
      %v3488 = vadd.f32 %v3486, %v3487
      %v3489 = vrot.slane %v3488, 2
      %v3490 = vadd.f32 %v3488, %v3489
      %v3491 = vrot.slane %v3490, 1
      %v3492 = vadd.f32 %v3490, %v3491
      %v3493 = vsel %vm1818, %v1678, 0.0
      %v3494 = vsel %vm1818, %v1679, 0.0
      %v3495 = vadd.f32 %v3493, %v3494
      %v3496 = vrot.slane %v3495, 4
      %v3497 = vadd.f32 %v3495, %v3496
      %v3498 = vrot.slane %v3497, 2
      %v3499 = vadd.f32 %v3497, %v3498
      %v3500 = vrot.slane %v3499, 1
      %v3501 = vadd.f32 %v3499, %v3500
      %v3502 = vsel %vm1818, %v1680, 0.0
      %v3503 = vsel %vm1818, %v1681, 0.0
      %v3504 = vadd.f32 %v3502, %v3503
      %v3505 = vrot.slane %v3504, 4
      %v3506 = vadd.f32 %v3504, %v3505
      %v3507 = vrot.slane %v3506, 2
      %v3508 = vadd.f32 %v3506, %v3507
      %v3509 = vrot.slane %v3508, 1
      %v3510 = vadd.f32 %v3508, %v3509
      %v3511 = vsel %vm1818, %v1682, 0.0
      %v3512 = vsel %vm1818, %v1683, 0.0
      %v3513 = vadd.f32 %v3511, %v3512
      %v3514 = vrot.slane %v3513, 4
      %v3515 = vadd.f32 %v3513, %v3514
      %v3516 = vrot.slane %v3515, 2
      %v3517 = vadd.f32 %v3515, %v3516
      %v3518 = vrot.slane %v3517, 1
      %v3519 = vadd.f32 %v3517, %v3518
      %v3520 = vsel %vm1818, %v1684, 0.0
      %v3521 = vsel %vm1818, %v1685, 0.0
      %v3522 = vadd.f32 %v3520, %v3521
      %v3523 = vrot.slane %v3522, 4
      %v3524 = vadd.f32 %v3522, %v3523
      %v3525 = vrot.slane %v3524, 2
      %v3526 = vadd.f32 %v3524, %v3525
      %v3527 = vrot.slane %v3526, 1
      %v3528 = vadd.f32 %v3526, %v3527
      %v3529 = vsel %vm1818, %v1686, 0.0
      %v3530 = vsel %vm1818, %v1687, 0.0
      %v3531 = vadd.f32 %v3529, %v3530
      %v3532 = vrot.slane %v3531, 4
      %v3533 = vadd.f32 %v3531, %v3532
      %v3534 = vrot.slane %v3533, 2
      %v3535 = vadd.f32 %v3533, %v3534
      %v3536 = vrot.slane %v3535, 1
      %v3537 = vadd.f32 %v3535, %v3536
      %v3538 = vsel %vm1818, %v1688, 0.0
      %v3539 = vsel %vm1818, %v1689, 0.0
      %v3540 = vadd.f32 %v3538, %v3539
      %v3541 = vrot.slane %v3540, 4
      %v3542 = vadd.f32 %v3540, %v3541
      %v3543 = vrot.slane %v3542, 2
      %v3544 = vadd.f32 %v3542, %v3543
      %v3545 = vrot.slane %v3544, 1
      %v3546 = vadd.f32 %v3544, %v3545
      %v3547 = vsel %vm1818, %v1690, 0.0
      %v3548 = vsel %vm1818, %v1691, 0.0
      %v3549 = vadd.f32 %v3547, %v3548
      %v3550 = vrot.slane %v3549, 4
      %v3551 = vadd.f32 %v3549, %v3550
      %v3552 = vrot.slane %v3551, 2
      %v3553 = vadd.f32 %v3551, %v3552
      %v3554 = vrot.slane %v3553, 1
      %v3555 = vadd.f32 %v3553, %v3554
      %v3556 = vsel %vm1818, %v1692, 0.0
      %v3557 = vsel %vm1818, %v1693, 0.0
      %v3558 = vadd.f32 %v3556, %v3557
      %v3559 = vrot.slane %v3558, 4
      %v3560 = vadd.f32 %v3558, %v3559
      %v3561 = vrot.slane %v3560, 2
      %v3562 = vadd.f32 %v3560, %v3561
      %v3563 = vrot.slane %v3562, 1
      %v3564 = vadd.f32 %v3562, %v3563
      %v3565 = vsel %vm1818, %v1694, 0.0
      %v3566 = vsel %vm1818, %v1695, 0.0
      %v3567 = vadd.f32 %v3565, %v3566
      %v3568 = vrot.slane %v3567, 4
      %v3569 = vadd.f32 %v3567, %v3568
      %v3570 = vrot.slane %v3569, 2
      %v3571 = vadd.f32 %v3569, %v3570
      %v3572 = vrot.slane %v3571, 1
      %v3573 = vadd.f32 %v3571, %v3572
      %v3574 = vsel %vm1818, %v1696, 0.0
      %v3575 = vsel %vm1818, %v1697, 0.0
      %v3576 = vadd.f32 %v3574, %v3575
      %v3577 = vrot.slane %v3576, 4
      %v3578 = vadd.f32 %v3576, %v3577
      %v3579 = vrot.slane %v3578, 2
      %v3580 = vadd.f32 %v3578, %v3579
      %v3581 = vrot.slane %v3580, 1
      %v3582 = vadd.f32 %v3580, %v3581
      %v3583 = vsel %vm1818, %v1698, 0.0
      %v3584 = vsel %vm1818, %v1699, 0.0
      %v3585 = vadd.f32 %v3583, %v3584
      %v3586 = vrot.slane %v3585, 4
      %v3587 = vadd.f32 %v3585, %v3586
      %v3588 = vrot.slane %v3587, 2
      %v3589 = vadd.f32 %v3587, %v3588
      %v3590 = vrot.slane %v3589, 1
      %v3591 = vadd.f32 %v3589, %v3590
      %v3592 = vsel %vm1818, %v1700, 0.0
      %v3593 = vsel %vm1818, %v1701, 0.0
      %v3594 = vadd.f32 %v3592, %v3593
      %v3595 = vrot.slane %v3594, 4
      %v3596 = vadd.f32 %v3594, %v3595
      %v3597 = vrot.slane %v3596, 2
      %v3598 = vadd.f32 %v3596, %v3597
      %v3599 = vrot.slane %v3598, 1
      %v3600 = vadd.f32 %v3598, %v3599
      %v3601 = vsel %vm1818, %v1702, 0.0
      %v3602 = vsel %vm1818, %v1703, 0.0
      %v3603 = vadd.f32 %v3601, %v3602
      %v3604 = vrot.slane %v3603, 4
      %v3605 = vadd.f32 %v3603, %v3604
      %v3606 = vrot.slane %v3605, 2
      %v3607 = vadd.f32 %v3605, %v3606
      %v3608 = vrot.slane %v3607, 1
      %v3609 = vadd.f32 %v3607, %v3608
      %v3610 = vsel %vm1818, %v1704, 0.0
      %v3611 = vsel %vm1818, %v1705, 0.0
      %v3612 = vadd.f32 %v3610, %v3611
      %v3613 = vrot.slane %v3612, 4
      %v3614 = vadd.f32 %v3612, %v3613
      %v3615 = vrot.slane %v3614, 2
      %v3616 = vadd.f32 %v3614, %v3615
      %v3617 = vrot.slane %v3616, 1
      %v3618 = vadd.f32 %v3616, %v3617
      %v3619 = vsel %vm1818, %v1706, 0.0
      %v3620 = vsel %vm1818, %v1707, 0.0
      %v3621 = vadd.f32 %v3619, %v3620
      %v3622 = vrot.slane %v3621, 4
      %v3623 = vadd.f32 %v3621, %v3622
      %v3624 = vrot.slane %v3623, 2
      %v3625 = vadd.f32 %v3623, %v3624
      %v3626 = vrot.slane %v3625, 1
      %v3627 = vadd.f32 %v3625, %v3626
      %v3628 = vsel %vm1818, %v1708, 0.0
      %v3629 = vsel %vm1818, %v1709, 0.0
      %v3630 = vadd.f32 %v3628, %v3629
      %v3631 = vrot.slane %v3630, 4
      %v3632 = vadd.f32 %v3630, %v3631
      %v3633 = vrot.slane %v3632, 2
      %v3634 = vadd.f32 %v3632, %v3633
      %v3635 = vrot.slane %v3634, 1
      %v3636 = vadd.f32 %v3634, %v3635
      %v3637 = vsel %vm1818, %v1710, 0.0
      %v3638 = vsel %vm1818, %v1711, 0.0
      %v3639 = vadd.f32 %v3637, %v3638
      %v3640 = vrot.slane %v3639, 4
      %v3641 = vadd.f32 %v3639, %v3640
      %v3642 = vrot.slane %v3641, 2
      %v3643 = vadd.f32 %v3641, %v3642
      %v3644 = vrot.slane %v3643, 1
      %v3645 = vadd.f32 %v3643, %v3644
      %v3646 = vsel %vm1818, %v1712, 0.0
      %v3647 = vsel %vm1818, %v1713, 0.0
      %v3648 = vadd.f32 %v3646, %v3647
      %v3649 = vrot.slane %v3648, 4
      %v3650 = vadd.f32 %v3648, %v3649
      %v3651 = vrot.slane %v3650, 2
      %v3652 = vadd.f32 %v3650, %v3651
      %v3653 = vrot.slane %v3652, 1
      %v3654 = vadd.f32 %v3652, %v3653
      %v3655 = vsel %vm1818, %v1714, 0.0
      %v3656 = vsel %vm1818, %v1715, 0.0
      %v3657 = vadd.f32 %v3655, %v3656
      %v3658 = vrot.slane %v3657, 4
      %v3659 = vadd.f32 %v3657, %v3658
      %v3660 = vrot.slane %v3659, 2
      %v3661 = vadd.f32 %v3659, %v3660
      %v3662 = vrot.slane %v3661, 1
      %v3663 = vadd.f32 %v3661, %v3662
      %v3664 = vsel %vm1818, %v1716, 0.0
      %v3665 = vsel %vm1818, %v1717, 0.0
      %v3666 = vadd.f32 %v3664, %v3665
      %v3667 = vrot.slane %v3666, 4
      %v3668 = vadd.f32 %v3666, %v3667
      %v3669 = vrot.slane %v3668, 2
      %v3670 = vadd.f32 %v3668, %v3669
      %v3671 = vrot.slane %v3670, 1
      %v3672 = vadd.f32 %v3670, %v3671
      %v3673 = vsel %vm1818, %v1718, 0.0
      %v3674 = vsel %vm1818, %v1719, 0.0
      %v3675 = vadd.f32 %v3673, %v3674
      %v3676 = vrot.slane %v3675, 4
      %v3677 = vadd.f32 %v3675, %v3676
      %v3678 = vrot.slane %v3677, 2
      %v3679 = vadd.f32 %v3677, %v3678
      %v3680 = vrot.slane %v3679, 1
      %v3681 = vadd.f32 %v3679, %v3680
      %v3682 = vsel %vm1818, %v1720, 0.0
      %v3683 = vsel %vm1818, %v1721, 0.0
      %v3684 = vadd.f32 %v3682, %v3683
      %v3685 = vrot.slane %v3684, 4
      %v3686 = vadd.f32 %v3684, %v3685
      %v3687 = vrot.slane %v3686, 2
      %v3688 = vadd.f32 %v3686, %v3687
      %v3689 = vrot.slane %v3688, 1
      %v3690 = vadd.f32 %v3688, %v3689
      %v3691 = vsel %vm1818, %v1722, 0.0
      %v3692 = vsel %vm1818, %v1723, 0.0
      %v3693 = vadd.f32 %v3691, %v3692
      %v3694 = vrot.slane %v3693, 4
      %v3695 = vadd.f32 %v3693, %v3694
      %v3696 = vrot.slane %v3695, 2
      %v3697 = vadd.f32 %v3695, %v3696
      %v3698 = vrot.slane %v3697, 1
      %v3699 = vadd.f32 %v3697, %v3698
      %v3700 = vsel %vm1818, %v1724, 0.0
      %v3701 = vsel %vm1818, %v1725, 0.0
      %v3702 = vadd.f32 %v3700, %v3701
      %v3703 = vrot.slane %v3702, 4
      %v3704 = vadd.f32 %v3702, %v3703
      %v3705 = vrot.slane %v3704, 2
      %v3706 = vadd.f32 %v3704, %v3705
      %v3707 = vrot.slane %v3706, 1
      %v3708 = vadd.f32 %v3706, %v3707
      %v3709 = vsel %vm1818, %v1726, 0.0
      %v3710 = vsel %vm1818, %v1727, 0.0
      %v3711 = vadd.f32 %v3709, %v3710
      %v3712 = vrot.slane %v3711, 4
      %v3713 = vadd.f32 %v3711, %v3712
      %v3714 = vrot.slane %v3713, 2
      %v3715 = vadd.f32 %v3713, %v3714
      %v3716 = vrot.slane %v3715, 1
      %v3717 = vadd.f32 %v3715, %v3716
      %v3718 = vsel %vm1818, %v1728, 0.0
      %v3719 = vsel %vm1818, %v1729, 0.0
      %v3720 = vadd.f32 %v3718, %v3719
      %v3721 = vrot.slane %v3720, 4
      %v3722 = vadd.f32 %v3720, %v3721
      %v3723 = vrot.slane %v3722, 2
      %v3724 = vadd.f32 %v3722, %v3723
      %v3725 = vrot.slane %v3724, 1
      %v3726 = vadd.f32 %v3724, %v3725
      %v3727 = vsel %vm1818, %v1730, 0.0
      %v3728 = vsel %vm1818, %v1731, 0.0
      %v3729 = vadd.f32 %v3727, %v3728
      %v3730 = vrot.slane %v3729, 4
      %v3731 = vadd.f32 %v3729, %v3730
      %v3732 = vrot.slane %v3731, 2
      %v3733 = vadd.f32 %v3731, %v3732
      %v3734 = vrot.slane %v3733, 1
      %v3735 = vadd.f32 %v3733, %v3734
      %v3736 = vsel %vm1818, %v1732, 0.0
      %v3737 = vsel %vm1818, %v1733, 0.0
      %v3738 = vadd.f32 %v3736, %v3737
      %v3739 = vrot.slane %v3738, 4
      %v3740 = vadd.f32 %v3738, %v3739
      %v3741 = vrot.slane %v3740, 2
      %v3742 = vadd.f32 %v3740, %v3741
      %v3743 = vrot.slane %v3742, 1
      %v3744 = vadd.f32 %v3742, %v3743
      %v3745 = vsel %vm1818, %v1734, 0.0
      %v3746 = vsel %vm1818, %v1735, 0.0
      %v3747 = vadd.f32 %v3745, %v3746
      %v3748 = vrot.slane %v3747, 4
      %v3749 = vadd.f32 %v3747, %v3748
      %v3750 = vrot.slane %v3749, 2
      %v3751 = vadd.f32 %v3749, %v3750
      %v3752 = vrot.slane %v3751, 1
      %v3753 = vadd.f32 %v3751, %v3752
      %v3754 = vsel %vm1818, %v1736, 0.0
      %v3755 = vsel %vm1818, %v1737, 0.0
      %v3756 = vadd.f32 %v3754, %v3755
      %v3757 = vrot.slane %v3756, 4
      %v3758 = vadd.f32 %v3756, %v3757
      %v3759 = vrot.slane %v3758, 2
      %v3760 = vadd.f32 %v3758, %v3759
      %v3761 = vrot.slane %v3760, 1
      %v3762 = vadd.f32 %v3760, %v3761
      %v3763 = vsel %vm1818, %v1738, 0.0
      %v3764 = vsel %vm1818, %v1739, 0.0
      %v3765 = vadd.f32 %v3763, %v3764
      %v3766 = vrot.slane %v3765, 4
      %v3767 = vadd.f32 %v3765, %v3766
      %v3768 = vrot.slane %v3767, 2
      %v3769 = vadd.f32 %v3767, %v3768
      %v3770 = vrot.slane %v3769, 1
      %v3771 = vadd.f32 %v3769, %v3770
      %v3772 = vsel %vm1818, %v1740, 0.0
      %v3773 = vsel %vm1818, %v1741, 0.0
      %v3774 = vadd.f32 %v3772, %v3773
      %v3775 = vrot.slane %v3774, 4
      %v3776 = vadd.f32 %v3774, %v3775
      %v3777 = vrot.slane %v3776, 2
      %v3778 = vadd.f32 %v3776, %v3777
      %v3779 = vrot.slane %v3778, 1
      %v3780 = vadd.f32 %v3778, %v3779
      %v3781 = vsel %vm1818, %v1742, 0.0
      %v3782 = vsel %vm1818, %v1743, 0.0
      %v3783 = vadd.f32 %v3781, %v3782
      %v3784 = vrot.slane %v3783, 4
      %v3785 = vadd.f32 %v3783, %v3784
      %v3786 = vrot.slane %v3785, 2
      %v3787 = vadd.f32 %v3785, %v3786
      %v3788 = vrot.slane %v3787, 1
      %v3789 = vadd.f32 %v3787, %v3788
      %v3790 = vsel %vm1818, %v1744, 0.0
      %v3791 = vsel %vm1818, %v1745, 0.0
      %v3792 = vadd.f32 %v3790, %v3791
      %v3793 = vrot.slane %v3792, 4
      %v3794 = vadd.f32 %v3792, %v3793
      %v3795 = vrot.slane %v3794, 2
      %v3796 = vadd.f32 %v3794, %v3795
      %v3797 = vrot.slane %v3796, 1
      %v3798 = vadd.f32 %v3796, %v3797
      %v3799 = vsel %vm1818, %v1746, 0.0
      %v3800 = vsel %vm1818, %v1747, 0.0
      %v3801 = vadd.f32 %v3799, %v3800
      %v3802 = vrot.slane %v3801, 4
      %v3803 = vadd.f32 %v3801, %v3802
      %v3804 = vrot.slane %v3803, 2
      %v3805 = vadd.f32 %v3803, %v3804
      %v3806 = vrot.slane %v3805, 1
      %v3807 = vadd.f32 %v3805, %v3806
      %v3808 = vsel %vm1818, %v1748, 0.0
      %v3809 = vsel %vm1818, %v1749, 0.0
      %v3810 = vadd.f32 %v3808, %v3809
      %v3811 = vrot.slane %v3810, 4
      %v3812 = vadd.f32 %v3810, %v3811
      %v3813 = vrot.slane %v3812, 2
      %v3814 = vadd.f32 %v3812, %v3813
      %v3815 = vrot.slane %v3814, 1
      %v3816 = vadd.f32 %v3814, %v3815
      %v3817 = vsel %vm1818, %v1750, 0.0
      %v3818 = vsel %vm1818, %v1751, 0.0
      %v3819 = vadd.f32 %v3817, %v3818
      %v3820 = vrot.slane %v3819, 4
      %v3821 = vadd.f32 %v3819, %v3820
      %v3822 = vrot.slane %v3821, 2
      %v3823 = vadd.f32 %v3821, %v3822
      %v3824 = vrot.slane %v3823, 1
      %v3825 = vadd.f32 %v3823, %v3824
      %v3826 = vsel %vm1818, %v1752, 0.0
      %v3827 = vsel %vm1818, %v1753, 0.0
      %v3828 = vadd.f32 %v3826, %v3827
      %v3829 = vrot.slane %v3828, 4
      %v3830 = vadd.f32 %v3828, %v3829
      %v3831 = vrot.slane %v3830, 2
      %v3832 = vadd.f32 %v3830, %v3831
      %v3833 = vrot.slane %v3832, 1
      %v3834 = vadd.f32 %v3832, %v3833
      %v3835 = vsel %vm1818, %v1754, 0.0
      %v3836 = vsel %vm1818, %v1755, 0.0
      %v3837 = vadd.f32 %v3835, %v3836
      %v3838 = vrot.slane %v3837, 4
      %v3839 = vadd.f32 %v3837, %v3838
      %v3840 = vrot.slane %v3839, 2
      %v3841 = vadd.f32 %v3839, %v3840
      %v3842 = vrot.slane %v3841, 1
      %v3843 = vadd.f32 %v3841, %v3842
      %v3844 = vsel %vm1818, %v1756, 0.0
      %v3845 = vsel %vm1818, %v1757, 0.0
      %v3846 = vadd.f32 %v3844, %v3845
      %v3847 = vrot.slane %v3846, 4
      %v3848 = vadd.f32 %v3846, %v3847
      %v3849 = vrot.slane %v3848, 2
      %v3850 = vadd.f32 %v3848, %v3849
      %v3851 = vrot.slane %v3850, 1
      %v3852 = vadd.f32 %v3850, %v3851
      %v3853 = vsel %vm1818, %v1758, 0.0
      %v3854 = vsel %vm1818, %v1759, 0.0
      %v3855 = vadd.f32 %v3853, %v3854
      %v3856 = vrot.slane %v3855, 4
      %v3857 = vadd.f32 %v3855, %v3856
      %v3858 = vrot.slane %v3857, 2
      %v3859 = vadd.f32 %v3857, %v3858
      %v3860 = vrot.slane %v3859, 1
      %v3861 = vadd.f32 %v3859, %v3860
      %v3862 = vsel %vm1818, %v1760, 0.0
      %v3863 = vsel %vm1818, %v1761, 0.0
      %v3864 = vadd.f32 %v3862, %v3863
      %v3865 = vrot.slane %v3864, 4
      %v3866 = vadd.f32 %v3864, %v3865
      %v3867 = vrot.slane %v3866, 2
      %v3868 = vadd.f32 %v3866, %v3867
      %v3869 = vrot.slane %v3868, 1
      %v3870 = vadd.f32 %v3868, %v3869
      %v3871 = vsel %vm1818, %v1762, 0.0
      %v3872 = vsel %vm1818, %v1763, 0.0
      %v3873 = vadd.f32 %v3871, %v3872
      %v3874 = vrot.slane %v3873, 4
      %v3875 = vadd.f32 %v3873, %v3874
      %v3876 = vrot.slane %v3875, 2
      %v3877 = vadd.f32 %v3875, %v3876
      %v3878 = vrot.slane %v3877, 1
      %v3879 = vadd.f32 %v3877, %v3878
      %v3880 = vsel %vm1818, %v1764, 0.0
      %v3881 = vsel %vm1818, %v1765, 0.0
      %v3882 = vadd.f32 %v3880, %v3881
      %v3883 = vrot.slane %v3882, 4
      %v3884 = vadd.f32 %v3882, %v3883
      %v3885 = vrot.slane %v3884, 2
      %v3886 = vadd.f32 %v3884, %v3885
      %v3887 = vrot.slane %v3886, 1
      %v3888 = vadd.f32 %v3886, %v3887
      %v3889 = vsel %vm1818, %v1766, 0.0
      %v3890 = vsel %vm1818, %v1767, 0.0
      %v3891 = vadd.f32 %v3889, %v3890
      %v3892 = vrot.slane %v3891, 4
      %v3893 = vadd.f32 %v3891, %v3892
      %v3894 = vrot.slane %v3893, 2
      %v3895 = vadd.f32 %v3893, %v3894
      %v3896 = vrot.slane %v3895, 1
      %v3897 = vadd.f32 %v3895, %v3896
      %v3898 = vsel %vm1818, %v1768, 0.0
      %v3899 = vsel %vm1818, %v1769, 0.0
      %v3900 = vadd.f32 %v3898, %v3899
      %v3901 = vrot.slane %v3900, 4
      %v3902 = vadd.f32 %v3900, %v3901
      %v3903 = vrot.slane %v3902, 2
      %v3904 = vadd.f32 %v3902, %v3903
      %v3905 = vrot.slane %v3904, 1
      %v3906 = vadd.f32 %v3904, %v3905
      %v3907 = vsel %vm1818, %v1770, 0.0
      %v3908 = vsel %vm1818, %v1771, 0.0
      %v3909 = vadd.f32 %v3907, %v3908
      %v3910 = vrot.slane %v3909, 4
      %v3911 = vadd.f32 %v3909, %v3910
      %v3912 = vrot.slane %v3911, 2
      %v3913 = vadd.f32 %v3911, %v3912
      %v3914 = vrot.slane %v3913, 1
      %v3915 = vadd.f32 %v3913, %v3914
      %v3916 = vsel %vm1818, %v1772, 0.0
      %v3917 = vsel %vm1818, %v1773, 0.0
      %v3918 = vadd.f32 %v3916, %v3917
      %v3919 = vrot.slane %v3918, 4
      %v3920 = vadd.f32 %v3918, %v3919
      %v3921 = vrot.slane %v3920, 2
      %v3922 = vadd.f32 %v3920, %v3921
      %v3923 = vrot.slane %v3922, 1
      %v3924 = vadd.f32 %v3922, %v3923
      %v3925 = vsel %vm1818, %v1774, 0.0
      %v3926 = vsel %vm1818, %v1775, 0.0
      %v3927 = vadd.f32 %v3925, %v3926
      %v3928 = vrot.slane %v3927, 4
      %v3929 = vadd.f32 %v3927, %v3928
      %v3930 = vrot.slane %v3929, 2
      %v3931 = vadd.f32 %v3929, %v3930
      %v3932 = vrot.slane %v3931, 1
      %v3933 = vadd.f32 %v3931, %v3932
      %v3934 = vsel %vm1818, %v1776, 0.0
      %v3935 = vsel %vm1818, %v1777, 0.0
      %v3936 = vadd.f32 %v3934, %v3935
      %v3937 = vrot.slane %v3936, 4
      %v3938 = vadd.f32 %v3936, %v3937
      %v3939 = vrot.slane %v3938, 2
      %v3940 = vadd.f32 %v3938, %v3939
      %v3941 = vrot.slane %v3940, 1
      %v3942 = vadd.f32 %v3940, %v3941
      %v3943 = vsel %vm1818, %v1778, 0.0
      %v3944 = vsel %vm1818, %v1779, 0.0
      %v3945 = vadd.f32 %v3943, %v3944
      %v3946 = vrot.slane %v3945, 4
      %v3947 = vadd.f32 %v3945, %v3946
      %v3948 = vrot.slane %v3947, 2
      %v3949 = vadd.f32 %v3947, %v3948
      %v3950 = vrot.slane %v3949, 1
      %v3951 = vadd.f32 %v3949, %v3950
      %v3952 = vsel %vm1818, %v1780, 0.0
      %v3953 = vsel %vm1818, %v1781, 0.0
      %v3954 = vadd.f32 %v3952, %v3953
      %v3955 = vrot.slane %v3954, 4
      %v3956 = vadd.f32 %v3954, %v3955
      %v3957 = vrot.slane %v3956, 2
      %v3958 = vadd.f32 %v3956, %v3957
      %v3959 = vrot.slane %v3958, 1
      %v3960 = vadd.f32 %v3958, %v3959
      %v3961 = vsel %vm1818, %v1782, 0.0
      %v3962 = vsel %vm1818, %v1783, 0.0
      %v3963 = vadd.f32 %v3961, %v3962
      %v3964 = vrot.slane %v3963, 4
      %v3965 = vadd.f32 %v3963, %v3964
      %v3966 = vrot.slane %v3965, 2
      %v3967 = vadd.f32 %v3965, %v3966
      %v3968 = vrot.slane %v3967, 1
      %v3969 = vadd.f32 %v3967, %v3968
      %v3970 = vsel %vm1818, %v1784, 0.0
      %v3971 = vsel %vm1818, %v1785, 0.0
      %v3972 = vadd.f32 %v3970, %v3971
      %v3973 = vrot.slane %v3972, 4
      %v3974 = vadd.f32 %v3972, %v3973
      %v3975 = vrot.slane %v3974, 2
      %v3976 = vadd.f32 %v3974, %v3975
      %v3977 = vrot.slane %v3976, 1
      %v3978 = vadd.f32 %v3976, %v3977
      %v3979 = vsel %vm1818, %v1786, 0.0
      %v3980 = vsel %vm1818, %v1787, 0.0
      %v3981 = vadd.f32 %v3979, %v3980
      %v3982 = vrot.slane %v3981, 4
      %v3983 = vadd.f32 %v3981, %v3982
      %v3984 = vrot.slane %v3983, 2
      %v3985 = vadd.f32 %v3983, %v3984
      %v3986 = vrot.slane %v3985, 1
      %v3987 = vadd.f32 %v3985, %v3986
      %v3988 = vsel %vm1818, %v1788, 0.0
      %v3989 = vsel %vm1818, %v1789, 0.0
      %v3990 = vadd.f32 %v3988, %v3989
      %v3991 = vrot.slane %v3990, 4
      %v3992 = vadd.f32 %v3990, %v3991
      %v3993 = vrot.slane %v3992, 2
      %v3994 = vadd.f32 %v3992, %v3993
      %v3995 = vrot.slane %v3994, 1
      %v3996 = vadd.f32 %v3994, %v3995
      %v3997 = vsel %vm1818, %v1790, 0.0
      %v3998 = vsel %vm1818, %v1791, 0.0
      %v3999 = vadd.f32 %v3997, %v3998
      %v4000 = vrot.slane %v3999, 4
      %v4001 = vadd.f32 %v3999, %v4000
      %v4002 = vrot.slane %v4001, 2
      %v4003 = vadd.f32 %v4001, %v4002
      %v4004 = vrot.slane %v4003, 1
      %v4005 = vadd.f32 %v4003, %v4004
      %v4006 = vsel %vm1818, %v1792, 0.0
      %v4007 = vsel %vm1818, %v1793, 0.0
      %v4008 = vadd.f32 %v4006, %v4007
      %v4009 = vrot.slane %v4008, 4
      %v4010 = vadd.f32 %v4008, %v4009
      %v4011 = vrot.slane %v4010, 2
      %v4012 = vadd.f32 %v4010, %v4011
      %v4013 = vrot.slane %v4012, 1
      %v4014 = vadd.f32 %v4012, %v4013
      %v4015 = vsel %vm1818, %v1794, 0.0
      %v4016 = vsel %vm1818, %v1795, 0.0
      %v4017 = vadd.f32 %v4015, %v4016
      %v4018 = vrot.slane %v4017, 4
      %v4019 = vadd.f32 %v4017, %v4018
      %v4020 = vrot.slane %v4019, 2
      %v4021 = vadd.f32 %v4019, %v4020
      %v4022 = vrot.slane %v4021, 1
      %v4023 = vadd.f32 %v4021, %v4022
      %v4024 = vsel %vm1818, %v1796, 0.0
      %v4025 = vsel %vm1818, %v1797, 0.0
      %v4026 = vadd.f32 %v4024, %v4025
      %v4027 = vrot.slane %v4026, 4
      %v4028 = vadd.f32 %v4026, %v4027
      %v4029 = vrot.slane %v4028, 2
      %v4030 = vadd.f32 %v4028, %v4029
      %v4031 = vrot.slane %v4030, 1
      %v4032 = vadd.f32 %v4030, %v4031
      %v4033 = vsel %vm1818, %v1798, 0.0
      %v4034 = vsel %vm1818, %v1799, 0.0
      %v4035 = vadd.f32 %v4033, %v4034
      %v4036 = vrot.slane %v4035, 4
      %v4037 = vadd.f32 %v4035, %v4036
      %v4038 = vrot.slane %v4037, 2
      %v4039 = vadd.f32 %v4037, %v4038
      %v4040 = vrot.slane %v4039, 1
      %v4041 = vadd.f32 %v4039, %v4040
      %v4042 = vsel %vm1818, %v1800, 0.0
      %v4043 = vsel %vm1818, %v1801, 0.0
      %v4044 = vadd.f32 %v4042, %v4043
      %v4045 = vrot.slane %v4044, 4
      %v4046 = vadd.f32 %v4044, %v4045
      %v4047 = vrot.slane %v4046, 2
      %v4048 = vadd.f32 %v4046, %v4047
      %v4049 = vrot.slane %v4048, 1
      %v4050 = vadd.f32 %v4048, %v4049
      %v4051 = vsel %vm1818, %v1802, 0.0
      %v4052 = vsel %vm1818, %v1803, 0.0
      %v4053 = vadd.f32 %v4051, %v4052
      %v4054 = vrot.slane %v4053, 4
      %v4055 = vadd.f32 %v4053, %v4054
      %v4056 = vrot.slane %v4055, 2
      %v4057 = vadd.f32 %v4055, %v4056
      %v4058 = vrot.slane %v4057, 1
      %v4059 = vadd.f32 %v4057, %v4058
      %v4060 = vsel %vm1818, %v1804, 0.0
      %v4061 = vsel %vm1818, %v1805, 0.0
      %v4062 = vadd.f32 %v4060, %v4061
      %v4063 = vrot.slane %v4062, 4
      %v4064 = vadd.f32 %v4062, %v4063
      %v4065 = vrot.slane %v4064, 2
      %v4066 = vadd.f32 %v4064, %v4065
      %v4067 = vrot.slane %v4066, 1
      %v4068 = vadd.f32 %v4066, %v4067
      %v4069 = vsel %vm1818, %v1806, 0.0
      %v4070 = vsel %vm1818, %v1807, 0.0
      %v4071 = vadd.f32 %v4069, %v4070
      %v4072 = vrot.slane %v4071, 4
      %v4073 = vadd.f32 %v4071, %v4072
      %v4074 = vrot.slane %v4073, 2
      %v4075 = vadd.f32 %v4073, %v4074
      %v4076 = vrot.slane %v4075, 1
      %v4077 = vadd.f32 %v4075, %v4076
      %v4078 = vsel %vm1818, %v1808, 0.0
      %v4079 = vsel %vm1818, %v1809, 0.0
      %v4080 = vadd.f32 %v4078, %v4079
      %v4081 = vrot.slane %v4080, 4
      %v4082 = vadd.f32 %v4080, %v4081
      %v4083 = vrot.slane %v4082, 2
      %v4084 = vadd.f32 %v4082, %v4083
      %v4085 = vrot.slane %v4084, 1
      %v4086 = vadd.f32 %v4084, %v4085
      %v4087 = vsel %vm1818, %v1810, 0.0
      %v4088 = vsel %vm1818, %v1811, 0.0
      %v4089 = vadd.f32 %v4087, %v4088
      %v4090 = vrot.slane %v4089, 4
      %v4091 = vadd.f32 %v4089, %v4090
      %v4092 = vrot.slane %v4091, 2
      %v4093 = vadd.f32 %v4091, %v4092
      %v4094 = vrot.slane %v4093, 1
      %v4095 = vadd.f32 %v4093, %v4094
      %v4096 = vsel %vm1818, %v1812, 0.0
      %v4097 = vsel %vm1818, %v1813, 0.0
      %v4098 = vadd.f32 %v4096, %v4097
      %v4099 = vrot.slane %v4098, 4
      %v4100 = vadd.f32 %v4098, %v4099
      %v4101 = vrot.slane %v4100, 2
      %v4102 = vadd.f32 %v4100, %v4101
      %v4103 = vrot.slane %v4102, 1
      %v4104 = vadd.f32 %v4102, %v4103
      %v4105 = vsel %vm1818, %v1814, 0.0
      %v4106 = vsel %vm1818, %v1815, 0.0
      %v4107 = vadd.f32 %v4105, %v4106
      %v4108 = vrot.slane %v4107, 4
      %v4109 = vadd.f32 %v4107, %v4108
      %v4110 = vrot.slane %v4109, 2
      %v4111 = vadd.f32 %v4109, %v4110
      %v4112 = vrot.slane %v4111, 1
      %v4113 = vadd.f32 %v4111, %v4112
      %v4114 = vsel %vm1818, %v1816, 0.0
      %v4115 = vsel %vm1818, %v1817, 0.0
      %v4116 = vadd.f32 %v4114, %v4115
      %v4117 = vrot.slane %v4116, 4
      %v4118 = vadd.f32 %v4116, %v4117
      %v4119 = vrot.slane %v4118, 2
      %v4120 = vadd.f32 %v4118, %v4119
      %v4121 = vrot.slane %v4120, 1
      %v4122 = vadd.f32 %v4120, %v4121
      %v4123 = vld [vmem:[%s3] sm:$0xff]
      %v4124 = vld [vmem:[%s3 + $0x8] sm:$0xff]
      %v4125 = vmul.f32 %v792, %v4123
      %v4126 = vmul.f32 %v793, %v4124
      %v4127 = vmul.f32 %v794, %v4123
      %v4128 = vmul.f32 %v795, %v4124
      %v4129 = vmul.f32 %v796, %v4123
      %v4130 = vmul.f32 %v797, %v4124
      %v4131 = vmul.f32 %v798, %v4123
      %v4132 = vmul.f32 %v799, %v4124
      %v4133 = vmul.f32 %v800, %v4123
      %v4134 = vmul.f32 %v801, %v4124
      %v4135 = vmul.f32 %v802, %v4123
      %v4136 = vmul.f32 %v803, %v4124
      %v4137 = vmul.f32 %v804, %v4123
      %v4138 = vmul.f32 %v805, %v4124
      %v4139 = vmul.f32 %v806, %v4123
      %v4140 = vmul.f32 %v807, %v4124
      %v4141 = vmul.f32 %v808, %v4123
      %v4142 = vmul.f32 %v809, %v4124
      %v4143 = vmul.f32 %v810, %v4123
      %v4144 = vmul.f32 %v811, %v4124
      %v4145 = vmul.f32 %v812, %v4123
      %v4146 = vmul.f32 %v813, %v4124
      %v4147 = vmul.f32 %v814, %v4123
      %v4148 = vmul.f32 %v815, %v4124
      %v4149 = vmul.f32 %v816, %v4123
      %v4150 = vmul.f32 %v817, %v4124
      %v4151 = vmul.f32 %v818, %v4123
      %v4152 = vmul.f32 %v819, %v4124
      %v4153 = vmul.f32 %v820, %v4123
      %v4154 = vmul.f32 %v821, %v4124
      %v4155 = vmul.f32 %v822, %v4123
      %v4156 = vmul.f32 %v823, %v4124
      %v4157 = vmul.f32 %v824, %v4123
      %v4158 = vmul.f32 %v825, %v4124
      %v4159 = vmul.f32 %v826, %v4123
      %v4160 = vmul.f32 %v827, %v4124
      %v4161 = vmul.f32 %v828, %v4123
      %v4162 = vmul.f32 %v829, %v4124
      %v4163 = vmul.f32 %v830, %v4123
      %v4164 = vmul.f32 %v831, %v4124
      %v4165 = vmul.f32 %v832, %v4123
      %v4166 = vmul.f32 %v833, %v4124
      %v4167 = vmul.f32 %v834, %v4123
      %v4168 = vmul.f32 %v835, %v4124
      %v4169 = vmul.f32 %v836, %v4123
      %v4170 = vmul.f32 %v837, %v4124
      %v4171 = vmul.f32 %v838, %v4123
      %v4172 = vmul.f32 %v839, %v4124
      %v4173 = vmul.f32 %v840, %v4123
      %v4174 = vmul.f32 %v841, %v4124
      %v4175 = vmul.f32 %v842, %v4123
      %v4176 = vmul.f32 %v843, %v4124
      %v4177 = vmul.f32 %v844, %v4123
      %v4178 = vmul.f32 %v845, %v4124
      %v4179 = vmul.f32 %v846, %v4123
      %v4180 = vmul.f32 %v847, %v4124
      %v4181 = vmul.f32 %v848, %v4123
      %v4182 = vmul.f32 %v849, %v4124
      %v4183 = vmul.f32 %v850, %v4123
      %v4184 = vmul.f32 %v851, %v4124
      %v4185 = vmul.f32 %v852, %v4123
      %v4186 = vmul.f32 %v853, %v4124
      %v4187 = vmul.f32 %v854, %v4123
      %v4188 = vmul.f32 %v855, %v4124
      %v4189 = vmul.f32 %v856, %v4123
      %v4190 = vmul.f32 %v857, %v4124
      %v4191 = vmul.f32 %v858, %v4123
      %v4192 = vmul.f32 %v859, %v4124
      %v4193 = vmul.f32 %v860, %v4123
      %v4194 = vmul.f32 %v861, %v4124
      %v4195 = vmul.f32 %v862, %v4123
      %v4196 = vmul.f32 %v863, %v4124
      %v4197 = vmul.f32 %v864, %v4123
      %v4198 = vmul.f32 %v865, %v4124
      %v4199 = vmul.f32 %v866, %v4123
      %v4200 = vmul.f32 %v867, %v4124
      %v4201 = vmul.f32 %v868, %v4123
      %v4202 = vmul.f32 %v869, %v4124
      %v4203 = vmul.f32 %v870, %v4123
      %v4204 = vmul.f32 %v871, %v4124
      %v4205 = vmul.f32 %v872, %v4123
      %v4206 = vmul.f32 %v873, %v4124
      %v4207 = vmul.f32 %v874, %v4123
      %v4208 = vmul.f32 %v875, %v4124
      %v4209 = vmul.f32 %v876, %v4123
      %v4210 = vmul.f32 %v877, %v4124
      %v4211 = vmul.f32 %v878, %v4123
      %v4212 = vmul.f32 %v879, %v4124
      %v4213 = vmul.f32 %v880, %v4123
      %v4214 = vmul.f32 %v881, %v4124
      %v4215 = vmul.f32 %v882, %v4123
      %v4216 = vmul.f32 %v883, %v4124
      %v4217 = vmul.f32 %v884, %v4123
      %v4218 = vmul.f32 %v885, %v4124
      %v4219 = vmul.f32 %v886, %v4123
      %v4220 = vmul.f32 %v887, %v4124
      %v4221 = vmul.f32 %v888, %v4123
      %v4222 = vmul.f32 %v889, %v4124
      %v4223 = vmul.f32 %v890, %v4123
      %v4224 = vmul.f32 %v891, %v4124
      %v4225 = vmul.f32 %v892, %v4123
      %v4226 = vmul.f32 %v893, %v4124
      %v4227 = vmul.f32 %v894, %v4123
      %v4228 = vmul.f32 %v895, %v4124
      %v4229 = vmul.f32 %v896, %v4123
      %v4230 = vmul.f32 %v897, %v4124
      %v4231 = vmul.f32 %v898, %v4123
      %v4232 = vmul.f32 %v899, %v4124
      %v4233 = vmul.f32 %v900, %v4123
      %v4234 = vmul.f32 %v901, %v4124
      %v4235 = vmul.f32 %v902, %v4123
      %v4236 = vmul.f32 %v903, %v4124
      %v4237 = vmul.f32 %v904, %v4123
      %v4238 = vmul.f32 %v905, %v4124
      %v4239 = vmul.f32 %v906, %v4123
      %v4240 = vmul.f32 %v907, %v4124
      %v4241 = vmul.f32 %v908, %v4123
      %v4242 = vmul.f32 %v909, %v4124
      %v4243 = vmul.f32 %v910, %v4123
      %v4244 = vmul.f32 %v911, %v4124
      %v4245 = vmul.f32 %v912, %v4123
      %v4246 = vmul.f32 %v913, %v4124
      %v4247 = vmul.f32 %v914, %v4123
      %v4248 = vmul.f32 %v915, %v4124
      %v4249 = vmul.f32 %v916, %v4123
      %v4250 = vmul.f32 %v917, %v4124
      %v4251 = vmul.f32 %v918, %v4123
      %v4252 = vmul.f32 %v919, %v4124
      %v4253 = vmul.f32 %v920, %v4123
      %v4254 = vmul.f32 %v921, %v4124
      %v4255 = vmul.f32 %v922, %v4123
      %v4256 = vmul.f32 %v923, %v4124
      %v4257 = vmul.f32 %v924, %v4123
      %v4258 = vmul.f32 %v925, %v4124
      %v4259 = vmul.f32 %v926, %v4123
      %v4260 = vmul.f32 %v927, %v4124
      %v4261 = vmul.f32 %v928, %v4123
      %v4262 = vmul.f32 %v929, %v4124
      %v4263 = vmul.f32 %v930, %v4123
      %v4264 = vmul.f32 %v931, %v4124
      %v4265 = vmul.f32 %v932, %v4123
      %v4266 = vmul.f32 %v933, %v4124
      %v4267 = vmul.f32 %v934, %v4123
      %v4268 = vmul.f32 %v935, %v4124
      %v4269 = vmul.f32 %v936, %v4123
      %v4270 = vmul.f32 %v937, %v4124
      %v4271 = vmul.f32 %v938, %v4123
      %v4272 = vmul.f32 %v939, %v4124
      %v4273 = vmul.f32 %v940, %v4123
      %v4274 = vmul.f32 %v941, %v4124
      %v4275 = vmul.f32 %v942, %v4123
      %v4276 = vmul.f32 %v943, %v4124
      %v4277 = vmul.f32 %v944, %v4123
      %v4278 = vmul.f32 %v945, %v4124
      %v4279 = vmul.f32 %v946, %v4123
      %v4280 = vmul.f32 %v947, %v4124
      %v4281 = vmul.f32 %v948, %v4123
      %v4282 = vmul.f32 %v949, %v4124
      %v4283 = vmul.f32 %v950, %v4123
      %v4284 = vmul.f32 %v951, %v4124
      %v4285 = vmul.f32 %v952, %v4123
      %v4286 = vmul.f32 %v953, %v4124
      %v4287 = vmul.f32 %v954, %v4123
      %v4288 = vmul.f32 %v955, %v4124
      %v4289 = vmul.f32 %v956, %v4123
      %v4290 = vmul.f32 %v957, %v4124
      %v4291 = vmul.f32 %v958, %v4123
      %v4292 = vmul.f32 %v959, %v4124
      %v4293 = vmul.f32 %v960, %v4123
      %v4294 = vmul.f32 %v961, %v4124
      %v4295 = vmul.f32 %v962, %v4123
      %v4296 = vmul.f32 %v963, %v4124
      %v4297 = vmul.f32 %v964, %v4123
      %v4298 = vmul.f32 %v965, %v4124
      %v4299 = vmul.f32 %v966, %v4123
      %v4300 = vmul.f32 %v967, %v4124
      %v4301 = vmul.f32 %v968, %v4123
      %v4302 = vmul.f32 %v969, %v4124
      %v4303 = vmul.f32 %v970, %v4123
      %v4304 = vmul.f32 %v971, %v4124
      %v4305 = vmul.f32 %v972, %v4123
      %v4306 = vmul.f32 %v973, %v4124
      %v4307 = vmul.f32 %v974, %v4123
      %v4308 = vmul.f32 %v975, %v4124
      %v4309 = vmul.f32 %v976, %v4123
      %v4310 = vmul.f32 %v977, %v4124
      %v4311 = vmul.f32 %v978, %v4123
      %v4312 = vmul.f32 %v979, %v4124
      %v4313 = vmul.f32 %v980, %v4123
      %v4314 = vmul.f32 %v981, %v4124
      %v4315 = vmul.f32 %v982, %v4123
      %v4316 = vmul.f32 %v983, %v4124
      %v4317 = vmul.f32 %v984, %v4123
      %v4318 = vmul.f32 %v985, %v4124
      %v4319 = vmul.f32 %v986, %v4123
      %v4320 = vmul.f32 %v987, %v4124
      %v4321 = vmul.f32 %v988, %v4123
      %v4322 = vmul.f32 %v989, %v4124
      %v4323 = vmul.f32 %v990, %v4123
      %v4324 = vmul.f32 %v991, %v4124
      %v4325 = vmul.f32 %v992, %v4123
      %v4326 = vmul.f32 %v993, %v4124
      %v4327 = vmul.f32 %v994, %v4123
      %v4328 = vmul.f32 %v995, %v4124
      %v4329 = vmul.f32 %v996, %v4123
      %v4330 = vmul.f32 %v997, %v4124
      %v4331 = vmul.f32 %v998, %v4123
      %v4332 = vmul.f32 %v999, %v4124
      %v4333 = vmul.f32 %v1000, %v4123
      %v4334 = vmul.f32 %v1001, %v4124
      %v4335 = vmul.f32 %v1002, %v4123
      %v4336 = vmul.f32 %v1003, %v4124
      %v4337 = vmul.f32 %v1004, %v4123
      %v4338 = vmul.f32 %v1005, %v4124
      %v4339 = vmul.f32 %v1006, %v4123
      %v4340 = vmul.f32 %v1007, %v4124
      %v4341 = vmul.f32 %v1008, %v4123
      %v4342 = vmul.f32 %v1009, %v4124
      %v4343 = vmul.f32 %v1010, %v4123
      %v4344 = vmul.f32 %v1011, %v4124
      %v4345 = vmul.f32 %v1012, %v4123
      %v4346 = vmul.f32 %v1013, %v4124
      %v4347 = vmul.f32 %v1014, %v4123
      %v4348 = vmul.f32 %v1015, %v4124
      %v4349 = vmul.f32 %v1016, %v4123
      %v4350 = vmul.f32 %v1017, %v4124
      %v4351 = vmul.f32 %v1018, %v4123
      %v4352 = vmul.f32 %v1019, %v4124
      %v4353 = vmul.f32 %v1020, %v4123
      %v4354 = vmul.f32 %v1021, %v4124
      %v4355 = vmul.f32 %v1022, %v4123
      %v4356 = vmul.f32 %v1023, %v4124
      %v4357 = vmul.f32 %v1024, %v4123
      %v4358 = vmul.f32 %v1025, %v4124
      %v4359 = vmul.f32 %v1026, %v4123
      %v4360 = vmul.f32 %v1027, %v4124
      %v4361 = vmul.f32 %v1028, %v4123
      %v4362 = vmul.f32 %v1029, %v4124
      %v4363 = vmul.f32 %v1030, %v4123
      %v4364 = vmul.f32 %v1031, %v4124
      %v4365 = vmul.f32 %v1032, %v4123
      %v4366 = vmul.f32 %v1033, %v4124
      %v4367 = vmul.f32 %v1034, %v4123
      %v4368 = vmul.f32 %v1035, %v4124
      %v4369 = vmul.f32 %v1036, %v4123
      %v4370 = vmul.f32 %v1037, %v4124
      %v4371 = vmul.f32 %v1038, %v4123
      %v4372 = vmul.f32 %v1039, %v4124
      %v4373 = vmul.f32 %v1040, %v4123
      %v4374 = vmul.f32 %v1041, %v4124
      %v4375 = vmul.f32 %v1042, %v4123
      %v4376 = vmul.f32 %v1043, %v4124
      %v4377 = vmul.f32 %v1044, %v4123
      %v4378 = vmul.f32 %v1045, %v4124
      %v4379 = vmul.f32 %v1046, %v4123
      %v4380 = vmul.f32 %v1047, %v4124
      %v4381 = vmul.f32 %v1048, %v4123
      %v4382 = vmul.f32 %v1049, %v4124
      %v4383 = vmul.f32 %v1050, %v4123
      %v4384 = vmul.f32 %v1051, %v4124
      %v4385 = vmul.f32 %v1052, %v4123
      %v4386 = vmul.f32 %v1053, %v4124
      %v4387 = vmul.f32 %v1054, %v4123
      %v4388 = vmul.f32 %v1055, %v4124
      %v4389 = vmul.f32 %v1056, %v4123
      %v4390 = vmul.f32 %v1057, %v4124
      %v4391 = vmul.f32 %v1058, %v4123
      %v4392 = vmul.f32 %v1059, %v4124
      %v4393 = vmul.f32 %v1060, %v4123
      %v4394 = vmul.f32 %v1061, %v4124
      %v4395 = vmul.f32 %v1062, %v4123
      %v4396 = vmul.f32 %v1063, %v4124
      %v4397 = vmul.f32 %v1064, %v4123
      %v4398 = vmul.f32 %v1065, %v4124
      %v4399 = vmul.f32 %v1066, %v4123
      %v4400 = vmul.f32 %v1067, %v4124
      %v4401 = vmul.f32 %v1068, %v4123
      %v4402 = vmul.f32 %v1069, %v4124
      %v4403 = vmul.f32 %v1070, %v4123
      %v4404 = vmul.f32 %v1071, %v4124
      %v4405 = vmul.f32 %v1072, %v4123
      %v4406 = vmul.f32 %v1073, %v4124
      %v4407 = vmul.f32 %v1074, %v4123
      %v4408 = vmul.f32 %v1075, %v4124
      %v4409 = vmul.f32 %v1076, %v4123
      %v4410 = vmul.f32 %v1077, %v4124
      %v4411 = vmul.f32 %v1078, %v4123
      %v4412 = vmul.f32 %v1079, %v4124
      %v4413 = vmul.f32 %v1080, %v4123
      %v4414 = vmul.f32 %v1081, %v4124
      %v4415 = vmul.f32 %v1082, %v4123
      %v4416 = vmul.f32 %v1083, %v4124
      %v4417 = vmul.f32 %v1084, %v4123
      %v4418 = vmul.f32 %v1085, %v4124
      %v4419 = vmul.f32 %v1086, %v4123
      %v4420 = vmul.f32 %v1087, %v4124
      %v4421 = vmul.f32 %v1088, %v4123
      %v4422 = vmul.f32 %v1089, %v4124
      %v4423 = vmul.f32 %v1090, %v4123
      %v4424 = vmul.f32 %v1091, %v4124
      %v4425 = vmul.f32 %v1092, %v4123
      %v4426 = vmul.f32 %v1093, %v4124
      %v4427 = vmul.f32 %v1094, %v4123
      %v4428 = vmul.f32 %v1095, %v4124
      %v4429 = vmul.f32 %v1096, %v4123
      %v4430 = vmul.f32 %v1097, %v4124
      %v4431 = vmul.f32 %v1098, %v4123
      %v4432 = vmul.f32 %v1099, %v4124
      %v4433 = vmul.f32 %v1100, %v4123
      %v4434 = vmul.f32 %v1101, %v4124
      %v4435 = vmul.f32 %v1102, %v4123
      %v4436 = vmul.f32 %v1103, %v4124
      %v4437 = vmul.f32 %v1104, %v4123
      %v4438 = vmul.f32 %v1105, %v4124
      %v4439 = vmul.f32 %v1106, %v4123
      %v4440 = vmul.f32 %v1107, %v4124
      %v4441 = vmul.f32 %v1108, %v4123
      %v4442 = vmul.f32 %v1109, %v4124
      %v4443 = vmul.f32 %v1110, %v4123
      %v4444 = vmul.f32 %v1111, %v4124
      %v4445 = vmul.f32 %v1112, %v4123
      %v4446 = vmul.f32 %v1113, %v4124
      %v4447 = vmul.f32 %v1114, %v4123
      %v4448 = vmul.f32 %v1115, %v4124
      %v4449 = vmul.f32 %v1116, %v4123
      %v4450 = vmul.f32 %v1117, %v4124
      %v4451 = vmul.f32 %v1118, %v4123
      %v4452 = vmul.f32 %v1119, %v4124
      %v4453 = vmul.f32 %v1120, %v4123
      %v4454 = vmul.f32 %v1121, %v4124
      %v4455 = vmul.f32 %v1122, %v4123
      %v4456 = vmul.f32 %v1123, %v4124
      %v4457 = vmul.f32 %v1124, %v4123
      %v4458 = vmul.f32 %v1125, %v4124
      %v4459 = vmul.f32 %v1126, %v4123
      %v4460 = vmul.f32 %v1127, %v4124
      %v4461 = vmul.f32 %v1128, %v4123
      %v4462 = vmul.f32 %v1129, %v4124
      %v4463 = vmul.f32 %v1130, %v4123
      %v4464 = vmul.f32 %v1131, %v4124
      %v4465 = vmul.f32 %v1132, %v4123
      %v4466 = vmul.f32 %v1133, %v4124
      %v4467 = vmul.f32 %v1134, %v4123
      %v4468 = vmul.f32 %v1135, %v4124
      %v4469 = vmul.f32 %v1136, %v4123
      %v4470 = vmul.f32 %v1137, %v4124
      %v4471 = vmul.f32 %v1138, %v4123
      %v4472 = vmul.f32 %v1139, %v4124
      %v4473 = vmul.f32 %v1140, %v4123
      %v4474 = vmul.f32 %v1141, %v4124
      %v4475 = vmul.f32 %v1142, %v4123
      %v4476 = vmul.f32 %v1143, %v4124
      %v4477 = vmul.f32 %v1144, %v4123
      %v4478 = vmul.f32 %v1145, %v4124
      %v4479 = vmul.f32 %v1146, %v4123
      %v4480 = vmul.f32 %v1147, %v4124
      %v4481 = vmul.f32 %v1148, %v4123
      %v4482 = vmul.f32 %v1149, %v4124
      %v4483 = vmul.f32 %v1150, %v4123
      %v4484 = vmul.f32 %v1151, %v4124
      %v4485 = vmul.f32 %v1152, %v4123
      %v4486 = vmul.f32 %v1153, %v4124
      %v4487 = vmul.f32 %v1154, %v4123
      %v4488 = vmul.f32 %v1155, %v4124
      %v4489 = vmul.f32 %v1156, %v4123
      %v4490 = vmul.f32 %v1157, %v4124
      %v4491 = vmul.f32 %v1158, %v4123
      %v4492 = vmul.f32 %v1159, %v4124
      %v4493 = vmul.f32 %v1160, %v4123
      %v4494 = vmul.f32 %v1161, %v4124
      %v4495 = vmul.f32 %v1162, %v4123
      %v4496 = vmul.f32 %v1163, %v4124
      %v4497 = vmul.f32 %v1164, %v4123
      %v4498 = vmul.f32 %v1165, %v4124
      %v4499 = vmul.f32 %v1166, %v4123
      %v4500 = vmul.f32 %v1167, %v4124
      %v4501 = vmul.f32 %v1168, %v4123
      %v4502 = vmul.f32 %v1169, %v4124
      %v4503 = vmul.f32 %v1170, %v4123
      %v4504 = vmul.f32 %v1171, %v4124
      %v4505 = vmul.f32 %v1172, %v4123
      %v4506 = vmul.f32 %v1173, %v4124
      %v4507 = vmul.f32 %v1174, %v4123
      %v4508 = vmul.f32 %v1175, %v4124
      %v4509 = vmul.f32 %v1176, %v4123
      %v4510 = vmul.f32 %v1177, %v4124
      %v4511 = vmul.f32 %v1178, %v4123
      %v4512 = vmul.f32 %v1179, %v4124
      %v4513 = vmul.f32 %v1180, %v4123
      %v4514 = vmul.f32 %v1181, %v4124
      %v4515 = vmul.f32 %v1182, %v4123
      %v4516 = vmul.f32 %v1183, %v4124
      %v4517 = vmul.f32 %v1184, %v4123
      %v4518 = vmul.f32 %v1185, %v4124
      %v4519 = vmul.f32 %v1186, %v4123
      %v4520 = vmul.f32 %v1187, %v4124
      %v4521 = vmul.f32 %v1188, %v4123
      %v4522 = vmul.f32 %v1189, %v4124
      %v4523 = vmul.f32 %v1190, %v4123
      %v4524 = vmul.f32 %v1191, %v4124
      %v4525 = vmul.f32 %v1192, %v4123
      %v4526 = vmul.f32 %v1193, %v4124
      %v4527 = vmul.f32 %v1194, %v4123
      %v4528 = vmul.f32 %v1195, %v4124
      %v4529 = vmul.f32 %v1196, %v4123
      %v4530 = vmul.f32 %v1197, %v4124
      %v4531 = vmul.f32 %v1198, %v4123
      %v4532 = vmul.f32 %v1199, %v4124
      %v4533 = vmul.f32 %v1200, %v4123
      %v4534 = vmul.f32 %v1201, %v4124
      %v4535 = vmul.f32 %v1202, %v4123
      %v4536 = vmul.f32 %v1203, %v4124
      %v4537 = vmul.f32 %v1204, %v4123
      %v4538 = vmul.f32 %v1205, %v4124
      %v4539 = vmul.f32 %v1206, %v4123
      %v4540 = vmul.f32 %v1207, %v4124
      %v4541 = vmul.f32 %v1208, %v4123
      %v4542 = vmul.f32 %v1209, %v4124
      %v4543 = vmul.f32 %v1210, %v4123
      %v4544 = vmul.f32 %v1211, %v4124
      %v4545 = vmul.f32 %v1212, %v4123
      %v4546 = vmul.f32 %v1213, %v4124
      %v4547 = vmul.f32 %v1214, %v4123
      %v4548 = vmul.f32 %v1215, %v4124
      %v4549 = vmul.f32 %v1216, %v4123
      %v4550 = vmul.f32 %v1217, %v4124
      %v4551 = vmul.f32 %v1218, %v4123
      %v4552 = vmul.f32 %v1219, %v4124
      %v4553 = vmul.f32 %v1220, %v4123
      %v4554 = vmul.f32 %v1221, %v4124
      %v4555 = vmul.f32 %v1222, %v4123
      %v4556 = vmul.f32 %v1223, %v4124
      %v4557 = vmul.f32 %v1224, %v4123
      %v4558 = vmul.f32 %v1225, %v4124
      %v4559 = vmul.f32 %v1226, %v4123
      %v4560 = vmul.f32 %v1227, %v4124
      %v4561 = vmul.f32 %v1228, %v4123
      %v4562 = vmul.f32 %v1229, %v4124
      %v4563 = vmul.f32 %v1230, %v4123
      %v4564 = vmul.f32 %v1231, %v4124
      %v4565 = vmul.f32 %v1232, %v4123
      %v4566 = vmul.f32 %v1233, %v4124
      %v4567 = vmul.f32 %v1234, %v4123
      %v4568 = vmul.f32 %v1235, %v4124
      %v4569 = vmul.f32 %v1236, %v4123
      %v4570 = vmul.f32 %v1237, %v4124
      %v4571 = vmul.f32 %v1238, %v4123
      %v4572 = vmul.f32 %v1239, %v4124
      %v4573 = vmul.f32 %v1240, %v4123
      %v4574 = vmul.f32 %v1241, %v4124
      %v4575 = vmul.f32 %v1242, %v4123
      %v4576 = vmul.f32 %v1243, %v4124
      %v4577 = vmul.f32 %v1244, %v4123
      %v4578 = vmul.f32 %v1245, %v4124
      %v4579 = vmul.f32 %v1246, %v4123
      %v4580 = vmul.f32 %v1247, %v4124
      %v4581 = vmul.f32 %v1248, %v4123
      %v4582 = vmul.f32 %v1249, %v4124
      %v4583 = vmul.f32 %v1250, %v4123
      %v4584 = vmul.f32 %v1251, %v4124
      %v4585 = vmul.f32 %v1252, %v4123
      %v4586 = vmul.f32 %v1253, %v4124
      %v4587 = vmul.f32 %v1254, %v4123
      %v4588 = vmul.f32 %v1255, %v4124
      %v4589 = vmul.f32 %v1256, %v4123
      %v4590 = vmul.f32 %v1257, %v4124
      %v4591 = vmul.f32 %v1258, %v4123
      %v4592 = vmul.f32 %v1259, %v4124
      %v4593 = vmul.f32 %v1260, %v4123
      %v4594 = vmul.f32 %v1261, %v4124
      %v4595 = vmul.f32 %v1262, %v4123
      %v4596 = vmul.f32 %v1263, %v4124
      %v4597 = vmul.f32 %v1264, %v4123
      %v4598 = vmul.f32 %v1265, %v4124
      %v4599 = vmul.f32 %v1266, %v4123
      %v4600 = vmul.f32 %v1267, %v4124
      %v4601 = vmul.f32 %v1268, %v4123
      %v4602 = vmul.f32 %v1269, %v4124
      %v4603 = vmul.f32 %v1270, %v4123
      %v4604 = vmul.f32 %v1271, %v4124
      %v4605 = vmul.f32 %v1272, %v4123
      %v4606 = vmul.f32 %v1273, %v4124
      %v4607 = vmul.f32 %v1274, %v4123
      %v4608 = vmul.f32 %v1275, %v4124
      %v4609 = vmul.f32 %v1276, %v4123
      %v4610 = vmul.f32 %v1277, %v4124
      %v4611 = vmul.f32 %v1278, %v4123
      %v4612 = vmul.f32 %v1279, %v4124
      %v4613 = vmul.f32 %v1280, %v4123
      %v4614 = vmul.f32 %v1281, %v4124
      %v4615 = vmul.f32 %v1282, %v4123
      %v4616 = vmul.f32 %v1283, %v4124
      %v4617 = vmul.f32 %v1284, %v4123
      %v4618 = vmul.f32 %v1285, %v4124
      %v4619 = vmul.f32 %v1286, %v4123
      %v4620 = vmul.f32 %v1287, %v4124
      %v4621 = vmul.f32 %v1288, %v4123
      %v4622 = vmul.f32 %v1289, %v4124
      %v4623 = vmul.f32 %v1290, %v4123
      %v4624 = vmul.f32 %v1291, %v4124
      %v4625 = vmul.f32 %v1292, %v4123
      %v4626 = vmul.f32 %v1293, %v4124
      %v4627 = vmul.f32 %v1294, %v4123
      %v4628 = vmul.f32 %v1295, %v4124
      %v4629 = vmul.f32 %v1296, %v4123
      %v4630 = vmul.f32 %v1297, %v4124
      %v4631 = vmul.f32 %v1298, %v4123
      %v4632 = vmul.f32 %v1299, %v4124
      %v4633 = vmul.f32 %v1300, %v4123
      %v4634 = vmul.f32 %v1301, %v4124
      %v4635 = vmul.f32 %v1302, %v4123
      %v4636 = vmul.f32 %v1303, %v4124
      %v4637 = vsel %vm1818, %v4125, 0.0
      %v4638 = vsel %vm1818, %v4126, 0.0
      %v4639 = vadd.f32 %v4637, %v4638
      %v4640 = vrot.slane %v4639, 4
      %v4641 = vadd.f32 %v4639, %v4640
      %v4642 = vrot.slane %v4641, 2
      %v4643 = vadd.f32 %v4641, %v4642
      %v4644 = vrot.slane %v4643, 1
      %v4645 = vadd.f32 %v4643, %v4644
      %v4646 = vsel %vm1818, %v4127, 0.0
      %v4647 = vsel %vm1818, %v4128, 0.0
      %v4648 = vadd.f32 %v4646, %v4647
      %v4649 = vrot.slane %v4648, 4
      %v4650 = vadd.f32 %v4648, %v4649
      %v4651 = vrot.slane %v4650, 2
      %v4652 = vadd.f32 %v4650, %v4651
      %v4653 = vrot.slane %v4652, 1
      %v4654 = vadd.f32 %v4652, %v4653
      %v4655 = vsel %vm1818, %v4129, 0.0
      %v4656 = vsel %vm1818, %v4130, 0.0
      %v4657 = vadd.f32 %v4655, %v4656
      %v4658 = vrot.slane %v4657, 4
      %v4659 = vadd.f32 %v4657, %v4658
      %v4660 = vrot.slane %v4659, 2
      %v4661 = vadd.f32 %v4659, %v4660
      %v4662 = vrot.slane %v4661, 1
      %v4663 = vadd.f32 %v4661, %v4662
      %v4664 = vsel %vm1818, %v4131, 0.0
      %v4665 = vsel %vm1818, %v4132, 0.0
      %v4666 = vadd.f32 %v4664, %v4665
      %v4667 = vrot.slane %v4666, 4
      %v4668 = vadd.f32 %v4666, %v4667
      %v4669 = vrot.slane %v4668, 2
      %v4670 = vadd.f32 %v4668, %v4669
      %v4671 = vrot.slane %v4670, 1
      %v4672 = vadd.f32 %v4670, %v4671
      %v4673 = vsel %vm1818, %v4133, 0.0
      %v4674 = vsel %vm1818, %v4134, 0.0
      %v4675 = vadd.f32 %v4673, %v4674
      %v4676 = vrot.slane %v4675, 4
      %v4677 = vadd.f32 %v4675, %v4676
      %v4678 = vrot.slane %v4677, 2
      %v4679 = vadd.f32 %v4677, %v4678
      %v4680 = vrot.slane %v4679, 1
      %v4681 = vadd.f32 %v4679, %v4680
      %v4682 = vsel %vm1818, %v4135, 0.0
      %v4683 = vsel %vm1818, %v4136, 0.0
      %v4684 = vadd.f32 %v4682, %v4683
      %v4685 = vrot.slane %v4684, 4
      %v4686 = vadd.f32 %v4684, %v4685
      %v4687 = vrot.slane %v4686, 2
      %v4688 = vadd.f32 %v4686, %v4687
      %v4689 = vrot.slane %v4688, 1
      %v4690 = vadd.f32 %v4688, %v4689
      %v4691 = vsel %vm1818, %v4137, 0.0
      %v4692 = vsel %vm1818, %v4138, 0.0
      %v4693 = vadd.f32 %v4691, %v4692
      %v4694 = vrot.slane %v4693, 4
      %v4695 = vadd.f32 %v4693, %v4694
      %v4696 = vrot.slane %v4695, 2
      %v4697 = vadd.f32 %v4695, %v4696
      %v4698 = vrot.slane %v4697, 1
      %v4699 = vadd.f32 %v4697, %v4698
      %v4700 = vsel %vm1818, %v4139, 0.0
      %v4701 = vsel %vm1818, %v4140, 0.0
      %v4702 = vadd.f32 %v4700, %v4701
      %v4703 = vrot.slane %v4702, 4
      %v4704 = vadd.f32 %v4702, %v4703
      %v4705 = vrot.slane %v4704, 2
      %v4706 = vadd.f32 %v4704, %v4705
      %v4707 = vrot.slane %v4706, 1
      %v4708 = vadd.f32 %v4706, %v4707
      %v4709 = vsel %vm1818, %v4141, 0.0
      %v4710 = vsel %vm1818, %v4142, 0.0
      %v4711 = vadd.f32 %v4709, %v4710
      %v4712 = vrot.slane %v4711, 4
      %v4713 = vadd.f32 %v4711, %v4712
      %v4714 = vrot.slane %v4713, 2
      %v4715 = vadd.f32 %v4713, %v4714
      %v4716 = vrot.slane %v4715, 1
      %v4717 = vadd.f32 %v4715, %v4716
      %v4718 = vsel %vm1818, %v4143, 0.0
      %v4719 = vsel %vm1818, %v4144, 0.0
      %v4720 = vadd.f32 %v4718, %v4719
      %v4721 = vrot.slane %v4720, 4
      %v4722 = vadd.f32 %v4720, %v4721
      %v4723 = vrot.slane %v4722, 2
      %v4724 = vadd.f32 %v4722, %v4723
      %v4725 = vrot.slane %v4724, 1
      %v4726 = vadd.f32 %v4724, %v4725
      %v4727 = vsel %vm1818, %v4145, 0.0
      %v4728 = vsel %vm1818, %v4146, 0.0
      %v4729 = vadd.f32 %v4727, %v4728
      %v4730 = vrot.slane %v4729, 4
      %v4731 = vadd.f32 %v4729, %v4730
      %v4732 = vrot.slane %v4731, 2
      %v4733 = vadd.f32 %v4731, %v4732
      %v4734 = vrot.slane %v4733, 1
      %v4735 = vadd.f32 %v4733, %v4734
      %v4736 = vsel %vm1818, %v4147, 0.0
      %v4737 = vsel %vm1818, %v4148, 0.0
      %v4738 = vadd.f32 %v4736, %v4737
      %v4739 = vrot.slane %v4738, 4
      %v4740 = vadd.f32 %v4738, %v4739
      %v4741 = vrot.slane %v4740, 2
      %v4742 = vadd.f32 %v4740, %v4741
      %v4743 = vrot.slane %v4742, 1
      %v4744 = vadd.f32 %v4742, %v4743
      %v4745 = vsel %vm1818, %v4149, 0.0
      %v4746 = vsel %vm1818, %v4150, 0.0
      %v4747 = vadd.f32 %v4745, %v4746
      %v4748 = vrot.slane %v4747, 4
      %v4749 = vadd.f32 %v4747, %v4748
      %v4750 = vrot.slane %v4749, 2
      %v4751 = vadd.f32 %v4749, %v4750
      %v4752 = vrot.slane %v4751, 1
      %v4753 = vadd.f32 %v4751, %v4752
      %v4754 = vsel %vm1818, %v4151, 0.0
      %v4755 = vsel %vm1818, %v4152, 0.0
      %v4756 = vadd.f32 %v4754, %v4755
      %v4757 = vrot.slane %v4756, 4
      %v4758 = vadd.f32 %v4756, %v4757
      %v4759 = vrot.slane %v4758, 2
      %v4760 = vadd.f32 %v4758, %v4759
      %v4761 = vrot.slane %v4760, 1
      %v4762 = vadd.f32 %v4760, %v4761
      %v4763 = vsel %vm1818, %v4153, 0.0
      %v4764 = vsel %vm1818, %v4154, 0.0
      %v4765 = vadd.f32 %v4763, %v4764
      %v4766 = vrot.slane %v4765, 4
      %v4767 = vadd.f32 %v4765, %v4766
      %v4768 = vrot.slane %v4767, 2
      %v4769 = vadd.f32 %v4767, %v4768
      %v4770 = vrot.slane %v4769, 1
      %v4771 = vadd.f32 %v4769, %v4770
      %v4772 = vsel %vm1818, %v4155, 0.0
      %v4773 = vsel %vm1818, %v4156, 0.0
      %v4774 = vadd.f32 %v4772, %v4773
      %v4775 = vrot.slane %v4774, 4
      %v4776 = vadd.f32 %v4774, %v4775
      %v4777 = vrot.slane %v4776, 2
      %v4778 = vadd.f32 %v4776, %v4777
      %v4779 = vrot.slane %v4778, 1
      %v4780 = vadd.f32 %v4778, %v4779
      %v4781 = vsel %vm1818, %v4157, 0.0
      %v4782 = vsel %vm1818, %v4158, 0.0
      %v4783 = vadd.f32 %v4781, %v4782
      %v4784 = vrot.slane %v4783, 4
      %v4785 = vadd.f32 %v4783, %v4784
      %v4786 = vrot.slane %v4785, 2
      %v4787 = vadd.f32 %v4785, %v4786
      %v4788 = vrot.slane %v4787, 1
      %v4789 = vadd.f32 %v4787, %v4788
      %v4790 = vsel %vm1818, %v4159, 0.0
      %v4791 = vsel %vm1818, %v4160, 0.0
      %v4792 = vadd.f32 %v4790, %v4791
      %v4793 = vrot.slane %v4792, 4
      %v4794 = vadd.f32 %v4792, %v4793
      %v4795 = vrot.slane %v4794, 2
      %v4796 = vadd.f32 %v4794, %v4795
      %v4797 = vrot.slane %v4796, 1
      %v4798 = vadd.f32 %v4796, %v4797
      %v4799 = vsel %vm1818, %v4161, 0.0
      %v4800 = vsel %vm1818, %v4162, 0.0
      %v4801 = vadd.f32 %v4799, %v4800
      %v4802 = vrot.slane %v4801, 4
      %v4803 = vadd.f32 %v4801, %v4802
      %v4804 = vrot.slane %v4803, 2
      %v4805 = vadd.f32 %v4803, %v4804
      %v4806 = vrot.slane %v4805, 1
      %v4807 = vadd.f32 %v4805, %v4806
      %v4808 = vsel %vm1818, %v4163, 0.0
      %v4809 = vsel %vm1818, %v4164, 0.0
      %v4810 = vadd.f32 %v4808, %v4809
      %v4811 = vrot.slane %v4810, 4
      %v4812 = vadd.f32 %v4810, %v4811
      %v4813 = vrot.slane %v4812, 2
      %v4814 = vadd.f32 %v4812, %v4813
      %v4815 = vrot.slane %v4814, 1
      %v4816 = vadd.f32 %v4814, %v4815
      %v4817 = vsel %vm1818, %v4165, 0.0
      %v4818 = vsel %vm1818, %v4166, 0.0
      %v4819 = vadd.f32 %v4817, %v4818
      %v4820 = vrot.slane %v4819, 4
      %v4821 = vadd.f32 %v4819, %v4820
      %v4822 = vrot.slane %v4821, 2
      %v4823 = vadd.f32 %v4821, %v4822
      %v4824 = vrot.slane %v4823, 1
      %v4825 = vadd.f32 %v4823, %v4824
      %v4826 = vsel %vm1818, %v4167, 0.0
      %v4827 = vsel %vm1818, %v4168, 0.0
      %v4828 = vadd.f32 %v4826, %v4827
      %v4829 = vrot.slane %v4828, 4
      %v4830 = vadd.f32 %v4828, %v4829
      %v4831 = vrot.slane %v4830, 2
      %v4832 = vadd.f32 %v4830, %v4831
      %v4833 = vrot.slane %v4832, 1
      %v4834 = vadd.f32 %v4832, %v4833
      %v4835 = vsel %vm1818, %v4169, 0.0
      %v4836 = vsel %vm1818, %v4170, 0.0
      %v4837 = vadd.f32 %v4835, %v4836
      %v4838 = vrot.slane %v4837, 4
      %v4839 = vadd.f32 %v4837, %v4838
      %v4840 = vrot.slane %v4839, 2
      %v4841 = vadd.f32 %v4839, %v4840
      %v4842 = vrot.slane %v4841, 1
      %v4843 = vadd.f32 %v4841, %v4842
      %v4844 = vsel %vm1818, %v4171, 0.0
      %v4845 = vsel %vm1818, %v4172, 0.0
      %v4846 = vadd.f32 %v4844, %v4845
      %v4847 = vrot.slane %v4846, 4
      %v4848 = vadd.f32 %v4846, %v4847
      %v4849 = vrot.slane %v4848, 2
      %v4850 = vadd.f32 %v4848, %v4849
      %v4851 = vrot.slane %v4850, 1
      %v4852 = vadd.f32 %v4850, %v4851
      %v4853 = vsel %vm1818, %v4173, 0.0
      %v4854 = vsel %vm1818, %v4174, 0.0
      %v4855 = vadd.f32 %v4853, %v4854
      %v4856 = vrot.slane %v4855, 4
      %v4857 = vadd.f32 %v4855, %v4856
      %v4858 = vrot.slane %v4857, 2
      %v4859 = vadd.f32 %v4857, %v4858
      %v4860 = vrot.slane %v4859, 1
      %v4861 = vadd.f32 %v4859, %v4860
      %v4862 = vsel %vm1818, %v4175, 0.0
      %v4863 = vsel %vm1818, %v4176, 0.0
      %v4864 = vadd.f32 %v4862, %v4863
      %v4865 = vrot.slane %v4864, 4
      %v4866 = vadd.f32 %v4864, %v4865
      %v4867 = vrot.slane %v4866, 2
      %v4868 = vadd.f32 %v4866, %v4867
      %v4869 = vrot.slane %v4868, 1
      %v4870 = vadd.f32 %v4868, %v4869
      %v4871 = vsel %vm1818, %v4177, 0.0
      %v4872 = vsel %vm1818, %v4178, 0.0
      %v4873 = vadd.f32 %v4871, %v4872
      %v4874 = vrot.slane %v4873, 4
      %v4875 = vadd.f32 %v4873, %v4874
      %v4876 = vrot.slane %v4875, 2
      %v4877 = vadd.f32 %v4875, %v4876
      %v4878 = vrot.slane %v4877, 1
      %v4879 = vadd.f32 %v4877, %v4878
      %v4880 = vsel %vm1818, %v4179, 0.0
      %v4881 = vsel %vm1818, %v4180, 0.0
      %v4882 = vadd.f32 %v4880, %v4881
      %v4883 = vrot.slane %v4882, 4
      %v4884 = vadd.f32 %v4882, %v4883
      %v4885 = vrot.slane %v4884, 2
      %v4886 = vadd.f32 %v4884, %v4885
      %v4887 = vrot.slane %v4886, 1
      %v4888 = vadd.f32 %v4886, %v4887
      %v4889 = vsel %vm1818, %v4181, 0.0
      %v4890 = vsel %vm1818, %v4182, 0.0
      %v4891 = vadd.f32 %v4889, %v4890
      %v4892 = vrot.slane %v4891, 4
      %v4893 = vadd.f32 %v4891, %v4892
      %v4894 = vrot.slane %v4893, 2
      %v4895 = vadd.f32 %v4893, %v4894
      %v4896 = vrot.slane %v4895, 1
      %v4897 = vadd.f32 %v4895, %v4896
      %v4898 = vsel %vm1818, %v4183, 0.0
      %v4899 = vsel %vm1818, %v4184, 0.0
      %v4900 = vadd.f32 %v4898, %v4899
      %v4901 = vrot.slane %v4900, 4
      %v4902 = vadd.f32 %v4900, %v4901
      %v4903 = vrot.slane %v4902, 2
      %v4904 = vadd.f32 %v4902, %v4903
      %v4905 = vrot.slane %v4904, 1
      %v4906 = vadd.f32 %v4904, %v4905
      %v4907 = vsel %vm1818, %v4185, 0.0
      %v4908 = vsel %vm1818, %v4186, 0.0
      %v4909 = vadd.f32 %v4907, %v4908
      %v4910 = vrot.slane %v4909, 4
      %v4911 = vadd.f32 %v4909, %v4910
      %v4912 = vrot.slane %v4911, 2
      %v4913 = vadd.f32 %v4911, %v4912
      %v4914 = vrot.slane %v4913, 1
      %v4915 = vadd.f32 %v4913, %v4914
      %v4916 = vsel %vm1818, %v4187, 0.0
      %v4917 = vsel %vm1818, %v4188, 0.0
      %v4918 = vadd.f32 %v4916, %v4917
      %v4919 = vrot.slane %v4918, 4
      %v4920 = vadd.f32 %v4918, %v4919
      %v4921 = vrot.slane %v4920, 2
      %v4922 = vadd.f32 %v4920, %v4921
      %v4923 = vrot.slane %v4922, 1
      %v4924 = vadd.f32 %v4922, %v4923
      %v4925 = vsel %vm1818, %v4189, 0.0
      %v4926 = vsel %vm1818, %v4190, 0.0
      %v4927 = vadd.f32 %v4925, %v4926
      %v4928 = vrot.slane %v4927, 4
      %v4929 = vadd.f32 %v4927, %v4928
      %v4930 = vrot.slane %v4929, 2
      %v4931 = vadd.f32 %v4929, %v4930
      %v4932 = vrot.slane %v4931, 1
      %v4933 = vadd.f32 %v4931, %v4932
      %v4934 = vsel %vm1818, %v4191, 0.0
      %v4935 = vsel %vm1818, %v4192, 0.0
      %v4936 = vadd.f32 %v4934, %v4935
      %v4937 = vrot.slane %v4936, 4
      %v4938 = vadd.f32 %v4936, %v4937
      %v4939 = vrot.slane %v4938, 2
      %v4940 = vadd.f32 %v4938, %v4939
      %v4941 = vrot.slane %v4940, 1
      %v4942 = vadd.f32 %v4940, %v4941
      %v4943 = vsel %vm1818, %v4193, 0.0
      %v4944 = vsel %vm1818, %v4194, 0.0
      %v4945 = vadd.f32 %v4943, %v4944
      %v4946 = vrot.slane %v4945, 4
      %v4947 = vadd.f32 %v4945, %v4946
      %v4948 = vrot.slane %v4947, 2
      %v4949 = vadd.f32 %v4947, %v4948
      %v4950 = vrot.slane %v4949, 1
      %v4951 = vadd.f32 %v4949, %v4950
      %v4952 = vsel %vm1818, %v4195, 0.0
      %v4953 = vsel %vm1818, %v4196, 0.0
      %v4954 = vadd.f32 %v4952, %v4953
      %v4955 = vrot.slane %v4954, 4
      %v4956 = vadd.f32 %v4954, %v4955
      %v4957 = vrot.slane %v4956, 2
      %v4958 = vadd.f32 %v4956, %v4957
      %v4959 = vrot.slane %v4958, 1
      %v4960 = vadd.f32 %v4958, %v4959
      %v4961 = vsel %vm1818, %v4197, 0.0
      %v4962 = vsel %vm1818, %v4198, 0.0
      %v4963 = vadd.f32 %v4961, %v4962
      %v4964 = vrot.slane %v4963, 4
      %v4965 = vadd.f32 %v4963, %v4964
      %v4966 = vrot.slane %v4965, 2
      %v4967 = vadd.f32 %v4965, %v4966
      %v4968 = vrot.slane %v4967, 1
      %v4969 = vadd.f32 %v4967, %v4968
      %v4970 = vsel %vm1818, %v4199, 0.0
      %v4971 = vsel %vm1818, %v4200, 0.0
      %v4972 = vadd.f32 %v4970, %v4971
      %v4973 = vrot.slane %v4972, 4
      %v4974 = vadd.f32 %v4972, %v4973
      %v4975 = vrot.slane %v4974, 2
      %v4976 = vadd.f32 %v4974, %v4975
      %v4977 = vrot.slane %v4976, 1
      %v4978 = vadd.f32 %v4976, %v4977
      %v4979 = vsel %vm1818, %v4201, 0.0
      %v4980 = vsel %vm1818, %v4202, 0.0
      %v4981 = vadd.f32 %v4979, %v4980
      %v4982 = vrot.slane %v4981, 4
      %v4983 = vadd.f32 %v4981, %v4982
      %v4984 = vrot.slane %v4983, 2
      %v4985 = vadd.f32 %v4983, %v4984
      %v4986 = vrot.slane %v4985, 1
      %v4987 = vadd.f32 %v4985, %v4986
      %v4988 = vsel %vm1818, %v4203, 0.0
      %v4989 = vsel %vm1818, %v4204, 0.0
      %v4990 = vadd.f32 %v4988, %v4989
      %v4991 = vrot.slane %v4990, 4
      %v4992 = vadd.f32 %v4990, %v4991
      %v4993 = vrot.slane %v4992, 2
      %v4994 = vadd.f32 %v4992, %v4993
      %v4995 = vrot.slane %v4994, 1
      %v4996 = vadd.f32 %v4994, %v4995
      %v4997 = vsel %vm1818, %v4205, 0.0
      %v4998 = vsel %vm1818, %v4206, 0.0
      %v4999 = vadd.f32 %v4997, %v4998
      %v5000 = vrot.slane %v4999, 4
      %v5001 = vadd.f32 %v4999, %v5000
      %v5002 = vrot.slane %v5001, 2
      %v5003 = vadd.f32 %v5001, %v5002
      %v5004 = vrot.slane %v5003, 1
      %v5005 = vadd.f32 %v5003, %v5004
      %v5006 = vsel %vm1818, %v4207, 0.0
      %v5007 = vsel %vm1818, %v4208, 0.0
      %v5008 = vadd.f32 %v5006, %v5007
      %v5009 = vrot.slane %v5008, 4
      %v5010 = vadd.f32 %v5008, %v5009
      %v5011 = vrot.slane %v5010, 2
      %v5012 = vadd.f32 %v5010, %v5011
      %v5013 = vrot.slane %v5012, 1
      %v5014 = vadd.f32 %v5012, %v5013
      %v5015 = vsel %vm1818, %v4209, 0.0
      %v5016 = vsel %vm1818, %v4210, 0.0
      %v5017 = vadd.f32 %v5015, %v5016
      %v5018 = vrot.slane %v5017, 4
      %v5019 = vadd.f32 %v5017, %v5018
      %v5020 = vrot.slane %v5019, 2
      %v5021 = vadd.f32 %v5019, %v5020
      %v5022 = vrot.slane %v5021, 1
      %v5023 = vadd.f32 %v5021, %v5022
      %v5024 = vsel %vm1818, %v4211, 0.0
      %v5025 = vsel %vm1818, %v4212, 0.0
      %v5026 = vadd.f32 %v5024, %v5025
      %v5027 = vrot.slane %v5026, 4
      %v5028 = vadd.f32 %v5026, %v5027
      %v5029 = vrot.slane %v5028, 2
      %v5030 = vadd.f32 %v5028, %v5029
      %v5031 = vrot.slane %v5030, 1
      %v5032 = vadd.f32 %v5030, %v5031
      %v5033 = vsel %vm1818, %v4213, 0.0
      %v5034 = vsel %vm1818, %v4214, 0.0
      %v5035 = vadd.f32 %v5033, %v5034
      %v5036 = vrot.slane %v5035, 4
      %v5037 = vadd.f32 %v5035, %v5036
      %v5038 = vrot.slane %v5037, 2
      %v5039 = vadd.f32 %v5037, %v5038
      %v5040 = vrot.slane %v5039, 1
      %v5041 = vadd.f32 %v5039, %v5040
      %v5042 = vsel %vm1818, %v4215, 0.0
      %v5043 = vsel %vm1818, %v4216, 0.0
      %v5044 = vadd.f32 %v5042, %v5043
      %v5045 = vrot.slane %v5044, 4
      %v5046 = vadd.f32 %v5044, %v5045
      %v5047 = vrot.slane %v5046, 2
      %v5048 = vadd.f32 %v5046, %v5047
      %v5049 = vrot.slane %v5048, 1
      %v5050 = vadd.f32 %v5048, %v5049
      %v5051 = vsel %vm1818, %v4217, 0.0
      %v5052 = vsel %vm1818, %v4218, 0.0
      %v5053 = vadd.f32 %v5051, %v5052
      %v5054 = vrot.slane %v5053, 4
      %v5055 = vadd.f32 %v5053, %v5054
      %v5056 = vrot.slane %v5055, 2
      %v5057 = vadd.f32 %v5055, %v5056
      %v5058 = vrot.slane %v5057, 1
      %v5059 = vadd.f32 %v5057, %v5058
      %v5060 = vsel %vm1818, %v4219, 0.0
      %v5061 = vsel %vm1818, %v4220, 0.0
      %v5062 = vadd.f32 %v5060, %v5061
      %v5063 = vrot.slane %v5062, 4
      %v5064 = vadd.f32 %v5062, %v5063
      %v5065 = vrot.slane %v5064, 2
      %v5066 = vadd.f32 %v5064, %v5065
      %v5067 = vrot.slane %v5066, 1
      %v5068 = vadd.f32 %v5066, %v5067
      %v5069 = vsel %vm1818, %v4221, 0.0
      %v5070 = vsel %vm1818, %v4222, 0.0
      %v5071 = vadd.f32 %v5069, %v5070
      %v5072 = vrot.slane %v5071, 4
      %v5073 = vadd.f32 %v5071, %v5072
      %v5074 = vrot.slane %v5073, 2
      %v5075 = vadd.f32 %v5073, %v5074
      %v5076 = vrot.slane %v5075, 1
      %v5077 = vadd.f32 %v5075, %v5076
      %v5078 = vsel %vm1818, %v4223, 0.0
      %v5079 = vsel %vm1818, %v4224, 0.0
      %v5080 = vadd.f32 %v5078, %v5079
      %v5081 = vrot.slane %v5080, 4
      %v5082 = vadd.f32 %v5080, %v5081
      %v5083 = vrot.slane %v5082, 2
      %v5084 = vadd.f32 %v5082, %v5083
      %v5085 = vrot.slane %v5084, 1
      %v5086 = vadd.f32 %v5084, %v5085
      %v5087 = vsel %vm1818, %v4225, 0.0
      %v5088 = vsel %vm1818, %v4226, 0.0
      %v5089 = vadd.f32 %v5087, %v5088
      %v5090 = vrot.slane %v5089, 4
      %v5091 = vadd.f32 %v5089, %v5090
      %v5092 = vrot.slane %v5091, 2
      %v5093 = vadd.f32 %v5091, %v5092
      %v5094 = vrot.slane %v5093, 1
      %v5095 = vadd.f32 %v5093, %v5094
      %v5096 = vsel %vm1818, %v4227, 0.0
      %v5097 = vsel %vm1818, %v4228, 0.0
      %v5098 = vadd.f32 %v5096, %v5097
      %v5099 = vrot.slane %v5098, 4
      %v5100 = vadd.f32 %v5098, %v5099
      %v5101 = vrot.slane %v5100, 2
      %v5102 = vadd.f32 %v5100, %v5101
      %v5103 = vrot.slane %v5102, 1
      %v5104 = vadd.f32 %v5102, %v5103
      %v5105 = vsel %vm1818, %v4229, 0.0
      %v5106 = vsel %vm1818, %v4230, 0.0
      %v5107 = vadd.f32 %v5105, %v5106
      %v5108 = vrot.slane %v5107, 4
      %v5109 = vadd.f32 %v5107, %v5108
      %v5110 = vrot.slane %v5109, 2
      %v5111 = vadd.f32 %v5109, %v5110
      %v5112 = vrot.slane %v5111, 1
      %v5113 = vadd.f32 %v5111, %v5112
      %v5114 = vsel %vm1818, %v4231, 0.0
      %v5115 = vsel %vm1818, %v4232, 0.0
      %v5116 = vadd.f32 %v5114, %v5115
      %v5117 = vrot.slane %v5116, 4
      %v5118 = vadd.f32 %v5116, %v5117
      %v5119 = vrot.slane %v5118, 2
      %v5120 = vadd.f32 %v5118, %v5119
      %v5121 = vrot.slane %v5120, 1
      %v5122 = vadd.f32 %v5120, %v5121
      %v5123 = vsel %vm1818, %v4233, 0.0
      %v5124 = vsel %vm1818, %v4234, 0.0
      %v5125 = vadd.f32 %v5123, %v5124
      %v5126 = vrot.slane %v5125, 4
      %v5127 = vadd.f32 %v5125, %v5126
      %v5128 = vrot.slane %v5127, 2
      %v5129 = vadd.f32 %v5127, %v5128
      %v5130 = vrot.slane %v5129, 1
      %v5131 = vadd.f32 %v5129, %v5130
      %v5132 = vsel %vm1818, %v4235, 0.0
      %v5133 = vsel %vm1818, %v4236, 0.0
      %v5134 = vadd.f32 %v5132, %v5133
      %v5135 = vrot.slane %v5134, 4
      %v5136 = vadd.f32 %v5134, %v5135
      %v5137 = vrot.slane %v5136, 2
      %v5138 = vadd.f32 %v5136, %v5137
      %v5139 = vrot.slane %v5138, 1
      %v5140 = vadd.f32 %v5138, %v5139
      %v5141 = vsel %vm1818, %v4237, 0.0
      %v5142 = vsel %vm1818, %v4238, 0.0
      %v5143 = vadd.f32 %v5141, %v5142
      %v5144 = vrot.slane %v5143, 4
      %v5145 = vadd.f32 %v5143, %v5144
      %v5146 = vrot.slane %v5145, 2
      %v5147 = vadd.f32 %v5145, %v5146
      %v5148 = vrot.slane %v5147, 1
      %v5149 = vadd.f32 %v5147, %v5148
      %v5150 = vsel %vm1818, %v4239, 0.0
      %v5151 = vsel %vm1818, %v4240, 0.0
      %v5152 = vadd.f32 %v5150, %v5151
      %v5153 = vrot.slane %v5152, 4
      %v5154 = vadd.f32 %v5152, %v5153
      %v5155 = vrot.slane %v5154, 2
      %v5156 = vadd.f32 %v5154, %v5155
      %v5157 = vrot.slane %v5156, 1
      %v5158 = vadd.f32 %v5156, %v5157
      %v5159 = vsel %vm1818, %v4241, 0.0
      %v5160 = vsel %vm1818, %v4242, 0.0
      %v5161 = vadd.f32 %v5159, %v5160
      %v5162 = vrot.slane %v5161, 4
      %v5163 = vadd.f32 %v5161, %v5162
      %v5164 = vrot.slane %v5163, 2
      %v5165 = vadd.f32 %v5163, %v5164
      %v5166 = vrot.slane %v5165, 1
      %v5167 = vadd.f32 %v5165, %v5166
      %v5168 = vsel %vm1818, %v4243, 0.0
      %v5169 = vsel %vm1818, %v4244, 0.0
      %v5170 = vadd.f32 %v5168, %v5169
      %v5171 = vrot.slane %v5170, 4
      %v5172 = vadd.f32 %v5170, %v5171
      %v5173 = vrot.slane %v5172, 2
      %v5174 = vadd.f32 %v5172, %v5173
      %v5175 = vrot.slane %v5174, 1
      %v5176 = vadd.f32 %v5174, %v5175
      %v5177 = vsel %vm1818, %v4245, 0.0
      %v5178 = vsel %vm1818, %v4246, 0.0
      %v5179 = vadd.f32 %v5177, %v5178
      %v5180 = vrot.slane %v5179, 4
      %v5181 = vadd.f32 %v5179, %v5180
      %v5182 = vrot.slane %v5181, 2
      %v5183 = vadd.f32 %v5181, %v5182
      %v5184 = vrot.slane %v5183, 1
      %v5185 = vadd.f32 %v5183, %v5184
      %v5186 = vsel %vm1818, %v4247, 0.0
      %v5187 = vsel %vm1818, %v4248, 0.0
      %v5188 = vadd.f32 %v5186, %v5187
      %v5189 = vrot.slane %v5188, 4
      %v5190 = vadd.f32 %v5188, %v5189
      %v5191 = vrot.slane %v5190, 2
      %v5192 = vadd.f32 %v5190, %v5191
      %v5193 = vrot.slane %v5192, 1
      %v5194 = vadd.f32 %v5192, %v5193
      %v5195 = vsel %vm1818, %v4249, 0.0
      %v5196 = vsel %vm1818, %v4250, 0.0
      %v5197 = vadd.f32 %v5195, %v5196
      %v5198 = vrot.slane %v5197, 4
      %v5199 = vadd.f32 %v5197, %v5198
      %v5200 = vrot.slane %v5199, 2
      %v5201 = vadd.f32 %v5199, %v5200
      %v5202 = vrot.slane %v5201, 1
      %v5203 = vadd.f32 %v5201, %v5202
      %v5204 = vsel %vm1818, %v4251, 0.0
      %v5205 = vsel %vm1818, %v4252, 0.0
      %v5206 = vadd.f32 %v5204, %v5205
      %v5207 = vrot.slane %v5206, 4
      %v5208 = vadd.f32 %v5206, %v5207
      %v5209 = vrot.slane %v5208, 2
      %v5210 = vadd.f32 %v5208, %v5209
      %v5211 = vrot.slane %v5210, 1
      %v5212 = vadd.f32 %v5210, %v5211
      %v5213 = vsel %vm1818, %v4253, 0.0
      %v5214 = vsel %vm1818, %v4254, 0.0
      %v5215 = vadd.f32 %v5213, %v5214
      %v5216 = vrot.slane %v5215, 4
      %v5217 = vadd.f32 %v5215, %v5216
      %v5218 = vrot.slane %v5217, 2
      %v5219 = vadd.f32 %v5217, %v5218
      %v5220 = vrot.slane %v5219, 1
      %v5221 = vadd.f32 %v5219, %v5220
      %v5222 = vsel %vm1818, %v4255, 0.0
      %v5223 = vsel %vm1818, %v4256, 0.0
      %v5224 = vadd.f32 %v5222, %v5223
      %v5225 = vrot.slane %v5224, 4
      %v5226 = vadd.f32 %v5224, %v5225
      %v5227 = vrot.slane %v5226, 2
      %v5228 = vadd.f32 %v5226, %v5227
      %v5229 = vrot.slane %v5228, 1
      %v5230 = vadd.f32 %v5228, %v5229
      %v5231 = vsel %vm1818, %v4257, 0.0
      %v5232 = vsel %vm1818, %v4258, 0.0
      %v5233 = vadd.f32 %v5231, %v5232
      %v5234 = vrot.slane %v5233, 4
      %v5235 = vadd.f32 %v5233, %v5234
      %v5236 = vrot.slane %v5235, 2
      %v5237 = vadd.f32 %v5235, %v5236
      %v5238 = vrot.slane %v5237, 1
      %v5239 = vadd.f32 %v5237, %v5238
      %v5240 = vsel %vm1818, %v4259, 0.0
      %v5241 = vsel %vm1818, %v4260, 0.0
      %v5242 = vadd.f32 %v5240, %v5241
      %v5243 = vrot.slane %v5242, 4
      %v5244 = vadd.f32 %v5242, %v5243
      %v5245 = vrot.slane %v5244, 2
      %v5246 = vadd.f32 %v5244, %v5245
      %v5247 = vrot.slane %v5246, 1
      %v5248 = vadd.f32 %v5246, %v5247
      %v5249 = vsel %vm1818, %v4261, 0.0
      %v5250 = vsel %vm1818, %v4262, 0.0
      %v5251 = vadd.f32 %v5249, %v5250
      %v5252 = vrot.slane %v5251, 4
      %v5253 = vadd.f32 %v5251, %v5252
      %v5254 = vrot.slane %v5253, 2
      %v5255 = vadd.f32 %v5253, %v5254
      %v5256 = vrot.slane %v5255, 1
      %v5257 = vadd.f32 %v5255, %v5256
      %v5258 = vsel %vm1818, %v4263, 0.0
      %v5259 = vsel %vm1818, %v4264, 0.0
      %v5260 = vadd.f32 %v5258, %v5259
      %v5261 = vrot.slane %v5260, 4
      %v5262 = vadd.f32 %v5260, %v5261
      %v5263 = vrot.slane %v5262, 2
      %v5264 = vadd.f32 %v5262, %v5263
      %v5265 = vrot.slane %v5264, 1
      %v5266 = vadd.f32 %v5264, %v5265
      %v5267 = vsel %vm1818, %v4265, 0.0
      %v5268 = vsel %vm1818, %v4266, 0.0
      %v5269 = vadd.f32 %v5267, %v5268
      %v5270 = vrot.slane %v5269, 4
      %v5271 = vadd.f32 %v5269, %v5270
      %v5272 = vrot.slane %v5271, 2
      %v5273 = vadd.f32 %v5271, %v5272
      %v5274 = vrot.slane %v5273, 1
      %v5275 = vadd.f32 %v5273, %v5274
      %v5276 = vsel %vm1818, %v4267, 0.0
      %v5277 = vsel %vm1818, %v4268, 0.0
      %v5278 = vadd.f32 %v5276, %v5277
      %v5279 = vrot.slane %v5278, 4
      %v5280 = vadd.f32 %v5278, %v5279
      %v5281 = vrot.slane %v5280, 2
      %v5282 = vadd.f32 %v5280, %v5281
      %v5283 = vrot.slane %v5282, 1
      %v5284 = vadd.f32 %v5282, %v5283
      %v5285 = vsel %vm1818, %v4269, 0.0
      %v5286 = vsel %vm1818, %v4270, 0.0
      %v5287 = vadd.f32 %v5285, %v5286
      %v5288 = vrot.slane %v5287, 4
      %v5289 = vadd.f32 %v5287, %v5288
      %v5290 = vrot.slane %v5289, 2
      %v5291 = vadd.f32 %v5289, %v5290
      %v5292 = vrot.slane %v5291, 1
      %v5293 = vadd.f32 %v5291, %v5292
      %v5294 = vsel %vm1818, %v4271, 0.0
      %v5295 = vsel %vm1818, %v4272, 0.0
      %v5296 = vadd.f32 %v5294, %v5295
      %v5297 = vrot.slane %v5296, 4
      %v5298 = vadd.f32 %v5296, %v5297
      %v5299 = vrot.slane %v5298, 2
      %v5300 = vadd.f32 %v5298, %v5299
      %v5301 = vrot.slane %v5300, 1
      %v5302 = vadd.f32 %v5300, %v5301
      %v5303 = vsel %vm1818, %v4273, 0.0
      %v5304 = vsel %vm1818, %v4274, 0.0
      %v5305 = vadd.f32 %v5303, %v5304
      %v5306 = vrot.slane %v5305, 4
      %v5307 = vadd.f32 %v5305, %v5306
      %v5308 = vrot.slane %v5307, 2
      %v5309 = vadd.f32 %v5307, %v5308
      %v5310 = vrot.slane %v5309, 1
      %v5311 = vadd.f32 %v5309, %v5310
      %v5312 = vsel %vm1818, %v4275, 0.0
      %v5313 = vsel %vm1818, %v4276, 0.0
      %v5314 = vadd.f32 %v5312, %v5313
      %v5315 = vrot.slane %v5314, 4
      %v5316 = vadd.f32 %v5314, %v5315
      %v5317 = vrot.slane %v5316, 2
      %v5318 = vadd.f32 %v5316, %v5317
      %v5319 = vrot.slane %v5318, 1
      %v5320 = vadd.f32 %v5318, %v5319
      %v5321 = vsel %vm1818, %v4277, 0.0
      %v5322 = vsel %vm1818, %v4278, 0.0
      %v5323 = vadd.f32 %v5321, %v5322
      %v5324 = vrot.slane %v5323, 4
      %v5325 = vadd.f32 %v5323, %v5324
      %v5326 = vrot.slane %v5325, 2
      %v5327 = vadd.f32 %v5325, %v5326
      %v5328 = vrot.slane %v5327, 1
      %v5329 = vadd.f32 %v5327, %v5328
      %v5330 = vsel %vm1818, %v4279, 0.0
      %v5331 = vsel %vm1818, %v4280, 0.0
      %v5332 = vadd.f32 %v5330, %v5331
      %v5333 = vrot.slane %v5332, 4
      %v5334 = vadd.f32 %v5332, %v5333
      %v5335 = vrot.slane %v5334, 2
      %v5336 = vadd.f32 %v5334, %v5335
      %v5337 = vrot.slane %v5336, 1
      %v5338 = vadd.f32 %v5336, %v5337
      %v5339 = vsel %vm1818, %v4281, 0.0
      %v5340 = vsel %vm1818, %v4282, 0.0
      %v5341 = vadd.f32 %v5339, %v5340
      %v5342 = vrot.slane %v5341, 4
      %v5343 = vadd.f32 %v5341, %v5342
      %v5344 = vrot.slane %v5343, 2
      %v5345 = vadd.f32 %v5343, %v5344
      %v5346 = vrot.slane %v5345, 1
      %v5347 = vadd.f32 %v5345, %v5346
      %v5348 = vsel %vm1818, %v4283, 0.0
      %v5349 = vsel %vm1818, %v4284, 0.0
      %v5350 = vadd.f32 %v5348, %v5349
      %v5351 = vrot.slane %v5350, 4
      %v5352 = vadd.f32 %v5350, %v5351
      %v5353 = vrot.slane %v5352, 2
      %v5354 = vadd.f32 %v5352, %v5353
      %v5355 = vrot.slane %v5354, 1
      %v5356 = vadd.f32 %v5354, %v5355
      %v5357 = vsel %vm1818, %v4285, 0.0
      %v5358 = vsel %vm1818, %v4286, 0.0
      %v5359 = vadd.f32 %v5357, %v5358
      %v5360 = vrot.slane %v5359, 4
      %v5361 = vadd.f32 %v5359, %v5360
      %v5362 = vrot.slane %v5361, 2
      %v5363 = vadd.f32 %v5361, %v5362
      %v5364 = vrot.slane %v5363, 1
      %v5365 = vadd.f32 %v5363, %v5364
      %v5366 = vsel %vm1818, %v4287, 0.0
      %v5367 = vsel %vm1818, %v4288, 0.0
      %v5368 = vadd.f32 %v5366, %v5367
      %v5369 = vrot.slane %v5368, 4
      %v5370 = vadd.f32 %v5368, %v5369
      %v5371 = vrot.slane %v5370, 2
      %v5372 = vadd.f32 %v5370, %v5371
      %v5373 = vrot.slane %v5372, 1
      %v5374 = vadd.f32 %v5372, %v5373
      %v5375 = vsel %vm1818, %v4289, 0.0
      %v5376 = vsel %vm1818, %v4290, 0.0
      %v5377 = vadd.f32 %v5375, %v5376
      %v5378 = vrot.slane %v5377, 4
      %v5379 = vadd.f32 %v5377, %v5378
      %v5380 = vrot.slane %v5379, 2
      %v5381 = vadd.f32 %v5379, %v5380
      %v5382 = vrot.slane %v5381, 1
      %v5383 = vadd.f32 %v5381, %v5382
      %v5384 = vsel %vm1818, %v4291, 0.0
      %v5385 = vsel %vm1818, %v4292, 0.0
      %v5386 = vadd.f32 %v5384, %v5385
      %v5387 = vrot.slane %v5386, 4
      %v5388 = vadd.f32 %v5386, %v5387
      %v5389 = vrot.slane %v5388, 2
      %v5390 = vadd.f32 %v5388, %v5389
      %v5391 = vrot.slane %v5390, 1
      %v5392 = vadd.f32 %v5390, %v5391
      %v5393 = vsel %vm1818, %v4293, 0.0
      %v5394 = vsel %vm1818, %v4294, 0.0
      %v5395 = vadd.f32 %v5393, %v5394
      %v5396 = vrot.slane %v5395, 4
      %v5397 = vadd.f32 %v5395, %v5396
      %v5398 = vrot.slane %v5397, 2
      %v5399 = vadd.f32 %v5397, %v5398
      %v5400 = vrot.slane %v5399, 1
      %v5401 = vadd.f32 %v5399, %v5400
      %v5402 = vsel %vm1818, %v4295, 0.0
      %v5403 = vsel %vm1818, %v4296, 0.0
      %v5404 = vadd.f32 %v5402, %v5403
      %v5405 = vrot.slane %v5404, 4
      %v5406 = vadd.f32 %v5404, %v5405
      %v5407 = vrot.slane %v5406, 2
      %v5408 = vadd.f32 %v5406, %v5407
      %v5409 = vrot.slane %v5408, 1
      %v5410 = vadd.f32 %v5408, %v5409
      %v5411 = vsel %vm1818, %v4297, 0.0
      %v5412 = vsel %vm1818, %v4298, 0.0
      %v5413 = vadd.f32 %v5411, %v5412
      %v5414 = vrot.slane %v5413, 4
      %v5415 = vadd.f32 %v5413, %v5414
      %v5416 = vrot.slane %v5415, 2
      %v5417 = vadd.f32 %v5415, %v5416
      %v5418 = vrot.slane %v5417, 1
      %v5419 = vadd.f32 %v5417, %v5418
      %v5420 = vsel %vm1818, %v4299, 0.0
      %v5421 = vsel %vm1818, %v4300, 0.0
      %v5422 = vadd.f32 %v5420, %v5421
      %v5423 = vrot.slane %v5422, 4
      %v5424 = vadd.f32 %v5422, %v5423
      %v5425 = vrot.slane %v5424, 2
      %v5426 = vadd.f32 %v5424, %v5425
      %v5427 = vrot.slane %v5426, 1
      %v5428 = vadd.f32 %v5426, %v5427
      %v5429 = vsel %vm1818, %v4301, 0.0
      %v5430 = vsel %vm1818, %v4302, 0.0
      %v5431 = vadd.f32 %v5429, %v5430
      %v5432 = vrot.slane %v5431, 4
      %v5433 = vadd.f32 %v5431, %v5432
      %v5434 = vrot.slane %v5433, 2
      %v5435 = vadd.f32 %v5433, %v5434
      %v5436 = vrot.slane %v5435, 1
      %v5437 = vadd.f32 %v5435, %v5436
      %v5438 = vsel %vm1818, %v4303, 0.0
      %v5439 = vsel %vm1818, %v4304, 0.0
      %v5440 = vadd.f32 %v5438, %v5439
      %v5441 = vrot.slane %v5440, 4
      %v5442 = vadd.f32 %v5440, %v5441
      %v5443 = vrot.slane %v5442, 2
      %v5444 = vadd.f32 %v5442, %v5443
      %v5445 = vrot.slane %v5444, 1
      %v5446 = vadd.f32 %v5444, %v5445
      %v5447 = vsel %vm1818, %v4305, 0.0
      %v5448 = vsel %vm1818, %v4306, 0.0
      %v5449 = vadd.f32 %v5447, %v5448
      %v5450 = vrot.slane %v5449, 4
      %v5451 = vadd.f32 %v5449, %v5450
      %v5452 = vrot.slane %v5451, 2
      %v5453 = vadd.f32 %v5451, %v5452
      %v5454 = vrot.slane %v5453, 1
      %v5455 = vadd.f32 %v5453, %v5454
      %v5456 = vsel %vm1818, %v4307, 0.0
      %v5457 = vsel %vm1818, %v4308, 0.0
      %v5458 = vadd.f32 %v5456, %v5457
      %v5459 = vrot.slane %v5458, 4
      %v5460 = vadd.f32 %v5458, %v5459
      %v5461 = vrot.slane %v5460, 2
      %v5462 = vadd.f32 %v5460, %v5461
      %v5463 = vrot.slane %v5462, 1
      %v5464 = vadd.f32 %v5462, %v5463
      %v5465 = vsel %vm1818, %v4309, 0.0
      %v5466 = vsel %vm1818, %v4310, 0.0
      %v5467 = vadd.f32 %v5465, %v5466
      %v5468 = vrot.slane %v5467, 4
      %v5469 = vadd.f32 %v5467, %v5468
      %v5470 = vrot.slane %v5469, 2
      %v5471 = vadd.f32 %v5469, %v5470
      %v5472 = vrot.slane %v5471, 1
      %v5473 = vadd.f32 %v5471, %v5472
      %v5474 = vsel %vm1818, %v4311, 0.0
      %v5475 = vsel %vm1818, %v4312, 0.0
      %v5476 = vadd.f32 %v5474, %v5475
      %v5477 = vrot.slane %v5476, 4
      %v5478 = vadd.f32 %v5476, %v5477
      %v5479 = vrot.slane %v5478, 2
      %v5480 = vadd.f32 %v5478, %v5479
      %v5481 = vrot.slane %v5480, 1
      %v5482 = vadd.f32 %v5480, %v5481
      %v5483 = vsel %vm1818, %v4313, 0.0
      %v5484 = vsel %vm1818, %v4314, 0.0
      %v5485 = vadd.f32 %v5483, %v5484
      %v5486 = vrot.slane %v5485, 4
      %v5487 = vadd.f32 %v5485, %v5486
      %v5488 = vrot.slane %v5487, 2
      %v5489 = vadd.f32 %v5487, %v5488
      %v5490 = vrot.slane %v5489, 1
      %v5491 = vadd.f32 %v5489, %v5490
      %v5492 = vsel %vm1818, %v4315, 0.0
      %v5493 = vsel %vm1818, %v4316, 0.0
      %v5494 = vadd.f32 %v5492, %v5493
      %v5495 = vrot.slane %v5494, 4
      %v5496 = vadd.f32 %v5494, %v5495
      %v5497 = vrot.slane %v5496, 2
      %v5498 = vadd.f32 %v5496, %v5497
      %v5499 = vrot.slane %v5498, 1
      %v5500 = vadd.f32 %v5498, %v5499
      %v5501 = vsel %vm1818, %v4317, 0.0
      %v5502 = vsel %vm1818, %v4318, 0.0
      %v5503 = vadd.f32 %v5501, %v5502
      %v5504 = vrot.slane %v5503, 4
      %v5505 = vadd.f32 %v5503, %v5504
      %v5506 = vrot.slane %v5505, 2
      %v5507 = vadd.f32 %v5505, %v5506
      %v5508 = vrot.slane %v5507, 1
      %v5509 = vadd.f32 %v5507, %v5508
      %v5510 = vsel %vm1818, %v4319, 0.0
      %v5511 = vsel %vm1818, %v4320, 0.0
      %v5512 = vadd.f32 %v5510, %v5511
      %v5513 = vrot.slane %v5512, 4
      %v5514 = vadd.f32 %v5512, %v5513
      %v5515 = vrot.slane %v5514, 2
      %v5516 = vadd.f32 %v5514, %v5515
      %v5517 = vrot.slane %v5516, 1
      %v5518 = vadd.f32 %v5516, %v5517
      %v5519 = vsel %vm1818, %v4321, 0.0
      %v5520 = vsel %vm1818, %v4322, 0.0
      %v5521 = vadd.f32 %v5519, %v5520
      %v5522 = vrot.slane %v5521, 4
      %v5523 = vadd.f32 %v5521, %v5522
      %v5524 = vrot.slane %v5523, 2
      %v5525 = vadd.f32 %v5523, %v5524
      %v5526 = vrot.slane %v5525, 1
      %v5527 = vadd.f32 %v5525, %v5526
      %v5528 = vsel %vm1818, %v4323, 0.0
      %v5529 = vsel %vm1818, %v4324, 0.0
      %v5530 = vadd.f32 %v5528, %v5529
      %v5531 = vrot.slane %v5530, 4
      %v5532 = vadd.f32 %v5530, %v5531
      %v5533 = vrot.slane %v5532, 2
      %v5534 = vadd.f32 %v5532, %v5533
      %v5535 = vrot.slane %v5534, 1
      %v5536 = vadd.f32 %v5534, %v5535
      %v5537 = vsel %vm1818, %v4325, 0.0
      %v5538 = vsel %vm1818, %v4326, 0.0
      %v5539 = vadd.f32 %v5537, %v5538
      %v5540 = vrot.slane %v5539, 4
      %v5541 = vadd.f32 %v5539, %v5540
      %v5542 = vrot.slane %v5541, 2
      %v5543 = vadd.f32 %v5541, %v5542
      %v5544 = vrot.slane %v5543, 1
      %v5545 = vadd.f32 %v5543, %v5544
      %v5546 = vsel %vm1818, %v4327, 0.0
      %v5547 = vsel %vm1818, %v4328, 0.0
      %v5548 = vadd.f32 %v5546, %v5547
      %v5549 = vrot.slane %v5548, 4
      %v5550 = vadd.f32 %v5548, %v5549
      %v5551 = vrot.slane %v5550, 2
      %v5552 = vadd.f32 %v5550, %v5551
      %v5553 = vrot.slane %v5552, 1
      %v5554 = vadd.f32 %v5552, %v5553
      %v5555 = vsel %vm1818, %v4329, 0.0
      %v5556 = vsel %vm1818, %v4330, 0.0
      %v5557 = vadd.f32 %v5555, %v5556
      %v5558 = vrot.slane %v5557, 4
      %v5559 = vadd.f32 %v5557, %v5558
      %v5560 = vrot.slane %v5559, 2
      %v5561 = vadd.f32 %v5559, %v5560
      %v5562 = vrot.slane %v5561, 1
      %v5563 = vadd.f32 %v5561, %v5562
      %v5564 = vsel %vm1818, %v4331, 0.0
      %v5565 = vsel %vm1818, %v4332, 0.0
      %v5566 = vadd.f32 %v5564, %v5565
      %v5567 = vrot.slane %v5566, 4
      %v5568 = vadd.f32 %v5566, %v5567
      %v5569 = vrot.slane %v5568, 2
      %v5570 = vadd.f32 %v5568, %v5569
      %v5571 = vrot.slane %v5570, 1
      %v5572 = vadd.f32 %v5570, %v5571
      %v5573 = vsel %vm1818, %v4333, 0.0
      %v5574 = vsel %vm1818, %v4334, 0.0
      %v5575 = vadd.f32 %v5573, %v5574
      %v5576 = vrot.slane %v5575, 4
      %v5577 = vadd.f32 %v5575, %v5576
      %v5578 = vrot.slane %v5577, 2
      %v5579 = vadd.f32 %v5577, %v5578
      %v5580 = vrot.slane %v5579, 1
      %v5581 = vadd.f32 %v5579, %v5580
      %v5582 = vsel %vm1818, %v4335, 0.0
      %v5583 = vsel %vm1818, %v4336, 0.0
      %v5584 = vadd.f32 %v5582, %v5583
      %v5585 = vrot.slane %v5584, 4
      %v5586 = vadd.f32 %v5584, %v5585
      %v5587 = vrot.slane %v5586, 2
      %v5588 = vadd.f32 %v5586, %v5587
      %v5589 = vrot.slane %v5588, 1
      %v5590 = vadd.f32 %v5588, %v5589
      %v5591 = vsel %vm1818, %v4337, 0.0
      %v5592 = vsel %vm1818, %v4338, 0.0
      %v5593 = vadd.f32 %v5591, %v5592
      %v5594 = vrot.slane %v5593, 4
      %v5595 = vadd.f32 %v5593, %v5594
      %v5596 = vrot.slane %v5595, 2
      %v5597 = vadd.f32 %v5595, %v5596
      %v5598 = vrot.slane %v5597, 1
      %v5599 = vadd.f32 %v5597, %v5598
      %v5600 = vsel %vm1818, %v4339, 0.0
      %v5601 = vsel %vm1818, %v4340, 0.0
      %v5602 = vadd.f32 %v5600, %v5601
      %v5603 = vrot.slane %v5602, 4
      %v5604 = vadd.f32 %v5602, %v5603
      %v5605 = vrot.slane %v5604, 2
      %v5606 = vadd.f32 %v5604, %v5605
      %v5607 = vrot.slane %v5606, 1
      %v5608 = vadd.f32 %v5606, %v5607
      %v5609 = vsel %vm1818, %v4341, 0.0
      %v5610 = vsel %vm1818, %v4342, 0.0
      %v5611 = vadd.f32 %v5609, %v5610
      %v5612 = vrot.slane %v5611, 4
      %v5613 = vadd.f32 %v5611, %v5612
      %v5614 = vrot.slane %v5613, 2
      %v5615 = vadd.f32 %v5613, %v5614
      %v5616 = vrot.slane %v5615, 1
      %v5617 = vadd.f32 %v5615, %v5616
      %v5618 = vsel %vm1818, %v4343, 0.0
      %v5619 = vsel %vm1818, %v4344, 0.0
      %v5620 = vadd.f32 %v5618, %v5619
      %v5621 = vrot.slane %v5620, 4
      %v5622 = vadd.f32 %v5620, %v5621
      %v5623 = vrot.slane %v5622, 2
      %v5624 = vadd.f32 %v5622, %v5623
      %v5625 = vrot.slane %v5624, 1
      %v5626 = vadd.f32 %v5624, %v5625
      %v5627 = vsel %vm1818, %v4345, 0.0
      %v5628 = vsel %vm1818, %v4346, 0.0
      %v5629 = vadd.f32 %v5627, %v5628
      %v5630 = vrot.slane %v5629, 4
      %v5631 = vadd.f32 %v5629, %v5630
      %v5632 = vrot.slane %v5631, 2
      %v5633 = vadd.f32 %v5631, %v5632
      %v5634 = vrot.slane %v5633, 1
      %v5635 = vadd.f32 %v5633, %v5634
      %v5636 = vsel %vm1818, %v4347, 0.0
      %v5637 = vsel %vm1818, %v4348, 0.0
      %v5638 = vadd.f32 %v5636, %v5637
      %v5639 = vrot.slane %v5638, 4
      %v5640 = vadd.f32 %v5638, %v5639
      %v5641 = vrot.slane %v5640, 2
      %v5642 = vadd.f32 %v5640, %v5641
      %v5643 = vrot.slane %v5642, 1
      %v5644 = vadd.f32 %v5642, %v5643
      %v5645 = vsel %vm1818, %v4349, 0.0
      %v5646 = vsel %vm1818, %v4350, 0.0
      %v5647 = vadd.f32 %v5645, %v5646
      %v5648 = vrot.slane %v5647, 4
      %v5649 = vadd.f32 %v5647, %v5648
      %v5650 = vrot.slane %v5649, 2
      %v5651 = vadd.f32 %v5649, %v5650
      %v5652 = vrot.slane %v5651, 1
      %v5653 = vadd.f32 %v5651, %v5652
      %v5654 = vsel %vm1818, %v4351, 0.0
      %v5655 = vsel %vm1818, %v4352, 0.0
      %v5656 = vadd.f32 %v5654, %v5655
      %v5657 = vrot.slane %v5656, 4
      %v5658 = vadd.f32 %v5656, %v5657
      %v5659 = vrot.slane %v5658, 2
      %v5660 = vadd.f32 %v5658, %v5659
      %v5661 = vrot.slane %v5660, 1
      %v5662 = vadd.f32 %v5660, %v5661
      %v5663 = vsel %vm1818, %v4353, 0.0
      %v5664 = vsel %vm1818, %v4354, 0.0
      %v5665 = vadd.f32 %v5663, %v5664
      %v5666 = vrot.slane %v5665, 4
      %v5667 = vadd.f32 %v5665, %v5666
      %v5668 = vrot.slane %v5667, 2
      %v5669 = vadd.f32 %v5667, %v5668
      %v5670 = vrot.slane %v5669, 1
      %v5671 = vadd.f32 %v5669, %v5670
      %v5672 = vsel %vm1818, %v4355, 0.0
      %v5673 = vsel %vm1818, %v4356, 0.0
      %v5674 = vadd.f32 %v5672, %v5673
      %v5675 = vrot.slane %v5674, 4
      %v5676 = vadd.f32 %v5674, %v5675
      %v5677 = vrot.slane %v5676, 2
      %v5678 = vadd.f32 %v5676, %v5677
      %v5679 = vrot.slane %v5678, 1
      %v5680 = vadd.f32 %v5678, %v5679
      %v5681 = vsel %vm1818, %v4357, 0.0
      %v5682 = vsel %vm1818, %v4358, 0.0
      %v5683 = vadd.f32 %v5681, %v5682
      %v5684 = vrot.slane %v5683, 4
      %v5685 = vadd.f32 %v5683, %v5684
      %v5686 = vrot.slane %v5685, 2
      %v5687 = vadd.f32 %v5685, %v5686
      %v5688 = vrot.slane %v5687, 1
      %v5689 = vadd.f32 %v5687, %v5688
      %v5690 = vsel %vm1818, %v4359, 0.0
      %v5691 = vsel %vm1818, %v4360, 0.0
      %v5692 = vadd.f32 %v5690, %v5691
      %v5693 = vrot.slane %v5692, 4
      %v5694 = vadd.f32 %v5692, %v5693
      %v5695 = vrot.slane %v5694, 2
      %v5696 = vadd.f32 %v5694, %v5695
      %v5697 = vrot.slane %v5696, 1
      %v5698 = vadd.f32 %v5696, %v5697
      %v5699 = vsel %vm1818, %v4361, 0.0
      %v5700 = vsel %vm1818, %v4362, 0.0
      %v5701 = vadd.f32 %v5699, %v5700
      %v5702 = vrot.slane %v5701, 4
      %v5703 = vadd.f32 %v5701, %v5702
      %v5704 = vrot.slane %v5703, 2
      %v5705 = vadd.f32 %v5703, %v5704
      %v5706 = vrot.slane %v5705, 1
      %v5707 = vadd.f32 %v5705, %v5706
      %v5708 = vsel %vm1818, %v4363, 0.0
      %v5709 = vsel %vm1818, %v4364, 0.0
      %v5710 = vadd.f32 %v5708, %v5709
      %v5711 = vrot.slane %v5710, 4
      %v5712 = vadd.f32 %v5710, %v5711
      %v5713 = vrot.slane %v5712, 2
      %v5714 = vadd.f32 %v5712, %v5713
      %v5715 = vrot.slane %v5714, 1
      %v5716 = vadd.f32 %v5714, %v5715
      %v5717 = vsel %vm1818, %v4365, 0.0
      %v5718 = vsel %vm1818, %v4366, 0.0
      %v5719 = vadd.f32 %v5717, %v5718
      %v5720 = vrot.slane %v5719, 4
      %v5721 = vadd.f32 %v5719, %v5720
      %v5722 = vrot.slane %v5721, 2
      %v5723 = vadd.f32 %v5721, %v5722
      %v5724 = vrot.slane %v5723, 1
      %v5725 = vadd.f32 %v5723, %v5724
      %v5726 = vsel %vm1818, %v4367, 0.0
      %v5727 = vsel %vm1818, %v4368, 0.0
      %v5728 = vadd.f32 %v5726, %v5727
      %v5729 = vrot.slane %v5728, 4
      %v5730 = vadd.f32 %v5728, %v5729
      %v5731 = vrot.slane %v5730, 2
      %v5732 = vadd.f32 %v5730, %v5731
      %v5733 = vrot.slane %v5732, 1
      %v5734 = vadd.f32 %v5732, %v5733
      %v5735 = vsel %vm1818, %v4369, 0.0
      %v5736 = vsel %vm1818, %v4370, 0.0
      %v5737 = vadd.f32 %v5735, %v5736
      %v5738 = vrot.slane %v5737, 4
      %v5739 = vadd.f32 %v5737, %v5738
      %v5740 = vrot.slane %v5739, 2
      %v5741 = vadd.f32 %v5739, %v5740
      %v5742 = vrot.slane %v5741, 1
      %v5743 = vadd.f32 %v5741, %v5742
      %v5744 = vsel %vm1818, %v4371, 0.0
      %v5745 = vsel %vm1818, %v4372, 0.0
      %v5746 = vadd.f32 %v5744, %v5745
      %v5747 = vrot.slane %v5746, 4
      %v5748 = vadd.f32 %v5746, %v5747
      %v5749 = vrot.slane %v5748, 2
      %v5750 = vadd.f32 %v5748, %v5749
      %v5751 = vrot.slane %v5750, 1
      %v5752 = vadd.f32 %v5750, %v5751
      %v5753 = vsel %vm1818, %v4373, 0.0
      %v5754 = vsel %vm1818, %v4374, 0.0
      %v5755 = vadd.f32 %v5753, %v5754
      %v5756 = vrot.slane %v5755, 4
      %v5757 = vadd.f32 %v5755, %v5756
      %v5758 = vrot.slane %v5757, 2
      %v5759 = vadd.f32 %v5757, %v5758
      %v5760 = vrot.slane %v5759, 1
      %v5761 = vadd.f32 %v5759, %v5760
      %v5762 = vsel %vm1818, %v4375, 0.0
      %v5763 = vsel %vm1818, %v4376, 0.0
      %v5764 = vadd.f32 %v5762, %v5763
      %v5765 = vrot.slane %v5764, 4
      %v5766 = vadd.f32 %v5764, %v5765
      %v5767 = vrot.slane %v5766, 2
      %v5768 = vadd.f32 %v5766, %v5767
      %v5769 = vrot.slane %v5768, 1
      %v5770 = vadd.f32 %v5768, %v5769
      %v5771 = vsel %vm1818, %v4377, 0.0
      %v5772 = vsel %vm1818, %v4378, 0.0
      %v5773 = vadd.f32 %v5771, %v5772
      %v5774 = vrot.slane %v5773, 4
      %v5775 = vadd.f32 %v5773, %v5774
      %v5776 = vrot.slane %v5775, 2
      %v5777 = vadd.f32 %v5775, %v5776
      %v5778 = vrot.slane %v5777, 1
      %v5779 = vadd.f32 %v5777, %v5778
      %v5780 = vsel %vm1818, %v4379, 0.0
      %v5781 = vsel %vm1818, %v4380, 0.0
      %v5782 = vadd.f32 %v5780, %v5781
      %v5783 = vrot.slane %v5782, 4
      %v5784 = vadd.f32 %v5782, %v5783
      %v5785 = vrot.slane %v5784, 2
      %v5786 = vadd.f32 %v5784, %v5785
      %v5787 = vrot.slane %v5786, 1
      %v5788 = vadd.f32 %v5786, %v5787
      %v5789 = vsel %vm1818, %v4381, 0.0
      %v5790 = vsel %vm1818, %v4382, 0.0
      %v5791 = vadd.f32 %v5789, %v5790
      %v5792 = vrot.slane %v5791, 4
      %v5793 = vadd.f32 %v5791, %v5792
      %v5794 = vrot.slane %v5793, 2
      %v5795 = vadd.f32 %v5793, %v5794
      %v5796 = vrot.slane %v5795, 1
      %v5797 = vadd.f32 %v5795, %v5796
      %v5798 = vsel %vm1818, %v4383, 0.0
      %v5799 = vsel %vm1818, %v4384, 0.0
      %v5800 = vadd.f32 %v5798, %v5799
      %v5801 = vrot.slane %v5800, 4
      %v5802 = vadd.f32 %v5800, %v5801
      %v5803 = vrot.slane %v5802, 2
      %v5804 = vadd.f32 %v5802, %v5803
      %v5805 = vrot.slane %v5804, 1
      %v5806 = vadd.f32 %v5804, %v5805
      %v5807 = vsel %vm1818, %v4385, 0.0
      %v5808 = vsel %vm1818, %v4386, 0.0
      %v5809 = vadd.f32 %v5807, %v5808
      %v5810 = vrot.slane %v5809, 4
      %v5811 = vadd.f32 %v5809, %v5810
      %v5812 = vrot.slane %v5811, 2
      %v5813 = vadd.f32 %v5811, %v5812
      %v5814 = vrot.slane %v5813, 1
      %v5815 = vadd.f32 %v5813, %v5814
      %v5816 = vsel %vm1818, %v4387, 0.0
      %v5817 = vsel %vm1818, %v4388, 0.0
      %v5818 = vadd.f32 %v5816, %v5817
      %v5819 = vrot.slane %v5818, 4
      %v5820 = vadd.f32 %v5818, %v5819
      %v5821 = vrot.slane %v5820, 2
      %v5822 = vadd.f32 %v5820, %v5821
      %v5823 = vrot.slane %v5822, 1
      %v5824 = vadd.f32 %v5822, %v5823
      %v5825 = vsel %vm1818, %v4389, 0.0
      %v5826 = vsel %vm1818, %v4390, 0.0
      %v5827 = vadd.f32 %v5825, %v5826
      %v5828 = vrot.slane %v5827, 4
      %v5829 = vadd.f32 %v5827, %v5828
      %v5830 = vrot.slane %v5829, 2
      %v5831 = vadd.f32 %v5829, %v5830
      %v5832 = vrot.slane %v5831, 1
      %v5833 = vadd.f32 %v5831, %v5832
      %v5834 = vsel %vm1818, %v4391, 0.0
      %v5835 = vsel %vm1818, %v4392, 0.0
      %v5836 = vadd.f32 %v5834, %v5835
      %v5837 = vrot.slane %v5836, 4
      %v5838 = vadd.f32 %v5836, %v5837
      %v5839 = vrot.slane %v5838, 2
      %v5840 = vadd.f32 %v5838, %v5839
      %v5841 = vrot.slane %v5840, 1
      %v5842 = vadd.f32 %v5840, %v5841
      %v5843 = vsel %vm1818, %v4393, 0.0
      %v5844 = vsel %vm1818, %v4394, 0.0
      %v5845 = vadd.f32 %v5843, %v5844
      %v5846 = vrot.slane %v5845, 4
      %v5847 = vadd.f32 %v5845, %v5846
      %v5848 = vrot.slane %v5847, 2
      %v5849 = vadd.f32 %v5847, %v5848
      %v5850 = vrot.slane %v5849, 1
      %v5851 = vadd.f32 %v5849, %v5850
      %v5852 = vsel %vm1818, %v4395, 0.0
      %v5853 = vsel %vm1818, %v4396, 0.0
      %v5854 = vadd.f32 %v5852, %v5853
      %v5855 = vrot.slane %v5854, 4
      %v5856 = vadd.f32 %v5854, %v5855
      %v5857 = vrot.slane %v5856, 2
      %v5858 = vadd.f32 %v5856, %v5857
      %v5859 = vrot.slane %v5858, 1
      %v5860 = vadd.f32 %v5858, %v5859
      %v5861 = vsel %vm1818, %v4397, 0.0
      %v5862 = vsel %vm1818, %v4398, 0.0
      %v5863 = vadd.f32 %v5861, %v5862
      %v5864 = vrot.slane %v5863, 4
      %v5865 = vadd.f32 %v5863, %v5864
      %v5866 = vrot.slane %v5865, 2
      %v5867 = vadd.f32 %v5865, %v5866
      %v5868 = vrot.slane %v5867, 1
      %v5869 = vadd.f32 %v5867, %v5868
      %v5870 = vsel %vm1818, %v4399, 0.0
      %v5871 = vsel %vm1818, %v4400, 0.0
      %v5872 = vadd.f32 %v5870, %v5871
      %v5873 = vrot.slane %v5872, 4
      %v5874 = vadd.f32 %v5872, %v5873
      %v5875 = vrot.slane %v5874, 2
      %v5876 = vadd.f32 %v5874, %v5875
      %v5877 = vrot.slane %v5876, 1
      %v5878 = vadd.f32 %v5876, %v5877
      %v5879 = vsel %vm1818, %v4401, 0.0
      %v5880 = vsel %vm1818, %v4402, 0.0
      %v5881 = vadd.f32 %v5879, %v5880
      %v5882 = vrot.slane %v5881, 4
      %v5883 = vadd.f32 %v5881, %v5882
      %v5884 = vrot.slane %v5883, 2
      %v5885 = vadd.f32 %v5883, %v5884
      %v5886 = vrot.slane %v5885, 1
      %v5887 = vadd.f32 %v5885, %v5886
      %v5888 = vsel %vm1818, %v4403, 0.0
      %v5889 = vsel %vm1818, %v4404, 0.0
      %v5890 = vadd.f32 %v5888, %v5889
      %v5891 = vrot.slane %v5890, 4
      %v5892 = vadd.f32 %v5890, %v5891
      %v5893 = vrot.slane %v5892, 2
      %v5894 = vadd.f32 %v5892, %v5893
      %v5895 = vrot.slane %v5894, 1
      %v5896 = vadd.f32 %v5894, %v5895
      %v5897 = vsel %vm1818, %v4405, 0.0
      %v5898 = vsel %vm1818, %v4406, 0.0
      %v5899 = vadd.f32 %v5897, %v5898
      %v5900 = vrot.slane %v5899, 4
      %v5901 = vadd.f32 %v5899, %v5900
      %v5902 = vrot.slane %v5901, 2
      %v5903 = vadd.f32 %v5901, %v5902
      %v5904 = vrot.slane %v5903, 1
      %v5905 = vadd.f32 %v5903, %v5904
      %v5906 = vsel %vm1818, %v4407, 0.0
      %v5907 = vsel %vm1818, %v4408, 0.0
      %v5908 = vadd.f32 %v5906, %v5907
      %v5909 = vrot.slane %v5908, 4
      %v5910 = vadd.f32 %v5908, %v5909
      %v5911 = vrot.slane %v5910, 2
      %v5912 = vadd.f32 %v5910, %v5911
      %v5913 = vrot.slane %v5912, 1
      %v5914 = vadd.f32 %v5912, %v5913
      %v5915 = vsel %vm1818, %v4409, 0.0
      %v5916 = vsel %vm1818, %v4410, 0.0
      %v5917 = vadd.f32 %v5915, %v5916
      %v5918 = vrot.slane %v5917, 4
      %v5919 = vadd.f32 %v5917, %v5918
      %v5920 = vrot.slane %v5919, 2
      %v5921 = vadd.f32 %v5919, %v5920
      %v5922 = vrot.slane %v5921, 1
      %v5923 = vadd.f32 %v5921, %v5922
      %v5924 = vsel %vm1818, %v4411, 0.0
      %v5925 = vsel %vm1818, %v4412, 0.0
      %v5926 = vadd.f32 %v5924, %v5925
      %v5927 = vrot.slane %v5926, 4
      %v5928 = vadd.f32 %v5926, %v5927
      %v5929 = vrot.slane %v5928, 2
      %v5930 = vadd.f32 %v5928, %v5929
      %v5931 = vrot.slane %v5930, 1
      %v5932 = vadd.f32 %v5930, %v5931
      %v5933 = vsel %vm1818, %v4413, 0.0
      %v5934 = vsel %vm1818, %v4414, 0.0
      %v5935 = vadd.f32 %v5933, %v5934
      %v5936 = vrot.slane %v5935, 4
      %v5937 = vadd.f32 %v5935, %v5936
      %v5938 = vrot.slane %v5937, 2
      %v5939 = vadd.f32 %v5937, %v5938
      %v5940 = vrot.slane %v5939, 1
      %v5941 = vadd.f32 %v5939, %v5940
      %v5942 = vsel %vm1818, %v4415, 0.0
      %v5943 = vsel %vm1818, %v4416, 0.0
      %v5944 = vadd.f32 %v5942, %v5943
      %v5945 = vrot.slane %v5944, 4
      %v5946 = vadd.f32 %v5944, %v5945
      %v5947 = vrot.slane %v5946, 2
      %v5948 = vadd.f32 %v5946, %v5947
      %v5949 = vrot.slane %v5948, 1
      %v5950 = vadd.f32 %v5948, %v5949
      %v5951 = vsel %vm1818, %v4417, 0.0
      %v5952 = vsel %vm1818, %v4418, 0.0
      %v5953 = vadd.f32 %v5951, %v5952
      %v5954 = vrot.slane %v5953, 4
      %v5955 = vadd.f32 %v5953, %v5954
      %v5956 = vrot.slane %v5955, 2
      %v5957 = vadd.f32 %v5955, %v5956
      %v5958 = vrot.slane %v5957, 1
      %v5959 = vadd.f32 %v5957, %v5958
      %v5960 = vsel %vm1818, %v4419, 0.0
      %v5961 = vsel %vm1818, %v4420, 0.0
      %v5962 = vadd.f32 %v5960, %v5961
      %v5963 = vrot.slane %v5962, 4
      %v5964 = vadd.f32 %v5962, %v5963
      %v5965 = vrot.slane %v5964, 2
      %v5966 = vadd.f32 %v5964, %v5965
      %v5967 = vrot.slane %v5966, 1
      %v5968 = vadd.f32 %v5966, %v5967
      %v5969 = vsel %vm1818, %v4421, 0.0
      %v5970 = vsel %vm1818, %v4422, 0.0
      %v5971 = vadd.f32 %v5969, %v5970
      %v5972 = vrot.slane %v5971, 4
      %v5973 = vadd.f32 %v5971, %v5972
      %v5974 = vrot.slane %v5973, 2
      %v5975 = vadd.f32 %v5973, %v5974
      %v5976 = vrot.slane %v5975, 1
      %v5977 = vadd.f32 %v5975, %v5976
      %v5978 = vsel %vm1818, %v4423, 0.0
      %v5979 = vsel %vm1818, %v4424, 0.0
      %v5980 = vadd.f32 %v5978, %v5979
      %v5981 = vrot.slane %v5980, 4
      %v5982 = vadd.f32 %v5980, %v5981
      %v5983 = vrot.slane %v5982, 2
      %v5984 = vadd.f32 %v5982, %v5983
      %v5985 = vrot.slane %v5984, 1
      %v5986 = vadd.f32 %v5984, %v5985
      %v5987 = vsel %vm1818, %v4425, 0.0
      %v5988 = vsel %vm1818, %v4426, 0.0
      %v5989 = vadd.f32 %v5987, %v5988
      %v5990 = vrot.slane %v5989, 4
      %v5991 = vadd.f32 %v5989, %v5990
      %v5992 = vrot.slane %v5991, 2
      %v5993 = vadd.f32 %v5991, %v5992
      %v5994 = vrot.slane %v5993, 1
      %v5995 = vadd.f32 %v5993, %v5994
      %v5996 = vsel %vm1818, %v4427, 0.0
      %v5997 = vsel %vm1818, %v4428, 0.0
      %v5998 = vadd.f32 %v5996, %v5997
      %v5999 = vrot.slane %v5998, 4
      %v6000 = vadd.f32 %v5998, %v5999
      %v6001 = vrot.slane %v6000, 2
      %v6002 = vadd.f32 %v6000, %v6001
      %v6003 = vrot.slane %v6002, 1
      %v6004 = vadd.f32 %v6002, %v6003
      %v6005 = vsel %vm1818, %v4429, 0.0
      %v6006 = vsel %vm1818, %v4430, 0.0
      %v6007 = vadd.f32 %v6005, %v6006
      %v6008 = vrot.slane %v6007, 4
      %v6009 = vadd.f32 %v6007, %v6008
      %v6010 = vrot.slane %v6009, 2
      %v6011 = vadd.f32 %v6009, %v6010
      %v6012 = vrot.slane %v6011, 1
      %v6013 = vadd.f32 %v6011, %v6012
      %v6014 = vsel %vm1818, %v4431, 0.0
      %v6015 = vsel %vm1818, %v4432, 0.0
      %v6016 = vadd.f32 %v6014, %v6015
      %v6017 = vrot.slane %v6016, 4
      %v6018 = vadd.f32 %v6016, %v6017
      %v6019 = vrot.slane %v6018, 2
      %v6020 = vadd.f32 %v6018, %v6019
      %v6021 = vrot.slane %v6020, 1
      %v6022 = vadd.f32 %v6020, %v6021
      %v6023 = vsel %vm1818, %v4433, 0.0
      %v6024 = vsel %vm1818, %v4434, 0.0
      %v6025 = vadd.f32 %v6023, %v6024
      %v6026 = vrot.slane %v6025, 4
      %v6027 = vadd.f32 %v6025, %v6026
      %v6028 = vrot.slane %v6027, 2
      %v6029 = vadd.f32 %v6027, %v6028
      %v6030 = vrot.slane %v6029, 1
      %v6031 = vadd.f32 %v6029, %v6030
      %v6032 = vsel %vm1818, %v4435, 0.0
      %v6033 = vsel %vm1818, %v4436, 0.0
      %v6034 = vadd.f32 %v6032, %v6033
      %v6035 = vrot.slane %v6034, 4
      %v6036 = vadd.f32 %v6034, %v6035
      %v6037 = vrot.slane %v6036, 2
      %v6038 = vadd.f32 %v6036, %v6037
      %v6039 = vrot.slane %v6038, 1
      %v6040 = vadd.f32 %v6038, %v6039
      %v6041 = vsel %vm1818, %v4437, 0.0
      %v6042 = vsel %vm1818, %v4438, 0.0
      %v6043 = vadd.f32 %v6041, %v6042
      %v6044 = vrot.slane %v6043, 4
      %v6045 = vadd.f32 %v6043, %v6044
      %v6046 = vrot.slane %v6045, 2
      %v6047 = vadd.f32 %v6045, %v6046
      %v6048 = vrot.slane %v6047, 1
      %v6049 = vadd.f32 %v6047, %v6048
      %v6050 = vsel %vm1818, %v4439, 0.0
      %v6051 = vsel %vm1818, %v4440, 0.0
      %v6052 = vadd.f32 %v6050, %v6051
      %v6053 = vrot.slane %v6052, 4
      %v6054 = vadd.f32 %v6052, %v6053
      %v6055 = vrot.slane %v6054, 2
      %v6056 = vadd.f32 %v6054, %v6055
      %v6057 = vrot.slane %v6056, 1
      %v6058 = vadd.f32 %v6056, %v6057
      %v6059 = vsel %vm1818, %v4441, 0.0
      %v6060 = vsel %vm1818, %v4442, 0.0
      %v6061 = vadd.f32 %v6059, %v6060
      %v6062 = vrot.slane %v6061, 4
      %v6063 = vadd.f32 %v6061, %v6062
      %v6064 = vrot.slane %v6063, 2
      %v6065 = vadd.f32 %v6063, %v6064
      %v6066 = vrot.slane %v6065, 1
      %v6067 = vadd.f32 %v6065, %v6066
      %v6068 = vsel %vm1818, %v4443, 0.0
      %v6069 = vsel %vm1818, %v4444, 0.0
      %v6070 = vadd.f32 %v6068, %v6069
      %v6071 = vrot.slane %v6070, 4
      %v6072 = vadd.f32 %v6070, %v6071
      %v6073 = vrot.slane %v6072, 2
      %v6074 = vadd.f32 %v6072, %v6073
      %v6075 = vrot.slane %v6074, 1
      %v6076 = vadd.f32 %v6074, %v6075
      %v6077 = vsel %vm1818, %v4445, 0.0
      %v6078 = vsel %vm1818, %v4446, 0.0
      %v6079 = vadd.f32 %v6077, %v6078
      %v6080 = vrot.slane %v6079, 4
      %v6081 = vadd.f32 %v6079, %v6080
      %v6082 = vrot.slane %v6081, 2
      %v6083 = vadd.f32 %v6081, %v6082
      %v6084 = vrot.slane %v6083, 1
      %v6085 = vadd.f32 %v6083, %v6084
      %v6086 = vsel %vm1818, %v4447, 0.0
      %v6087 = vsel %vm1818, %v4448, 0.0
      %v6088 = vadd.f32 %v6086, %v6087
      %v6089 = vrot.slane %v6088, 4
      %v6090 = vadd.f32 %v6088, %v6089
      %v6091 = vrot.slane %v6090, 2
      %v6092 = vadd.f32 %v6090, %v6091
      %v6093 = vrot.slane %v6092, 1
      %v6094 = vadd.f32 %v6092, %v6093
      %v6095 = vsel %vm1818, %v4449, 0.0
      %v6096 = vsel %vm1818, %v4450, 0.0
      %v6097 = vadd.f32 %v6095, %v6096
      %v6098 = vrot.slane %v6097, 4
      %v6099 = vadd.f32 %v6097, %v6098
      %v6100 = vrot.slane %v6099, 2
      %v6101 = vadd.f32 %v6099, %v6100
      %v6102 = vrot.slane %v6101, 1
      %v6103 = vadd.f32 %v6101, %v6102
      %v6104 = vsel %vm1818, %v4451, 0.0
      %v6105 = vsel %vm1818, %v4452, 0.0
      %v6106 = vadd.f32 %v6104, %v6105
      %v6107 = vrot.slane %v6106, 4
      %v6108 = vadd.f32 %v6106, %v6107
      %v6109 = vrot.slane %v6108, 2
      %v6110 = vadd.f32 %v6108, %v6109
      %v6111 = vrot.slane %v6110, 1
      %v6112 = vadd.f32 %v6110, %v6111
      %v6113 = vsel %vm1818, %v4453, 0.0
      %v6114 = vsel %vm1818, %v4454, 0.0
      %v6115 = vadd.f32 %v6113, %v6114
      %v6116 = vrot.slane %v6115, 4
      %v6117 = vadd.f32 %v6115, %v6116
      %v6118 = vrot.slane %v6117, 2
      %v6119 = vadd.f32 %v6117, %v6118
      %v6120 = vrot.slane %v6119, 1
      %v6121 = vadd.f32 %v6119, %v6120
      %v6122 = vsel %vm1818, %v4455, 0.0
      %v6123 = vsel %vm1818, %v4456, 0.0
      %v6124 = vadd.f32 %v6122, %v6123
      %v6125 = vrot.slane %v6124, 4
      %v6126 = vadd.f32 %v6124, %v6125
      %v6127 = vrot.slane %v6126, 2
      %v6128 = vadd.f32 %v6126, %v6127
      %v6129 = vrot.slane %v6128, 1
      %v6130 = vadd.f32 %v6128, %v6129
      %v6131 = vsel %vm1818, %v4457, 0.0
      %v6132 = vsel %vm1818, %v4458, 0.0
      %v6133 = vadd.f32 %v6131, %v6132
      %v6134 = vrot.slane %v6133, 4
      %v6135 = vadd.f32 %v6133, %v6134
      %v6136 = vrot.slane %v6135, 2
      %v6137 = vadd.f32 %v6135, %v6136
      %v6138 = vrot.slane %v6137, 1
      %v6139 = vadd.f32 %v6137, %v6138
      %v6140 = vsel %vm1818, %v4459, 0.0
      %v6141 = vsel %vm1818, %v4460, 0.0
      %v6142 = vadd.f32 %v6140, %v6141
      %v6143 = vrot.slane %v6142, 4
      %v6144 = vadd.f32 %v6142, %v6143
      %v6145 = vrot.slane %v6144, 2
      %v6146 = vadd.f32 %v6144, %v6145
      %v6147 = vrot.slane %v6146, 1
      %v6148 = vadd.f32 %v6146, %v6147
      %v6149 = vsel %vm1818, %v4461, 0.0
      %v6150 = vsel %vm1818, %v4462, 0.0
      %v6151 = vadd.f32 %v6149, %v6150
      %v6152 = vrot.slane %v6151, 4
      %v6153 = vadd.f32 %v6151, %v6152
      %v6154 = vrot.slane %v6153, 2
      %v6155 = vadd.f32 %v6153, %v6154
      %v6156 = vrot.slane %v6155, 1
      %v6157 = vadd.f32 %v6155, %v6156
      %v6158 = vsel %vm1818, %v4463, 0.0
      %v6159 = vsel %vm1818, %v4464, 0.0
      %v6160 = vadd.f32 %v6158, %v6159
      %v6161 = vrot.slane %v6160, 4
      %v6162 = vadd.f32 %v6160, %v6161
      %v6163 = vrot.slane %v6162, 2
      %v6164 = vadd.f32 %v6162, %v6163
      %v6165 = vrot.slane %v6164, 1
      %v6166 = vadd.f32 %v6164, %v6165
      %v6167 = vsel %vm1818, %v4465, 0.0
      %v6168 = vsel %vm1818, %v4466, 0.0
      %v6169 = vadd.f32 %v6167, %v6168
      %v6170 = vrot.slane %v6169, 4
      %v6171 = vadd.f32 %v6169, %v6170
      %v6172 = vrot.slane %v6171, 2
      %v6173 = vadd.f32 %v6171, %v6172
      %v6174 = vrot.slane %v6173, 1
      %v6175 = vadd.f32 %v6173, %v6174
      %v6176 = vsel %vm1818, %v4467, 0.0
      %v6177 = vsel %vm1818, %v4468, 0.0
      %v6178 = vadd.f32 %v6176, %v6177
      %v6179 = vrot.slane %v6178, 4
      %v6180 = vadd.f32 %v6178, %v6179
      %v6181 = vrot.slane %v6180, 2
      %v6182 = vadd.f32 %v6180, %v6181
      %v6183 = vrot.slane %v6182, 1
      %v6184 = vadd.f32 %v6182, %v6183
      %v6185 = vsel %vm1818, %v4469, 0.0
      %v6186 = vsel %vm1818, %v4470, 0.0
      %v6187 = vadd.f32 %v6185, %v6186
      %v6188 = vrot.slane %v6187, 4
      %v6189 = vadd.f32 %v6187, %v6188
      %v6190 = vrot.slane %v6189, 2
      %v6191 = vadd.f32 %v6189, %v6190
      %v6192 = vrot.slane %v6191, 1
      %v6193 = vadd.f32 %v6191, %v6192
      %v6194 = vsel %vm1818, %v4471, 0.0
      %v6195 = vsel %vm1818, %v4472, 0.0
      %v6196 = vadd.f32 %v6194, %v6195
      %v6197 = vrot.slane %v6196, 4
      %v6198 = vadd.f32 %v6196, %v6197
      %v6199 = vrot.slane %v6198, 2
      %v6200 = vadd.f32 %v6198, %v6199
      %v6201 = vrot.slane %v6200, 1
      %v6202 = vadd.f32 %v6200, %v6201
      %v6203 = vsel %vm1818, %v4473, 0.0
      %v6204 = vsel %vm1818, %v4474, 0.0
      %v6205 = vadd.f32 %v6203, %v6204
      %v6206 = vrot.slane %v6205, 4
      %v6207 = vadd.f32 %v6205, %v6206
      %v6208 = vrot.slane %v6207, 2
      %v6209 = vadd.f32 %v6207, %v6208
      %v6210 = vrot.slane %v6209, 1
      %v6211 = vadd.f32 %v6209, %v6210
      %v6212 = vsel %vm1818, %v4475, 0.0
      %v6213 = vsel %vm1818, %v4476, 0.0
      %v6214 = vadd.f32 %v6212, %v6213
      %v6215 = vrot.slane %v6214, 4
      %v6216 = vadd.f32 %v6214, %v6215
      %v6217 = vrot.slane %v6216, 2
      %v6218 = vadd.f32 %v6216, %v6217
      %v6219 = vrot.slane %v6218, 1
      %v6220 = vadd.f32 %v6218, %v6219
      %v6221 = vsel %vm1818, %v4477, 0.0
      %v6222 = vsel %vm1818, %v4478, 0.0
      %v6223 = vadd.f32 %v6221, %v6222
      %v6224 = vrot.slane %v6223, 4
      %v6225 = vadd.f32 %v6223, %v6224
      %v6226 = vrot.slane %v6225, 2
      %v6227 = vadd.f32 %v6225, %v6226
      %v6228 = vrot.slane %v6227, 1
      %v6229 = vadd.f32 %v6227, %v6228
      %v6230 = vsel %vm1818, %v4479, 0.0
      %v6231 = vsel %vm1818, %v4480, 0.0
      %v6232 = vadd.f32 %v6230, %v6231
      %v6233 = vrot.slane %v6232, 4
      %v6234 = vadd.f32 %v6232, %v6233
      %v6235 = vrot.slane %v6234, 2
      %v6236 = vadd.f32 %v6234, %v6235
      %v6237 = vrot.slane %v6236, 1
      %v6238 = vadd.f32 %v6236, %v6237
      %v6239 = vsel %vm1818, %v4481, 0.0
      %v6240 = vsel %vm1818, %v4482, 0.0
      %v6241 = vadd.f32 %v6239, %v6240
      %v6242 = vrot.slane %v6241, 4
      %v6243 = vadd.f32 %v6241, %v6242
      %v6244 = vrot.slane %v6243, 2
      %v6245 = vadd.f32 %v6243, %v6244
      %v6246 = vrot.slane %v6245, 1
      %v6247 = vadd.f32 %v6245, %v6246
      %v6248 = vsel %vm1818, %v4483, 0.0
      %v6249 = vsel %vm1818, %v4484, 0.0
      %v6250 = vadd.f32 %v6248, %v6249
      %v6251 = vrot.slane %v6250, 4
      %v6252 = vadd.f32 %v6250, %v6251
      %v6253 = vrot.slane %v6252, 2
      %v6254 = vadd.f32 %v6252, %v6253
      %v6255 = vrot.slane %v6254, 1
      %v6256 = vadd.f32 %v6254, %v6255
      %v6257 = vsel %vm1818, %v4485, 0.0
      %v6258 = vsel %vm1818, %v4486, 0.0
      %v6259 = vadd.f32 %v6257, %v6258
      %v6260 = vrot.slane %v6259, 4
      %v6261 = vadd.f32 %v6259, %v6260
      %v6262 = vrot.slane %v6261, 2
      %v6263 = vadd.f32 %v6261, %v6262
      %v6264 = vrot.slane %v6263, 1
      %v6265 = vadd.f32 %v6263, %v6264
      %v6266 = vsel %vm1818, %v4487, 0.0
      %v6267 = vsel %vm1818, %v4488, 0.0
      %v6268 = vadd.f32 %v6266, %v6267
      %v6269 = vrot.slane %v6268, 4
      %v6270 = vadd.f32 %v6268, %v6269
      %v6271 = vrot.slane %v6270, 2
      %v6272 = vadd.f32 %v6270, %v6271
      %v6273 = vrot.slane %v6272, 1
      %v6274 = vadd.f32 %v6272, %v6273
      %v6275 = vsel %vm1818, %v4489, 0.0
      %v6276 = vsel %vm1818, %v4490, 0.0
      %v6277 = vadd.f32 %v6275, %v6276
      %v6278 = vrot.slane %v6277, 4
      %v6279 = vadd.f32 %v6277, %v6278
      %v6280 = vrot.slane %v6279, 2
      %v6281 = vadd.f32 %v6279, %v6280
      %v6282 = vrot.slane %v6281, 1
      %v6283 = vadd.f32 %v6281, %v6282
      %v6284 = vsel %vm1818, %v4491, 0.0
      %v6285 = vsel %vm1818, %v4492, 0.0
      %v6286 = vadd.f32 %v6284, %v6285
      %v6287 = vrot.slane %v6286, 4
      %v6288 = vadd.f32 %v6286, %v6287
      %v6289 = vrot.slane %v6288, 2
      %v6290 = vadd.f32 %v6288, %v6289
      %v6291 = vrot.slane %v6290, 1
      %v6292 = vadd.f32 %v6290, %v6291
      %v6293 = vsel %vm1818, %v4493, 0.0
      %v6294 = vsel %vm1818, %v4494, 0.0
      %v6295 = vadd.f32 %v6293, %v6294
      %v6296 = vrot.slane %v6295, 4
      %v6297 = vadd.f32 %v6295, %v6296
      %v6298 = vrot.slane %v6297, 2
      %v6299 = vadd.f32 %v6297, %v6298
      %v6300 = vrot.slane %v6299, 1
      %v6301 = vadd.f32 %v6299, %v6300
      %v6302 = vsel %vm1818, %v4495, 0.0
      %v6303 = vsel %vm1818, %v4496, 0.0
      %v6304 = vadd.f32 %v6302, %v6303
      %v6305 = vrot.slane %v6304, 4
      %v6306 = vadd.f32 %v6304, %v6305
      %v6307 = vrot.slane %v6306, 2
      %v6308 = vadd.f32 %v6306, %v6307
      %v6309 = vrot.slane %v6308, 1
      %v6310 = vadd.f32 %v6308, %v6309
      %v6311 = vsel %vm1818, %v4497, 0.0
      %v6312 = vsel %vm1818, %v4498, 0.0
      %v6313 = vadd.f32 %v6311, %v6312
      %v6314 = vrot.slane %v6313, 4
      %v6315 = vadd.f32 %v6313, %v6314
      %v6316 = vrot.slane %v6315, 2
      %v6317 = vadd.f32 %v6315, %v6316
      %v6318 = vrot.slane %v6317, 1
      %v6319 = vadd.f32 %v6317, %v6318
      %v6320 = vsel %vm1818, %v4499, 0.0
      %v6321 = vsel %vm1818, %v4500, 0.0
      %v6322 = vadd.f32 %v6320, %v6321
      %v6323 = vrot.slane %v6322, 4
      %v6324 = vadd.f32 %v6322, %v6323
      %v6325 = vrot.slane %v6324, 2
      %v6326 = vadd.f32 %v6324, %v6325
      %v6327 = vrot.slane %v6326, 1
      %v6328 = vadd.f32 %v6326, %v6327
      %v6329 = vsel %vm1818, %v4501, 0.0
      %v6330 = vsel %vm1818, %v4502, 0.0
      %v6331 = vadd.f32 %v6329, %v6330
      %v6332 = vrot.slane %v6331, 4
      %v6333 = vadd.f32 %v6331, %v6332
      %v6334 = vrot.slane %v6333, 2
      %v6335 = vadd.f32 %v6333, %v6334
      %v6336 = vrot.slane %v6335, 1
      %v6337 = vadd.f32 %v6335, %v6336
      %v6338 = vsel %vm1818, %v4503, 0.0
      %v6339 = vsel %vm1818, %v4504, 0.0
      %v6340 = vadd.f32 %v6338, %v6339
      %v6341 = vrot.slane %v6340, 4
      %v6342 = vadd.f32 %v6340, %v6341
      %v6343 = vrot.slane %v6342, 2
      %v6344 = vadd.f32 %v6342, %v6343
      %v6345 = vrot.slane %v6344, 1
      %v6346 = vadd.f32 %v6344, %v6345
      %v6347 = vsel %vm1818, %v4505, 0.0
      %v6348 = vsel %vm1818, %v4506, 0.0
      %v6349 = vadd.f32 %v6347, %v6348
      %v6350 = vrot.slane %v6349, 4
      %v6351 = vadd.f32 %v6349, %v6350
      %v6352 = vrot.slane %v6351, 2
      %v6353 = vadd.f32 %v6351, %v6352
      %v6354 = vrot.slane %v6353, 1
      %v6355 = vadd.f32 %v6353, %v6354
      %v6356 = vsel %vm1818, %v4507, 0.0
      %v6357 = vsel %vm1818, %v4508, 0.0
      %v6358 = vadd.f32 %v6356, %v6357
      %v6359 = vrot.slane %v6358, 4
      %v6360 = vadd.f32 %v6358, %v6359
      %v6361 = vrot.slane %v6360, 2
      %v6362 = vadd.f32 %v6360, %v6361
      %v6363 = vrot.slane %v6362, 1
      %v6364 = vadd.f32 %v6362, %v6363
      %v6365 = vsel %vm1818, %v4509, 0.0
      %v6366 = vsel %vm1818, %v4510, 0.0
      %v6367 = vadd.f32 %v6365, %v6366
      %v6368 = vrot.slane %v6367, 4
      %v6369 = vadd.f32 %v6367, %v6368
      %v6370 = vrot.slane %v6369, 2
      %v6371 = vadd.f32 %v6369, %v6370
      %v6372 = vrot.slane %v6371, 1
      %v6373 = vadd.f32 %v6371, %v6372
      %v6374 = vsel %vm1818, %v4511, 0.0
      %v6375 = vsel %vm1818, %v4512, 0.0
      %v6376 = vadd.f32 %v6374, %v6375
      %v6377 = vrot.slane %v6376, 4
      %v6378 = vadd.f32 %v6376, %v6377
      %v6379 = vrot.slane %v6378, 2
      %v6380 = vadd.f32 %v6378, %v6379
      %v6381 = vrot.slane %v6380, 1
      %v6382 = vadd.f32 %v6380, %v6381
      %v6383 = vsel %vm1818, %v4513, 0.0
      %v6384 = vsel %vm1818, %v4514, 0.0
      %v6385 = vadd.f32 %v6383, %v6384
      %v6386 = vrot.slane %v6385, 4
      %v6387 = vadd.f32 %v6385, %v6386
      %v6388 = vrot.slane %v6387, 2
      %v6389 = vadd.f32 %v6387, %v6388
      %v6390 = vrot.slane %v6389, 1
      %v6391 = vadd.f32 %v6389, %v6390
      %v6392 = vsel %vm1818, %v4515, 0.0
      %v6393 = vsel %vm1818, %v4516, 0.0
      %v6394 = vadd.f32 %v6392, %v6393
      %v6395 = vrot.slane %v6394, 4
      %v6396 = vadd.f32 %v6394, %v6395
      %v6397 = vrot.slane %v6396, 2
      %v6398 = vadd.f32 %v6396, %v6397
      %v6399 = vrot.slane %v6398, 1
      %v6400 = vadd.f32 %v6398, %v6399
      %v6401 = vsel %vm1818, %v4517, 0.0
      %v6402 = vsel %vm1818, %v4518, 0.0
      %v6403 = vadd.f32 %v6401, %v6402
      %v6404 = vrot.slane %v6403, 4
      %v6405 = vadd.f32 %v6403, %v6404
      %v6406 = vrot.slane %v6405, 2
      %v6407 = vadd.f32 %v6405, %v6406
      %v6408 = vrot.slane %v6407, 1
      %v6409 = vadd.f32 %v6407, %v6408
      %v6410 = vsel %vm1818, %v4519, 0.0
      %v6411 = vsel %vm1818, %v4520, 0.0
      %v6412 = vadd.f32 %v6410, %v6411
      %v6413 = vrot.slane %v6412, 4
      %v6414 = vadd.f32 %v6412, %v6413
      %v6415 = vrot.slane %v6414, 2
      %v6416 = vadd.f32 %v6414, %v6415
      %v6417 = vrot.slane %v6416, 1
      %v6418 = vadd.f32 %v6416, %v6417
      %v6419 = vsel %vm1818, %v4521, 0.0
      %v6420 = vsel %vm1818, %v4522, 0.0
      %v6421 = vadd.f32 %v6419, %v6420
      %v6422 = vrot.slane %v6421, 4
      %v6423 = vadd.f32 %v6421, %v6422
      %v6424 = vrot.slane %v6423, 2
      %v6425 = vadd.f32 %v6423, %v6424
      %v6426 = vrot.slane %v6425, 1
      %v6427 = vadd.f32 %v6425, %v6426
      %v6428 = vsel %vm1818, %v4523, 0.0
      %v6429 = vsel %vm1818, %v4524, 0.0
      %v6430 = vadd.f32 %v6428, %v6429
      %v6431 = vrot.slane %v6430, 4
      %v6432 = vadd.f32 %v6430, %v6431
      %v6433 = vrot.slane %v6432, 2
      %v6434 = vadd.f32 %v6432, %v6433
      %v6435 = vrot.slane %v6434, 1
      %v6436 = vadd.f32 %v6434, %v6435
      %v6437 = vsel %vm1818, %v4525, 0.0
      %v6438 = vsel %vm1818, %v4526, 0.0
      %v6439 = vadd.f32 %v6437, %v6438
      %v6440 = vrot.slane %v6439, 4
      %v6441 = vadd.f32 %v6439, %v6440
      %v6442 = vrot.slane %v6441, 2
      %v6443 = vadd.f32 %v6441, %v6442
      %v6444 = vrot.slane %v6443, 1
      %v6445 = vadd.f32 %v6443, %v6444
      %v6446 = vsel %vm1818, %v4527, 0.0
      %v6447 = vsel %vm1818, %v4528, 0.0
      %v6448 = vadd.f32 %v6446, %v6447
      %v6449 = vrot.slane %v6448, 4
      %v6450 = vadd.f32 %v6448, %v6449
      %v6451 = vrot.slane %v6450, 2
      %v6452 = vadd.f32 %v6450, %v6451
      %v6453 = vrot.slane %v6452, 1
      %v6454 = vadd.f32 %v6452, %v6453
      %v6455 = vsel %vm1818, %v4529, 0.0
      %v6456 = vsel %vm1818, %v4530, 0.0
      %v6457 = vadd.f32 %v6455, %v6456
      %v6458 = vrot.slane %v6457, 4
      %v6459 = vadd.f32 %v6457, %v6458
      %v6460 = vrot.slane %v6459, 2
      %v6461 = vadd.f32 %v6459, %v6460
      %v6462 = vrot.slane %v6461, 1
      %v6463 = vadd.f32 %v6461, %v6462
      %v6464 = vsel %vm1818, %v4531, 0.0
      %v6465 = vsel %vm1818, %v4532, 0.0
      %v6466 = vadd.f32 %v6464, %v6465
      %v6467 = vrot.slane %v6466, 4
      %v6468 = vadd.f32 %v6466, %v6467
      %v6469 = vrot.slane %v6468, 2
      %v6470 = vadd.f32 %v6468, %v6469
      %v6471 = vrot.slane %v6470, 1
      %v6472 = vadd.f32 %v6470, %v6471
      %v6473 = vsel %vm1818, %v4533, 0.0
      %v6474 = vsel %vm1818, %v4534, 0.0
      %v6475 = vadd.f32 %v6473, %v6474
      %v6476 = vrot.slane %v6475, 4
      %v6477 = vadd.f32 %v6475, %v6476
      %v6478 = vrot.slane %v6477, 2
      %v6479 = vadd.f32 %v6477, %v6478
      %v6480 = vrot.slane %v6479, 1
      %v6481 = vadd.f32 %v6479, %v6480
      %v6482 = vsel %vm1818, %v4535, 0.0
      %v6483 = vsel %vm1818, %v4536, 0.0
      %v6484 = vadd.f32 %v6482, %v6483
      %v6485 = vrot.slane %v6484, 4
      %v6486 = vadd.f32 %v6484, %v6485
      %v6487 = vrot.slane %v6486, 2
      %v6488 = vadd.f32 %v6486, %v6487
      %v6489 = vrot.slane %v6488, 1
      %v6490 = vadd.f32 %v6488, %v6489
      %v6491 = vsel %vm1818, %v4537, 0.0
      %v6492 = vsel %vm1818, %v4538, 0.0
      %v6493 = vadd.f32 %v6491, %v6492
      %v6494 = vrot.slane %v6493, 4
      %v6495 = vadd.f32 %v6493, %v6494
      %v6496 = vrot.slane %v6495, 2
      %v6497 = vadd.f32 %v6495, %v6496
      %v6498 = vrot.slane %v6497, 1
      %v6499 = vadd.f32 %v6497, %v6498
      %v6500 = vsel %vm1818, %v4539, 0.0
      %v6501 = vsel %vm1818, %v4540, 0.0
      %v6502 = vadd.f32 %v6500, %v6501
      %v6503 = vrot.slane %v6502, 4
      %v6504 = vadd.f32 %v6502, %v6503
      %v6505 = vrot.slane %v6504, 2
      %v6506 = vadd.f32 %v6504, %v6505
      %v6507 = vrot.slane %v6506, 1
      %v6508 = vadd.f32 %v6506, %v6507
      %v6509 = vsel %vm1818, %v4541, 0.0
      %v6510 = vsel %vm1818, %v4542, 0.0
      %v6511 = vadd.f32 %v6509, %v6510
      %v6512 = vrot.slane %v6511, 4
      %v6513 = vadd.f32 %v6511, %v6512
      %v6514 = vrot.slane %v6513, 2
      %v6515 = vadd.f32 %v6513, %v6514
      %v6516 = vrot.slane %v6515, 1
      %v6517 = vadd.f32 %v6515, %v6516
      %v6518 = vsel %vm1818, %v4543, 0.0
      %v6519 = vsel %vm1818, %v4544, 0.0
      %v6520 = vadd.f32 %v6518, %v6519
      %v6521 = vrot.slane %v6520, 4
      %v6522 = vadd.f32 %v6520, %v6521
      %v6523 = vrot.slane %v6522, 2
      %v6524 = vadd.f32 %v6522, %v6523
      %v6525 = vrot.slane %v6524, 1
      %v6526 = vadd.f32 %v6524, %v6525
      %v6527 = vsel %vm1818, %v4545, 0.0
      %v6528 = vsel %vm1818, %v4546, 0.0
      %v6529 = vadd.f32 %v6527, %v6528
      %v6530 = vrot.slane %v6529, 4
      %v6531 = vadd.f32 %v6529, %v6530
      %v6532 = vrot.slane %v6531, 2
      %v6533 = vadd.f32 %v6531, %v6532
      %v6534 = vrot.slane %v6533, 1
      %v6535 = vadd.f32 %v6533, %v6534
      %v6536 = vsel %vm1818, %v4547, 0.0
      %v6537 = vsel %vm1818, %v4548, 0.0
      %v6538 = vadd.f32 %v6536, %v6537
      %v6539 = vrot.slane %v6538, 4
      %v6540 = vadd.f32 %v6538, %v6539
      %v6541 = vrot.slane %v6540, 2
      %v6542 = vadd.f32 %v6540, %v6541
      %v6543 = vrot.slane %v6542, 1
      %v6544 = vadd.f32 %v6542, %v6543
      %v6545 = vsel %vm1818, %v4549, 0.0
      %v6546 = vsel %vm1818, %v4550, 0.0
      %v6547 = vadd.f32 %v6545, %v6546
      %v6548 = vrot.slane %v6547, 4
      %v6549 = vadd.f32 %v6547, %v6548
      %v6550 = vrot.slane %v6549, 2
      %v6551 = vadd.f32 %v6549, %v6550
      %v6552 = vrot.slane %v6551, 1
      %v6553 = vadd.f32 %v6551, %v6552
      %v6554 = vsel %vm1818, %v4551, 0.0
      %v6555 = vsel %vm1818, %v4552, 0.0
      %v6556 = vadd.f32 %v6554, %v6555
      %v6557 = vrot.slane %v6556, 4
      %v6558 = vadd.f32 %v6556, %v6557
      %v6559 = vrot.slane %v6558, 2
      %v6560 = vadd.f32 %v6558, %v6559
      %v6561 = vrot.slane %v6560, 1
      %v6562 = vadd.f32 %v6560, %v6561
      %v6563 = vsel %vm1818, %v4553, 0.0
      %v6564 = vsel %vm1818, %v4554, 0.0
      %v6565 = vadd.f32 %v6563, %v6564
      %v6566 = vrot.slane %v6565, 4
      %v6567 = vadd.f32 %v6565, %v6566
      %v6568 = vrot.slane %v6567, 2
      %v6569 = vadd.f32 %v6567, %v6568
      %v6570 = vrot.slane %v6569, 1
      %v6571 = vadd.f32 %v6569, %v6570
      %v6572 = vsel %vm1818, %v4555, 0.0
      %v6573 = vsel %vm1818, %v4556, 0.0
      %v6574 = vadd.f32 %v6572, %v6573
      %v6575 = vrot.slane %v6574, 4
      %v6576 = vadd.f32 %v6574, %v6575
      %v6577 = vrot.slane %v6576, 2
      %v6578 = vadd.f32 %v6576, %v6577
      %v6579 = vrot.slane %v6578, 1
      %v6580 = vadd.f32 %v6578, %v6579
      %v6581 = vsel %vm1818, %v4557, 0.0
      %v6582 = vsel %vm1818, %v4558, 0.0
      %v6583 = vadd.f32 %v6581, %v6582
      %v6584 = vrot.slane %v6583, 4
      %v6585 = vadd.f32 %v6583, %v6584
      %v6586 = vrot.slane %v6585, 2
      %v6587 = vadd.f32 %v6585, %v6586
      %v6588 = vrot.slane %v6587, 1
      %v6589 = vadd.f32 %v6587, %v6588
      %v6590 = vsel %vm1818, %v4559, 0.0
      %v6591 = vsel %vm1818, %v4560, 0.0
      %v6592 = vadd.f32 %v6590, %v6591
      %v6593 = vrot.slane %v6592, 4
      %v6594 = vadd.f32 %v6592, %v6593
      %v6595 = vrot.slane %v6594, 2
      %v6596 = vadd.f32 %v6594, %v6595
      %v6597 = vrot.slane %v6596, 1
      %v6598 = vadd.f32 %v6596, %v6597
      %v6599 = vsel %vm1818, %v4561, 0.0
      %v6600 = vsel %vm1818, %v4562, 0.0
      %v6601 = vadd.f32 %v6599, %v6600
      %v6602 = vrot.slane %v6601, 4
      %v6603 = vadd.f32 %v6601, %v6602
      %v6604 = vrot.slane %v6603, 2
      %v6605 = vadd.f32 %v6603, %v6604
      %v6606 = vrot.slane %v6605, 1
      %v6607 = vadd.f32 %v6605, %v6606
      %v6608 = vsel %vm1818, %v4563, 0.0
      %v6609 = vsel %vm1818, %v4564, 0.0
      %v6610 = vadd.f32 %v6608, %v6609
      %v6611 = vrot.slane %v6610, 4
      %v6612 = vadd.f32 %v6610, %v6611
      %v6613 = vrot.slane %v6612, 2
      %v6614 = vadd.f32 %v6612, %v6613
      %v6615 = vrot.slane %v6614, 1
      %v6616 = vadd.f32 %v6614, %v6615
      %v6617 = vsel %vm1818, %v4565, 0.0
      %v6618 = vsel %vm1818, %v4566, 0.0
      %v6619 = vadd.f32 %v6617, %v6618
      %v6620 = vrot.slane %v6619, 4
      %v6621 = vadd.f32 %v6619, %v6620
      %v6622 = vrot.slane %v6621, 2
      %v6623 = vadd.f32 %v6621, %v6622
      %v6624 = vrot.slane %v6623, 1
      %v6625 = vadd.f32 %v6623, %v6624
      %v6626 = vsel %vm1818, %v4567, 0.0
      %v6627 = vsel %vm1818, %v4568, 0.0
      %v6628 = vadd.f32 %v6626, %v6627
      %v6629 = vrot.slane %v6628, 4
      %v6630 = vadd.f32 %v6628, %v6629
      %v6631 = vrot.slane %v6630, 2
      %v6632 = vadd.f32 %v6630, %v6631
      %v6633 = vrot.slane %v6632, 1
      %v6634 = vadd.f32 %v6632, %v6633
      %v6635 = vsel %vm1818, %v4569, 0.0
      %v6636 = vsel %vm1818, %v4570, 0.0
      %v6637 = vadd.f32 %v6635, %v6636
      %v6638 = vrot.slane %v6637, 4
      %v6639 = vadd.f32 %v6637, %v6638
      %v6640 = vrot.slane %v6639, 2
      %v6641 = vadd.f32 %v6639, %v6640
      %v6642 = vrot.slane %v6641, 1
      %v6643 = vadd.f32 %v6641, %v6642
      %v6644 = vsel %vm1818, %v4571, 0.0
      %v6645 = vsel %vm1818, %v4572, 0.0
      %v6646 = vadd.f32 %v6644, %v6645
      %v6647 = vrot.slane %v6646, 4
      %v6648 = vadd.f32 %v6646, %v6647
      %v6649 = vrot.slane %v6648, 2
      %v6650 = vadd.f32 %v6648, %v6649
      %v6651 = vrot.slane %v6650, 1
      %v6652 = vadd.f32 %v6650, %v6651
      %v6653 = vsel %vm1818, %v4573, 0.0
      %v6654 = vsel %vm1818, %v4574, 0.0
      %v6655 = vadd.f32 %v6653, %v6654
      %v6656 = vrot.slane %v6655, 4
      %v6657 = vadd.f32 %v6655, %v6656
      %v6658 = vrot.slane %v6657, 2
      %v6659 = vadd.f32 %v6657, %v6658
      %v6660 = vrot.slane %v6659, 1
      %v6661 = vadd.f32 %v6659, %v6660
      %v6662 = vsel %vm1818, %v4575, 0.0
      %v6663 = vsel %vm1818, %v4576, 0.0
      %v6664 = vadd.f32 %v6662, %v6663
      %v6665 = vrot.slane %v6664, 4
      %v6666 = vadd.f32 %v6664, %v6665
      %v6667 = vrot.slane %v6666, 2
      %v6668 = vadd.f32 %v6666, %v6667
      %v6669 = vrot.slane %v6668, 1
      %v6670 = vadd.f32 %v6668, %v6669
      %v6671 = vsel %vm1818, %v4577, 0.0
      %v6672 = vsel %vm1818, %v4578, 0.0
      %v6673 = vadd.f32 %v6671, %v6672
      %v6674 = vrot.slane %v6673, 4
      %v6675 = vadd.f32 %v6673, %v6674
      %v6676 = vrot.slane %v6675, 2
      %v6677 = vadd.f32 %v6675, %v6676
      %v6678 = vrot.slane %v6677, 1
      %v6679 = vadd.f32 %v6677, %v6678
      %v6680 = vsel %vm1818, %v4579, 0.0
      %v6681 = vsel %vm1818, %v4580, 0.0
      %v6682 = vadd.f32 %v6680, %v6681
      %v6683 = vrot.slane %v6682, 4
      %v6684 = vadd.f32 %v6682, %v6683
      %v6685 = vrot.slane %v6684, 2
      %v6686 = vadd.f32 %v6684, %v6685
      %v6687 = vrot.slane %v6686, 1
      %v6688 = vadd.f32 %v6686, %v6687
      %v6689 = vsel %vm1818, %v4581, 0.0
      %v6690 = vsel %vm1818, %v4582, 0.0
      %v6691 = vadd.f32 %v6689, %v6690
      %v6692 = vrot.slane %v6691, 4
      %v6693 = vadd.f32 %v6691, %v6692
      %v6694 = vrot.slane %v6693, 2
      %v6695 = vadd.f32 %v6693, %v6694
      %v6696 = vrot.slane %v6695, 1
      %v6697 = vadd.f32 %v6695, %v6696
      %v6698 = vsel %vm1818, %v4583, 0.0
      %v6699 = vsel %vm1818, %v4584, 0.0
      %v6700 = vadd.f32 %v6698, %v6699
      %v6701 = vrot.slane %v6700, 4
      %v6702 = vadd.f32 %v6700, %v6701
      %v6703 = vrot.slane %v6702, 2
      %v6704 = vadd.f32 %v6702, %v6703
      %v6705 = vrot.slane %v6704, 1
      %v6706 = vadd.f32 %v6704, %v6705
      %v6707 = vsel %vm1818, %v4585, 0.0
      %v6708 = vsel %vm1818, %v4586, 0.0
      %v6709 = vadd.f32 %v6707, %v6708
      %v6710 = vrot.slane %v6709, 4
      %v6711 = vadd.f32 %v6709, %v6710
      %v6712 = vrot.slane %v6711, 2
      %v6713 = vadd.f32 %v6711, %v6712
      %v6714 = vrot.slane %v6713, 1
      %v6715 = vadd.f32 %v6713, %v6714
      %v6716 = vsel %vm1818, %v4587, 0.0
      %v6717 = vsel %vm1818, %v4588, 0.0
      %v6718 = vadd.f32 %v6716, %v6717
      %v6719 = vrot.slane %v6718, 4
      %v6720 = vadd.f32 %v6718, %v6719
      %v6721 = vrot.slane %v6720, 2
      %v6722 = vadd.f32 %v6720, %v6721
      %v6723 = vrot.slane %v6722, 1
      %v6724 = vadd.f32 %v6722, %v6723
      %v6725 = vsel %vm1818, %v4589, 0.0
      %v6726 = vsel %vm1818, %v4590, 0.0
      %v6727 = vadd.f32 %v6725, %v6726
      %v6728 = vrot.slane %v6727, 4
      %v6729 = vadd.f32 %v6727, %v6728
      %v6730 = vrot.slane %v6729, 2
      %v6731 = vadd.f32 %v6729, %v6730
      %v6732 = vrot.slane %v6731, 1
      %v6733 = vadd.f32 %v6731, %v6732
      %v6734 = vsel %vm1818, %v4591, 0.0
      %v6735 = vsel %vm1818, %v4592, 0.0
      %v6736 = vadd.f32 %v6734, %v6735
      %v6737 = vrot.slane %v6736, 4
      %v6738 = vadd.f32 %v6736, %v6737
      %v6739 = vrot.slane %v6738, 2
      %v6740 = vadd.f32 %v6738, %v6739
      %v6741 = vrot.slane %v6740, 1
      %v6742 = vadd.f32 %v6740, %v6741
      %v6743 = vsel %vm1818, %v4593, 0.0
      %v6744 = vsel %vm1818, %v4594, 0.0
      %v6745 = vadd.f32 %v6743, %v6744
      %v6746 = vrot.slane %v6745, 4
      %v6747 = vadd.f32 %v6745, %v6746
      %v6748 = vrot.slane %v6747, 2
      %v6749 = vadd.f32 %v6747, %v6748
      %v6750 = vrot.slane %v6749, 1
      %v6751 = vadd.f32 %v6749, %v6750
      %v6752 = vsel %vm1818, %v4595, 0.0
      %v6753 = vsel %vm1818, %v4596, 0.0
      %v6754 = vadd.f32 %v6752, %v6753
      %v6755 = vrot.slane %v6754, 4
      %v6756 = vadd.f32 %v6754, %v6755
      %v6757 = vrot.slane %v6756, 2
      %v6758 = vadd.f32 %v6756, %v6757
      %v6759 = vrot.slane %v6758, 1
      %v6760 = vadd.f32 %v6758, %v6759
      %v6761 = vsel %vm1818, %v4597, 0.0
      %v6762 = vsel %vm1818, %v4598, 0.0
      %v6763 = vadd.f32 %v6761, %v6762
      %v6764 = vrot.slane %v6763, 4
      %v6765 = vadd.f32 %v6763, %v6764
      %v6766 = vrot.slane %v6765, 2
      %v6767 = vadd.f32 %v6765, %v6766
      %v6768 = vrot.slane %v6767, 1
      %v6769 = vadd.f32 %v6767, %v6768
      %v6770 = vsel %vm1818, %v4599, 0.0
      %v6771 = vsel %vm1818, %v4600, 0.0
      %v6772 = vadd.f32 %v6770, %v6771
      %v6773 = vrot.slane %v6772, 4
      %v6774 = vadd.f32 %v6772, %v6773
      %v6775 = vrot.slane %v6774, 2
      %v6776 = vadd.f32 %v6774, %v6775
      %v6777 = vrot.slane %v6776, 1
      %v6778 = vadd.f32 %v6776, %v6777
      %v6779 = vsel %vm1818, %v4601, 0.0
      %v6780 = vsel %vm1818, %v4602, 0.0
      %v6781 = vadd.f32 %v6779, %v6780
      %v6782 = vrot.slane %v6781, 4
      %v6783 = vadd.f32 %v6781, %v6782
      %v6784 = vrot.slane %v6783, 2
      %v6785 = vadd.f32 %v6783, %v6784
      %v6786 = vrot.slane %v6785, 1
      %v6787 = vadd.f32 %v6785, %v6786
      %v6788 = vsel %vm1818, %v4603, 0.0
      %v6789 = vsel %vm1818, %v4604, 0.0
      %v6790 = vadd.f32 %v6788, %v6789
      %v6791 = vrot.slane %v6790, 4
      %v6792 = vadd.f32 %v6790, %v6791
      %v6793 = vrot.slane %v6792, 2
      %v6794 = vadd.f32 %v6792, %v6793
      %v6795 = vrot.slane %v6794, 1
      %v6796 = vadd.f32 %v6794, %v6795
      %v6797 = vsel %vm1818, %v4605, 0.0
      %v6798 = vsel %vm1818, %v4606, 0.0
      %v6799 = vadd.f32 %v6797, %v6798
      %v6800 = vrot.slane %v6799, 4
      %v6801 = vadd.f32 %v6799, %v6800
      %v6802 = vrot.slane %v6801, 2
      %v6803 = vadd.f32 %v6801, %v6802
      %v6804 = vrot.slane %v6803, 1
      %v6805 = vadd.f32 %v6803, %v6804
      %v6806 = vsel %vm1818, %v4607, 0.0
      %v6807 = vsel %vm1818, %v4608, 0.0
      %v6808 = vadd.f32 %v6806, %v6807
      %v6809 = vrot.slane %v6808, 4
      %v6810 = vadd.f32 %v6808, %v6809
      %v6811 = vrot.slane %v6810, 2
      %v6812 = vadd.f32 %v6810, %v6811
      %v6813 = vrot.slane %v6812, 1
      %v6814 = vadd.f32 %v6812, %v6813
      %v6815 = vsel %vm1818, %v4609, 0.0
      %v6816 = vsel %vm1818, %v4610, 0.0
      %v6817 = vadd.f32 %v6815, %v6816
      %v6818 = vrot.slane %v6817, 4
      %v6819 = vadd.f32 %v6817, %v6818
      %v6820 = vrot.slane %v6819, 2
      %v6821 = vadd.f32 %v6819, %v6820
      %v6822 = vrot.slane %v6821, 1
      %v6823 = vadd.f32 %v6821, %v6822
      %v6824 = vsel %vm1818, %v4611, 0.0
      %v6825 = vsel %vm1818, %v4612, 0.0
      %v6826 = vadd.f32 %v6824, %v6825
      %v6827 = vrot.slane %v6826, 4
      %v6828 = vadd.f32 %v6826, %v6827
      %v6829 = vrot.slane %v6828, 2
      %v6830 = vadd.f32 %v6828, %v6829
      %v6831 = vrot.slane %v6830, 1
      %v6832 = vadd.f32 %v6830, %v6831
      %v6833 = vsel %vm1818, %v4613, 0.0
      %v6834 = vsel %vm1818, %v4614, 0.0
      %v6835 = vadd.f32 %v6833, %v6834
      %v6836 = vrot.slane %v6835, 4
      %v6837 = vadd.f32 %v6835, %v6836
      %v6838 = vrot.slane %v6837, 2
      %v6839 = vadd.f32 %v6837, %v6838
      %v6840 = vrot.slane %v6839, 1
      %v6841 = vadd.f32 %v6839, %v6840
      %v6842 = vsel %vm1818, %v4615, 0.0
      %v6843 = vsel %vm1818, %v4616, 0.0
      %v6844 = vadd.f32 %v6842, %v6843
      %v6845 = vrot.slane %v6844, 4
      %v6846 = vadd.f32 %v6844, %v6845
      %v6847 = vrot.slane %v6846, 2
      %v6848 = vadd.f32 %v6846, %v6847
      %v6849 = vrot.slane %v6848, 1
      %v6850 = vadd.f32 %v6848, %v6849
      %v6851 = vsel %vm1818, %v4617, 0.0
      %v6852 = vsel %vm1818, %v4618, 0.0
      %v6853 = vadd.f32 %v6851, %v6852
      %v6854 = vrot.slane %v6853, 4
      %v6855 = vadd.f32 %v6853, %v6854
      %v6856 = vrot.slane %v6855, 2
      %v6857 = vadd.f32 %v6855, %v6856
      %v6858 = vrot.slane %v6857, 1
      %v6859 = vadd.f32 %v6857, %v6858
      %v6860 = vsel %vm1818, %v4619, 0.0
      %v6861 = vsel %vm1818, %v4620, 0.0
      %v6862 = vadd.f32 %v6860, %v6861
      %v6863 = vrot.slane %v6862, 4
      %v6864 = vadd.f32 %v6862, %v6863
      %v6865 = vrot.slane %v6864, 2
      %v6866 = vadd.f32 %v6864, %v6865
      %v6867 = vrot.slane %v6866, 1
      %v6868 = vadd.f32 %v6866, %v6867
      %v6869 = vsel %vm1818, %v4621, 0.0
      %v6870 = vsel %vm1818, %v4622, 0.0
      %v6871 = vadd.f32 %v6869, %v6870
      %v6872 = vrot.slane %v6871, 4
      %v6873 = vadd.f32 %v6871, %v6872
      %v6874 = vrot.slane %v6873, 2
      %v6875 = vadd.f32 %v6873, %v6874
      %v6876 = vrot.slane %v6875, 1
      %v6877 = vadd.f32 %v6875, %v6876
      %v6878 = vsel %vm1818, %v4623, 0.0
      %v6879 = vsel %vm1818, %v4624, 0.0
      %v6880 = vadd.f32 %v6878, %v6879
      %v6881 = vrot.slane %v6880, 4
      %v6882 = vadd.f32 %v6880, %v6881
      %v6883 = vrot.slane %v6882, 2
      %v6884 = vadd.f32 %v6882, %v6883
      %v6885 = vrot.slane %v6884, 1
      %v6886 = vadd.f32 %v6884, %v6885
      %v6887 = vsel %vm1818, %v4625, 0.0
      %v6888 = vsel %vm1818, %v4626, 0.0
      %v6889 = vadd.f32 %v6887, %v6888
      %v6890 = vrot.slane %v6889, 4
      %v6891 = vadd.f32 %v6889, %v6890
      %v6892 = vrot.slane %v6891, 2
      %v6893 = vadd.f32 %v6891, %v6892
      %v6894 = vrot.slane %v6893, 1
      %v6895 = vadd.f32 %v6893, %v6894
      %v6896 = vsel %vm1818, %v4627, 0.0
      %v6897 = vsel %vm1818, %v4628, 0.0
      %v6898 = vadd.f32 %v6896, %v6897
      %v6899 = vrot.slane %v6898, 4
      %v6900 = vadd.f32 %v6898, %v6899
      %v6901 = vrot.slane %v6900, 2
      %v6902 = vadd.f32 %v6900, %v6901
      %v6903 = vrot.slane %v6902, 1
      %v6904 = vadd.f32 %v6902, %v6903
      %v6905 = vsel %vm1818, %v4629, 0.0
      %v6906 = vsel %vm1818, %v4630, 0.0
      %v6907 = vadd.f32 %v6905, %v6906
      %v6908 = vrot.slane %v6907, 4
      %v6909 = vadd.f32 %v6907, %v6908
      %v6910 = vrot.slane %v6909, 2
      %v6911 = vadd.f32 %v6909, %v6910
      %v6912 = vrot.slane %v6911, 1
      %v6913 = vadd.f32 %v6911, %v6912
      %v6914 = vsel %vm1818, %v4631, 0.0
      %v6915 = vsel %vm1818, %v4632, 0.0
      %v6916 = vadd.f32 %v6914, %v6915
      %v6917 = vrot.slane %v6916, 4
      %v6918 = vadd.f32 %v6916, %v6917
      %v6919 = vrot.slane %v6918, 2
      %v6920 = vadd.f32 %v6918, %v6919
      %v6921 = vrot.slane %v6920, 1
      %v6922 = vadd.f32 %v6920, %v6921
      %v6923 = vsel %vm1818, %v4633, 0.0
      %v6924 = vsel %vm1818, %v4634, 0.0
      %v6925 = vadd.f32 %v6923, %v6924
      %v6926 = vrot.slane %v6925, 4
      %v6927 = vadd.f32 %v6925, %v6926
      %v6928 = vrot.slane %v6927, 2
      %v6929 = vadd.f32 %v6927, %v6928
      %v6930 = vrot.slane %v6929, 1
      %v6931 = vadd.f32 %v6929, %v6930
      %v6932 = vsel %vm1818, %v4635, 0.0
      %v6933 = vsel %vm1818, %v4636, 0.0
      %v6934 = vadd.f32 %v6932, %v6933
      %v6935 = vrot.slane %v6934, 4
      %v6936 = vadd.f32 %v6934, %v6935
      %v6937 = vrot.slane %v6936, 2
      %v6938 = vadd.f32 %v6936, %v6937
      %v6939 = vrot.slane %v6938, 1
      %v6940 = vadd.f32 %v6938, %v6939
      %vm7197 = vcmask 1041409
      %v7198 = vsel %vm7197, %v1836, %v1827
      %vm7199 = vcmask 1042434
      %v7200 = vsel %vm7199, %v1845, %v7198
      %vm7201 = vcmask 1043459
      %v7202 = vsel %vm7201, %v1854, %v7200
      %vm7203 = vcmask 1044484
      %v7204 = vsel %vm7203, %v1863, %v7202
      %vm7205 = vcmask 1045509
      %v7206 = vsel %vm7205, %v1872, %v7204
      %vm7207 = vcmask 1046534
      %v7208 = vsel %vm7207, %v1881, %v7206
      %vm7209 = vcmask 1047559
      %v7210 = vsel %vm7209, %v1890, %v7208
      %v7211 = vsel %vm7197, %v1908, %v1899
      %v7212 = vsel %vm7199, %v1917, %v7211
      %v7213 = vsel %vm7201, %v1926, %v7212
      %v7214 = vsel %vm7203, %v1935, %v7213
      %v7215 = vsel %vm7205, %v1944, %v7214
      %v7216 = vsel %vm7207, %v1953, %v7215
      %v7217 = vsel %vm7209, %v1962, %v7216
      %v7218 = vsel %vm7197, %v1980, %v1971
      %v7219 = vsel %vm7199, %v1989, %v7218
      %v7220 = vsel %vm7201, %v1998, %v7219
      %v7221 = vsel %vm7203, %v2007, %v7220
      %v7222 = vsel %vm7205, %v2016, %v7221
      %v7223 = vsel %vm7207, %v2025, %v7222
      %v7224 = vsel %vm7209, %v2034, %v7223
      %v7225 = vsel %vm7197, %v2052, %v2043
      %v7226 = vsel %vm7199, %v2061, %v7225
      %v7227 = vsel %vm7201, %v2070, %v7226
      %v7228 = vsel %vm7203, %v2079, %v7227
      %v7229 = vsel %vm7205, %v2088, %v7228
      %v7230 = vsel %vm7207, %v2097, %v7229
      %v7231 = vsel %vm7209, %v2106, %v7230
      %v7232 = vsel %vm7197, %v2124, %v2115
      %v7233 = vsel %vm7199, %v2133, %v7232
      %v7234 = vsel %vm7201, %v2142, %v7233
      %v7235 = vsel %vm7203, %v2151, %v7234
      %v7236 = vsel %vm7205, %v2160, %v7235
      %v7237 = vsel %vm7207, %v2169, %v7236
      %v7238 = vsel %vm7209, %v2178, %v7237
      %v7239 = vsel %vm7197, %v2196, %v2187
      %v7240 = vsel %vm7199, %v2205, %v7239
      %v7241 = vsel %vm7201, %v2214, %v7240
      %v7242 = vsel %vm7203, %v2223, %v7241
      %v7243 = vsel %vm7205, %v2232, %v7242
      %v7244 = vsel %vm7207, %v2241, %v7243
      %v7245 = vsel %vm7209, %v2250, %v7244
      %v7246 = vsel %vm7197, %v2268, %v2259
      %v7247 = vsel %vm7199, %v2277, %v7246
      %v7248 = vsel %vm7201, %v2286, %v7247
      %v7249 = vsel %vm7203, %v2295, %v7248
      %v7250 = vsel %vm7205, %v2304, %v7249
      %v7251 = vsel %vm7207, %v2313, %v7250
      %v7252 = vsel %vm7209, %v2322, %v7251
      %v7253 = vsel %vm7197, %v2340, %v2331
      %v7254 = vsel %vm7199, %v2349, %v7253
      %v7255 = vsel %vm7201, %v2358, %v7254
      %v7256 = vsel %vm7203, %v2367, %v7255
      %v7257 = vsel %vm7205, %v2376, %v7256
      %v7258 = vsel %vm7207, %v2385, %v7257
      %v7259 = vsel %vm7209, %v2394, %v7258
      %v7260 = vsel %vm7197, %v2412, %v2403
      %v7261 = vsel %vm7199, %v2421, %v7260
      %v7262 = vsel %vm7201, %v2430, %v7261
      %v7263 = vsel %vm7203, %v2439, %v7262
      %v7264 = vsel %vm7205, %v2448, %v7263
      %v7265 = vsel %vm7207, %v2457, %v7264
      %v7266 = vsel %vm7209, %v2466, %v7265
      %v7267 = vsel %vm7197, %v2484, %v2475
      %v7268 = vsel %vm7199, %v2493, %v7267
      %v7269 = vsel %vm7201, %v2502, %v7268
      %v7270 = vsel %vm7203, %v2511, %v7269
      %v7271 = vsel %vm7205, %v2520, %v7270
      %v7272 = vsel %vm7207, %v2529, %v7271
      %v7273 = vsel %vm7209, %v2538, %v7272
      %v7274 = vsel %vm7197, %v2556, %v2547
      %v7275 = vsel %vm7199, %v2565, %v7274
      %v7276 = vsel %vm7201, %v2574, %v7275
      %v7277 = vsel %vm7203, %v2583, %v7276
      %v7278 = vsel %vm7205, %v2592, %v7277
      %v7279 = vsel %vm7207, %v2601, %v7278
      %v7280 = vsel %vm7209, %v2610, %v7279
      %v7281 = vsel %vm7197, %v2628, %v2619
      %v7282 = vsel %vm7199, %v2637, %v7281
      %v7283 = vsel %vm7201, %v2646, %v7282
      %v7284 = vsel %vm7203, %v2655, %v7283
      %v7285 = vsel %vm7205, %v2664, %v7284
      %v7286 = vsel %vm7207, %v2673, %v7285
      %v7287 = vsel %vm7209, %v2682, %v7286
      %v7288 = vsel %vm7197, %v2700, %v2691
      %v7289 = vsel %vm7199, %v2709, %v7288
      %v7290 = vsel %vm7201, %v2718, %v7289
      %v7291 = vsel %vm7203, %v2727, %v7290
      %v7292 = vsel %vm7205, %v2736, %v7291
      %v7293 = vsel %vm7207, %v2745, %v7292
      %v7294 = vsel %vm7209, %v2754, %v7293
      %v7295 = vsel %vm7197, %v2772, %v2763
      %v7296 = vsel %vm7199, %v2781, %v7295
      %v7297 = vsel %vm7201, %v2790, %v7296
      %v7298 = vsel %vm7203, %v2799, %v7297
      %v7299 = vsel %vm7205, %v2808, %v7298
      %v7300 = vsel %vm7207, %v2817, %v7299
      %v7301 = vsel %vm7209, %v2826, %v7300
      %v7302 = vsel %vm7197, %v2844, %v2835
      %v7303 = vsel %vm7199, %v2853, %v7302
      %v7304 = vsel %vm7201, %v2862, %v7303
      %v7305 = vsel %vm7203, %v2871, %v7304
      %v7306 = vsel %vm7205, %v2880, %v7305
      %v7307 = vsel %vm7207, %v2889, %v7306
      %v7308 = vsel %vm7209, %v2898, %v7307
      %v7309 = vsel %vm7197, %v2916, %v2907
      %v7310 = vsel %vm7199, %v2925, %v7309
      %v7311 = vsel %vm7201, %v2934, %v7310
      %v7312 = vsel %vm7203, %v2943, %v7311
      %v7313 = vsel %vm7205, %v2952, %v7312
      %v7314 = vsel %vm7207, %v2961, %v7313
      %v7315 = vsel %vm7209, %v2970, %v7314
      %v7316 = vsel %vm7197, %v2988, %v2979
      %v7317 = vsel %vm7199, %v2997, %v7316
      %v7318 = vsel %vm7201, %v3006, %v7317
      %v7319 = vsel %vm7203, %v3015, %v7318
      %v7320 = vsel %vm7205, %v3024, %v7319
      %v7321 = vsel %vm7207, %v3033, %v7320
      %v7322 = vsel %vm7209, %v3042, %v7321
      %v7323 = vsel %vm7197, %v3060, %v3051
      %v7324 = vsel %vm7199, %v3069, %v7323
      %v7325 = vsel %vm7201, %v3078, %v7324
      %v7326 = vsel %vm7203, %v3087, %v7325
      %v7327 = vsel %vm7205, %v3096, %v7326
      %v7328 = vsel %vm7207, %v3105, %v7327
      %v7329 = vsel %vm7209, %v3114, %v7328
      %v7330 = vsel %vm7197, %v3132, %v3123
      %v7331 = vsel %vm7199, %v3141, %v7330
      %v7332 = vsel %vm7201, %v3150, %v7331
      %v7333 = vsel %vm7203, %v3159, %v7332
      %v7334 = vsel %vm7205, %v3168, %v7333
      %v7335 = vsel %vm7207, %v3177, %v7334
      %v7336 = vsel %vm7209, %v3186, %v7335
      %v7337 = vsel %vm7197, %v3204, %v3195
      %v7338 = vsel %vm7199, %v3213, %v7337
      %v7339 = vsel %vm7201, %v3222, %v7338
      %v7340 = vsel %vm7203, %v3231, %v7339
      %v7341 = vsel %vm7205, %v3240, %v7340
      %v7342 = vsel %vm7207, %v3249, %v7341
      %v7343 = vsel %vm7209, %v3258, %v7342
      %v7344 = vsel %vm7197, %v3276, %v3267
      %v7345 = vsel %vm7199, %v3285, %v7344
      %v7346 = vsel %vm7201, %v3294, %v7345
      %v7347 = vsel %vm7203, %v3303, %v7346
      %v7348 = vsel %vm7205, %v3312, %v7347
      %v7349 = vsel %vm7207, %v3321, %v7348
      %v7350 = vsel %vm7209, %v3330, %v7349
      %v7351 = vsel %vm7197, %v3348, %v3339
      %v7352 = vsel %vm7199, %v3357, %v7351
      %v7353 = vsel %vm7201, %v3366, %v7352
      %v7354 = vsel %vm7203, %v3375, %v7353
      %v7355 = vsel %vm7205, %v3384, %v7354
      %v7356 = vsel %vm7207, %v3393, %v7355
      %v7357 = vsel %vm7209, %v3402, %v7356
      %v7358 = vsel %vm7197, %v3420, %v3411
      %v7359 = vsel %vm7199, %v3429, %v7358
      %v7360 = vsel %vm7201, %v3438, %v7359
      %v7361 = vsel %vm7203, %v3447, %v7360
      %v7362 = vsel %vm7205, %v3456, %v7361
      %v7363 = vsel %vm7207, %v3465, %v7362
      %v7364 = vsel %vm7209, %v3474, %v7363
      %v7365 = vsel %vm7197, %v3492, %v3483
      %v7366 = vsel %vm7199, %v3501, %v7365
      %v7367 = vsel %vm7201, %v3510, %v7366
      %v7368 = vsel %vm7203, %v3519, %v7367
      %v7369 = vsel %vm7205, %v3528, %v7368
      %v7370 = vsel %vm7207, %v3537, %v7369
      %v7371 = vsel %vm7209, %v3546, %v7370
      %v7372 = vsel %vm7197, %v3564, %v3555
      %v7373 = vsel %vm7199, %v3573, %v7372
      %v7374 = vsel %vm7201, %v3582, %v7373
      %v7375 = vsel %vm7203, %v3591, %v7374
      %v7376 = vsel %vm7205, %v3600, %v7375
      %v7377 = vsel %vm7207, %v3609, %v7376
      %v7378 = vsel %vm7209, %v3618, %v7377
      %v7379 = vsel %vm7197, %v3636, %v3627
      %v7380 = vsel %vm7199, %v3645, %v7379
      %v7381 = vsel %vm7201, %v3654, %v7380
      %v7382 = vsel %vm7203, %v3663, %v7381
      %v7383 = vsel %vm7205, %v3672, %v7382
      %v7384 = vsel %vm7207, %v3681, %v7383
      %v7385 = vsel %vm7209, %v3690, %v7384
      %v7386 = vsel %vm7197, %v3708, %v3699
      %v7387 = vsel %vm7199, %v3717, %v7386
      %v7388 = vsel %vm7201, %v3726, %v7387
      %v7389 = vsel %vm7203, %v3735, %v7388
      %v7390 = vsel %vm7205, %v3744, %v7389
      %v7391 = vsel %vm7207, %v3753, %v7390
      %v7392 = vsel %vm7209, %v3762, %v7391
      %v7393 = vsel %vm7197, %v3780, %v3771
      %v7394 = vsel %vm7199, %v3789, %v7393
      %v7395 = vsel %vm7201, %v3798, %v7394
      %v7396 = vsel %vm7203, %v3807, %v7395
      %v7397 = vsel %vm7205, %v3816, %v7396
      %v7398 = vsel %vm7207, %v3825, %v7397
      %v7399 = vsel %vm7209, %v3834, %v7398
      %v7400 = vsel %vm7197, %v3852, %v3843
      %v7401 = vsel %vm7199, %v3861, %v7400
      %v7402 = vsel %vm7201, %v3870, %v7401
      %v7403 = vsel %vm7203, %v3879, %v7402
      %v7404 = vsel %vm7205, %v3888, %v7403
      %v7405 = vsel %vm7207, %v3897, %v7404
      %v7406 = vsel %vm7209, %v3906, %v7405
      %v7407 = vsel %vm7197, %v3924, %v3915
      %v7408 = vsel %vm7199, %v3933, %v7407
      %v7409 = vsel %vm7201, %v3942, %v7408
      %v7410 = vsel %vm7203, %v3951, %v7409
      %v7411 = vsel %vm7205, %v3960, %v7410
      %v7412 = vsel %vm7207, %v3969, %v7411
      %v7413 = vsel %vm7209, %v3978, %v7412
      %v7414 = vsel %vm7197, %v3996, %v3987
      %v7415 = vsel %vm7199, %v4005, %v7414
      %v7416 = vsel %vm7201, %v4014, %v7415
      %v7417 = vsel %vm7203, %v4023, %v7416
      %v7418 = vsel %vm7205, %v4032, %v7417
      %v7419 = vsel %vm7207, %v4041, %v7418
      %v7420 = vsel %vm7209, %v4050, %v7419
      %v7421 = vsel %vm7197, %v4068, %v4059
      %v7422 = vsel %vm7199, %v4077, %v7421
      %v7423 = vsel %vm7201, %v4086, %v7422
      %v7424 = vsel %vm7203, %v4095, %v7423
      %v7425 = vsel %vm7205, %v4104, %v7424
      %v7426 = vsel %vm7207, %v4113, %v7425
      %v7427 = vsel %vm7209, %v4122, %v7426
      %v7716 = vsel %vm7197, %v4654, %v4645
      %v7717 = vsel %vm7199, %v4663, %v7716
      %v7718 = vsel %vm7201, %v4672, %v7717
      %v7719 = vsel %vm7203, %v4681, %v7718
      %v7720 = vsel %vm7205, %v4690, %v7719
      %v7721 = vsel %vm7207, %v4699, %v7720
      %v7722 = vsel %vm7209, %v4708, %v7721
      %v7723 = vsel %vm7197, %v4726, %v4717
      %v7724 = vsel %vm7199, %v4735, %v7723
      %v7725 = vsel %vm7201, %v4744, %v7724
      %v7726 = vsel %vm7203, %v4753, %v7725
      %v7727 = vsel %vm7205, %v4762, %v7726
      %v7728 = vsel %vm7207, %v4771, %v7727
      %v7729 = vsel %vm7209, %v4780, %v7728
      %v7730 = vsel %vm7197, %v4798, %v4789
      %v7731 = vsel %vm7199, %v4807, %v7730
      %v7732 = vsel %vm7201, %v4816, %v7731
      %v7733 = vsel %vm7203, %v4825, %v7732
      %v7734 = vsel %vm7205, %v4834, %v7733
      %v7735 = vsel %vm7207, %v4843, %v7734
      %v7736 = vsel %vm7209, %v4852, %v7735
      %v7737 = vsel %vm7197, %v4870, %v4861
      %v7738 = vsel %vm7199, %v4879, %v7737
      %v7739 = vsel %vm7201, %v4888, %v7738
      %v7740 = vsel %vm7203, %v4897, %v7739
      %v7741 = vsel %vm7205, %v4906, %v7740
      %v7742 = vsel %vm7207, %v4915, %v7741
      %v7743 = vsel %vm7209, %v4924, %v7742
      %v7744 = vsel %vm7197, %v4942, %v4933
      %v7745 = vsel %vm7199, %v4951, %v7744
      %v7746 = vsel %vm7201, %v4960, %v7745
      %v7747 = vsel %vm7203, %v4969, %v7746
      %v7748 = vsel %vm7205, %v4978, %v7747
      %v7749 = vsel %vm7207, %v4987, %v7748
      %v7750 = vsel %vm7209, %v4996, %v7749
      %v7751 = vsel %vm7197, %v5014, %v5005
      %v7752 = vsel %vm7199, %v5023, %v7751
      %v7753 = vsel %vm7201, %v5032, %v7752
      %v7754 = vsel %vm7203, %v5041, %v7753
      %v7755 = vsel %vm7205, %v5050, %v7754
      %v7756 = vsel %vm7207, %v5059, %v7755
      %v7757 = vsel %vm7209, %v5068, %v7756
      %v7758 = vsel %vm7197, %v5086, %v5077
      %v7759 = vsel %vm7199, %v5095, %v7758
      %v7760 = vsel %vm7201, %v5104, %v7759
      %v7761 = vsel %vm7203, %v5113, %v7760
      %v7762 = vsel %vm7205, %v5122, %v7761
      %v7763 = vsel %vm7207, %v5131, %v7762
      %v7764 = vsel %vm7209, %v5140, %v7763
      %v7765 = vsel %vm7197, %v5158, %v5149
      %v7766 = vsel %vm7199, %v5167, %v7765
      %v7767 = vsel %vm7201, %v5176, %v7766
      %v7768 = vsel %vm7203, %v5185, %v7767
      %v7769 = vsel %vm7205, %v5194, %v7768
      %v7770 = vsel %vm7207, %v5203, %v7769
      %v7771 = vsel %vm7209, %v5212, %v7770
      %v7772 = vsel %vm7197, %v5230, %v5221
      %v7773 = vsel %vm7199, %v5239, %v7772
      %v7774 = vsel %vm7201, %v5248, %v7773
      %v7775 = vsel %vm7203, %v5257, %v7774
      %v7776 = vsel %vm7205, %v5266, %v7775
      %v7777 = vsel %vm7207, %v5275, %v7776
      %v7778 = vsel %vm7209, %v5284, %v7777
      %v7779 = vsel %vm7197, %v5302, %v5293
      %v7780 = vsel %vm7199, %v5311, %v7779
      %v7781 = vsel %vm7201, %v5320, %v7780
      %v7782 = vsel %vm7203, %v5329, %v7781
      %v7783 = vsel %vm7205, %v5338, %v7782
      %v7784 = vsel %vm7207, %v5347, %v7783
      %v7785 = vsel %vm7209, %v5356, %v7784
      %v7786 = vsel %vm7197, %v5374, %v5365
      %v7787 = vsel %vm7199, %v5383, %v7786
      %v7788 = vsel %vm7201, %v5392, %v7787
      %v7789 = vsel %vm7203, %v5401, %v7788
      %v7790 = vsel %vm7205, %v5410, %v7789
      %v7791 = vsel %vm7207, %v5419, %v7790
      %v7792 = vsel %vm7209, %v5428, %v7791
      %v7793 = vsel %vm7197, %v5446, %v5437
      %v7794 = vsel %vm7199, %v5455, %v7793
      %v7795 = vsel %vm7201, %v5464, %v7794
      %v7796 = vsel %vm7203, %v5473, %v7795
      %v7797 = vsel %vm7205, %v5482, %v7796
      %v7798 = vsel %vm7207, %v5491, %v7797
      %v7799 = vsel %vm7209, %v5500, %v7798
      %v7800 = vsel %vm7197, %v5518, %v5509
      %v7801 = vsel %vm7199, %v5527, %v7800
      %v7802 = vsel %vm7201, %v5536, %v7801
      %v7803 = vsel %vm7203, %v5545, %v7802
      %v7804 = vsel %vm7205, %v5554, %v7803
      %v7805 = vsel %vm7207, %v5563, %v7804
      %v7806 = vsel %vm7209, %v5572, %v7805
      %v7807 = vsel %vm7197, %v5590, %v5581
      %v7808 = vsel %vm7199, %v5599, %v7807
      %v7809 = vsel %vm7201, %v5608, %v7808
      %v7810 = vsel %vm7203, %v5617, %v7809
      %v7811 = vsel %vm7205, %v5626, %v7810
      %v7812 = vsel %vm7207, %v5635, %v7811
      %v7813 = vsel %vm7209, %v5644, %v7812
      %v7814 = vsel %vm7197, %v5662, %v5653
      %v7815 = vsel %vm7199, %v5671, %v7814
      %v7816 = vsel %vm7201, %v5680, %v7815
      %v7817 = vsel %vm7203, %v5689, %v7816
      %v7818 = vsel %vm7205, %v5698, %v7817
      %v7819 = vsel %vm7207, %v5707, %v7818
      %v7820 = vsel %vm7209, %v5716, %v7819
      %v7821 = vsel %vm7197, %v5734, %v5725
      %v7822 = vsel %vm7199, %v5743, %v7821
      %v7823 = vsel %vm7201, %v5752, %v7822
      %v7824 = vsel %vm7203, %v5761, %v7823
      %v7825 = vsel %vm7205, %v5770, %v7824
      %v7826 = vsel %vm7207, %v5779, %v7825
      %v7827 = vsel %vm7209, %v5788, %v7826
      %v7828 = vsel %vm7197, %v5806, %v5797
      %v7829 = vsel %vm7199, %v5815, %v7828
      %v7830 = vsel %vm7201, %v5824, %v7829
      %v7831 = vsel %vm7203, %v5833, %v7830
      %v7832 = vsel %vm7205, %v5842, %v7831
      %v7833 = vsel %vm7207, %v5851, %v7832
      %v7834 = vsel %vm7209, %v5860, %v7833
      %v7835 = vsel %vm7197, %v5878, %v5869
      %v7836 = vsel %vm7199, %v5887, %v7835
      %v7837 = vsel %vm7201, %v5896, %v7836
      %v7838 = vsel %vm7203, %v5905, %v7837
      %v7839 = vsel %vm7205, %v5914, %v7838
      %v7840 = vsel %vm7207, %v5923, %v7839
      %v7841 = vsel %vm7209, %v5932, %v7840
      %v7842 = vsel %vm7197, %v5950, %v5941
      %v7843 = vsel %vm7199, %v5959, %v7842
      %v7844 = vsel %vm7201, %v5968, %v7843
      %v7845 = vsel %vm7203, %v5977, %v7844
      %v7846 = vsel %vm7205, %v5986, %v7845
      %v7847 = vsel %vm7207, %v5995, %v7846
      %v7848 = vsel %vm7209, %v6004, %v7847
      %v7849 = vsel %vm7197, %v6022, %v6013
      %v7850 = vsel %vm7199, %v6031, %v7849
      %v7851 = vsel %vm7201, %v6040, %v7850
      %v7852 = vsel %vm7203, %v6049, %v7851
      %v7853 = vsel %vm7205, %v6058, %v7852
      %v7854 = vsel %vm7207, %v6067, %v7853
      %v7855 = vsel %vm7209, %v6076, %v7854
      %v7856 = vsel %vm7197, %v6094, %v6085
      %v7857 = vsel %vm7199, %v6103, %v7856
      %v7858 = vsel %vm7201, %v6112, %v7857
      %v7859 = vsel %vm7203, %v6121, %v7858
      %v7860 = vsel %vm7205, %v6130, %v7859
      %v7861 = vsel %vm7207, %v6139, %v7860
      %v7862 = vsel %vm7209, %v6148, %v7861
      %v7863 = vsel %vm7197, %v6166, %v6157
      %v7864 = vsel %vm7199, %v6175, %v7863
      %v7865 = vsel %vm7201, %v6184, %v7864
      %v7866 = vsel %vm7203, %v6193, %v7865
      %v7867 = vsel %vm7205, %v6202, %v7866
      %v7868 = vsel %vm7207, %v6211, %v7867
      %v7869 = vsel %vm7209, %v6220, %v7868
      %v7870 = vsel %vm7197, %v6238, %v6229
      %v7871 = vsel %vm7199, %v6247, %v7870
      %v7872 = vsel %vm7201, %v6256, %v7871
      %v7873 = vsel %vm7203, %v6265, %v7872
      %v7874 = vsel %vm7205, %v6274, %v7873
      %v7875 = vsel %vm7207, %v6283, %v7874
      %v7876 = vsel %vm7209, %v6292, %v7875
      %v7877 = vsel %vm7197, %v6310, %v6301
      %v7878 = vsel %vm7199, %v6319, %v7877
      %v7879 = vsel %vm7201, %v6328, %v7878
      %v7880 = vsel %vm7203, %v6337, %v7879
      %v7881 = vsel %vm7205, %v6346, %v7880
      %v7882 = vsel %vm7207, %v6355, %v7881
      %v7883 = vsel %vm7209, %v6364, %v7882
      %v7884 = vsel %vm7197, %v6382, %v6373
      %v7885 = vsel %vm7199, %v6391, %v7884
      %v7886 = vsel %vm7201, %v6400, %v7885
      %v7887 = vsel %vm7203, %v6409, %v7886
      %v7888 = vsel %vm7205, %v6418, %v7887
      %v7889 = vsel %vm7207, %v6427, %v7888
      %v7890 = vsel %vm7209, %v6436, %v7889
      %v7891 = vsel %vm7197, %v6454, %v6445
      %v7892 = vsel %vm7199, %v6463, %v7891
      %v7893 = vsel %vm7201, %v6472, %v7892
      %v7894 = vsel %vm7203, %v6481, %v7893
      %v7895 = vsel %vm7205, %v6490, %v7894
      %v7896 = vsel %vm7207, %v6499, %v7895
      %v7897 = vsel %vm7209, %v6508, %v7896
      %v7898 = vsel %vm7197, %v6526, %v6517
      %v7899 = vsel %vm7199, %v6535, %v7898
      %v7900 = vsel %vm7201, %v6544, %v7899
      %v7901 = vsel %vm7203, %v6553, %v7900
      %v7902 = vsel %vm7205, %v6562, %v7901
      %v7903 = vsel %vm7207, %v6571, %v7902
      %v7904 = vsel %vm7209, %v6580, %v7903
      %v7905 = vsel %vm7197, %v6598, %v6589
      %v7906 = vsel %vm7199, %v6607, %v7905
      %v7907 = vsel %vm7201, %v6616, %v7906
      %v7908 = vsel %vm7203, %v6625, %v7907
      %v7909 = vsel %vm7205, %v6634, %v7908
      %v7910 = vsel %vm7207, %v6643, %v7909
      %v7911 = vsel %vm7209, %v6652, %v7910
      %v7912 = vsel %vm7197, %v6670, %v6661
      %v7913 = vsel %vm7199, %v6679, %v7912
      %v7914 = vsel %vm7201, %v6688, %v7913
      %v7915 = vsel %vm7203, %v6697, %v7914
      %v7916 = vsel %vm7205, %v6706, %v7915
      %v7917 = vsel %vm7207, %v6715, %v7916
      %v7918 = vsel %vm7209, %v6724, %v7917
      %v7919 = vsel %vm7197, %v6742, %v6733
      %v7920 = vsel %vm7199, %v6751, %v7919
      %v7921 = vsel %vm7201, %v6760, %v7920
      %v7922 = vsel %vm7203, %v6769, %v7921
      %v7923 = vsel %vm7205, %v6778, %v7922
      %v7924 = vsel %vm7207, %v6787, %v7923
      %v7925 = vsel %vm7209, %v6796, %v7924
      %v7926 = vsel %vm7197, %v6814, %v6805
      %v7927 = vsel %vm7199, %v6823, %v7926
      %v7928 = vsel %vm7201, %v6832, %v7927
      %v7929 = vsel %vm7203, %v6841, %v7928
      %v7930 = vsel %vm7205, %v6850, %v7929
      %v7931 = vsel %vm7207, %v6859, %v7930
      %v7932 = vsel %vm7209, %v6868, %v7931
      %v7933 = vsel %vm7197, %v6886, %v6877
      %v7934 = vsel %vm7199, %v6895, %v7933
      %v7935 = vsel %vm7201, %v6904, %v7934
      %v7936 = vsel %vm7203, %v6913, %v7935
      %v7937 = vsel %vm7205, %v6922, %v7936
      %v7938 = vsel %vm7207, %v6931, %v7937
      %v7939 = vsel %vm7209, %v6940, %v7938
      %7940 = vrot.lane.b32.xlu0 %v7722, 32
      %v7941 = vpop.permute.xlu0 %7940
      %7942 = vrot.lane.b32.xlu0 %v7729, 32
      %v7943 = vpop.permute.xlu0 %7942
      %7944 = vrot.lane.b32.xlu0 %v7736, 32
      %v7945 = vpop.permute.xlu0 %7944
      %7946 = vrot.lane.b32.xlu0 %v7743, 32
      %v7947 = vpop.permute.xlu0 %7946
      %7948 = vrot.lane.b32.xlu0 %v7750, 32
      %v7949 = vpop.permute.xlu0 %7948
      %7950 = vrot.lane.b32.xlu0 %v7757, 32
      %v7951 = vpop.permute.xlu0 %7950
      %7952 = vrot.lane.b32.xlu0 %v7764, 32
      %v7953 = vpop.permute.xlu0 %7952
      %7954 = vrot.lane.b32.xlu0 %v7771, 32
      %v7955 = vpop.permute.xlu0 %7954
      %7956 = vrot.lane.b32.xlu0 %v7778, 32
      %v7957 = vpop.permute.xlu0 %7956
      %7958 = vrot.lane.b32.xlu0 %v7785, 32
      %v7959 = vpop.permute.xlu0 %7958
      %7960 = vrot.lane.b32.xlu0 %v7792, 32
      %v7961 = vpop.permute.xlu0 %7960
      %7962 = vrot.lane.b32.xlu0 %v7799, 32
      %v7963 = vpop.permute.xlu0 %7962
      %7964 = vrot.lane.b32.xlu0 %v7806, 32
      %v7965 = vpop.permute.xlu0 %7964
      %7966 = vrot.lane.b32.xlu0 %v7813, 32
      %v7967 = vpop.permute.xlu0 %7966
      %7968 = vrot.lane.b32.xlu0 %v7820, 32
      %v7969 = vpop.permute.xlu0 %7968
      %7970 = vrot.lane.b32.xlu0 %v7827, 32
      %v7971 = vpop.permute.xlu0 %7970
      %7972 = vrot.lane.b32.xlu0 %v7834, 32
      %v7973 = vpop.permute.xlu0 %7972
      %7974 = vrot.lane.b32.xlu0 %v7841, 32
      %v7975 = vpop.permute.xlu0 %7974
      %7976 = vrot.lane.b32.xlu0 %v7848, 32
      %v7977 = vpop.permute.xlu0 %7976
      %7978 = vrot.lane.b32.xlu0 %v7855, 32
      %v7979 = vpop.permute.xlu0 %7978
      %7980 = vrot.lane.b32.xlu0 %v7862, 32
      %v7981 = vpop.permute.xlu0 %7980
      %7982 = vrot.lane.b32.xlu0 %v7869, 32
      %v7983 = vpop.permute.xlu0 %7982
      %7984 = vrot.lane.b32.xlu0 %v7876, 32
      %v7985 = vpop.permute.xlu0 %7984
      %7986 = vrot.lane.b32.xlu0 %v7883, 32
      %v7987 = vpop.permute.xlu0 %7986
      %7988 = vrot.lane.b32.xlu0 %v7890, 32
      %v7989 = vpop.permute.xlu0 %7988
      %7990 = vrot.lane.b32.xlu0 %v7897, 32
      %v7991 = vpop.permute.xlu0 %7990
      %7992 = vrot.lane.b32.xlu0 %v7904, 32
      %v7993 = vpop.permute.xlu0 %7992
      %7994 = vrot.lane.b32.xlu0 %v7911, 32
      %v7995 = vpop.permute.xlu0 %7994
      %7996 = vrot.lane.b32.xlu0 %v7918, 32
      %v7997 = vpop.permute.xlu0 %7996
      %7998 = vrot.lane.b32.xlu0 %v7925, 32
      %v7999 = vpop.permute.xlu0 %7998
      %8000 = vrot.lane.b32.xlu0 %v7932, 32
      %v8001 = vpop.permute.xlu0 %8000
      %8002 = vrot.lane.b32.xlu0 %v7939, 32
      %v8003 = vpop.permute.xlu0 %8002
      %v8036 = vsel %vm1818, %v7210, %v7941
      %v8037 = vsel %vm1818, %v7217, %v7943
      %v8038 = vsel %vm1818, %v7224, %v7945
      %v8039 = vsel %vm1818, %v7231, %v7947
      %v8040 = vsel %vm1818, %v7238, %v7949
      %v8041 = vsel %vm1818, %v7245, %v7951
      %v8042 = vsel %vm1818, %v7252, %v7953
      %v8043 = vsel %vm1818, %v7259, %v7955
      %v8044 = vsel %vm1818, %v7266, %v7957
      %v8045 = vsel %vm1818, %v7273, %v7959
      %v8046 = vsel %vm1818, %v7280, %v7961
      %v8047 = vsel %vm1818, %v7287, %v7963
      %v8048 = vsel %vm1818, %v7294, %v7965
      %v8049 = vsel %vm1818, %v7301, %v7967
      %v8050 = vsel %vm1818, %v7308, %v7969
      %v8051 = vsel %vm1818, %v7315, %v7971
      %v8052 = vsel %vm1818, %v7322, %v7973
      %v8053 = vsel %vm1818, %v7329, %v7975
      %v8054 = vsel %vm1818, %v7336, %v7977
      %v8055 = vsel %vm1818, %v7343, %v7979
      %v8056 = vsel %vm1818, %v7350, %v7981
      %v8057 = vsel %vm1818, %v7357, %v7983
      %v8058 = vsel %vm1818, %v7364, %v7985
      %v8059 = vsel %vm1818, %v7371, %v7987
      %v8060 = vsel %vm1818, %v7378, %v7989
      %v8061 = vsel %vm1818, %v7385, %v7991
      %v8062 = vsel %vm1818, %v7392, %v7993
      %v8063 = vsel %vm1818, %v7399, %v7995
      %v8064 = vsel %vm1818, %v7406, %v7997
      %v8065 = vsel %vm1818, %v7413, %v7999
      %v8066 = vsel %vm1818, %v7420, %v8001
      %v8067 = vsel %vm1818, %v7427, %v8003
      %v8068 = vld [vmem:[%s4] sm:$0xff]
      %v8069 = vld [vmem:[%s4 + $0x8] sm:$0xff]
      %v8070 = vld [vmem:[%s4 + $0x10] sm:$0xff]
      %v8071 = vld [vmem:[%s4 + $0x18] sm:$0xff]
      %v8072 = vld [vmem:[%s4 + $0x20] sm:$0xff]
      %v8073 = vld [vmem:[%s4 + $0x28] sm:$0xff]
      %v8074 = vld [vmem:[%s4 + $0x30] sm:$0xff]
      %v8075 = vld [vmem:[%s4 + $0x38] sm:$0xff]
      %v8076 = vld [vmem:[%s5] sm:$0x1]
      %v8078 = vlaneseq
      %v8079 = vshrl.u32 %v8078, 7
      %v8080 = vsub.s32 0, %v8079
      %v8081 = vrot.slane %v8076, %v8080
      %vm8083 = vcmask 523264
      %v8085 = vsel %vm8083, %v8036, 0
      %v8088 = vsel %vm8083, %v8037, 0
      %v8091 = vsel %vm8083, %v8038, 0
      %v8094 = vsel %vm8083, %v8039, 0
      %v8097 = vsel %vm8083, %v8040, 0
      %v8100 = vsel %vm8083, %v8041, 0
      %v8103 = vsel %vm8083, %v8042, 0
      %v8106 = vsel %vm8083, %v8043, 0
      %v8109 = vsel %vm8083, %v8044, 0
      %v8112 = vsel %vm8083, %v8045, 0
      %v8115 = vsel %vm8083, %v8046, 0
      %v8118 = vsel %vm8083, %v8047, 0
      %v8121 = vsel %vm8083, %v8048, 0
      %v8124 = vsel %vm8083, %v8049, 0
      %v8127 = vsel %vm8083, %v8050, 0
      %v8130 = vsel %vm8083, %v8051, 0
      %v8133 = vsel %vm8083, %v8052, 0
      %v8136 = vsel %vm8083, %v8053, 0
      %v8139 = vsel %vm8083, %v8054, 0
      %v8142 = vsel %vm8083, %v8055, 0
      %v8145 = vsel %vm8083, %v8056, 0
      %v8148 = vsel %vm8083, %v8057, 0
      %v8151 = vsel %vm8083, %v8058, 0
      %v8154 = vsel %vm8083, %v8059, 0
      %v8157 = vsel %vm8083, %v8060, 0
      %v8160 = vsel %vm8083, %v8061, 0
      %v8163 = vsel %vm8083, %v8062, 0
      %v8166 = vsel %vm8083, %v8063, 0
      %v8169 = vsel %vm8083, %v8064, 0
      %v8172 = vsel %vm8083, %v8065, 0
      %v8175 = vsel %vm8083, %v8066, 0
      %v8178 = vsel %vm8083, %v8067, 0
      %8180 = vmatprep.subr.mxu0 0.0
      %8181 = vmatpush1.msra.mxu0 %v8068
      %8182 = vmatprep.subr.mxu0 0.0
      %8183 = vmatpush1.msra.mxu0 %v8069
      %8184 = vmatprep.subr.mxu0 0.0
      %8185 = vmatpush1.msra.mxu0 %v8070
      %8186 = vmatprep.subr.mxu0 0.0
      %8187 = vmatpush1.msra.mxu0 %v8071
      %8188 = vmatprep.subr.mxu0 0.0
      %8189 = vmatpush1.msra.mxu0 %v8072
      %8190 = vmatprep.subr.mxu0 0.0
      %8191 = vmatpush1.msra.mxu0 %v8073
      %8192 = vmatprep.subr.mxu0 0.0
      %8193 = vmatpush1.msra.mxu0 %v8074
      %8194 = vmatprep.subr.mxu0 0.0
      %8195 = vmatpush1.msra.mxu0 %v8075
      %8196 = vmatprep.subr.mxu0 0.0
      %8197 = vmatpush1.msra.mxu0 0.0
      %8198 = vmatprep.subr.mxu0 0.0
      %8199 = vmatpush1.msra.mxu0 0.0
      %8200 = vmatprep.subr.mxu0 0.0
      %8201 = vmatpush1.msra.mxu0 0.0
      %8202 = vmatprep.subr.mxu0 0.0
      %8203 = vmatpush1.msra.mxu0 0.0
      %8204 = vmatprep.subr.mxu0 0.0
      %8205 = vmatpush1.msra.mxu0 0.0
      %8206 = vmatprep.subr.mxu0 0.0
      %8207 = vmatpush1.msra.mxu0 0.0
      %8208 = vmatprep.subr.mxu0 0.0
      %8209 = vmatpush1.msra.mxu0 0.0
      %8210 = vmatprep.subr.mxu0 0.0
      %8211 = vmatpush1.msra.mxu0 0.0
      %8212 = vmatprep.subr.mxu0 0.0
      %8213 = vmatpush1.msra.mxu0 0.0
      %8214 = vmatprep.subr.mxu0 0.0
      %8215 = vmatpush1.msra.mxu0 0.0
      %8216 = vmatprep.subr.mxu0 0.0
      %8217 = vmatpush1.msra.mxu0 0.0
      %8218 = vmatprep.subr.mxu0 0.0
      %8219 = vmatpush1.msra.mxu0 0.0
      %8220 = vmatprep.subr.mxu0 0.0
      %8221 = vmatpush1.msra.mxu0 0.0
      %8222 = vmatprep.subr.mxu0 0.0
      %8223 = vmatpush1.msra.mxu0 0.0
      %8224 = vmatprep.subr.mxu0 0.0
      %8225 = vmatpush1.msra.mxu0 0.0
      %8226 = vmatprep.subr.mxu0 0.0
      %8227 = vmatpush1.msra.mxu0 0.0
      %8228 = vmatprep.subr.mxu0 0.0
      %8229 = vmatpush1.msra.mxu0 0.0
      %8230 = vmatprep.subr.mxu0 0.0
      %8231 = vmatpush1.msra.mxu0 0.0
      %8232 = vmatprep.subr.mxu0 0.0
      %8233 = vmatpush1.msra.mxu0 0.0
      %8234 = vmatprep.subr.mxu0 0.0
      %8235 = vmatpush1.msra.mxu0 0.0
      %8236 = vmatprep.subr.mxu0 0.0
      %8237 = vmatpush1.msra.mxu0 0.0
      %8238 = vmatprep.subr.mxu0 0.0
      %8239 = vmatpush1.msra.mxu0 0.0
      %8240 = vmatprep.subr.mxu0 0.0
      %8241 = vmatpush1.msra.mxu0 0.0
      %8242 = vmatprep.subr.mxu0 0.0
      %8243 = vmatpush1.msra.mxu0 0.0
      %8244 = vmatprep.mubr.f32.mxu0 0.0
      %8245 = vmatmul.mubr.f32.gmra.mrb[0].mxu0 %v8085
      %v8246 = vpop.f32.mrb[0].mxu0
      %v8247 = vadd.f32 %v8081, %v8246
      %v8248 = vpop.f32.mrb[0].mxu0
      %8249 = vmatprep.mubr.f32.mxu0 0.0
      %8250 = vmatmul.mubr.f32.gmra.mrb[0].mxu0 %v8088
      %v8251 = vpop.f32.mrb[0].mxu0
      %v8252 = vadd.f32 %v8081, %v8251
      %v8253 = vpop.f32.mrb[0].mxu0
      %8254 = vmatprep.mubr.f32.mxu0 0.0
      %8255 = vmatmul.mubr.f32.gmra.mrb[0].mxu0 %v8091
      %v8256 = vpop.f32.mrb[0].mxu0
      %v8257 = vadd.f32 %v8081, %v8256
      %v8258 = vpop.f32.mrb[0].mxu0
      %8259 = vmatprep.mubr.f32.mxu0 0.0
      %8260 = vmatmul.mubr.f32.gmra.mrb[0].mxu0 %v8094
      %v8261 = vpop.f32.mrb[0].mxu0
      %v8262 = vadd.f32 %v8081, %v8261
      %v8263 = vpop.f32.mrb[0].mxu0
      %8264 = vmatprep.mubr.f32.mxu0 0.0
      %8265 = vmatmul.mubr.f32.gmra.mrb[0].mxu0 %v8097
      %v8266 = vpop.f32.mrb[0].mxu0
      %v8267 = vadd.f32 %v8081, %v8266
      %v8268 = vpop.f32.mrb[0].mxu0
      %8269 = vmatprep.mubr.f32.mxu0 0.0
      %8270 = vmatmul.mubr.f32.gmra.mrb[0].mxu0 %v8100
      %v8271 = vpop.f32.mrb[0].mxu0
      %v8272 = vadd.f32 %v8081, %v8271
      %v8273 = vpop.f32.mrb[0].mxu0
      %8274 = vmatprep.mubr.f32.mxu0 0.0
      %8275 = vmatmul.mubr.f32.gmra.mrb[0].mxu0 %v8103
      %v8276 = vpop.f32.mrb[0].mxu0
      %v8277 = vadd.f32 %v8081, %v8276
      %v8278 = vpop.f32.mrb[0].mxu0
      %8279 = vmatprep.mubr.f32.mxu0 0.0
      %8280 = vmatmul.mubr.f32.gmra.mrb[0].mxu0 %v8106
      %v8281 = vpop.f32.mrb[0].mxu0
      %v8282 = vadd.f32 %v8081, %v8281
      %v8283 = vpop.f32.mrb[0].mxu0
      %8284 = vmatprep.mubr.f32.mxu0 0.0
      %8285 = vmatmul.mubr.f32.gmra.mrb[0].mxu0 %v8109
      %v8286 = vpop.f32.mrb[0].mxu0
      %v8287 = vadd.f32 %v8081, %v8286
      %v8288 = vpop.f32.mrb[0].mxu0
      %8289 = vmatprep.mubr.f32.mxu0 0.0
      %8290 = vmatmul.mubr.f32.gmra.mrb[0].mxu0 %v8112
      %v8291 = vpop.f32.mrb[0].mxu0
      %v8292 = vadd.f32 %v8081, %v8291
      %v8293 = vpop.f32.mrb[0].mxu0
      %8294 = vmatprep.mubr.f32.mxu0 0.0
      %8295 = vmatmul.mubr.f32.gmra.mrb[0].mxu0 %v8115
      %v8296 = vpop.f32.mrb[0].mxu0
      %v8297 = vadd.f32 %v8081, %v8296
      %v8298 = vpop.f32.mrb[0].mxu0
      %8299 = vmatprep.mubr.f32.mxu0 0.0
      %8300 = vmatmul.mubr.f32.gmra.mrb[0].mxu0 %v8118
      %v8301 = vpop.f32.mrb[0].mxu0
      %v8302 = vadd.f32 %v8081, %v8301
      %v8303 = vpop.f32.mrb[0].mxu0
      %8304 = vmatprep.mubr.f32.mxu0 0.0
      %8305 = vmatmul.mubr.f32.gmra.mrb[0].mxu0 %v8121
      %v8306 = vpop.f32.mrb[0].mxu0
      %v8307 = vadd.f32 %v8081, %v8306
      %v8308 = vpop.f32.mrb[0].mxu0
      %8309 = vmatprep.mubr.f32.mxu0 0.0
      %8310 = vmatmul.mubr.f32.gmra.mrb[0].mxu0 %v8124
      %v8311 = vpop.f32.mrb[0].mxu0
      %v8312 = vadd.f32 %v8081, %v8311
      %v8313 = vpop.f32.mrb[0].mxu0
      %8314 = vmatprep.mubr.f32.mxu0 0.0
      %8315 = vmatmul.mubr.f32.gmra.mrb[0].mxu0 %v8127
      %v8316 = vpop.f32.mrb[0].mxu0
      %v8317 = vadd.f32 %v8081, %v8316
      %v8318 = vpop.f32.mrb[0].mxu0
      %8319 = vmatprep.mubr.f32.mxu0 0.0
      %8320 = vmatmul.mubr.f32.gmra.mrb[0].mxu0 %v8130
      %v8321 = vpop.f32.mrb[0].mxu0
      %v8322 = vadd.f32 %v8081, %v8321
      %v8323 = vpop.f32.mrb[0].mxu0
      %8324 = vmatprep.mubr.f32.mxu0 0.0
      %8325 = vmatmul.mubr.f32.gmra.mrb[0].mxu0 %v8133
      %v8326 = vpop.f32.mrb[0].mxu0
      %v8327 = vadd.f32 %v8081, %v8326
      %v8328 = vpop.f32.mrb[0].mxu0
      %8329 = vmatprep.mubr.f32.mxu0 0.0
      %8330 = vmatmul.mubr.f32.gmra.mrb[0].mxu0 %v8136
      %v8331 = vpop.f32.mrb[0].mxu0
      %v8332 = vadd.f32 %v8081, %v8331
      %v8333 = vpop.f32.mrb[0].mxu0
      %8334 = vmatprep.mubr.f32.mxu0 0.0
      %8335 = vmatmul.mubr.f32.gmra.mrb[0].mxu0 %v8139
      %v8336 = vpop.f32.mrb[0].mxu0
      %v8337 = vadd.f32 %v8081, %v8336
      %v8338 = vpop.f32.mrb[0].mxu0
      %8339 = vmatprep.mubr.f32.mxu0 0.0
      %8340 = vmatmul.mubr.f32.gmra.mrb[0].mxu0 %v8142
      %v8341 = vpop.f32.mrb[0].mxu0
      %v8342 = vadd.f32 %v8081, %v8341
      %v8343 = vpop.f32.mrb[0].mxu0
      %8344 = vmatprep.mubr.f32.mxu0 0.0
      %8345 = vmatmul.mubr.f32.gmra.mrb[0].mxu0 %v8145
      %v8346 = vpop.f32.mrb[0].mxu0
      %v8347 = vadd.f32 %v8081, %v8346
      %v8348 = vpop.f32.mrb[0].mxu0
      %8349 = vmatprep.mubr.f32.mxu0 0.0
      %8350 = vmatmul.mubr.f32.gmra.mrb[0].mxu0 %v8148
      %v8351 = vpop.f32.mrb[0].mxu0
      %v8352 = vadd.f32 %v8081, %v8351
      %v8353 = vpop.f32.mrb[0].mxu0
      %8354 = vmatprep.mubr.f32.mxu0 0.0
      %8355 = vmatmul.mubr.f32.gmra.mrb[0].mxu0 %v8151
      %v8356 = vpop.f32.mrb[0].mxu0
      %v8357 = vadd.f32 %v8081, %v8356
      %v8358 = vpop.f32.mrb[0].mxu0
      %8359 = vmatprep.mubr.f32.mxu0 0.0
      %8360 = vmatmul.mubr.f32.gmra.mrb[0].mxu0 %v8154
      %v8361 = vpop.f32.mrb[0].mxu0
      %v8362 = vadd.f32 %v8081, %v8361
      %v8363 = vpop.f32.mrb[0].mxu0
      %8364 = vmatprep.mubr.f32.mxu0 0.0
      %8365 = vmatmul.mubr.f32.gmra.mrb[0].mxu0 %v8157
      %v8366 = vpop.f32.mrb[0].mxu0
      %v8367 = vadd.f32 %v8081, %v8366
      %v8368 = vpop.f32.mrb[0].mxu0
      %8369 = vmatprep.mubr.f32.mxu0 0.0
      %8370 = vmatmul.mubr.f32.gmra.mrb[0].mxu0 %v8160
      %v8371 = vpop.f32.mrb[0].mxu0
      %v8372 = vadd.f32 %v8081, %v8371
      %v8373 = vpop.f32.mrb[0].mxu0
      %8374 = vmatprep.mubr.f32.mxu0 0.0
      %8375 = vmatmul.mubr.f32.gmra.mrb[0].mxu0 %v8163
      %v8376 = vpop.f32.mrb[0].mxu0
      %v8377 = vadd.f32 %v8081, %v8376
      %v8378 = vpop.f32.mrb[0].mxu0
      %8379 = vmatprep.mubr.f32.mxu0 0.0
      %8380 = vmatmul.mubr.f32.gmra.mrb[0].mxu0 %v8166
      %v8381 = vpop.f32.mrb[0].mxu0
      %v8382 = vadd.f32 %v8081, %v8381
      %v8383 = vpop.f32.mrb[0].mxu0
      %8384 = vmatprep.mubr.f32.mxu0 0.0
      %8385 = vmatmul.mubr.f32.gmra.mrb[0].mxu0 %v8169
      %v8386 = vpop.f32.mrb[0].mxu0
      %v8387 = vadd.f32 %v8081, %v8386
      %v8388 = vpop.f32.mrb[0].mxu0
      %8389 = vmatprep.mubr.f32.mxu0 0.0
      %8390 = vmatmul.mubr.f32.gmra.mrb[0].mxu0 %v8172
      %v8391 = vpop.f32.mrb[0].mxu0
      %v8392 = vadd.f32 %v8081, %v8391
      %v8393 = vpop.f32.mrb[0].mxu0
      %8394 = vmatprep.mubr.f32.mxu0 0.0
      %8395 = vmatmul.mubr.f32.gmra.mrb[0].mxu0 %v8175
      %v8396 = vpop.f32.mrb[0].mxu0
      %v8397 = vadd.f32 %v8081, %v8396
      %v8398 = vpop.f32.mrb[0].mxu0
      %8399 = vmatprep.mubr.f32.mxu0 0.0
      %8400 = vmatmul.mubr.f32.gmra.mrb[0].mxu0 %v8178
      %v8401 = vpop.f32.mrb[0].mxu0
      %v8402 = vadd.f32 %v8081, %v8401
      %v8403 = vpop.f32.mrb[0].mxu0
      %8404 = vdwg.mxu0
      %v8405 = vmax.f32 %v8247, 0.0
      %v8406 = vmax.f32 %v8252, 0.0
      %v8407 = vmax.f32 %v8257, 0.0
      %v8408 = vmax.f32 %v8262, 0.0
      %v8409 = vmax.f32 %v8267, 0.0
      %v8410 = vmax.f32 %v8272, 0.0
      %v8411 = vmax.f32 %v8277, 0.0
      %v8412 = vmax.f32 %v8282, 0.0
      %v8413 = vmax.f32 %v8287, 0.0
      %v8414 = vmax.f32 %v8292, 0.0
      %v8415 = vmax.f32 %v8297, 0.0
      %v8416 = vmax.f32 %v8302, 0.0
      %v8417 = vmax.f32 %v8307, 0.0
      %v8418 = vmax.f32 %v8312, 0.0
      %v8419 = vmax.f32 %v8317, 0.0
      %v8420 = vmax.f32 %v8322, 0.0
      %v8421 = vmax.f32 %v8327, 0.0
      %v8422 = vmax.f32 %v8332, 0.0
      %v8423 = vmax.f32 %v8337, 0.0
      %v8424 = vmax.f32 %v8342, 0.0
      %v8425 = vmax.f32 %v8347, 0.0
      %v8426 = vmax.f32 %v8352, 0.0
      %v8427 = vmax.f32 %v8357, 0.0
      %v8428 = vmax.f32 %v8362, 0.0
      %v8429 = vmax.f32 %v8367, 0.0
      %v8430 = vmax.f32 %v8372, 0.0
      %v8431 = vmax.f32 %v8377, 0.0
      %v8432 = vmax.f32 %v8382, 0.0
      %v8433 = vmax.f32 %v8387, 0.0
      %v8434 = vmax.f32 %v8392, 0.0
      %v8435 = vmax.f32 %v8397, 0.0
      %v8436 = vmax.f32 %v8402, 0.0
      %8469 = vrot.lane.b32.xlu0 %v8405, 96
      %v8470 = vpop.permute.xlu0 %8469
      %8471 = vrot.lane.b32.xlu0 %v8406, 96
      %v8472 = vpop.permute.xlu0 %8471
      %8473 = vrot.lane.b32.xlu0 %v8407, 96
      %v8474 = vpop.permute.xlu0 %8473
      %8475 = vrot.lane.b32.xlu0 %v8408, 96
      %v8476 = vpop.permute.xlu0 %8475
      %8477 = vrot.lane.b32.xlu0 %v8409, 96
      %v8478 = vpop.permute.xlu0 %8477
      %8479 = vrot.lane.b32.xlu0 %v8410, 96
      %v8480 = vpop.permute.xlu0 %8479
      %8481 = vrot.lane.b32.xlu0 %v8411, 96
      %v8482 = vpop.permute.xlu0 %8481
      %8483 = vrot.lane.b32.xlu0 %v8412, 96
      %v8484 = vpop.permute.xlu0 %8483
      %8485 = vrot.lane.b32.xlu0 %v8413, 96
      %v8486 = vpop.permute.xlu0 %8485
      %8487 = vrot.lane.b32.xlu0 %v8414, 96
      %v8488 = vpop.permute.xlu0 %8487
      %8489 = vrot.lane.b32.xlu0 %v8415, 96
      %v8490 = vpop.permute.xlu0 %8489
      %8491 = vrot.lane.b32.xlu0 %v8416, 96
      %v8492 = vpop.permute.xlu0 %8491
      %8493 = vrot.lane.b32.xlu0 %v8417, 96
      %v8494 = vpop.permute.xlu0 %8493
      %8495 = vrot.lane.b32.xlu0 %v8418, 96
      %v8496 = vpop.permute.xlu0 %8495
      %8497 = vrot.lane.b32.xlu0 %v8419, 96
      %v8498 = vpop.permute.xlu0 %8497
      %8499 = vrot.lane.b32.xlu0 %v8420, 96
      %v8500 = vpop.permute.xlu0 %8499
      %8501 = vrot.lane.b32.xlu0 %v8421, 96
      %v8502 = vpop.permute.xlu0 %8501
      %8503 = vrot.lane.b32.xlu0 %v8422, 96
      %v8504 = vpop.permute.xlu0 %8503
      %8505 = vrot.lane.b32.xlu0 %v8423, 96
      %v8506 = vpop.permute.xlu0 %8505
      %8507 = vrot.lane.b32.xlu0 %v8424, 96
      %v8508 = vpop.permute.xlu0 %8507
      %8509 = vrot.lane.b32.xlu0 %v8425, 96
      %v8510 = vpop.permute.xlu0 %8509
      %8511 = vrot.lane.b32.xlu0 %v8426, 96
      %v8512 = vpop.permute.xlu0 %8511
      %8513 = vrot.lane.b32.xlu0 %v8427, 96
      %v8514 = vpop.permute.xlu0 %8513
      %8515 = vrot.lane.b32.xlu0 %v8428, 96
      %v8516 = vpop.permute.xlu0 %8515
      %8517 = vrot.lane.b32.xlu0 %v8429, 96
      %v8518 = vpop.permute.xlu0 %8517
      %8519 = vrot.lane.b32.xlu0 %v8430, 96
      %v8520 = vpop.permute.xlu0 %8519
      %8521 = vrot.lane.b32.xlu0 %v8431, 96
      %v8522 = vpop.permute.xlu0 %8521
      %8523 = vrot.lane.b32.xlu0 %v8432, 96
      %v8524 = vpop.permute.xlu0 %8523
      %8525 = vrot.lane.b32.xlu0 %v8433, 96
      %v8526 = vpop.permute.xlu0 %8525
      %8527 = vrot.lane.b32.xlu0 %v8434, 96
      %v8528 = vpop.permute.xlu0 %8527
      %8529 = vrot.lane.b32.xlu0 %v8435, 96
      %v8530 = vpop.permute.xlu0 %8529
      %8531 = vrot.lane.b32.xlu0 %v8436, 96
      %v8532 = vpop.permute.xlu0 %8531
      %v8565 = vadd.f32 %v8405, %v8470
      %v8566 = vadd.f32 %v8406, %v8472
      %v8567 = vadd.f32 %v8407, %v8474
      %v8568 = vadd.f32 %v8408, %v8476
      %v8569 = vadd.f32 %v8409, %v8478
      %v8570 = vadd.f32 %v8410, %v8480
      %v8571 = vadd.f32 %v8411, %v8482
      %v8572 = vadd.f32 %v8412, %v8484
      %v8573 = vadd.f32 %v8413, %v8486
      %v8574 = vadd.f32 %v8414, %v8488
      %v8575 = vadd.f32 %v8415, %v8490
      %v8576 = vadd.f32 %v8416, %v8492
      %v8577 = vadd.f32 %v8417, %v8494
      %v8578 = vadd.f32 %v8418, %v8496
      %v8579 = vadd.f32 %v8419, %v8498
      %v8580 = vadd.f32 %v8420, %v8500
      %v8581 = vadd.f32 %v8421, %v8502
      %v8582 = vadd.f32 %v8422, %v8504
      %v8583 = vadd.f32 %v8423, %v8506
      %v8584 = vadd.f32 %v8424, %v8508
      %v8585 = vadd.f32 %v8425, %v8510
      %v8586 = vadd.f32 %v8426, %v8512
      %v8587 = vadd.f32 %v8427, %v8514
      %v8588 = vadd.f32 %v8428, %v8516
      %v8589 = vadd.f32 %v8429, %v8518
      %v8590 = vadd.f32 %v8430, %v8520
      %v8591 = vadd.f32 %v8431, %v8522
      %v8592 = vadd.f32 %v8432, %v8524
      %v8593 = vadd.f32 %v8433, %v8526
      %v8594 = vadd.f32 %v8434, %v8528
      %v8595 = vadd.f32 %v8435, %v8530
      %v8596 = vadd.f32 %v8436, %v8532
      %v8597 = vld [vmem:[%s272] sm:$0xff]
      %v8598 = vld [vmem:[%s272 + $0x8] sm:$0xff]
      %v8599 = vld [vmem:[%s272 + $0x10] sm:$0xff]
      %v8600 = vld [vmem:[%s272 + $0x18] sm:$0xff]
      %v8601 = vld [vmem:[%s272 + $0x20] sm:$0xff]
      %v8602 = vld [vmem:[%s272 + $0x28] sm:$0xff]
      %v8603 = vld [vmem:[%s272 + $0x30] sm:$0xff]
      %v8604 = vld [vmem:[%s272 + $0x38] sm:$0xff]
      %v8605 = vld [vmem:[%s272 + $0x40] sm:$0xff]
      %v8606 = vld [vmem:[%s272 + $0x48] sm:$0xff]
      %v8607 = vld [vmem:[%s272 + $0x50] sm:$0xff]
      %v8608 = vld [vmem:[%s272 + $0x58] sm:$0xff]
      %v8609 = vld [vmem:[%s272 + $0x60] sm:$0xff]
      %v8610 = vld [vmem:[%s272 + $0x68] sm:$0xff]
      %v8611 = vld [vmem:[%s272 + $0x70] sm:$0xff]
      %v8612 = vld [vmem:[%s272 + $0x78] sm:$0xff]
      %v8613 = vld [vmem:[%s272 + $0x80] sm:$0xff]
      %v8614 = vld [vmem:[%s272 + $0x88] sm:$0xff]
      %v8615 = vld [vmem:[%s272 + $0x90] sm:$0xff]
      %v8616 = vld [vmem:[%s272 + $0x98] sm:$0xff]
      %v8617 = vld [vmem:[%s272 + $0xa0] sm:$0xff]
      %v8618 = vld [vmem:[%s272 + $0xa8] sm:$0xff]
      %v8619 = vld [vmem:[%s272 + $0xb0] sm:$0xff]
      %v8620 = vld [vmem:[%s272 + $0xb8] sm:$0xff]
      %v8621 = vld [vmem:[%s272 + $0xc0] sm:$0xff]
      %v8622 = vld [vmem:[%s272 + $0xc8] sm:$0xff]
      %v8623 = vld [vmem:[%s272 + $0xd0] sm:$0xff]
      %v8624 = vld [vmem:[%s272 + $0xd8] sm:$0xff]
      %v8625 = vld [vmem:[%s272 + $0xe0] sm:$0xff]
      %v8626 = vld [vmem:[%s272 + $0xe8] sm:$0xff]
      %v8627 = vld [vmem:[%s272 + $0xf0] sm:$0xff]
      %v8628 = vld [vmem:[%s272 + $0xf8] sm:$0xff]
      %v8629 = vadd.f32 %v8565, %v8597
      %v8630 = vadd.f32 %v8566, %v8598
      %v8631 = vadd.f32 %v8567, %v8599
      %v8632 = vadd.f32 %v8568, %v8600
      %v8633 = vadd.f32 %v8569, %v8601
      %v8634 = vadd.f32 %v8570, %v8602
      %v8635 = vadd.f32 %v8571, %v8603
      %v8636 = vadd.f32 %v8572, %v8604
      %v8637 = vadd.f32 %v8573, %v8605
      %v8638 = vadd.f32 %v8574, %v8606
      %v8639 = vadd.f32 %v8575, %v8607
      %v8640 = vadd.f32 %v8576, %v8608
      %v8641 = vadd.f32 %v8577, %v8609
      %v8642 = vadd.f32 %v8578, %v8610
      %v8643 = vadd.f32 %v8579, %v8611
      %v8644 = vadd.f32 %v8580, %v8612
      %v8645 = vadd.f32 %v8581, %v8613
      %v8646 = vadd.f32 %v8582, %v8614
      %v8647 = vadd.f32 %v8583, %v8615
      %v8648 = vadd.f32 %v8584, %v8616
      %v8649 = vadd.f32 %v8585, %v8617
      %v8650 = vadd.f32 %v8586, %v8618
      %v8651 = vadd.f32 %v8587, %v8619
      %v8652 = vadd.f32 %v8588, %v8620
      %v8653 = vadd.f32 %v8589, %v8621
      %v8654 = vadd.f32 %v8590, %v8622
      %v8655 = vadd.f32 %v8591, %v8623
      %v8656 = vadd.f32 %v8592, %v8624
      %v8657 = vadd.f32 %v8593, %v8625
      %v8658 = vadd.f32 %v8594, %v8626
      %v8659 = vadd.f32 %v8595, %v8627
      %v8660 = vadd.f32 %v8596, %v8628
      %8661 = vst.msk [vmem:[%s278] sm:$0xff] %vm1818, %v8629
      %8662 = vst.msk [vmem:[%s278 + $0x8] sm:$0xff] %vm1818, %v8630
      %8663 = vst.msk [vmem:[%s278 + $0x10] sm:$0xff] %vm1818, %v8631
      %8664 = vst.msk [vmem:[%s278 + $0x18] sm:$0xff] %vm1818, %v8632
      %8665 = vst.msk [vmem:[%s278 + $0x20] sm:$0xff] %vm1818, %v8633
      %8666 = vst.msk [vmem:[%s278 + $0x28] sm:$0xff] %vm1818, %v8634
      %8667 = vst.msk [vmem:[%s278 + $0x30] sm:$0xff] %vm1818, %v8635
      %8668 = vst.msk [vmem:[%s278 + $0x38] sm:$0xff] %vm1818, %v8636
      %8669 = vst.msk [vmem:[%s278 + $0x40] sm:$0xff] %vm1818, %v8637
      %8670 = vst.msk [vmem:[%s278 + $0x48] sm:$0xff] %vm1818, %v8638
      %8671 = vst.msk [vmem:[%s278 + $0x50] sm:$0xff] %vm1818, %v8639
      %8672 = vst.msk [vmem:[%s278 + $0x58] sm:$0xff] %vm1818, %v8640
      %8673 = vst.msk [vmem:[%s278 + $0x60] sm:$0xff] %vm1818, %v8641
      %8674 = vst.msk [vmem:[%s278 + $0x68] sm:$0xff] %vm1818, %v8642
      %8675 = vst.msk [vmem:[%s278 + $0x70] sm:$0xff] %vm1818, %v8643
      %8676 = vst.msk [vmem:[%s278 + $0x78] sm:$0xff] %vm1818, %v8644
      %8677 = vst.msk [vmem:[%s278 + $0x80] sm:$0xff] %vm1818, %v8645
      %8678 = vst.msk [vmem:[%s278 + $0x88] sm:$0xff] %vm1818, %v8646
      %8679 = vst.msk [vmem:[%s278 + $0x90] sm:$0xff] %vm1818, %v8647
      %8680 = vst.msk [vmem:[%s278 + $0x98] sm:$0xff] %vm1818, %v8648
      %8681 = vst.msk [vmem:[%s278 + $0xa0] sm:$0xff] %vm1818, %v8649
      %8682 = vst.msk [vmem:[%s278 + $0xa8] sm:$0xff] %vm1818, %v8650
      %8683 = vst.msk [vmem:[%s278 + $0xb0] sm:$0xff] %vm1818, %v8651
      %8684 = vst.msk [vmem:[%s278 + $0xb8] sm:$0xff] %vm1818, %v8652
      %8685 = vst.msk [vmem:[%s278 + $0xc0] sm:$0xff] %vm1818, %v8653
      %8686 = vst.msk [vmem:[%s278 + $0xc8] sm:$0xff] %vm1818, %v8654
      %8687 = vst.msk [vmem:[%s278 + $0xd0] sm:$0xff] %vm1818, %v8655
      %8688 = vst.msk [vmem:[%s278 + $0xd8] sm:$0xff] %vm1818, %v8656
      %8689 = vst.msk [vmem:[%s278 + $0xe0] sm:$0xff] %vm1818, %v8657
      %8690 = vst.msk [vmem:[%s278 + $0xe8] sm:$0xff] %vm1818, %v8658
      %8691 = vst.msk [vmem:[%s278 + $0xf0] sm:$0xff] %vm1818, %v8659
      %8692 = vst.msk [vmem:[%s278 + $0xf8] sm:$0xff] %vm1818, %v8660
      %s8693 = smul.u32 32, %s17
      %p8694 = scmp.lt.s32.totalorder %s8693, 95
      %s8695 = scalar_select %p8694, %s8693, 95
      %s8696 = smul.addr %s8695, 8
      %s8697 = scalar_lea.vmem %s6, %s8696
      // Predicated region
      $region45: #{tpu_custom_call.1} parent=43 // pred_check
        %p8698 = pneg %p171
      $region46: #{tpu_custom_call.1} parent=43 // pred_check_branch
        %8700 = sbr.rel (%p8698) target = $region48
      $region47: #{tpu_custom_call.1} parent=43 // pred_region
        %s8701 = smul.u32 32, %s17
      $region48: #{tpu_custom_call.1} parent=43 // pred_fallthru
        _
    $region44: #{tpu_custom_call.1} parent=5 // pred_fallthru
      _
    %p8702 = scmp.le.s32.totalorder 2, %s12
    // Predicated region
    $region49: #{tpu_custom_call.1} parent=5 // pred_check
      %p8703 = pneg %p8702
    $region50: #{tpu_custom_call.1} parent=5 // pred_check_branch
      %8705 = sbr.rel (%p8703) target = $region52
    $region51: #{tpu_custom_call.1} parent=5 // pred_region
      %s8706 = ssub.s32 %s12, 2
      // Predicated region
      $region53: #{tpu_custom_call.1} parent=51 // pred_check
        %p8707 = pneg %p177
      $region54: #{tpu_custom_call.1} parent=51 // pred_check_branch
        %8709 = sbr.rel (%p8707) target = $region56
      $region55: #{tpu_custom_call.1} parent=51 // pred_region
        %s8710 = smul.u32 32, %s18
        %p8711 = scmp.lt.s32.totalorder %s8710, 95
        %s8712 = scalar_select %p8711, %s8710, 95
        %s8713 = smul.addr %s8712, 8
        %s8714 = scalar_lea.vmem %s6, %s8713
      $region56: #{tpu_custom_call.1} parent=51 // pred_fallthru
        _
    $region52: #{tpu_custom_call.1} parent=5 // pred_fallthru
      _
  $region6: #{tpu_custom_call.1} parent=0 // loop_footer
    %s16 = sadd.s32 1, %s12
  $region7: #{tpu_custom_call.1} parent=0 // loop_footer_branch
    %11 = sbr.rel target = $region3
  $region8: #{tpu_custom_call.1} parent=0 // loop_exit
    _

</llo_original>
